<compile_context>
chip_gen: v7x
topology: tpu7x:2x2x1
jax: 0.10.0
libtpu: 0.0.40
codegen_flags: <defaults>
</compile_context>

<pallas_src>
import functools

import jax
import jax.numpy as jnp
from jax.experimental import pallas as pl
from jax.experimental.pallas import tpu as pltpu


def resblock_kernel(x_ref, w1_ref, b1_ref, w2_ref, b2_ref, o_ref, buf_ref,
                    *, H, W, img_start, res_scale):
    """One grid step == one image.

    x_ref  : (H*W, C)          flattened NHWC input, compute dtype
    w*_ref : (3, 3, C, C)      conv weights (kh, kw, Cin, Cout), compute dtype
    b*_ref : (1, C)            conv biases, f32
    o_ref  : (H*W, C)          output, f32
    buf_ref: (2*img_start + H*W, C)  shared VMEM workspace:
             [0, img_start)                -> zero halo (top pad + left shift room)
             [img_start, img_start + H*W)  -> image rows (x, then relu(conv1))
             [img_start + H*W, end)        -> zero halo (bottom pad + right shift room)
    """
    HW = H * W
    C = x_ref.shape[-1]
    cdt = buf_ref.dtype

    # Zero only the halo rows (not the whole scratch).  Done every step —
    # cheap (O(img_start * C)) and keeps the kernel correct when the
    # "parallel" batch axis is split across TensorCores (scratch is per-core,
    # so a program_id==0 guard would leave the second core uninitialized).
    zeros_pad = jnp.zeros((img_start, C), cdt)
    buf_ref[pl.ds(0, img_start), :] = zeros_pad
    buf_ref[pl.ds(img_start + HW, img_start), :] = zeros_pad

    # Column-edge masks for the flattened-row trick: a tap with dx==0 (dx==2)
    # reads the previous (next) row's edge pixel for output column 0 (W-1),
    # which must contribute zero (it is the width padding).
    col = jax.lax.broadcasted_iota(jnp.int32, (HW, 1), 0) % W
    not_first = col != 0
    not_last = col != (W - 1)

    def conv3x3(w_ref):
        # 9 whole-image MXU matmuls (H*W, C) x (C, C), f32 accumulation.
        acc = jnp.zeros((HW, C), jnp.float32)
        for dy in range(3):
            for dx in range(3):
                start = img_start + (dy - 1) * W + (dx - 1)
                patch = buf_ref[pl.ds(start, HW), :]
                if dx == 0:
                    patch = jnp.where(not_first, patch, jnp.zeros_like(patch))
                elif dx == 2:
                    patch = jnp.where(not_last, patch, jnp.zeros_like(patch))
                acc += jnp.dot(patch, w_ref[dy, dx],
                               preferred_element_type=jnp.float32)
        return acc

    # ---- conv1 + bias + ReLU (epilogue in f32, bias broadcast once) --------
    buf_ref[pl.ds(img_start, HW), :] = x_ref[...]
    y1 = jnp.maximum(conv3x3(w1_ref) + b1_ref[...], 0.0)

    # ---- conv2: reuse the same workspace (conv1 inputs fully consumed) -----
    buf_ref[pl.ds(img_start, HW), :] = y1.astype(cdt)
    y2 = conv3x3(w2_ref) + b2_ref[...]

    # ---- residual epilogue in f32: (conv2 * s + x) * s  (matches module) ---
    x_res = x_ref[...].astype(jnp.float32)
    o_ref[...] = ((y2 * res_scale + x_res) * res_scale).astype(o_ref.dtype)


def resblock_forward(x_nchw, w1, b1, w2, b2, res_scale=1.0,
                     compute_dtype=jnp.bfloat16):
    """x_nchw: (N, C, H, W); w*: (Cout, Cin, 3, 3) [PyTorch OIHW]; b*: (C,)."""
    N, C, H, W = x_nchw.shape
    HW = H * W

    # NHWC with spatial flattened: every per-image tensor is (pixels, channels)
    # with channels on the lane axis.  (The reshape/transpose here is layout
    # plumbing outside the kernel; no jnp.pad round-trip through HBM.)
    x = jnp.transpose(x_nchw, (0, 2, 3, 1)).reshape(N, HW, C).astype(compute_dtype)
    w1k = jnp.transpose(w1, (2, 3, 1, 0)).astype(compute_dtype)   # (kh, kw, Ci, Co)
    w2k = jnp.transpose(w2, (2, 3, 1, 0)).astype(compute_dtype)
    b1k = b1.reshape(1, C).astype(jnp.float32)
    b2k = b2.reshape(1, C).astype(jnp.float32)

    # Sublane-aligned start of the image inside the padded workspace
    # (8 rows for f32, 16 for 2-byte dtypes); must also be >= W + 1 so every
    # tap slice stays in bounds.
    esize = jnp.dtype(compute_dtype).itemsize
    sub = 8 if esize == 4 else 16
    img_start = -(-max(W + 1, sub) // sub) * sub
    buf_rows = img_start + HW + img_start

    kernel = functools.partial(resblock_kernel, H=H, W=W,
                               img_start=img_start,
                               res_scale=float(res_scale))

    cost = pl.CostEstimate(
        flops=4 * 9 * N * HW * C * C,              # 2 convs, 2 flops / MAC
        transcendentals=0,
        bytes_accessed=(N * HW * C * (esize + 4)   # x in, out (f32)
                        + 2 * 9 * C * C * esize    # both weight tensors
                        + 2 * C * 4),              # biases
    )

    out = pl.pallas_call(
        kernel,
        out_shape=jax.ShapeDtypeStruct((N, HW, C), jnp.float32),
        grid_spec=pltpu.PrefetchScalarGridSpec(
            num_scalar_prefetch=0,
            grid=(N,),
            in_specs=[
                pl.BlockSpec((None, HW, C), lambda n: (n, 0, 0)),
                pl.BlockSpec((3, 3, C, C), lambda n: (0, 0, 0, 0)),
                pl.BlockSpec((1, C), lambda n: (0, 0)),
                pl.BlockSpec((3, 3, C, C), lambda n: (0, 0, 0, 0)),
                pl.BlockSpec((1, C), lambda n: (0, 0)),
            ],
            out_specs=pl.BlockSpec((None, HW, C), lambda n: (n, 0, 0)),
            scratch_shapes=[pltpu.VMEM((buf_rows, C), compute_dtype)],
        ),
        compiler_params=pltpu.CompilerParams(
            dimension_semantics=("parallel",),
            vmem_limit_bytes=32 * 1024 * 1024,
        ),
        cost_estimate=cost,
    )(x, w1k, b1k, w2k, b2k)

    out = out.reshape(N, H, W, C)
    return jnp.transpose(out, (0, 3, 1, 2))                       # back to NCHW


def resblock_reference(x, w1, b1, w2, b2, res_scale):
    """Pure-JAX reference matching the PyTorch module exactly (NCHW/OIHW)."""
    conv = lambda a, w: jax.lax.conv_general_dilated(
        a, w, window_strides=(1, 1), padding=((1, 1), (1, 1)),
        dimension_numbers=("NCHW", "OIHW", "NCHW"),
        precision=jax.lax.Precision.HIGHEST)
    y = jnp.maximum(conv(x, w1) + b1.reshape(1, -1, 1, 1), 0.0)
    y = conv(y, w2) + b2.reshape(1, -1, 1, 1)
    return (y * res_scale + x) * res_scale


if __name__ == "__main__":
    key = jax.random.PRNGKey(0)
    k1, k2, k3, k4, k5 = jax.random.split(key, 5)

    N, C, H, W = 2, 64, 16, 16       # n_feats = 64 (EDSR default), small spatial
    res_scale = 0.5

    x = jax.random.normal(k1, (N, C, H, W), jnp.float32)
    # Deterministic synthetic parameters (PyTorch Conv2d shapes: OIHW + bias).
    w1 = 0.05 * jax.random.normal(k2, (C, C, 3, 3), jnp.float32)
    b1 = 0.1 * jax.random.normal(k3, (C,), jnp.float32)
    w2 = 0.05 * jax.random.normal(k4, (C, C, 3, 3), jnp.float32)
    b2 = 0.1 * jax.random.normal(k5, (C,), jnp.float32)

    ref = resblock_reference(x, w1, b1, w2, b2, res_scale)

    # f32 path: tight check of the conv/residual algorithm.
    out_f32 = jax.block_until_ready(
        resblock_forward(x, w1, b1, w2, b2, res_scale, compute_dtype=jnp.float32))
    assert out_f32.shape == ref.shape == (N, C, H, W)
    err_f32 = float(jnp.max(jnp.abs(out_f32 - ref)))
    assert err_f32 < 1e-3, f"f32 mismatch vs reference: {err_f32}"

    # bf16 MXU path (recommended on v6e/v7x): f32 accumulate, looser tolerance.
    out_bf16 = jax.block_until_ready(
        resblock_forward(x, w1, b1, w2, b2, res_scale, compute_dtype=jnp.bfloat16))
    err_bf16 = float(jnp.max(jnp.abs(out_bf16 - ref)))
    assert err_bf16 < 5e-2, f"bf16 mismatch vs reference: {err_bf16}"

    print("KERNEL_OK")
</pallas_src>

<mosaic_0001>
module attributes {stable_mosaic.version = 11 : i64} {
  func.func @resblock_kernel(%arg0: i32, %arg1: memref<1x256x64xf32, #tpu.memory_space<vmem>>, %arg2: memref<3x3x64x64xf32, #tpu.memory_space<vmem>>, %arg3: memref<1x64xf32, #tpu.memory_space<vmem>>, %arg4: memref<3x3x64x64xf32, #tpu.memory_space<vmem>>, %arg5: memref<1x64xf32, #tpu.memory_space<vmem>>, %arg6: memref<1x256x64xf32, #tpu.memory_space<vmem>>, %arg7: memref<304x64xf32, #tpu.memory_space<vmem>>) attributes {dimension_semantics = [#tpu.dimension_semantics<parallel>], iteration_bounds = array<i64: 2>, scalar_prefetch = 0 : i64, scratch_operands = 1 : i64, tpu.core_type = #tpu.core_type<tc>, window_params = [{transform_indices = @transform_0, window_bounds = array<i64: 1, 256, 64>}, {pipeline_mode = #tpu.pipeline_mode<synchronous>, transform_indices = @transform_1, window_bounds = array<i64: 3, 3, 64, 64>}, {pipeline_mode = #tpu.pipeline_mode<synchronous>, transform_indices = @transform_2, window_bounds = array<i64: 1, 64>}, {pipeline_mode = #tpu.pipeline_mode<synchronous>, transform_indices = @transform_3, window_bounds = array<i64: 3, 3, 64, 64>}, {pipeline_mode = #tpu.pipeline_mode<synchronous>, transform_indices = @transform_4, window_bounds = array<i64: 1, 64>}, {transform_indices = @transform_5, window_bounds = array<i64: 1, 256, 64>}]} {
    %cst = arith.constant 0.000000e+00 : f32
    %0 = vector.broadcast %cst : f32 to vector<24x64xf32>
    %c0 = arith.constant 0 : index
    %c0_0 = arith.constant 0 : index
    %1 = vector.load %arg7[%c0, %c0_0] : memref<304x64xf32, #tpu.memory_space<vmem>>, vector<24x64xf32>
    tpu.vector_store %arg7[%c0, %c0_0], %0 {strides = array<i32>} : memref<304x64xf32, #tpu.memory_space<vmem>>, vector<24x64xf32>,
    %c280 = arith.constant 280 : index
    %c0_1 = arith.constant 0 : index
    %2 = vector.load %arg7[%c280, %c0_1] : memref<304x64xf32, #tpu.memory_space<vmem>>, vector<24x64xf32>
    tpu.vector_store %arg7[%c280, %c0_1], %0 {strides = array<i32>} : memref<304x64xf32, #tpu.memory_space<vmem>>, vector<24x64xf32>,
    %3 = tpu.iota {dimensions = array<i32: 0>} : vector<256x1xi32>
    %c16_i32 = arith.constant 16 : i32
    %c0_i32 = arith.constant 0 : i32
    %4 = arith.cmpi eq, %c16_i32, %c0_i32 : i32
    %c1_i32 = arith.constant 1 : i32
    %5 = arith.select %4, %c1_i32, %c16_i32 : i32
    %6 = vector.broadcast %5 : i32 to vector<256x1xi32>
    %7 = arith.remsi %3, %6 : vector<256x1xi32>
    %c0_i32_2 = arith.constant 0 : i32
    %8 = vector.broadcast %c0_i32_2 : i32 to vector<256x1xi32>
    %9 = arith.cmpi ne, %7, %8 : vector<256x1xi32>
    %c0_i32_3 = arith.constant 0 : i32
    %10 = vector.broadcast %c0_i32_3 : i32 to vector<256x1xi32>
    %11 = arith.cmpi slt, %7, %10 : vector<256x1xi32>
    %c0_i32_4 = arith.constant 0 : i32
    %12 = arith.cmpi slt, %5, %c0_i32_4 : i32
    %13 = vector.broadcast %12 : i1 to vector<256x1xi1>
    %14 = vector.broadcast %13 : vector<256x1xi1> to vector<256x1xi1>
    %15 = arith.xori %11, %14 : vector<256x1xi1>
    %16 = arith.andi %15, %9 : vector<256x1xi1>
    %17 = vector.broadcast %5 : i32 to vector<256x1xi32>
    %18 = arith.addi %7, %17 : vector<256x1xi32>
    %19 = arith.select %16, %18, %7 : vector<256x1xi1>, vector<256x1xi32>
    %c0_i32_5 = arith.constant 0 : i32
    %20 = vector.broadcast %c0_i32_5 : i32 to vector<256x1xi32>
    %21 = arith.cmpi ne, %19, %20 : vector<256x1xi32>
    %c15_i32 = arith.constant 15 : i32
    %22 = vector.broadcast %c15_i32 : i32 to vector<256x1xi32>
    %23 = arith.cmpi ne, %19, %22 : vector<256x1xi32>
    %c0_6 = arith.constant 0 : index
    %c0_7 = arith.constant 0 : index
    %c0_8 = arith.constant 0 : index
    %24 = vector.load %arg1[%c0_6, %c0_7, %c0_8] : memref<1x256x64xf32, #tpu.memory_space<vmem>>, vector<1x256x64xf32>
    %25 = vector.shape_cast %24 : vector<1x256x64xf32> to vector<256x64xf32>
    %c24 = arith.constant 24 : index
    %c0_9 = arith.constant 0 : index
    %26 = vector.load %arg7[%c24, %c0_9] : memref<304x64xf32, #tpu.memory_space<vmem>>, vector<256x64xf32>
    tpu.vector_store %arg7[%c24, %c0_9], %25 {strides = array<i32>} : memref<304x64xf32, #tpu.memory_space<vmem>>, vector<256x64xf32>,
    %cst_10 = arith.constant 0.000000e+00 : f32
    %27 = vector.broadcast %cst_10 : f32 to vector<256x64xf32>
    %c7 = arith.constant 7 : index
    %c0_11 = arith.constant 0 : index
    %28 = vector.load %arg7[%c7, %c0_11] : memref<304x64xf32, #tpu.memory_space<vmem>>, vector<256x64xf32>
    %cst_12 = arith.constant 0.000000e+00 : f32
    %29 = vector.broadcast %cst_12 : f32 to vector<256x64xf32>
    %30 = vector.shape_cast %21 : vector<256x1xi1> to vector<256x1xi1>
    %31 = vector.broadcast %30 : vector<256x1xi1> to vector<256x64xi1>
    %32 = arith.select %31, %28, %29 : vector<256x64xi1>, vector<256x64xf32>
    %c0_13 = arith.constant 0 : index
    %c0_14 = arith.constant 0 : index
    %c0_15 = arith.constant 0 : index
    %c0_16 = arith.constant 0 : index
    %33 = vector.load %arg2[%c0_13, %c0_14, %c0_15, %c0_16] : memref<3x3x64x64xf32, #tpu.memory_space<vmem>>, vector<1x1x64x64xf32>
    %34 = vector.shape_cast %33 : vector<1x1x64x64xf32> to vector<64x64xf32>
    %cst_17 = arith.constant dense<0.000000e+00> : vector<256x64xf32>
    %35 = tpu.matmul %32, %34, %cst_17 {dimension_numbers = #tpu.dot_dimension_numbers<[1], [0], [0], [1], [0, 0, 1, 1], [], []>} : vector<256x64xf32>, vector<64x64xf32>, vector<256x64xf32> -> vector<256x64xf32>
    %36 = arith.addf %27, %35 : vector<256x64xf32>
    %c8 = arith.constant 8 : index
    %c0_18 = arith.constant 0 : index
    %37 = vector.load %arg7[%c8, %c0_18] : memref<304x64xf32, #tpu.memory_space<vmem>>, vector<256x64xf32>
    %c0_19 = arith.constant 0 : index
    %c1 = arith.constant 1 : index
    %c0_20 = arith.constant 0 : index
    %c0_21 = arith.constant 0 : index
    %38 = vector.load %arg2[%c0_19, %c1, %c0_20, %c0_21] : memref<3x3x64x64xf32, #tpu.memory_space<vmem>>, vector<1x1x64x64xf32>
    %39 = vector.shape_cast %38 : vector<1x1x64x64xf32> to vector<64x64xf32>
    %cst_22 = arith.constant dense<0.000000e+00> : vector<256x64xf32>
    %40 = tpu.matmul %37, %39, %cst_22 {dimension_numbers = #tpu.dot_dimension_numbers<[1], [0], [0], [1], [0, 0, 1, 1], [], []>} : vector<256x64xf32>, vector<64x64xf32>, vector<256x64xf32> -> vector<256x64xf32>
    %41 = arith.addf %36, %40 : vector<256x64xf32>
    %c9 = arith.constant 9 : index
    %c0_23 = arith.constant 0 : index
    %42 = vector.load %arg7[%c9, %c0_23] : memref<304x64xf32, #tpu.memory_space<vmem>>, vector<256x64xf32>
    %cst_24 = arith.constant 0.000000e+00 : f32
    %43 = vector.broadcast %cst_24 : f32 to vector<256x64xf32>
    %44 = vector.shape_cast %23 : vector<256x1xi1> to vector<256x1xi1>
    %45 = vector.broadcast %44 : vector<256x1xi1> to vector<256x64xi1>
    %46 = arith.select %45, %42, %43 : vector<256x64xi1>, vector<256x64xf32>
    %c0_25 = arith.constant 0 : index
    %c2 = arith.constant 2 : index
    %c0_26 = arith.constant 0 : index
    %c0_27 = arith.constant 0 : index
    %47 = vector.load %arg2[%c0_25, %c2, %c0_26, %c0_27] : memref<3x3x64x64xf32, #tpu.memory_space<vmem>>, vector<1x1x64x64xf32>
    %48 = vector.shape_cast %47 : vector<1x1x64x64xf32> to vector<64x64xf32>
    %cst_28 = arith.constant dense<0.000000e+00> : vector<256x64xf32>
    %49 = tpu.matmul %46, %48, %cst_28 {dimension_numbers = #tpu.dot_dimension_numbers<[1], [0], [0], [1], [0, 0, 1, 1], [], []>} : vector<256x64xf32>, vector<64x64xf32>, vector<256x64xf32> -> vector<256x64xf32>
    %50 = arith.addf %41, %49 : vector<256x64xf32>
    %c23 = arith.constant 23 : index
    %c0_29 = arith.constant 0 : index
    %51 = vector.load %arg7[%c23, %c0_29] : memref<304x64xf32, #tpu.memory_space<vmem>>, vector<256x64xf32>
    %cst_30 = arith.constant 0.000000e+00 : f32
    %52 = vector.broadcast %cst_30 : f32 to vector<256x64xf32>
    %53 = vector.shape_cast %21 : vector<256x1xi1> to vector<256x1xi1>
    %54 = vector.broadcast %53 : vector<256x1xi1> to vector<256x64xi1>
    %55 = arith.select %54, %51, %52 : vector<256x64xi1>, vector<256x64xf32>
    %c1_31 = arith.constant 1 : index
    %c0_32 = arith.constant 0 : index
    %c0_33 = arith.constant 0 : index
    %c0_34 = arith.constant 0 : index
    %56 = vector.load %arg2[%c1_31, %c0_32, %c0_33, %c0_34] : memref<3x3x64x64xf32, #tpu.memory_space<vmem>>, vector<1x1x64x64xf32>
    %57 = vector.shape_cast %56 : vector<1x1x64x64xf32> to vector<64x64xf32>
    %cst_35 = arith.constant dense<0.000000e+00> : vector<256x64xf32>
    %58 = tpu.matmul %55, %57, %cst_35 {dimension_numbers = #tpu.dot_dimension_numbers<[1], [0], [0], [1], [0, 0, 1, 1], [], []>} : vector<256x64xf32>, vector<64x64xf32>, vector<256x64xf32> -> vector<256x64xf32>
    %59 = arith.addf %50, %58 : vector<256x64xf32>
    %c24_36 = arith.constant 24 : index
    %c0_37 = arith.constant 0 : index
    %60 = vector.load %arg7[%c24_36, %c0_37] : memref<304x64xf32, #tpu.memory_space<vmem>>, vector<256x64xf32>
    %c1_38 = arith.constant 1 : index
    %c1_39 = arith.constant 1 : index
    %c0_40 = arith.constant 0 : index
    %c0_41 = arith.constant 0 : index
    %61 = vector.load %arg2[%c1_38, %c1_39, %c0_40, %c0_41] : memref<3x3x64x64xf32, #tpu.memory_space<vmem>>, vector<1x1x64x64xf32>
    %62 = vector.shape_cast %61 : vector<1x1x64x64xf32> to vector<64x64xf32>
    %cst_42 = arith.constant dense<0.000000e+00> : vector<256x64xf32>
    %63 = tpu.matmul %60, %62, %cst_42 {dimension_numbers = #tpu.dot_dimension_numbers<[1], [0], [0], [1], [0, 0, 1, 1], [], []>} : vector<256x64xf32>, vector<64x64xf32>, vector<256x64xf32> -> vector<256x64xf32>
    %64 = arith.addf %59, %63 : vector<256x64xf32>
    %c25 = arith.constant 25 : index
    %c0_43 = arith.constant 0 : index
    %65 = vector.load %arg7[%c25, %c0_43] : memref<304x64xf32, #tpu.memory_space<vmem>>, vector<256x64xf32>
    %cst_44 = arith.constant 0.000000e+00 : f32
    %66 = vector.broadcast %cst_44 : f32 to vector<256x64xf32>
    %67 = vector.shape_cast %23 : vector<256x1xi1> to vector<256x1xi1>
    %68 = vector.broadcast %67 : vector<256x1xi1> to vector<256x64xi1>
    %69 = arith.select %68, %65, %66 : vector<256x64xi1>, vector<256x64xf32>
    %c1_45 = arith.constant 1 : index
    %c2_46 = arith.constant 2 : index
    %c0_47 = arith.constant 0 : index
    %c0_48 = arith.constant 0 : index
    %70 = vector.load %arg2[%c1_45, %c2_46, %c0_47, %c0_48] : memref<3x3x64x64xf32, #tpu.memory_space<vmem>>, vector<1x1x64x64xf32>
    %71 = vector.shape_cast %70 : vector<1x1x64x64xf32> to vector<64x64xf32>
    %cst_49 = arith.constant dense<0.000000e+00> : vector<256x64xf32>
    %72 = tpu.matmul %69, %71, %cst_49 {dimension_numbers = #tpu.dot_dimension_numbers<[1], [0], [0], [1], [0, 0, 1, 1], [], []>} : vector<256x64xf32>, vector<64x64xf32>, vector<256x64xf32> -> vector<256x64xf32>
    %73 = arith.addf %64, %72 : vector<256x64xf32>
    %c39 = arith.constant 39 : index
    %c0_50 = arith.constant 0 : index
    %74 = vector.load %arg7[%c39, %c0_50] : memref<304x64xf32, #tpu.memory_space<vmem>>, vector<256x64xf32>
    %cst_51 = arith.constant 0.000000e+00 : f32
    %75 = vector.broadcast %cst_51 : f32 to vector<256x64xf32>
    %76 = vector.shape_cast %21 : vector<256x1xi1> to vector<256x1xi1>
    %77 = vector.broadcast %76 : vector<256x1xi1> to vector<256x64xi1>
    %78 = arith.select %77, %74, %75 : vector<256x64xi1>, vector<256x64xf32>
    %c2_52 = arith.constant 2 : index
    %c0_53 = arith.constant 0 : index
    %c0_54 = arith.constant 0 : index
    %c0_55 = arith.constant 0 : index
    %79 = vector.load %arg2[%c2_52, %c0_53, %c0_54, %c0_55] : memref<3x3x64x64xf32, #tpu.memory_space<vmem>>, vector<1x1x64x64xf32>
    %80 = vector.shape_cast %79 : vector<1x1x64x64xf32> to vector<64x64xf32>
    %cst_56 = arith.constant dense<0.000000e+00> : vector<256x64xf32>
    %81 = tpu.matmul %78, %80, %cst_56 {dimension_numbers = #tpu.dot_dimension_numbers<[1], [0], [0], [1], [0, 0, 1, 1], [], []>} : vector<256x64xf32>, vector<64x64xf32>, vector<256x64xf32> -> vector<256x64xf32>
    %82 = arith.addf %73, %81 : vector<256x64xf32>
    %c40 = arith.constant 40 : index
    %c0_57 = arith.constant 0 : index
    %83 = vector.load %arg7[%c40, %c0_57] : memref<304x64xf32, #tpu.memory_space<vmem>>, vector<256x64xf32>
    %c2_58 = arith.constant 2 : index
    %c1_59 = arith.constant 1 : index
    %c0_60 = arith.constant 0 : index
    %c0_61 = arith.constant 0 : index
    %84 = vector.load %arg2[%c2_58, %c1_59, %c0_60, %c0_61] : memref<3x3x64x64xf32, #tpu.memory_space<vmem>>, vector<1x1x64x64xf32>
    %85 = vector.shape_cast %84 : vector<1x1x64x64xf32> to vector<64x64xf32>
    %cst_62 = arith.constant dense<0.000000e+00> : vector<256x64xf32>
    %86 = tpu.matmul %83, %85, %cst_62 {dimension_numbers = #tpu.dot_dimension_numbers<[1], [0], [0], [1], [0, 0, 1, 1], [], []>} : vector<256x64xf32>, vector<64x64xf32>, vector<256x64xf32> -> vector<256x64xf32>
    %87 = arith.addf %82, %86 : vector<256x64xf32>
    %c41 = arith.constant 41 : index
    %c0_63 = arith.constant 0 : index
    %88 = vector.load %arg7[%c41, %c0_63] : memref<304x64xf32, #tpu.memory_space<vmem>>, vector<256x64xf32>
    %cst_64 = arith.constant 0.000000e+00 : f32
    %89 = vector.broadcast %cst_64 : f32 to vector<256x64xf32>
    %90 = vector.shape_cast %23 : vector<256x1xi1> to vector<256x1xi1>
    %91 = vector.broadcast %90 : vector<256x1xi1> to vector<256x64xi1>
    %92 = arith.select %91, %88, %89 : vector<256x64xi1>, vector<256x64xf32>
    %c2_65 = arith.constant 2 : index
    %c2_66 = arith.constant 2 : index
    %c0_67 = arith.constant 0 : index
    %c0_68 = arith.constant 0 : index
    %93 = vector.load %arg2[%c2_65, %c2_66, %c0_67, %c0_68] : memref<3x3x64x64xf32, #tpu.memory_space<vmem>>, vector<1x1x64x64xf32>
    %94 = vector.shape_cast %93 : vector<1x1x64x64xf32> to vector<64x64xf32>
    %cst_69 = arith.constant dense<0.000000e+00> : vector<256x64xf32>
    %95 = tpu.matmul %92, %94, %cst_69 {dimension_numbers = #tpu.dot_dimension_numbers<[1], [0], [0], [1], [0, 0, 1, 1], [], []>} : vector<256x64xf32>, vector<64x64xf32>, vector<256x64xf32> -> vector<256x64xf32>
    %96 = arith.addf %87, %95 : vector<256x64xf32>
    %c0_70 = arith.constant 0 : index
    %c0_71 = arith.constant 0 : index
    %97 = vector.load %arg3[%c0_70, %c0_71] : memref<1x64xf32, #tpu.memory_space<vmem>>, vector<1x64xf32>
    %98 = vector.broadcast %97 : vector<1x64xf32> to vector<256x64xf32>
    %99 = arith.addf %96, %98 : vector<256x64xf32>
    %cst_72 = arith.constant 0.000000e+00 : f32
    %100 = vector.broadcast %cst_72 : f32 to vector<256x64xf32>
    %101 = arith.maximumf %99, %100 : vector<256x64xf32>
    %c24_73 = arith.constant 24 : index
    %c0_74 = arith.constant 0 : index
    %102 = vector.load %arg7[%c24_73, %c0_74] : memref<304x64xf32, #tpu.memory_space<vmem>>, vector<256x64xf32>
    tpu.vector_store %arg7[%c24_73, %c0_74], %101 {strides = array<i32>} : memref<304x64xf32, #tpu.memory_space<vmem>>, vector<256x64xf32>,
    %cst_75 = arith.constant 0.000000e+00 : f32
    %103 = vector.broadcast %cst_75 : f32 to vector<256x64xf32>
    %c7_76 = arith.constant 7 : index
    %c0_77 = arith.constant 0 : index
    %104 = vector.load %arg7[%c7_76, %c0_77] : memref<304x64xf32, #tpu.memory_space<vmem>>, vector<256x64xf32>
    %cst_78 = arith.constant 0.000000e+00 : f32
    %105 = vector.broadcast %cst_78 : f32 to vector<256x64xf32>
    %106 = vector.shape_cast %21 : vector<256x1xi1> to vector<256x1xi1>
    %107 = vector.broadcast %106 : vector<256x1xi1> to vector<256x64xi1>
    %108 = arith.select %107, %104, %105 : vector<256x64xi1>, vector<256x64xf32>
    %c0_79 = arith.constant 0 : index
    %c0_80 = arith.constant 0 : index
    %c0_81 = arith.constant 0 : index
    %c0_82 = arith.constant 0 : index
    %109 = vector.load %arg4[%c0_79, %c0_80, %c0_81, %c0_82] : memref<3x3x64x64xf32, #tpu.memory_space<vmem>>, vector<1x1x64x64xf32>
    %110 = vector.shape_cast %109 : vector<1x1x64x64xf32> to vector<64x64xf32>
    %cst_83 = arith.constant dense<0.000000e+00> : vector<256x64xf32>
    %111 = tpu.matmul %108, %110, %cst_83 {dimension_numbers = #tpu.dot_dimension_numbers<[1], [0], [0], [1], [0, 0, 1, 1], [], []>} : vector<256x64xf32>, vector<64x64xf32>, vector<256x64xf32> -> vector<256x64xf32>
    %112 = arith.addf %103, %111 : vector<256x64xf32>
    %c8_84 = arith.constant 8 : index
    %c0_85 = arith.constant 0 : index
    %113 = vector.load %arg7[%c8_84, %c0_85] : memref<304x64xf32, #tpu.memory_space<vmem>>, vector<256x64xf32>
    %c0_86 = arith.constant 0 : index
    %c1_87 = arith.constant 1 : index
    %c0_88 = arith.constant 0 : index
    %c0_89 = arith.constant 0 : index
    %114 = vector.load %arg4[%c0_86, %c1_87, %c0_88, %c0_89] : memref<3x3x64x64xf32, #tpu.memory_space<vmem>>, vector<1x1x64x64xf32>
    %115 = vector.shape_cast %114 : vector<1x1x64x64xf32> to vector<64x64xf32>
    %cst_90 = arith.constant dense<0.000000e+00> : vector<256x64xf32>
    %116 = tpu.matmul %113, %115, %cst_90 {dimension_numbers = #tpu.dot_dimension_numbers<[1], [0], [0], [1], [0, 0, 1, 1], [], []>} : vector<256x64xf32>, vector<64x64xf32>, vector<256x64xf32> -> vector<256x64xf32>
    %117 = arith.addf %112, %116 : vector<256x64xf32>
    %c9_91 = arith.constant 9 : index
    %c0_92 = arith.constant 0 : index
    %118 = vector.load %arg7[%c9_91, %c0_92] : memref<304x64xf32, #tpu.memory_space<vmem>>, vector<256x64xf32>
    %cst_93 = arith.constant 0.000000e+00 : f32
    %119 = vector.broadcast %cst_93 : f32 to vector<256x64xf32>
    %120 = vector.shape_cast %23 : vector<256x1xi1> to vector<256x1xi1>
    %121 = vector.broadcast %120 : vector<256x1xi1> to vector<256x64xi1>
    %122 = arith.select %121, %118, %119 : vector<256x64xi1>, vector<256x64xf32>
    %c0_94 = arith.constant 0 : index
    %c2_95 = arith.constant 2 : index
    %c0_96 = arith.constant 0 : index
    %c0_97 = arith.constant 0 : index
    %123 = vector.load %arg4[%c0_94, %c2_95, %c0_96, %c0_97] : memref<3x3x64x64xf32, #tpu.memory_space<vmem>>, vector<1x1x64x64xf32>
    %124 = vector.shape_cast %123 : vector<1x1x64x64xf32> to vector<64x64xf32>
    %cst_98 = arith.constant dense<0.000000e+00> : vector<256x64xf32>
    %125 = tpu.matmul %122, %124, %cst_98 {dimension_numbers = #tpu.dot_dimension_numbers<[1], [0], [0], [1], [0, 0, 1, 1], [], []>} : vector<256x64xf32>, vector<64x64xf32>, vector<256x64xf32> -> vector<256x64xf32>
    %126 = arith.addf %117, %125 : vector<256x64xf32>
    %c23_99 = arith.constant 23 : index
    %c0_100 = arith.constant 0 : index
    %127 = vector.load %arg7[%c23_99, %c0_100] : memref<304x64xf32, #tpu.memory_space<vmem>>, vector<256x64xf32>
    %cst_101 = arith.constant 0.000000e+00 : f32
    %128 = vector.broadcast %cst_101 : f32 to vector<256x64xf32>
    %129 = vector.shape_cast %21 : vector<256x1xi1> to vector<256x1xi1>
    %130 = vector.broadcast %129 : vector<256x1xi1> to vector<256x64xi1>
    %131 = arith.select %130, %127, %128 : vector<256x64xi1>, vector<256x64xf32>
    %c1_102 = arith.constant 1 : index
    %c0_103 = arith.constant 0 : index
    %c0_104 = arith.constant 0 : index
    %c0_105 = arith.constant 0 : index
    %132 = vector.load %arg4[%c1_102, %c0_103, %c0_104, %c0_105] : memref<3x3x64x64xf32, #tpu.memory_space<vmem>>, vector<1x1x64x64xf32>
    %133 = vector.shape_cast %132 : vector<1x1x64x64xf32> to vector<64x64xf32>
    %cst_106 = arith.constant dense<0.000000e+00> : vector<256x64xf32>
    %134 = tpu.matmul %131, %133, %cst_106 {dimension_numbers = #tpu.dot_dimension_numbers<[1], [0], [0], [1], [0, 0, 1, 1], [], []>} : vector<256x64xf32>, vector<64x64xf32>, vector<256x64xf32> -> vector<256x64xf32>
    %135 = arith.addf %126, %134 : vector<256x64xf32>
    %c24_107 = arith.constant 24 : index
    %c0_108 = arith.constant 0 : index
    %136 = vector.load %arg7[%c24_107, %c0_108] : memref<304x64xf32, #tpu.memory_space<vmem>>, vector<256x64xf32>
    %c1_109 = arith.constant 1 : index
    %c1_110 = arith.constant 1 : index
    %c0_111 = arith.constant 0 : index
    %c0_112 = arith.constant 0 : index
    %137 = vector.load %arg4[%c1_109, %c1_110, %c0_111, %c0_112] : memref<3x3x64x64xf32, #tpu.memory_space<vmem>>, vector<1x1x64x64xf32>
    %138 = vector.shape_cast %137 : vector<1x1x64x64xf32> to vector<64x64xf32>
    %cst_113 = arith.constant dense<0.000000e+00> : vector<256x64xf32>
    %139 = tpu.matmul %136, %138, %cst_113 {dimension_numbers = #tpu.dot_dimension_numbers<[1], [0], [0], [1], [0, 0, 1, 1], [], []>} : vector<256x64xf32>, vector<64x64xf32>, vector<256x64xf32> -> vector<256x64xf32>
    %140 = arith.addf %135, %139 : vector<256x64xf32>
    %c25_114 = arith.constant 25 : index
    %c0_115 = arith.constant 0 : index
    %141 = vector.load %arg7[%c25_114, %c0_115] : memref<304x64xf32, #tpu.memory_space<vmem>>, vector<256x64xf32>
    %cst_116 = arith.constant 0.000000e+00 : f32
    %142 = vector.broadcast %cst_116 : f32 to vector<256x64xf32>
    %143 = vector.shape_cast %23 : vector<256x1xi1> to vector<256x1xi1>
    %144 = vector.broadcast %143 : vector<256x1xi1> to vector<256x64xi1>
    %145 = arith.select %144, %141, %142 : vector<256x64xi1>, vector<256x64xf32>
    %c1_117 = arith.constant 1 : index
    %c2_118 = arith.constant 2 : index
    %c0_119 = arith.constant 0 : index
    %c0_120 = arith.constant 0 : index
    %146 = vector.load %arg4[%c1_117, %c2_118, %c0_119, %c0_120] : memref<3x3x64x64xf32, #tpu.memory_space<vmem>>, vector<1x1x64x64xf32>
    %147 = vector.shape_cast %146 : vector<1x1x64x64xf32> to vector<64x64xf32>
    %cst_121 = arith.constant dense<0.000000e+00> : vector<256x64xf32>
    %148 = tpu.matmul %145, %147, %cst_121 {dimension_numbers = #tpu.dot_dimension_numbers<[1], [0], [0], [1], [0, 0, 1, 1], [], []>} : vector<256x64xf32>, vector<64x64xf32>, vector<256x64xf32> -> vector<256x64xf32>
    %149 = arith.addf %140, %148 : vector<256x64xf32>
    %c39_122 = arith.constant 39 : index
    %c0_123 = arith.constant 0 : index
    %150 = vector.load %arg7[%c39_122, %c0_123] : memref<304x64xf32, #tpu.memory_space<vmem>>, vector<256x64xf32>
    %cst_124 = arith.constant 0.000000e+00 : f32
    %151 = vector.broadcast %cst_124 : f32 to vector<256x64xf32>
    %152 = vector.shape_cast %21 : vector<256x1xi1> to vector<256x1xi1>
    %153 = vector.broadcast %152 : vector<256x1xi1> to vector<256x64xi1>
    %154 = arith.select %153, %150, %151 : vector<256x64xi1>, vector<256x64xf32>
    %c2_125 = arith.constant 2 : index
    %c0_126 = arith.constant 0 : index
    %c0_127 = arith.constant 0 : index
    %c0_128 = arith.constant 0 : index
    %155 = vector.load %arg4[%c2_125, %c0_126, %c0_127, %c0_128] : memref<3x3x64x64xf32, #tpu.memory_space<vmem>>, vector<1x1x64x64xf32>
    %156 = vector.shape_cast %155 : vector<1x1x64x64xf32> to vector<64x64xf32>
    %cst_129 = arith.constant dense<0.000000e+00> : vector<256x64xf32>
    %157 = tpu.matmul %154, %156, %cst_129 {dimension_numbers = #tpu.dot_dimension_numbers<[1], [0], [0], [1], [0, 0, 1, 1], [], []>} : vector<256x64xf32>, vector<64x64xf32>, vector<256x64xf32> -> vector<256x64xf32>
    %158 = arith.addf %149, %157 : vector<256x64xf32>
    %c40_130 = arith.constant 40 : index
    %c0_131 = arith.constant 0 : index
    %159 = vector.load %arg7[%c40_130, %c0_131] : memref<304x64xf32, #tpu.memory_space<vmem>>, vector<256x64xf32>
    %c2_132 = arith.constant 2 : index
    %c1_133 = arith.constant 1 : index
    %c0_134 = arith.constant 0 : index
    %c0_135 = arith.constant 0 : index
    %160 = vector.load %arg4[%c2_132, %c1_133, %c0_134, %c0_135] : memref<3x3x64x64xf32, #tpu.memory_space<vmem>>, vector<1x1x64x64xf32>
    %161 = vector.shape_cast %160 : vector<1x1x64x64xf32> to vector<64x64xf32>
    %cst_136 = arith.constant dense<0.000000e+00> : vector<256x64xf32>
    %162 = tpu.matmul %159, %161, %cst_136 {dimension_numbers = #tpu.dot_dimension_numbers<[1], [0], [0], [1], [0, 0, 1, 1], [], []>} : vector<256x64xf32>, vector<64x64xf32>, vector<256x64xf32> -> vector<256x64xf32>
    %163 = arith.addf %158, %162 : vector<256x64xf32>
    %c41_137 = arith.constant 41 : index
    %c0_138 = arith.constant 0 : index
    %164 = vector.load %arg7[%c41_137, %c0_138] : memref<304x64xf32, #tpu.memory_space<vmem>>, vector<256x64xf32>
    %cst_139 = arith.constant 0.000000e+00 : f32
    %165 = vector.broadcast %cst_139 : f32 to vector<256x64xf32>
    %166 = vector.shape_cast %23 : vector<256x1xi1> to vector<256x1xi1>
    %167 = vector.broadcast %166 : vector<256x1xi1> to vector<256x64xi1>
    %168 = arith.select %167, %164, %165 : vector<256x64xi1>, vector<256x64xf32>
    %c2_140 = arith.constant 2 : index
    %c2_141 = arith.constant 2 : index
    %c0_142 = arith.constant 0 : index
    %c0_143 = arith.constant 0 : index
    %169 = vector.load %arg4[%c2_140, %c2_141, %c0_142, %c0_143] : memref<3x3x64x64xf32, #tpu.memory_space<vmem>>, vector<1x1x64x64xf32>
    %170 = vector.shape_cast %169 : vector<1x1x64x64xf32> to vector<64x64xf32>
    %cst_144 = arith.constant dense<0.000000e+00> : vector<256x64xf32>
    %171 = tpu.matmul %168, %170, %cst_144 {dimension_numbers = #tpu.dot_dimension_numbers<[1], [0], [0], [1], [0, 0, 1, 1], [], []>} : vector<256x64xf32>, vector<64x64xf32>, vector<256x64xf32> -> vector<256x64xf32>
    %172 = arith.addf %163, %171 : vector<256x64xf32>
    %c0_145 = arith.constant 0 : index
    %c0_146 = arith.constant 0 : index
    %173 = vector.load %arg5[%c0_145, %c0_146] : memref<1x64xf32, #tpu.memory_space<vmem>>, vector<1x64xf32>
    %174 = vector.broadcast %173 : vector<1x64xf32> to vector<256x64xf32>
    %175 = arith.addf %172, %174 : vector<256x64xf32>
    %c0_147 = arith.constant 0 : index
    %c0_148 = arith.constant 0 : index
    %c0_149 = arith.constant 0 : index
    %176 = vector.load %arg1[%c0_147, %c0_148, %c0_149] : memref<1x256x64xf32, #tpu.memory_space<vmem>>, vector<1x256x64xf32>
    %177 = vector.shape_cast %176 : vector<1x256x64xf32> to vector<256x64xf32>
    %cst_150 = arith.constant 5.000000e-01 : f32
    %178 = vector.broadcast %cst_150 : f32 to vector<256x64xf32>
    %179 = arith.mulf %175, %178 : vector<256x64xf32>
    %180 = arith.addf %179, %177 : vector<256x64xf32>
    %cst_151 = arith.constant 5.000000e-01 : f32
    %181 = vector.broadcast %cst_151 : f32 to vector<256x64xf32>
    %182 = arith.mulf %180, %181 : vector<256x64xf32>
    %c0_152 = arith.constant 0 : index
    %c0_153 = arith.constant 0 : index
    %c0_154 = arith.constant 0 : index
    %183 = vector.load %arg6[%c0_152, %c0_153, %c0_154] : memref<1x256x64xf32, #tpu.memory_space<vmem>>, vector<1x256x64xf32>
    %184 = vector.shape_cast %183 : vector<1x256x64xf32> to vector<256x64xf32>
    %185 = vector.shape_cast %182 : vector<256x64xf32> to vector<1x256x64xf32>
    tpu.vector_store %arg6[%c0_152, %c0_153, %c0_154], %185 {strides = array<i32>} : memref<1x256x64xf32, #tpu.memory_space<vmem>>, vector<1x256x64xf32>,
    return
  }
  func.func @transform_0(%arg0: i32) -> (i32, i32, i32) {
    %c0_i32 = arith.constant 0 : i32
    %c0_i32_0 = arith.constant 0 : i32
    %c0_i32_1 = arith.constant 0 : i32
    return %arg0, %c0_i32, %c0_i32_0 : i32, i32, i32
  }
  func.func @transform_1(%arg0: i32) -> (i32, i32, i32, i32) {
    %c0_i32 = arith.constant 0 : i32
    %c0_i32_0 = arith.constant 0 : i32
    %c0_i32_1 = arith.constant 0 : i32
    %c0_i32_2 = arith.constant 0 : i32
    %c0_i32_3 = arith.constant 0 : i32
    return %c0_i32, %c0_i32_0, %c0_i32_1, %c0_i32_2 : i32, i32, i32, i32
  }
  func.func @transform_2(%arg0: i32) -> (i32, i32) {
    %c0_i32 = arith.constant 0 : i32
    %c0_i32_0 = arith.constant 0 : i32
    %c0_i32_1 = arith.constant 0 : i32
    return %c0_i32, %c0_i32_0 : i32, i32
  }
  func.func @transform_3(%arg0: i32) -> (i32, i32, i32, i32) {
    %c0_i32 = arith.constant 0 : i32
    %c0_i32_0 = arith.constant 0 : i32
    %c0_i32_1 = arith.constant 0 : i32
    %c0_i32_2 = arith.constant 0 : i32
    %c0_i32_3 = arith.constant 0 : i32
    return %c0_i32, %c0_i32_0, %c0_i32_1, %c0_i32_2 : i32, i32, i32, i32
  }
  func.func @transform_4(%arg0: i32) -> (i32, i32) {
    %c0_i32 = arith.constant 0 : i32
    %c0_i32_0 = arith.constant 0 : i32
    %c0_i32_1 = arith.constant 0 : i32
    return %c0_i32, %c0_i32_0 : i32, i32
  }
  func.func @transform_5(%arg0: i32) -> (i32, i32, i32) {
    %c0_i32 = arith.constant 0 : i32
    %c0_i32_0 = arith.constant 0 : i32
    %c0_i32_1 = arith.constant 0 : i32
    return %arg0, %c0_i32, %c0_i32_0 : i32, i32, i32
  }
}

</mosaic_0001>

<llo_original>
// kernel: tpu_custom_call.1
$region0: #{tpu_custom_call.1}
  #allocation0 [shape = 'u32[]', space=smem, size = 0x4, offset = 0x4, fixed_abs, tag = 'smem constant byte address 0x4 - core index']
  #allocation1 [shape = 'u32[144,128]{1,0:T(1,128)}', space=vmem, size = 0x12000, scoped, tag = 'internal scratch']
  #allocation2 [shape = 'f32[304,64]{1,0:T(8,128)}', space=vmem, size = 0x26000, scoped, tag = 'scratch operand']
  %s0 = inlined_call_operand.vmem [shape: f32[2,256,64], index: 0, kind: input, shape index: {}]
  %s1 = inlined_call_operand.vmem [shape: f32[3,3,64,64], index: 1, kind: input, shape index: {}]
  %s2 = inlined_call_operand.vmem [shape: f32[1,64], index: 2, kind: input, shape index: {}]
  %s3 = inlined_call_operand.hbm [shape: f32[3,3,64,64], index: 3, kind: input, shape index: {}]
  %s4 = inlined_call_operand.vmem [shape: f32[1,64], index: 4, kind: input, shape index: {}]
  %s5 = inlined_call_operand.vmem [shape: f32[2,256,64], index: 5, kind: output, shape index: {}]
  %s6 = sld [smem:[#allocation0]]
  $region57: #{tpu_custom_call.1} parent=0
    _
  %s8 = ssub.s32 1, %s6
  %s9 = scalar_select 0, %s8, %s6
  $region1: #{tpu_custom_call.1} parent=0
    #allocation3 [shape = 'u8[294912]{0}', space=vmem, size = 0x48000, scoped, tag = 'input window, operand 3, single buffered']
    #allocation4 [shape = 's32[2]{0}', space=sflag, size = 0x8, scoped, tag = 'scoped memory for tpu_custom_call.1']
    %10 = vsyncpa [#allocation4], 0
    loop: start=0, step=1, limit=4
    $region2: #{tpu_custom_call.1} parent=1 // loop_pre_header
      _
    $region3: #{tpu_custom_call.1} parent=1 // loop_header
      %s12 = sphi 0, %s16
      %p13 = scmp.ge.s32.totalorder %s12, 4
      %s22 = sphi 0, %s24
      %s25 = sphi 0, %s22
      %s26 = sphi 0, %s25
      %s42 = sphi 0, %s26
      %s46 = sphi 0, %s46
      %s48 = sphi 0, %s46
      %s49 = sphi 0, %s48
      %s63 = sphi 0, %s49
      %s67 = sphi 0, %s67
      %s69 = sphi 0, %s67
      %s70 = sphi 0, %s69
      %s84 = sphi 0, %s70
      %s88 = sphi 0, %s88
      %s90 = sphi 0, %s88
      %s91 = sphi 0, %s90
      %s105 = sphi 0, %s91
      %s109 = sphi 0, %s109
      %s111 = sphi 0, %s109
      %s112 = sphi 0, %s111
      %s126 = sphi 0, %s112
      %s132 = sphi 0, %s134
      %s135 = sphi 0, %s132
      %s136 = sphi 0, %s135
      %s152 = sphi 0, %s136
    $region4: #{tpu_custom_call.1} parent=1 // loop_header_branch
      %15 = sbr.rel (%p13) target = $region8
    $region5: #{tpu_custom_call.1} parent=1 // loop_body
      %s17 = ssub.s32 %s12, 1
      %s18 = ssub.s32 %s12, 2
      %s19 = sadd.s32 %s12, 1
      %s20 = ssub.s32 %s12, %s19
      %p21 = scmp.eq.s32.totalorder %s20, 0
      %s23 = sadd.s32 %s22, 1
      %s24 = scalar_select %p21, %s22, %s23
      %p27 = pneg %p21
      %p28 = scmp.eq.s32.totalorder %s12, 1
      %p29 = por %p27, %p28
      %p30 = scmp.ne.s32.totalorder %s22, %s25
      %p31 = scmp.eq.s32.totalorder %s12, 0
      %p32 = por %p30, %p31
      %p33 = scmp.ne.s32.totalorder %s22, %s25
      %p34 = scmp.eq.s32.totalorder %s17, 1
      %p35 = por %p33, %p34
      %p36 = scmp.ne.s32.totalorder %s25, %s26
      %p37 = scmp.eq.s32.totalorder %s17, 0
      %p38 = por %p36, %p37
      %p39 = scmp.ne.s32.totalorder %s25, %s26
      %p40 = scmp.eq.s32.totalorder %s18, 1
      %p41 = por %p39, %p40
      %p43 = scmp.ne.s32.totalorder %s26, %s42
      %p44 = scmp.eq.s32.totalorder %s18, 0
      %p45 = por %p43, %p44
      %s47 = sadd.s32 %s46, 1
      %p50 = scmp.eq.s32.totalorder %s12, 1
      %p51 = scmp.ne.s32.totalorder %s46, %s48
      %p52 = scmp.eq.s32.totalorder %s12, 0
      %p53 = por %p51, %p52
      %p54 = scmp.ne.s32.totalorder %s46, %s48
      %p55 = scmp.eq.s32.totalorder %s17, 1
      %p56 = por %p54, %p55
      %p57 = scmp.ne.s32.totalorder %s48, %s49
      %p58 = scmp.eq.s32.totalorder %s17, 0
      %p59 = por %p57, %p58
      %p60 = scmp.ne.s32.totalorder %s48, %s49
      %p61 = scmp.eq.s32.totalorder %s18, 1
      %p62 = por %p60, %p61
      %p64 = scmp.ne.s32.totalorder %s49, %s63
      %p65 = scmp.eq.s32.totalorder %s18, 0
      %p66 = por %p64, %p65
      %s68 = sadd.s32 %s67, 1
      %p71 = scmp.eq.s32.totalorder %s12, 1
      %p72 = scmp.ne.s32.totalorder %s67, %s69
      %p73 = scmp.eq.s32.totalorder %s12, 0
      %p74 = por %p72, %p73
      %p75 = scmp.ne.s32.totalorder %s67, %s69
      %p76 = scmp.eq.s32.totalorder %s17, 1
      %p77 = por %p75, %p76
      %p78 = scmp.ne.s32.totalorder %s69, %s70
      %p79 = scmp.eq.s32.totalorder %s17, 0
      %p80 = por %p78, %p79
      %p81 = scmp.ne.s32.totalorder %s69, %s70
      %p82 = scmp.eq.s32.totalorder %s18, 1
      %p83 = por %p81, %p82
      %p85 = scmp.ne.s32.totalorder %s70, %s84
      %p86 = scmp.eq.s32.totalorder %s18, 0
      %p87 = por %p85, %p86
      %s89 = sadd.s32 %s88, 1
      %p92 = scmp.eq.s32.totalorder %s12, 1
      %p93 = scmp.ne.s32.totalorder %s88, %s90
      %p94 = scmp.eq.s32.totalorder %s12, 0
      %p95 = por %p93, %p94
      %p96 = scmp.ne.s32.totalorder %s88, %s90
      %p97 = scmp.eq.s32.totalorder %s17, 1
      %p98 = por %p96, %p97
      %p99 = scmp.ne.s32.totalorder %s90, %s91
      %p100 = scmp.eq.s32.totalorder %s17, 0
      %p101 = por %p99, %p100
      %p102 = scmp.ne.s32.totalorder %s90, %s91
      %p103 = scmp.eq.s32.totalorder %s18, 1
      %p104 = por %p102, %p103
      %p106 = scmp.ne.s32.totalorder %s91, %s105
      %p107 = scmp.eq.s32.totalorder %s18, 0
      %p108 = por %p106, %p107
      %s110 = sadd.s32 %s109, 1
      %p113 = scmp.eq.s32.totalorder %s12, 1
      %p114 = scmp.ne.s32.totalorder %s109, %s111
      %p115 = scmp.eq.s32.totalorder %s12, 0
      %p116 = por %p114, %p115
      %p117 = scmp.ne.s32.totalorder %s109, %s111
      %p118 = scmp.eq.s32.totalorder %s17, 1
      %p119 = por %p117, %p118
      %p120 = scmp.ne.s32.totalorder %s111, %s112
      %p121 = scmp.eq.s32.totalorder %s17, 0
      %p122 = por %p120, %p121
      %p123 = scmp.ne.s32.totalorder %s111, %s112
      %p124 = scmp.eq.s32.totalorder %s18, 1
      %p125 = por %p123, %p124
      %p127 = scmp.ne.s32.totalorder %s112, %s126
      %p128 = scmp.eq.s32.totalorder %s18, 0
      %p129 = por %p127, %p128
      %s130 = ssub.s32 %s12, %s19
      %p131 = scmp.eq.s32.totalorder %s130, 0
      %s133 = sadd.s32 %s132, 1
      %s134 = scalar_select %p131, %s132, %s133
      %p137 = pneg %p131
      %p138 = scmp.eq.s32.totalorder %s12, 1
      %p139 = por %p137, %p138
      %p140 = scmp.ne.s32.totalorder %s132, %s135
      %p141 = scmp.eq.s32.totalorder %s12, 0
      %p142 = por %p140, %p141
      %p143 = scmp.ne.s32.totalorder %s132, %s135
      %p144 = scmp.eq.s32.totalorder %s17, 1
      %p145 = por %p143, %p144
      %p146 = scmp.ne.s32.totalorder %s135, %s136
      %p147 = scmp.eq.s32.totalorder %s17, 0
      %p148 = por %p146, %p147
      %p149 = scmp.ne.s32.totalorder %s135, %s136
      %p150 = scmp.eq.s32.totalorder %s18, 1
      %p151 = por %p149, %p150
      %p153 = scmp.ne.s32.totalorder %s136, %s152
      %p154 = scmp.eq.s32.totalorder %s18, 0
      %p155 = por %p153, %p154
      %p156 = scmp.le.s32.totalorder 1, %s12
      %p157 = scmp.lt.s32.totalorder %s12, 3
      %p158 = pnand %p156, %p157
      %p159 = pneg %p158
      // Predicated region
      $region9: #{tpu_custom_call.1} parent=5 // pred_check
        _
      $region10: #{tpu_custom_call.1} parent=5 // pred_check_branch
        %161 = sbr.rel (%p158) target = $region12
      $region11: #{tpu_custom_call.1} parent=5 // pred_region
        %s162 = ssub.s32 %s12, 1
        // Predicated region
        $region13: #{tpu_custom_call.1} parent=11 // pred_check
          %p163 = pneg %p59
        $region14: #{tpu_custom_call.1} parent=11 // pred_check_branch
          %165 = sbr.rel (%p163) target = $region16
        $region15: #{tpu_custom_call.1} parent=11 // pred_region
          _
        $region16: #{tpu_custom_call.1} parent=11 // pred_fallthru
          _
        // Predicated region
        $region17: #{tpu_custom_call.1} parent=11 // pred_check
          %p166 = pneg %p80
        $region18: #{tpu_custom_call.1} parent=11 // pred_check_branch
          %168 = sbr.rel (%p166) target = $region20
        $region19: #{tpu_custom_call.1} parent=11 // pred_region
          _
        $region20: #{tpu_custom_call.1} parent=11 // pred_fallthru
          _
        // Predicated region
        $region21: #{tpu_custom_call.1} parent=11 // pred_check
          %p169 = pneg %p101
        $region22: #{tpu_custom_call.1} parent=11 // pred_check_branch
          %171 = sbr.rel (%p169) target = $region24
        $region23: #{tpu_custom_call.1} parent=11 // pred_region
          %s173 = ssub.s32 9216, 9216
          %174 = vsyncadd [#allocation4], %s173
          %s175 = sshll.u32 [#allocation3], 4
          %s176 = int_to_ptr.vmem [resolvable:$true] %s175
          %181 = dma.hbm_to_vmem [thread:$0]  %s3, 9216, %s176, [#allocation4], 128, 128, 8
        $region24: #{tpu_custom_call.1} parent=11 // pred_fallthru
          _
        // Predicated region
        $region25: #{tpu_custom_call.1} parent=11 // pred_check
          %p182 = pneg %p122
        $region26: #{tpu_custom_call.1} parent=11 // pred_check_branch
          %184 = sbr.rel (%p182) target = $region28
        $region27: #{tpu_custom_call.1} parent=11 // pred_region
          _
        $region28: #{tpu_custom_call.1} parent=11 // pred_fallthru
          _
      $region12: #{tpu_custom_call.1} parent=5 // pred_fallthru
        _
      %p185 = scmp.lt.s32.totalorder %s12, 2
      // Predicated region
      $region29: #{tpu_custom_call.1} parent=5 // pred_check
        %p186 = pneg %p185
      $region30: #{tpu_custom_call.1} parent=5 // pred_check_branch
        %188 = sbr.rel (%p186) target = $region32
      $region31: #{tpu_custom_call.1} parent=5 // pred_region
        // Predicated region
        $region33: #{tpu_custom_call.1} parent=31 // pred_check
          %p189 = pneg %p32
        $region34: #{tpu_custom_call.1} parent=31 // pred_check_branch
          %191 = sbr.rel (%p189) target = $region36
        $region35: #{tpu_custom_call.1} parent=31 // pred_region
          %p192 = scmp.lt.s32.totalorder %s12, 1
          %s193 = scalar_select %p192, %s12, 1
          %s194 = smul.addr %s193, 32
          %s195 = smul.addr %s194, 8
          %s196 = scalar_lea.vmem %s0, %s195
        $region36: #{tpu_custom_call.1} parent=31 // pred_fallthru
          _
      $region32: #{tpu_custom_call.1} parent=5 // pred_fallthru
        _
      %p197 = scmp.le.s32.totalorder 1, %s12
      %p198 = scmp.lt.s32.totalorder %s12, 3
      %p199 = pnand %p197, %p198
      %p200 = pneg %p199
      // Predicated region
      $region37: #{tpu_custom_call.1} parent=5 // pred_check
        _
      $region38: #{tpu_custom_call.1} parent=5 // pred_check_branch
        %202 = sbr.rel (%p199) target = $region40
      $region39: #{tpu_custom_call.1} parent=5 // pred_region
        %s203 = ssub.s32 %s12, 1
        // Predicated region
        $region41: #{tpu_custom_call.1} parent=39 // pred_check
          %p204 = pneg %p101
        $region42: #{tpu_custom_call.1} parent=39 // pred_check_branch
          %206 = sbr.rel (%p204) target = $region44
        $region43: #{tpu_custom_call.1} parent=39 // pred_region
          %207 = dma.done [#allocation4], 9216
        $region44: #{tpu_custom_call.1} parent=39 // pred_fallthru
          _
        %p208 = scmp.lt.s32.totalorder %s17, 1
        %s209 = scalar_select %p208, %s17, 1
        %s210 = smul.addr %s209, 32
        %s211 = smul.addr %s210, 8
        %s212 = scalar_lea.vmem %s0, %s211
        %p213 = pneg %p38
        %p214 = pneg %p35
        %p215 = pneg %p59
        %p216 = pneg %p56
        %p217 = pneg %p80
        %p218 = pneg %p77
        %p219 = pneg %p101
        %p220 = pneg %p98
        %p221 = pneg %p122
        %p222 = pneg %p119
        %p223 = pneg %p148
        %p224 = pneg %p145
        %p225 = scmp.lt.s32.totalorder %s17, 1
        %s226 = scalar_select %p225, %s17, 1
        %s227 = smul.addr %s226, 32
        %s228 = smul.addr %s227, 8
        %s229 = scalar_lea.vmem %s5, %s228
        %p230 = scmp.lt.s32.totalorder %s17, 1
        %s231 = scalar_select %p230, %s17, 1
        %s232 = smul.addr %s231, 32
        %s233 = smul.addr %s232, 8
        %s234 = scalar_lea.vmem %s0, %s233
        %p235 = scmp.lt.s32.totalorder %s17, 1
        %s236 = scalar_select %p235, %s17, 1
        %s237 = smul.addr %s236, 32
        %s238 = smul.addr %s237, 8
        %s239 = scalar_lea.vmem %s5, %s238
        %vm240 = vcmask 523264
        %241 = vst.msk [vmem:[#allocation2] sm:$0xff] %vm240, 0.0
        %242 = vst.msk [vmem:[#allocation2 + $0x8] sm:$0xff] %vm240, 0.0
        %243 = vst.msk [vmem:[#allocation2 + $0x10] sm:$0xff] %vm240, 0.0
        %244 = vst.msk [vmem:[#allocation2 + $0x118] sm:$0xff] %vm240, 0.0
        %245 = vst.msk [vmem:[#allocation2 + $0x120] sm:$0xff] %vm240, 0.0
        %246 = vst.msk [vmem:[#allocation2 + $0x128] sm:$0xff] %vm240, 0.0
        %v247 = vlaneseq
        %v248 = vshrl.u32 %v247, 7
        %v249 = vadd.s32 %v248, 8
        %v250 = vadd.s32 %v248, 16
        %v251 = vadd.s32 %v248, 24
        %v252 = vadd.s32 %v248, 32
        %v253 = vadd.s32 %v248, 40
        %v254 = vadd.s32 %v248, 48
        %v255 = vadd.s32 %v248, 56
        %v256 = vadd.s32 %v248, 64
        %v257 = vadd.s32 %v248, 72
        %v258 = vadd.s32 %v248, 80
        %v259 = vadd.s32 %v248, 88
        %v260 = vadd.s32 %v248, 96
        %v261 = vadd.s32 %v248, 104
        %v262 = vadd.s32 %v248, 112
        %v263 = vadd.s32 %v248, 120
        %v264 = vadd.s32 %v248, 128
        %v265 = vadd.s32 %v248, 136
        %v266 = vadd.s32 %v248, 144
        %v267 = vadd.s32 %v248, 152
        %v268 = vadd.s32 %v248, 160
        %v269 = vadd.s32 %v248, 168
        %v270 = vadd.s32 %v248, 176
        %v271 = vadd.s32 %v248, 184
        %v272 = vadd.s32 %v248, 192
        %v273 = vadd.s32 %v248, 200
        %v274 = vadd.s32 %v248, 208
        %v275 = vadd.s32 %v248, 216
        %v276 = vadd.s32 %v248, 224
        %v277 = vadd.s32 %v248, 232
        %v278 = vadd.s32 %v248, 240
        %v279 = vadd.s32 %v248, 248
        %vm280 = vcmp.lt.s32.totalorder %v248, 0
        %v281 = vsub.s32 0, %v248
        %v282 = vsel %vm280, %v281, %v248
        %v283 = vshrl.u32 %v282, 4
        %v284 = vand.u32 %v282, 15
        %v285 = vsub.s32 0, %v284
        %v286 = vsel %vm280, %v285, %v284
        %vm287 = vcmp.lt.s32.totalorder %v249, 0
        %v288 = vsub.s32 0, %v249
        %v289 = vsel %vm287, %v288, %v249
        %v290 = vshrl.u32 %v289, 4
        %v291 = vand.u32 %v289, 15
        %v292 = vsub.s32 0, %v291
        %v293 = vsel %vm287, %v292, %v291
        %vm294 = vcmp.lt.s32.totalorder %v250, 0
        %v295 = vsub.s32 0, %v250
        %v296 = vsel %vm294, %v295, %v250
        %v297 = vshrl.u32 %v296, 4
        %v298 = vand.u32 %v296, 15
        %v299 = vsub.s32 0, %v298
        %v300 = vsel %vm294, %v299, %v298
        %vm301 = vcmp.lt.s32.totalorder %v251, 0
        %v302 = vsub.s32 0, %v251
        %v303 = vsel %vm301, %v302, %v251
        %v304 = vshrl.u32 %v303, 4
        %v305 = vand.u32 %v303, 15
        %v306 = vsub.s32 0, %v305
        %v307 = vsel %vm301, %v306, %v305
        %vm308 = vcmp.lt.s32.totalorder %v252, 0
        %v309 = vsub.s32 0, %v252
        %v310 = vsel %vm308, %v309, %v252
        %v311 = vshrl.u32 %v310, 4
        %v312 = vand.u32 %v310, 15
        %v313 = vsub.s32 0, %v312
        %v314 = vsel %vm308, %v313, %v312
        %vm315 = vcmp.lt.s32.totalorder %v253, 0
        %v316 = vsub.s32 0, %v253
        %v317 = vsel %vm315, %v316, %v253
        %v318 = vshrl.u32 %v317, 4
        %v319 = vand.u32 %v317, 15
        %v320 = vsub.s32 0, %v319
        %v321 = vsel %vm315, %v320, %v319
        %vm322 = vcmp.lt.s32.totalorder %v254, 0
        %v323 = vsub.s32 0, %v254
        %v324 = vsel %vm322, %v323, %v254
        %v325 = vshrl.u32 %v324, 4
        %v326 = vand.u32 %v324, 15
        %v327 = vsub.s32 0, %v326
        %v328 = vsel %vm322, %v327, %v326
        %vm329 = vcmp.lt.s32.totalorder %v255, 0
        %v330 = vsub.s32 0, %v255
        %v331 = vsel %vm329, %v330, %v255
        %v332 = vshrl.u32 %v331, 4
        %v333 = vand.u32 %v331, 15
        %v334 = vsub.s32 0, %v333
        %v335 = vsel %vm329, %v334, %v333
        %vm336 = vcmp.lt.s32.totalorder %v256, 0
        %v337 = vsub.s32 0, %v256
        %v338 = vsel %vm336, %v337, %v256
        %v339 = vshrl.u32 %v338, 4
        %v340 = vand.u32 %v338, 15
        %v341 = vsub.s32 0, %v340
        %v342 = vsel %vm336, %v341, %v340
        %vm343 = vcmp.lt.s32.totalorder %v257, 0
        %v344 = vsub.s32 0, %v257
        %v345 = vsel %vm343, %v344, %v257
        %v346 = vshrl.u32 %v345, 4
        %v347 = vand.u32 %v345, 15
        %v348 = vsub.s32 0, %v347
        %v349 = vsel %vm343, %v348, %v347
        %vm350 = vcmp.lt.s32.totalorder %v258, 0
        %v351 = vsub.s32 0, %v258
        %v352 = vsel %vm350, %v351, %v258
        %v353 = vshrl.u32 %v352, 4
        %v354 = vand.u32 %v352, 15
        %v355 = vsub.s32 0, %v354
        %v356 = vsel %vm350, %v355, %v354
        %vm357 = vcmp.lt.s32.totalorder %v259, 0
        %v358 = vsub.s32 0, %v259
        %v359 = vsel %vm357, %v358, %v259
        %v360 = vshrl.u32 %v359, 4
        %v361 = vand.u32 %v359, 15
        %v362 = vsub.s32 0, %v361
        %v363 = vsel %vm357, %v362, %v361
        %vm364 = vcmp.lt.s32.totalorder %v260, 0
        %v365 = vsub.s32 0, %v260
        %v366 = vsel %vm364, %v365, %v260
        %v367 = vshrl.u32 %v366, 4
        %v368 = vand.u32 %v366, 15
        %v369 = vsub.s32 0, %v368
        %v370 = vsel %vm364, %v369, %v368
        %vm371 = vcmp.lt.s32.totalorder %v261, 0
        %v372 = vsub.s32 0, %v261
        %v373 = vsel %vm371, %v372, %v261
        %v374 = vshrl.u32 %v373, 4
        %v375 = vand.u32 %v373, 15
        %v376 = vsub.s32 0, %v375
        %v377 = vsel %vm371, %v376, %v375
        %vm378 = vcmp.lt.s32.totalorder %v262, 0
        %v379 = vsub.s32 0, %v262
        %v380 = vsel %vm378, %v379, %v262
        %v381 = vshrl.u32 %v380, 4
        %v382 = vand.u32 %v380, 15
        %v383 = vsub.s32 0, %v382
        %v384 = vsel %vm378, %v383, %v382
        %vm385 = vcmp.lt.s32.totalorder %v263, 0
        %v386 = vsub.s32 0, %v263
        %v387 = vsel %vm385, %v386, %v263
        %v388 = vshrl.u32 %v387, 4
        %v389 = vand.u32 %v387, 15
        %v390 = vsub.s32 0, %v389
        %v391 = vsel %vm385, %v390, %v389
        %vm392 = vcmp.lt.s32.totalorder %v264, 0
        %v393 = vsub.s32 0, %v264
        %v394 = vsel %vm392, %v393, %v264
        %v395 = vshrl.u32 %v394, 4
        %v396 = vand.u32 %v394, 15
        %v397 = vsub.s32 0, %v396
        %v398 = vsel %vm392, %v397, %v396
        %vm399 = vcmp.lt.s32.totalorder %v265, 0
        %v400 = vsub.s32 0, %v265
        %v401 = vsel %vm399, %v400, %v265
        %v402 = vshrl.u32 %v401, 4
        %v403 = vand.u32 %v401, 15
        %v404 = vsub.s32 0, %v403
        %v405 = vsel %vm399, %v404, %v403
        %vm406 = vcmp.lt.s32.totalorder %v266, 0
        %v407 = vsub.s32 0, %v266
        %v408 = vsel %vm406, %v407, %v266
        %v409 = vshrl.u32 %v408, 4
        %v410 = vand.u32 %v408, 15
        %v411 = vsub.s32 0, %v410
        %v412 = vsel %vm406, %v411, %v410
        %vm413 = vcmp.lt.s32.totalorder %v267, 0
        %v414 = vsub.s32 0, %v267
        %v415 = vsel %vm413, %v414, %v267
        %v416 = vshrl.u32 %v415, 4
        %v417 = vand.u32 %v415, 15
        %v418 = vsub.s32 0, %v417
        %v419 = vsel %vm413, %v418, %v417
        %vm420 = vcmp.lt.s32.totalorder %v268, 0
        %v421 = vsub.s32 0, %v268
        %v422 = vsel %vm420, %v421, %v268
        %v423 = vshrl.u32 %v422, 4
        %v424 = vand.u32 %v422, 15
        %v425 = vsub.s32 0, %v424
        %v426 = vsel %vm420, %v425, %v424
        %vm427 = vcmp.lt.s32.totalorder %v269, 0
        %v428 = vsub.s32 0, %v269
        %v429 = vsel %vm427, %v428, %v269
        %v430 = vshrl.u32 %v429, 4
        %v431 = vand.u32 %v429, 15
        %v432 = vsub.s32 0, %v431
        %v433 = vsel %vm427, %v432, %v431
        %vm434 = vcmp.lt.s32.totalorder %v270, 0
        %v435 = vsub.s32 0, %v270
        %v436 = vsel %vm434, %v435, %v270
        %v437 = vshrl.u32 %v436, 4
        %v438 = vand.u32 %v436, 15
        %v439 = vsub.s32 0, %v438
        %v440 = vsel %vm434, %v439, %v438
        %vm441 = vcmp.lt.s32.totalorder %v271, 0
        %v442 = vsub.s32 0, %v271
        %v443 = vsel %vm441, %v442, %v271
        %v444 = vshrl.u32 %v443, 4
        %v445 = vand.u32 %v443, 15
        %v446 = vsub.s32 0, %v445
        %v447 = vsel %vm441, %v446, %v445
        %vm448 = vcmp.lt.s32.totalorder %v272, 0
        %v449 = vsub.s32 0, %v272
        %v450 = vsel %vm448, %v449, %v272
        %v451 = vshrl.u32 %v450, 4
        %v452 = vand.u32 %v450, 15
        %v453 = vsub.s32 0, %v452
        %v454 = vsel %vm448, %v453, %v452
        %vm455 = vcmp.lt.s32.totalorder %v273, 0
        %v456 = vsub.s32 0, %v273
        %v457 = vsel %vm455, %v456, %v273
        %v458 = vshrl.u32 %v457, 4
        %v459 = vand.u32 %v457, 15
        %v460 = vsub.s32 0, %v459
        %v461 = vsel %vm455, %v460, %v459
        %vm462 = vcmp.lt.s32.totalorder %v274, 0
        %v463 = vsub.s32 0, %v274
        %v464 = vsel %vm462, %v463, %v274
        %v465 = vshrl.u32 %v464, 4
        %v466 = vand.u32 %v464, 15
        %v467 = vsub.s32 0, %v466
        %v468 = vsel %vm462, %v467, %v466
        %vm469 = vcmp.lt.s32.totalorder %v275, 0
        %v470 = vsub.s32 0, %v275
        %v471 = vsel %vm469, %v470, %v275
        %v472 = vshrl.u32 %v471, 4
        %v473 = vand.u32 %v471, 15
        %v474 = vsub.s32 0, %v473
        %v475 = vsel %vm469, %v474, %v473
        %vm476 = vcmp.lt.s32.totalorder %v276, 0
        %v477 = vsub.s32 0, %v276
        %v478 = vsel %vm476, %v477, %v276
        %v479 = vshrl.u32 %v478, 4
        %v480 = vand.u32 %v478, 15
        %v481 = vsub.s32 0, %v480
        %v482 = vsel %vm476, %v481, %v480
        %vm483 = vcmp.lt.s32.totalorder %v277, 0
        %v484 = vsub.s32 0, %v277
        %v485 = vsel %vm483, %v484, %v277
        %v486 = vshrl.u32 %v485, 4
        %v487 = vand.u32 %v485, 15
        %v488 = vsub.s32 0, %v487
        %v489 = vsel %vm483, %v488, %v487
        %vm490 = vcmp.lt.s32.totalorder %v278, 0
        %v491 = vsub.s32 0, %v278
        %v492 = vsel %vm490, %v491, %v278
        %v493 = vshrl.u32 %v492, 4
        %v494 = vand.u32 %v492, 15
        %v495 = vsub.s32 0, %v494
        %v496 = vsel %vm490, %v495, %v494
        %vm497 = vcmp.lt.s32.totalorder %v279, 0
        %v498 = vsub.s32 0, %v279
        %v499 = vsel %vm497, %v498, %v279
        %v500 = vshrl.u32 %v499, 4
        %v501 = vand.u32 %v499, 15
        %v502 = vsub.s32 0, %v501
        %v503 = vsel %vm497, %v502, %v501
        %vm504 = vcmp.ne.s32.totalorder %v286, 0
        %vm505 = vcmp.ne.s32.totalorder %v293, 0
        %vm506 = vcmp.ne.s32.totalorder %v300, 0
        %vm507 = vcmp.ne.s32.totalorder %v307, 0
        %vm508 = vcmp.ne.s32.totalorder %v314, 0
        %vm509 = vcmp.ne.s32.totalorder %v321, 0
        %vm510 = vcmp.ne.s32.totalorder %v328, 0
        %vm511 = vcmp.ne.s32.totalorder %v335, 0
        %vm512 = vcmp.ne.s32.totalorder %v342, 0
        %vm513 = vcmp.ne.s32.totalorder %v349, 0
        %vm514 = vcmp.ne.s32.totalorder %v356, 0
        %vm515 = vcmp.ne.s32.totalorder %v363, 0
        %vm516 = vcmp.ne.s32.totalorder %v370, 0
        %vm517 = vcmp.ne.s32.totalorder %v377, 0
        %vm518 = vcmp.ne.s32.totalorder %v384, 0
        %vm519 = vcmp.ne.s32.totalorder %v391, 0
        %vm520 = vcmp.ne.s32.totalorder %v398, 0
        %vm521 = vcmp.ne.s32.totalorder %v405, 0
        %vm522 = vcmp.ne.s32.totalorder %v412, 0
        %vm523 = vcmp.ne.s32.totalorder %v419, 0
        %vm524 = vcmp.ne.s32.totalorder %v426, 0
        %vm525 = vcmp.ne.s32.totalorder %v433, 0
        %vm526 = vcmp.ne.s32.totalorder %v440, 0
        %vm527 = vcmp.ne.s32.totalorder %v447, 0
        %vm528 = vcmp.ne.s32.totalorder %v454, 0
        %vm529 = vcmp.ne.s32.totalorder %v461, 0
        %vm530 = vcmp.ne.s32.totalorder %v468, 0
        %vm531 = vcmp.ne.s32.totalorder %v475, 0
        %vm532 = vcmp.ne.s32.totalorder %v482, 0
        %vm533 = vcmp.ne.s32.totalorder %v489, 0
        %vm534 = vcmp.ne.s32.totalorder %v496, 0
        %vm535 = vcmp.ne.s32.totalorder %v503, 0
        %vm536 = vcmp.lt.s32.totalorder %v286, 0
        %vm537 = vcmp.lt.s32.totalorder %v293, 0
        %vm538 = vcmp.lt.s32.totalorder %v300, 0
        %vm539 = vcmp.lt.s32.totalorder %v307, 0
        %vm540 = vcmp.lt.s32.totalorder %v314, 0
        %vm541 = vcmp.lt.s32.totalorder %v321, 0
        %vm542 = vcmp.lt.s32.totalorder %v328, 0
        %vm543 = vcmp.lt.s32.totalorder %v335, 0
        %vm544 = vcmp.lt.s32.totalorder %v342, 0
        %vm545 = vcmp.lt.s32.totalorder %v349, 0
        %vm546 = vcmp.lt.s32.totalorder %v356, 0
        %vm547 = vcmp.lt.s32.totalorder %v363, 0
        %vm548 = vcmp.lt.s32.totalorder %v370, 0
        %vm549 = vcmp.lt.s32.totalorder %v377, 0
        %vm550 = vcmp.lt.s32.totalorder %v384, 0
        %vm551 = vcmp.lt.s32.totalorder %v391, 0
        %vm552 = vcmp.lt.s32.totalorder %v398, 0
        %vm553 = vcmp.lt.s32.totalorder %v405, 0
        %vm554 = vcmp.lt.s32.totalorder %v412, 0
        %vm555 = vcmp.lt.s32.totalorder %v419, 0
        %vm556 = vcmp.lt.s32.totalorder %v426, 0
        %vm557 = vcmp.lt.s32.totalorder %v433, 0
        %vm558 = vcmp.lt.s32.totalorder %v440, 0
        %vm559 = vcmp.lt.s32.totalorder %v447, 0
        %vm560 = vcmp.lt.s32.totalorder %v454, 0
        %vm561 = vcmp.lt.s32.totalorder %v461, 0
        %vm562 = vcmp.lt.s32.totalorder %v468, 0
        %vm563 = vcmp.lt.s32.totalorder %v475, 0
        %vm564 = vcmp.lt.s32.totalorder %v482, 0
        %vm565 = vcmp.lt.s32.totalorder %v489, 0
        %vm566 = vcmp.lt.s32.totalorder %v496, 0
        %vm567 = vcmp.lt.s32.totalorder %v503, 0
        %vm568 = vmand %vm536, %vm504
        %vm569 = vmand %vm537, %vm505
        %vm570 = vmand %vm538, %vm506
        %vm571 = vmand %vm539, %vm507
        %vm572 = vmand %vm540, %vm508
        %vm573 = vmand %vm541, %vm509
        %vm574 = vmand %vm542, %vm510
        %vm575 = vmand %vm543, %vm511
        %vm576 = vmand %vm544, %vm512
        %vm577 = vmand %vm545, %vm513
        %vm578 = vmand %vm546, %vm514
        %vm579 = vmand %vm547, %vm515
        %vm580 = vmand %vm548, %vm516
        %vm581 = vmand %vm549, %vm517
        %vm582 = vmand %vm550, %vm518
        %vm583 = vmand %vm551, %vm519
        %vm584 = vmand %vm552, %vm520
        %vm585 = vmand %vm553, %vm521
        %vm586 = vmand %vm554, %vm522
        %vm587 = vmand %vm555, %vm523
        %vm588 = vmand %vm556, %vm524
        %vm589 = vmand %vm557, %vm525
        %vm590 = vmand %vm558, %vm526
        %vm591 = vmand %vm559, %vm527
        %vm592 = vmand %vm560, %vm528
        %vm593 = vmand %vm561, %vm529
        %vm594 = vmand %vm562, %vm530
        %vm595 = vmand %vm563, %vm531
        %vm596 = vmand %vm564, %vm532
        %vm597 = vmand %vm565, %vm533
        %vm598 = vmand %vm566, %vm534
        %vm599 = vmand %vm567, %vm535
        %v600 = vadd.s32 %v286, 16
        %v601 = vadd.s32 %v293, 16
        %v602 = vadd.s32 %v300, 16
        %v603 = vadd.s32 %v307, 16
        %v604 = vadd.s32 %v314, 16
        %v605 = vadd.s32 %v321, 16
        %v606 = vadd.s32 %v328, 16
        %v607 = vadd.s32 %v335, 16
        %v608 = vadd.s32 %v342, 16
        %v609 = vadd.s32 %v349, 16
        %v610 = vadd.s32 %v356, 16
        %v611 = vadd.s32 %v363, 16
        %v612 = vadd.s32 %v370, 16
        %v613 = vadd.s32 %v377, 16
        %v614 = vadd.s32 %v384, 16
        %v615 = vadd.s32 %v391, 16
        %v616 = vadd.s32 %v398, 16
        %v617 = vadd.s32 %v405, 16
        %v618 = vadd.s32 %v412, 16
        %v619 = vadd.s32 %v419, 16
        %v620 = vadd.s32 %v426, 16
        %v621 = vadd.s32 %v433, 16
        %v622 = vadd.s32 %v440, 16
        %v623 = vadd.s32 %v447, 16
        %v624 = vadd.s32 %v454, 16
        %v625 = vadd.s32 %v461, 16
        %v626 = vadd.s32 %v468, 16
        %v627 = vadd.s32 %v475, 16
        %v628 = vadd.s32 %v482, 16
        %v629 = vadd.s32 %v489, 16
        %v630 = vadd.s32 %v496, 16
        %v631 = vadd.s32 %v503, 16
        %v632 = vsel %vm568, %v600, %v286
        %v633 = vsel %vm569, %v601, %v293
        %v634 = vsel %vm570, %v602, %v300
        %v635 = vsel %vm571, %v603, %v307
        %v636 = vsel %vm572, %v604, %v314
        %v637 = vsel %vm573, %v605, %v321
        %v638 = vsel %vm574, %v606, %v328
        %v639 = vsel %vm575, %v607, %v335
        %v640 = vsel %vm576, %v608, %v342
        %v641 = vsel %vm577, %v609, %v349
        %v642 = vsel %vm578, %v610, %v356
        %v643 = vsel %vm579, %v611, %v363
        %v644 = vsel %vm580, %v612, %v370
        %v645 = vsel %vm581, %v613, %v377
        %v646 = vsel %vm582, %v614, %v384
        %v647 = vsel %vm583, %v615, %v391
        %v648 = vsel %vm584, %v616, %v398
        %v649 = vsel %vm585, %v617, %v405
        %v650 = vsel %vm586, %v618, %v412
        %v651 = vsel %vm587, %v619, %v419
        %v652 = vsel %vm588, %v620, %v426
        %v653 = vsel %vm589, %v621, %v433
        %v654 = vsel %vm590, %v622, %v440
        %v655 = vsel %vm591, %v623, %v447
        %v656 = vsel %vm592, %v624, %v454
        %v657 = vsel %vm593, %v625, %v461
        %v658 = vsel %vm594, %v626, %v468
        %v659 = vsel %vm595, %v627, %v475
        %v660 = vsel %vm596, %v628, %v482
        %v661 = vsel %vm597, %v629, %v489
        %v662 = vsel %vm598, %v630, %v496
        %v663 = vsel %vm599, %v631, %v503
        %vm664 = vcmp.ne.s32.totalorder %v632, 0
        %vm665 = vcmp.ne.s32.totalorder %v633, 0
        %vm666 = vcmp.ne.s32.totalorder %v634, 0
        %vm667 = vcmp.ne.s32.totalorder %v635, 0
        %vm668 = vcmp.ne.s32.totalorder %v636, 0
        %vm669 = vcmp.ne.s32.totalorder %v637, 0
        %vm670 = vcmp.ne.s32.totalorder %v638, 0
        %vm671 = vcmp.ne.s32.totalorder %v639, 0
        %vm672 = vcmp.ne.s32.totalorder %v640, 0
        %vm673 = vcmp.ne.s32.totalorder %v641, 0
        %vm674 = vcmp.ne.s32.totalorder %v642, 0
        %vm675 = vcmp.ne.s32.totalorder %v643, 0
        %vm676 = vcmp.ne.s32.totalorder %v644, 0
        %vm677 = vcmp.ne.s32.totalorder %v645, 0
        %vm678 = vcmp.ne.s32.totalorder %v646, 0
        %vm679 = vcmp.ne.s32.totalorder %v647, 0
        %vm680 = vcmp.ne.s32.totalorder %v648, 0
        %vm681 = vcmp.ne.s32.totalorder %v649, 0
        %vm682 = vcmp.ne.s32.totalorder %v650, 0
        %vm683 = vcmp.ne.s32.totalorder %v651, 0
        %vm684 = vcmp.ne.s32.totalorder %v652, 0
        %vm685 = vcmp.ne.s32.totalorder %v653, 0
        %vm686 = vcmp.ne.s32.totalorder %v654, 0
        %vm687 = vcmp.ne.s32.totalorder %v655, 0
        %vm688 = vcmp.ne.s32.totalorder %v656, 0
        %vm689 = vcmp.ne.s32.totalorder %v657, 0
        %vm690 = vcmp.ne.s32.totalorder %v658, 0
        %vm691 = vcmp.ne.s32.totalorder %v659, 0
        %vm692 = vcmp.ne.s32.totalorder %v660, 0
        %vm693 = vcmp.ne.s32.totalorder %v661, 0
        %vm694 = vcmp.ne.s32.totalorder %v662, 0
        %vm695 = vcmp.ne.s32.totalorder %v663, 0
        %vm696 = vcmp.ne.s32.totalorder %v632, 15
        %vm697 = vcmp.ne.s32.totalorder %v633, 15
        %vm698 = vcmp.ne.s32.totalorder %v634, 15
        %vm699 = vcmp.ne.s32.totalorder %v635, 15
        %vm700 = vcmp.ne.s32.totalorder %v636, 15
        %vm701 = vcmp.ne.s32.totalorder %v637, 15
        %vm702 = vcmp.ne.s32.totalorder %v638, 15
        %vm703 = vcmp.ne.s32.totalorder %v639, 15
        %vm704 = vcmp.ne.s32.totalorder %v640, 15
        %vm705 = vcmp.ne.s32.totalorder %v641, 15
        %vm706 = vcmp.ne.s32.totalorder %v642, 15
        %vm707 = vcmp.ne.s32.totalorder %v643, 15
        %vm708 = vcmp.ne.s32.totalorder %v644, 15
        %vm709 = vcmp.ne.s32.totalorder %v645, 15
        %vm710 = vcmp.ne.s32.totalorder %v646, 15
        %vm711 = vcmp.ne.s32.totalorder %v647, 15
        %vm712 = vcmp.ne.s32.totalorder %v648, 15
        %vm713 = vcmp.ne.s32.totalorder %v649, 15
        %vm714 = vcmp.ne.s32.totalorder %v650, 15
        %vm715 = vcmp.ne.s32.totalorder %v651, 15
        %vm716 = vcmp.ne.s32.totalorder %v652, 15
        %vm717 = vcmp.ne.s32.totalorder %v653, 15
        %vm718 = vcmp.ne.s32.totalorder %v654, 15
        %vm719 = vcmp.ne.s32.totalorder %v655, 15
        %vm720 = vcmp.ne.s32.totalorder %v656, 15
        %vm721 = vcmp.ne.s32.totalorder %v657, 15
        %vm722 = vcmp.ne.s32.totalorder %v658, 15
        %vm723 = vcmp.ne.s32.totalorder %v659, 15
        %vm724 = vcmp.ne.s32.totalorder %v660, 15
        %vm725 = vcmp.ne.s32.totalorder %v661, 15
        %vm726 = vcmp.ne.s32.totalorder %v662, 15
        %vm727 = vcmp.ne.s32.totalorder %v663, 15
        %v728 = vld [vmem:[%s234] sm:$0xff]
        %v729 = vld [vmem:[%s234 + $0x8] sm:$0xff]
        %v730 = vld [vmem:[%s234 + $0x10] sm:$0xff]
        %v731 = vld [vmem:[%s234 + $0x18] sm:$0xff]
        %v732 = vld [vmem:[%s234 + $0x20] sm:$0xff]
        %v733 = vld [vmem:[%s234 + $0x28] sm:$0xff]
        %v734 = vld [vmem:[%s234 + $0x30] sm:$0xff]
        %v735 = vld [vmem:[%s234 + $0x38] sm:$0xff]
        %v736 = vld [vmem:[%s234 + $0x40] sm:$0xff]
        %v737 = vld [vmem:[%s234 + $0x48] sm:$0xff]
        %v738 = vld [vmem:[%s234 + $0x50] sm:$0xff]
        %v739 = vld [vmem:[%s234 + $0x58] sm:$0xff]
        %v740 = vld [vmem:[%s234 + $0x60] sm:$0xff]
        %v741 = vld [vmem:[%s234 + $0x68] sm:$0xff]
        %v742 = vld [vmem:[%s234 + $0x70] sm:$0xff]
        %v743 = vld [vmem:[%s234 + $0x78] sm:$0xff]
        %v744 = vld [vmem:[%s234 + $0x80] sm:$0xff]
        %v745 = vld [vmem:[%s234 + $0x88] sm:$0xff]
        %v746 = vld [vmem:[%s234 + $0x90] sm:$0xff]
        %v747 = vld [vmem:[%s234 + $0x98] sm:$0xff]
        %v748 = vld [vmem:[%s234 + $0xa0] sm:$0xff]
        %v749 = vld [vmem:[%s234 + $0xa8] sm:$0xff]
        %v750 = vld [vmem:[%s234 + $0xb0] sm:$0xff]
        %v751 = vld [vmem:[%s234 + $0xb8] sm:$0xff]
        %v752 = vld [vmem:[%s234 + $0xc0] sm:$0xff]
        %v753 = vld [vmem:[%s234 + $0xc8] sm:$0xff]
        %v754 = vld [vmem:[%s234 + $0xd0] sm:$0xff]
        %v755 = vld [vmem:[%s234 + $0xd8] sm:$0xff]
        %v756 = vld [vmem:[%s234 + $0xe0] sm:$0xff]
        %v757 = vld [vmem:[%s234 + $0xe8] sm:$0xff]
        %v758 = vld [vmem:[%s234 + $0xf0] sm:$0xff]
        %v759 = vld [vmem:[%s234 + $0xf8] sm:$0xff]
        %760 = vst.msk [vmem:[#allocation2 + $0x18] sm:$0xff] %vm240, %v728
        %761 = vst.msk [vmem:[#allocation2 + $0x20] sm:$0xff] %vm240, %v729
        %762 = vst.msk [vmem:[#allocation2 + $0x28] sm:$0xff] %vm240, %v730
        %763 = vst.msk [vmem:[#allocation2 + $0x30] sm:$0xff] %vm240, %v731
        %764 = vst.msk [vmem:[#allocation2 + $0x38] sm:$0xff] %vm240, %v732
        %765 = vst.msk [vmem:[#allocation2 + $0x40] sm:$0xff] %vm240, %v733
        %766 = vst.msk [vmem:[#allocation2 + $0x48] sm:$0xff] %vm240, %v734
        %767 = vst.msk [vmem:[#allocation2 + $0x50] sm:$0xff] %vm240, %v735
        %768 = vst.msk [vmem:[#allocation2 + $0x58] sm:$0xff] %vm240, %v736
        %769 = vst.msk [vmem:[#allocation2 + $0x60] sm:$0xff] %vm240, %v737
        %770 = vst.msk [vmem:[#allocation2 + $0x68] sm:$0xff] %vm240, %v738
        %771 = vst.msk [vmem:[#allocation2 + $0x70] sm:$0xff] %vm240, %v739
        %772 = vst.msk [vmem:[#allocation2 + $0x78] sm:$0xff] %vm240, %v740
        %773 = vst.msk [vmem:[#allocation2 + $0x80] sm:$0xff] %vm240, %v741
        %774 = vst.msk [vmem:[#allocation2 + $0x88] sm:$0xff] %vm240, %v742
        %775 = vst.msk [vmem:[#allocation2 + $0x90] sm:$0xff] %vm240, %v743
        %776 = vst.msk [vmem:[#allocation2 + $0x98] sm:$0xff] %vm240, %v744
        %777 = vst.msk [vmem:[#allocation2 + $0xa0] sm:$0xff] %vm240, %v745
        %778 = vst.msk [vmem:[#allocation2 + $0xa8] sm:$0xff] %vm240, %v746
        %779 = vst.msk [vmem:[#allocation2 + $0xb0] sm:$0xff] %vm240, %v747
        %780 = vst.msk [vmem:[#allocation2 + $0xb8] sm:$0xff] %vm240, %v748
        %781 = vst.msk [vmem:[#allocation2 + $0xc0] sm:$0xff] %vm240, %v749
        %782 = vst.msk [vmem:[#allocation2 + $0xc8] sm:$0xff] %vm240, %v750
        %783 = vst.msk [vmem:[#allocation2 + $0xd0] sm:$0xff] %vm240, %v751
        %784 = vst.msk [vmem:[#allocation2 + $0xd8] sm:$0xff] %vm240, %v752
        %785 = vst.msk [vmem:[#allocation2 + $0xe0] sm:$0xff] %vm240, %v753
        %786 = vst.msk [vmem:[#allocation2 + $0xe8] sm:$0xff] %vm240, %v754
        %787 = vst.msk [vmem:[#allocation2 + $0xf0] sm:$0xff] %vm240, %v755
        %788 = vst.msk [vmem:[#allocation2 + $0xf8] sm:$0xff] %vm240, %v756
        %789 = vst.msk [vmem:[#allocation2 + $0x100] sm:$0xff] %vm240, %v757
        %790 = vst.msk [vmem:[#allocation2 + $0x108] sm:$0xff] %vm240, %v758
        %791 = vst.msk [vmem:[#allocation2 + $0x110] sm:$0xff] %vm240, %v759
        %v792 = vld [vmem:[#allocation2 + $0x7] sm:$0xff]
        %v793 = vld [vmem:[#allocation2 + $0xf] sm:$0xff]
        %v794 = vld [vmem:[#allocation2 + $0x17] sm:$0xff]
        %v795 = vld [vmem:[#allocation2 + $0x1f] sm:$0xff]
        %v796 = vld [vmem:[#allocation2 + $0x27] sm:$0xff]
        %v797 = vld [vmem:[#allocation2 + $0x2f] sm:$0xff]
        %v798 = vld [vmem:[#allocation2 + $0x37] sm:$0xff]
        %v799 = vld [vmem:[#allocation2 + $0x3f] sm:$0xff]
        %v800 = vld [vmem:[#allocation2 + $0x47] sm:$0xff]
        %v801 = vld [vmem:[#allocation2 + $0x4f] sm:$0xff]
        %v802 = vld [vmem:[#allocation2 + $0x57] sm:$0xff]
        %v803 = vld [vmem:[#allocation2 + $0x5f] sm:$0xff]
        %v804 = vld [vmem:[#allocation2 + $0x67] sm:$0xff]
        %v805 = vld [vmem:[#allocation2 + $0x6f] sm:$0xff]
        %v806 = vld [vmem:[#allocation2 + $0x77] sm:$0xff]
        %v807 = vld [vmem:[#allocation2 + $0x7f] sm:$0xff]
        %v808 = vld [vmem:[#allocation2 + $0x87] sm:$0xff]
        %v809 = vld [vmem:[#allocation2 + $0x8f] sm:$0xff]
        %v810 = vld [vmem:[#allocation2 + $0x97] sm:$0xff]
        %v811 = vld [vmem:[#allocation2 + $0x9f] sm:$0xff]
        %v812 = vld [vmem:[#allocation2 + $0xa7] sm:$0xff]
        %v813 = vld [vmem:[#allocation2 + $0xaf] sm:$0xff]
        %v814 = vld [vmem:[#allocation2 + $0xb7] sm:$0xff]
        %v815 = vld [vmem:[#allocation2 + $0xbf] sm:$0xff]
        %v816 = vld [vmem:[#allocation2 + $0xc7] sm:$0xff]
        %v817 = vld [vmem:[#allocation2 + $0xcf] sm:$0xff]
        %v818 = vld [vmem:[#allocation2 + $0xd7] sm:$0xff]
        %v819 = vld [vmem:[#allocation2 + $0xdf] sm:$0xff]
        %v820 = vld [vmem:[#allocation2 + $0xe7] sm:$0xff]
        %v821 = vld [vmem:[#allocation2 + $0xef] sm:$0xff]
        %v822 = vld [vmem:[#allocation2 + $0xf7] sm:$0xff]
        %v823 = vld [vmem:[#allocation2 + $0xff] sm:$0xff]
        %v824 = vsel %vm664, 1, 0
        %v825 = vsel %vm665, 1, 0
        %v826 = vsel %vm666, 1, 0
        %v827 = vsel %vm667, 1, 0
        %v828 = vsel %vm668, 1, 0
        %v829 = vsel %vm669, 1, 0
        %v830 = vsel %vm670, 1, 0
        %v831 = vsel %vm671, 1, 0
        %v832 = vsel %vm672, 1, 0
        %v833 = vsel %vm673, 1, 0
        %v834 = vsel %vm674, 1, 0
        %v835 = vsel %vm675, 1, 0
        %v836 = vsel %vm676, 1, 0
        %v837 = vsel %vm677, 1, 0
        %v838 = vsel %vm678, 1, 0
        %v839 = vsel %vm679, 1, 0
        %v840 = vsel %vm680, 1, 0
        %v841 = vsel %vm681, 1, 0
        %v842 = vsel %vm682, 1, 0
        %v843 = vsel %vm683, 1, 0
        %v844 = vsel %vm684, 1, 0
        %v845 = vsel %vm685, 1, 0
        %v846 = vsel %vm686, 1, 0
        %v847 = vsel %vm687, 1, 0
        %v848 = vsel %vm688, 1, 0
        %v849 = vsel %vm689, 1, 0
        %v850 = vsel %vm690, 1, 0
        %v851 = vsel %vm691, 1, 0
        %v852 = vsel %vm692, 1, 0
        %v853 = vsel %vm693, 1, 0
        %v854 = vsel %vm694, 1, 0
        %v855 = vsel %vm695, 1, 0
        %vm856 = vcmp.eq.s32.totalorder %v824, 1
        %vm857 = vcmp.eq.s32.totalorder %v825, 1
        %vm858 = vcmp.eq.s32.totalorder %v826, 1
        %vm859 = vcmp.eq.s32.totalorder %v827, 1
        %vm860 = vcmp.eq.s32.totalorder %v828, 1
        %vm861 = vcmp.eq.s32.totalorder %v829, 1
        %vm862 = vcmp.eq.s32.totalorder %v830, 1
        %vm863 = vcmp.eq.s32.totalorder %v831, 1
        %vm864 = vcmp.eq.s32.totalorder %v832, 1
        %vm865 = vcmp.eq.s32.totalorder %v833, 1
        %vm866 = vcmp.eq.s32.totalorder %v834, 1
        %vm867 = vcmp.eq.s32.totalorder %v835, 1
        %vm868 = vcmp.eq.s32.totalorder %v836, 1
        %vm869 = vcmp.eq.s32.totalorder %v837, 1
        %vm870 = vcmp.eq.s32.totalorder %v838, 1
        %vm871 = vcmp.eq.s32.totalorder %v839, 1
        %vm872 = vcmp.eq.s32.totalorder %v840, 1
        %vm873 = vcmp.eq.s32.totalorder %v841, 1
        %vm874 = vcmp.eq.s32.totalorder %v842, 1
        %vm875 = vcmp.eq.s32.totalorder %v843, 1
        %vm876 = vcmp.eq.s32.totalorder %v844, 1
        %vm877 = vcmp.eq.s32.totalorder %v845, 1
        %vm878 = vcmp.eq.s32.totalorder %v846, 1
        %vm879 = vcmp.eq.s32.totalorder %v847, 1
        %vm880 = vcmp.eq.s32.totalorder %v848, 1
        %vm881 = vcmp.eq.s32.totalorder %v849, 1
        %vm882 = vcmp.eq.s32.totalorder %v850, 1
        %vm883 = vcmp.eq.s32.totalorder %v851, 1
        %vm884 = vcmp.eq.s32.totalorder %v852, 1
        %vm885 = vcmp.eq.s32.totalorder %v853, 1
        %vm886 = vcmp.eq.s32.totalorder %v854, 1
        %vm887 = vcmp.eq.s32.totalorder %v855, 1
        %v888 = vsel %vm856, %v792, 0.0
        %v889 = vsel %vm857, %v793, 0.0
        %v890 = vsel %vm858, %v794, 0.0
        %v891 = vsel %vm859, %v795, 0.0
        %v892 = vsel %vm860, %v796, 0.0
        %v893 = vsel %vm861, %v797, 0.0
        %v894 = vsel %vm862, %v798, 0.0
        %v895 = vsel %vm863, %v799, 0.0
        %v896 = vsel %vm864, %v800, 0.0
        %v897 = vsel %vm865, %v801, 0.0
        %v898 = vsel %vm866, %v802, 0.0
        %v899 = vsel %vm867, %v803, 0.0
        %v900 = vsel %vm868, %v804, 0.0
        %v901 = vsel %vm869, %v805, 0.0
        %v902 = vsel %vm870, %v806, 0.0
        %v903 = vsel %vm871, %v807, 0.0
        %v904 = vsel %vm872, %v808, 0.0
        %v905 = vsel %vm873, %v809, 0.0
        %v906 = vsel %vm874, %v810, 0.0
        %v907 = vsel %vm875, %v811, 0.0
        %v908 = vsel %vm876, %v812, 0.0
        %v909 = vsel %vm877, %v813, 0.0
        %v910 = vsel %vm878, %v814, 0.0
        %v911 = vsel %vm879, %v815, 0.0
        %v912 = vsel %vm880, %v816, 0.0
        %v913 = vsel %vm881, %v817, 0.0
        %v914 = vsel %vm882, %v818, 0.0
        %v915 = vsel %vm883, %v819, 0.0
        %v916 = vsel %vm884, %v820, 0.0
        %v917 = vsel %vm885, %v821, 0.0
        %v918 = vsel %vm886, %v822, 0.0
        %v919 = vsel %vm887, %v823, 0.0
        %v920 = vld [vmem:[%s1] sm:$0xff]
        %v921 = vld [vmem:[%s1 + $0x8] sm:$0xff]
        %v922 = vld [vmem:[%s1 + $0x10] sm:$0xff]
        %v923 = vld [vmem:[%s1 + $0x18] sm:$0xff]
        %v924 = vld [vmem:[%s1 + $0x20] sm:$0xff]
        %v925 = vld [vmem:[%s1 + $0x28] sm:$0xff]
        %v926 = vld [vmem:[%s1 + $0x30] sm:$0xff]
        %v927 = vld [vmem:[%s1 + $0x38] sm:$0xff]
        %v928 = vld [vmem:[#allocation2 + $0x8] sm:$0xff]
        %v929 = vld [vmem:[#allocation2 + $0x10] sm:$0xff]
        %v930 = vld [vmem:[#allocation2 + $0x18] sm:$0xff]
        %v931 = vld [vmem:[#allocation2 + $0x20] sm:$0xff]
        %v932 = vld [vmem:[#allocation2 + $0x28] sm:$0xff]
        %v933 = vld [vmem:[#allocation2 + $0x30] sm:$0xff]
        %v934 = vld [vmem:[#allocation2 + $0x38] sm:$0xff]
        %v935 = vld [vmem:[#allocation2 + $0x40] sm:$0xff]
        %v936 = vld [vmem:[#allocation2 + $0x48] sm:$0xff]
        %v937 = vld [vmem:[#allocation2 + $0x50] sm:$0xff]
        %v938 = vld [vmem:[#allocation2 + $0x58] sm:$0xff]
        %v939 = vld [vmem:[#allocation2 + $0x60] sm:$0xff]
        %v940 = vld [vmem:[#allocation2 + $0x68] sm:$0xff]
        %v941 = vld [vmem:[#allocation2 + $0x70] sm:$0xff]
        %v942 = vld [vmem:[#allocation2 + $0x78] sm:$0xff]
        %v943 = vld [vmem:[#allocation2 + $0x80] sm:$0xff]
        %v944 = vld [vmem:[#allocation2 + $0x88] sm:$0xff]
        %v945 = vld [vmem:[#allocation2 + $0x90] sm:$0xff]
        %v946 = vld [vmem:[#allocation2 + $0x98] sm:$0xff]
        %v947 = vld [vmem:[#allocation2 + $0xa0] sm:$0xff]
        %v948 = vld [vmem:[#allocation2 + $0xa8] sm:$0xff]
        %v949 = vld [vmem:[#allocation2 + $0xb0] sm:$0xff]
        %v950 = vld [vmem:[#allocation2 + $0xb8] sm:$0xff]
        %v951 = vld [vmem:[#allocation2 + $0xc0] sm:$0xff]
        %v952 = vld [vmem:[#allocation2 + $0xc8] sm:$0xff]
        %v953 = vld [vmem:[#allocation2 + $0xd0] sm:$0xff]
        %v954 = vld [vmem:[#allocation2 + $0xd8] sm:$0xff]
        %v955 = vld [vmem:[#allocation2 + $0xe0] sm:$0xff]
        %v956 = vld [vmem:[#allocation2 + $0xe8] sm:$0xff]
        %v957 = vld [vmem:[#allocation2 + $0xf0] sm:$0xff]
        %v958 = vld [vmem:[#allocation2 + $0xf8] sm:$0xff]
        %v959 = vld [vmem:[#allocation2 + $0x100] sm:$0xff]
        %s960 = scalar_lea.vmem %s1, 64
        %v961 = vld [vmem:[%s960] sm:$0xff]
        %v962 = vld [vmem:[%s960 + $0x8] sm:$0xff]
        %v963 = vld [vmem:[%s960 + $0x10] sm:$0xff]
        %v964 = vld [vmem:[%s960 + $0x18] sm:$0xff]
        %v965 = vld [vmem:[%s960 + $0x20] sm:$0xff]
        %v966 = vld [vmem:[%s960 + $0x28] sm:$0xff]
        %v967 = vld [vmem:[%s960 + $0x30] sm:$0xff]
        %v968 = vld [vmem:[%s960 + $0x38] sm:$0xff]
        %v970 = vsel %vm240, %v928, 0
        %v973 = vsel %vm240, %v929, 0
        %v976 = vsel %vm240, %v930, 0
        %v979 = vsel %vm240, %v931, 0
        %v982 = vsel %vm240, %v932, 0
        %v985 = vsel %vm240, %v933, 0
        %v988 = vsel %vm240, %v934, 0
        %v991 = vsel %vm240, %v935, 0
        %v994 = vsel %vm240, %v936, 0
        %v997 = vsel %vm240, %v937, 0
        %v1000 = vsel %vm240, %v938, 0
        %v1003 = vsel %vm240, %v939, 0
        %v1006 = vsel %vm240, %v940, 0
        %v1009 = vsel %vm240, %v941, 0
        %v1012 = vsel %vm240, %v942, 0
        %v1015 = vsel %vm240, %v943, 0
        %v1018 = vsel %vm240, %v944, 0
        %v1021 = vsel %vm240, %v945, 0
        %v1024 = vsel %vm240, %v946, 0
        %v1027 = vsel %vm240, %v947, 0
        %v1030 = vsel %vm240, %v948, 0
        %v1033 = vsel %vm240, %v949, 0
        %v1036 = vsel %vm240, %v950, 0
        %v1039 = vsel %vm240, %v951, 0
        %v1042 = vsel %vm240, %v952, 0
        %v1045 = vsel %vm240, %v953, 0
        %v1048 = vsel %vm240, %v954, 0
        %v1051 = vsel %vm240, %v955, 0
        %v1054 = vsel %vm240, %v956, 0
        %v1057 = vsel %vm240, %v957, 0
        %v1060 = vsel %vm240, %v958, 0
        %v1063 = vsel %vm240, %v959, 0
        %1065 = vmatprep.subr.mxu0 0.0
        %1066 = vmatpush1.msra.mxu0 %v961
        %1067 = vmatprep.subr.mxu0 0.0
        %1068 = vmatpush1.msra.mxu0 %v962
        %1069 = vmatprep.subr.mxu0 0.0
        %1070 = vmatpush1.msra.mxu0 %v963
        %1071 = vmatprep.subr.mxu0 0.0
        %1072 = vmatpush1.msra.mxu0 %v964
        %1073 = vmatprep.subr.mxu0 0.0
        %1074 = vmatpush1.msra.mxu0 %v965
        %1075 = vmatprep.subr.mxu0 0.0
        %1076 = vmatpush1.msra.mxu0 %v966
        %1077 = vmatprep.subr.mxu0 0.0
        %1078 = vmatpush1.msra.mxu0 %v967
        %1079 = vmatprep.subr.mxu0 0.0
        %1080 = vmatpush1.msra.mxu0 %v968
        %1081 = vmatprep.subr.mxu0 0.0
        %1082 = vmatpush1.msra.mxu0 0.0
        %1083 = vmatprep.subr.mxu0 0.0
        %1084 = vmatpush1.msra.mxu0 0.0
        %1085 = vmatprep.subr.mxu0 0.0
        %1086 = vmatpush1.msra.mxu0 0.0
        %1087 = vmatprep.subr.mxu0 0.0
        %1088 = vmatpush1.msra.mxu0 0.0
        %1089 = vmatprep.subr.mxu0 0.0
        %1090 = vmatpush1.msra.mxu0 0.0
        %1091 = vmatprep.subr.mxu0 0.0
        %1092 = vmatpush1.msra.mxu0 0.0
        %1093 = vmatprep.subr.mxu0 0.0
        %1094 = vmatpush1.msra.mxu0 0.0
        %1095 = vmatprep.subr.mxu0 0.0
        %1096 = vmatpush1.msra.mxu0 0.0
        %1097 = vmatprep.subr.mxu0 0.0
        %1098 = vmatpush1.msra.mxu0 0.0
        %1099 = vmatprep.subr.mxu0 0.0
        %1100 = vmatpush1.msra.mxu0 0.0
        %1101 = vmatprep.subr.mxu0 0.0
        %1102 = vmatpush1.msra.mxu0 0.0
        %1103 = vmatprep.subr.mxu0 0.0
        %1104 = vmatpush1.msra.mxu0 0.0
        %1105 = vmatprep.subr.mxu0 0.0
        %1106 = vmatpush1.msra.mxu0 0.0
        %1107 = vmatprep.subr.mxu0 0.0
        %1108 = vmatpush1.msra.mxu0 0.0
        %1109 = vmatprep.subr.mxu0 0.0
        %1110 = vmatpush1.msra.mxu0 0.0
        %1111 = vmatprep.subr.mxu0 0.0
        %1112 = vmatpush1.msra.mxu0 0.0
        %1113 = vmatprep.subr.mxu0 0.0
        %1114 = vmatpush1.msra.mxu0 0.0
        %1115 = vmatprep.subr.mxu0 0.0
        %1116 = vmatpush1.msra.mxu0 0.0
        %1117 = vmatprep.subr.mxu0 0.0
        %1118 = vmatpush1.msra.mxu0 0.0
        %1119 = vmatprep.subr.mxu0 0.0
        %1120 = vmatpush1.msra.mxu0 0.0
        %1121 = vmatprep.subr.mxu0 0.0
        %1122 = vmatpush1.msra.mxu0 0.0
        %1123 = vmatprep.subr.mxu0 0.0
        %1124 = vmatpush1.msra.mxu0 0.0
        %1125 = vmatprep.subr.mxu0 0.0
        %1126 = vmatpush1.msra.mxu0 0.0
        %1127 = vmatprep.subr.mxu0 0.0
        %1128 = vmatpush1.msra.mxu0 0.0
        %1129 = vmatprep.mubr.f32.mxu0 0.0
        %1130 = vmatmul.mubr.f32.gmra.mrb[0].mxu0 %v970
        %v1131 = vpop.f32.mrb[0].mxu0
        %v1132 = vadd.f32 0.0, %v1131
        %v1133 = vpop.f32.mrb[0].mxu0
        %1134 = vmatprep.mubr.f32.mxu0 0.0
        %1135 = vmatmul.mubr.f32.gmra.mrb[0].mxu0 %v973
        %v1136 = vpop.f32.mrb[0].mxu0
        %v1137 = vadd.f32 0.0, %v1136
        %v1138 = vpop.f32.mrb[0].mxu0
        %1139 = vmatprep.mubr.f32.mxu0 0.0
        %1140 = vmatmul.mubr.f32.gmra.mrb[0].mxu0 %v976
        %v1141 = vpop.f32.mrb[0].mxu0
        %v1142 = vadd.f32 0.0, %v1141
        %v1143 = vpop.f32.mrb[0].mxu0
        %1144 = vmatprep.mubr.f32.mxu0 0.0
        %1145 = vmatmul.mubr.f32.gmra.mrb[0].mxu0 %v979
        %v1146 = vpop.f32.mrb[0].mxu0
        %v1147 = vadd.f32 0.0, %v1146
        %v1148 = vpop.f32.mrb[0].mxu0
        %1149 = vmatprep.mubr.f32.mxu0 0.0
        %1150 = vmatmul.mubr.f32.gmra.mrb[0].mxu0 %v982
        %v1151 = vpop.f32.mrb[0].mxu0
        %v1152 = vadd.f32 0.0, %v1151
        %v1153 = vpop.f32.mrb[0].mxu0
        %1154 = vmatprep.mubr.f32.mxu0 0.0
        %1155 = vmatmul.mubr.f32.gmra.mrb[0].mxu0 %v985
        %v1156 = vpop.f32.mrb[0].mxu0
        %v1157 = vadd.f32 0.0, %v1156
        %v1158 = vpop.f32.mrb[0].mxu0
        %1159 = vmatprep.mubr.f32.mxu0 0.0
        %1160 = vmatmul.mubr.f32.gmra.mrb[0].mxu0 %v988
        %v1161 = vpop.f32.mrb[0].mxu0
        %v1162 = vadd.f32 0.0, %v1161
        %v1163 = vpop.f32.mrb[0].mxu0
        %1164 = vmatprep.mubr.f32.mxu0 0.0
        %1165 = vmatmul.mubr.f32.gmra.mrb[0].mxu0 %v991
        %v1166 = vpop.f32.mrb[0].mxu0
        %v1167 = vadd.f32 0.0, %v1166
        %v1168 = vpop.f32.mrb[0].mxu0
        %1169 = vmatprep.mubr.f32.mxu0 0.0
        %1170 = vmatmul.mubr.f32.gmra.mrb[0].mxu0 %v994
        %v1171 = vpop.f32.mrb[0].mxu0
        %v1172 = vadd.f32 0.0, %v1171
        %v1173 = vpop.f32.mrb[0].mxu0
        %1174 = vmatprep.mubr.f32.mxu0 0.0
        %1175 = vmatmul.mubr.f32.gmra.mrb[0].mxu0 %v997
        %v1176 = vpop.f32.mrb[0].mxu0
        %v1177 = vadd.f32 0.0, %v1176
        %v1178 = vpop.f32.mrb[0].mxu0
        %1179 = vmatprep.mubr.f32.mxu0 0.0
        %1180 = vmatmul.mubr.f32.gmra.mrb[0].mxu0 %v1000
        %v1181 = vpop.f32.mrb[0].mxu0
        %v1182 = vadd.f32 0.0, %v1181
        %v1183 = vpop.f32.mrb[0].mxu0
        %1184 = vmatprep.mubr.f32.mxu0 0.0
        %1185 = vmatmul.mubr.f32.gmra.mrb[0].mxu0 %v1003
        %v1186 = vpop.f32.mrb[0].mxu0
        %v1187 = vadd.f32 0.0, %v1186
        %v1188 = vpop.f32.mrb[0].mxu0
        %1189 = vmatprep.mubr.f32.mxu0 0.0
        %1190 = vmatmul.mubr.f32.gmra.mrb[0].mxu0 %v1006
        %v1191 = vpop.f32.mrb[0].mxu0
        %v1192 = vadd.f32 0.0, %v1191
        %v1193 = vpop.f32.mrb[0].mxu0
        %1194 = vmatprep.mubr.f32.mxu0 0.0
        %1195 = vmatmul.mubr.f32.gmra.mrb[0].mxu0 %v1009
        %v1196 = vpop.f32.mrb[0].mxu0
        %v1197 = vadd.f32 0.0, %v1196
        %v1198 = vpop.f32.mrb[0].mxu0
        %1199 = vmatprep.mubr.f32.mxu0 0.0
        %1200 = vmatmul.mubr.f32.gmra.mrb[0].mxu0 %v1012
        %v1201 = vpop.f32.mrb[0].mxu0
        %v1202 = vadd.f32 0.0, %v1201
        %v1203 = vpop.f32.mrb[0].mxu0
        %1204 = vmatprep.mubr.f32.mxu0 0.0
        %1205 = vmatmul.mubr.f32.gmra.mrb[0].mxu0 %v1015
        %v1206 = vpop.f32.mrb[0].mxu0
        %v1207 = vadd.f32 0.0, %v1206
        %v1208 = vpop.f32.mrb[0].mxu0
        %1209 = vmatprep.mubr.f32.mxu0 0.0
        %1210 = vmatmul.mubr.f32.gmra.mrb[0].mxu0 %v1018
        %v1211 = vpop.f32.mrb[0].mxu0
        %v1212 = vadd.f32 0.0, %v1211
        %v1213 = vpop.f32.mrb[0].mxu0
        %1214 = vmatprep.mubr.f32.mxu0 0.0
        %1215 = vmatmul.mubr.f32.gmra.mrb[0].mxu0 %v1021
        %v1216 = vpop.f32.mrb[0].mxu0
        %v1217 = vadd.f32 0.0, %v1216
        %v1218 = vpop.f32.mrb[0].mxu0
        %1219 = vmatprep.mubr.f32.mxu0 0.0
        %1220 = vmatmul.mubr.f32.gmra.mrb[0].mxu0 %v1024
        %v1221 = vpop.f32.mrb[0].mxu0
        %v1222 = vadd.f32 0.0, %v1221
        %v1223 = vpop.f32.mrb[0].mxu0
        %1224 = vmatprep.mubr.f32.mxu0 0.0
        %1225 = vmatmul.mubr.f32.gmra.mrb[0].mxu0 %v1027
        %v1226 = vpop.f32.mrb[0].mxu0
        %v1227 = vadd.f32 0.0, %v1226
        %v1228 = vpop.f32.mrb[0].mxu0
        %1229 = vmatprep.mubr.f32.mxu0 0.0
        %1230 = vmatmul.mubr.f32.gmra.mrb[0].mxu0 %v1030
        %v1231 = vpop.f32.mrb[0].mxu0
        %v1232 = vadd.f32 0.0, %v1231
        %v1233 = vpop.f32.mrb[0].mxu0
        %1234 = vmatprep.mubr.f32.mxu0 0.0
        %1235 = vmatmul.mubr.f32.gmra.mrb[0].mxu0 %v1033
        %v1236 = vpop.f32.mrb[0].mxu0
        %v1237 = vadd.f32 0.0, %v1236
        %v1238 = vpop.f32.mrb[0].mxu0
        %1239 = vmatprep.mubr.f32.mxu0 0.0
        %1240 = vmatmul.mubr.f32.gmra.mrb[0].mxu0 %v1036
        %v1241 = vpop.f32.mrb[0].mxu0
        %v1242 = vadd.f32 0.0, %v1241
        %v1243 = vpop.f32.mrb[0].mxu0
        %1244 = vmatprep.mubr.f32.mxu0 0.0
        %1245 = vmatmul.mubr.f32.gmra.mrb[0].mxu0 %v1039
        %v1246 = vpop.f32.mrb[0].mxu0
        %v1247 = vadd.f32 0.0, %v1246
        %v1248 = vpop.f32.mrb[0].mxu0
        %1249 = vmatprep.mubr.f32.mxu0 0.0
        %1250 = vmatmul.mubr.f32.gmra.mrb[0].mxu0 %v1042
        %v1251 = vpop.f32.mrb[0].mxu0
        %v1252 = vadd.f32 0.0, %v1251
        %v1253 = vpop.f32.mrb[0].mxu0
        %1254 = vmatprep.mubr.f32.mxu0 0.0
        %1255 = vmatmul.mubr.f32.gmra.mrb[0].mxu0 %v1045
        %v1256 = vpop.f32.mrb[0].mxu0
        %v1257 = vadd.f32 0.0, %v1256
        %v1258 = vpop.f32.mrb[0].mxu0
        %1259 = vmatprep.mubr.f32.mxu0 0.0
        %1260 = vmatmul.mubr.f32.gmra.mrb[0].mxu0 %v1048
        %v1261 = vpop.f32.mrb[0].mxu0
        %v1262 = vadd.f32 0.0, %v1261
        %v1263 = vpop.f32.mrb[0].mxu0
        %1264 = vmatprep.mubr.f32.mxu0 0.0
        %1265 = vmatmul.mubr.f32.gmra.mrb[0].mxu0 %v1051
        %v1266 = vpop.f32.mrb[0].mxu0
        %v1267 = vadd.f32 0.0, %v1266
        %v1268 = vpop.f32.mrb[0].mxu0
        %1269 = vmatprep.mubr.f32.mxu0 0.0
        %1270 = vmatmul.mubr.f32.gmra.mrb[0].mxu0 %v1054
        %v1271 = vpop.f32.mrb[0].mxu0
        %v1272 = vadd.f32 0.0, %v1271
        %v1273 = vpop.f32.mrb[0].mxu0
        %1274 = vmatprep.mubr.f32.mxu0 0.0
        %1275 = vmatmul.mubr.f32.gmra.mrb[0].mxu0 %v1057
        %v1276 = vpop.f32.mrb[0].mxu0
        %v1277 = vadd.f32 0.0, %v1276
        %v1278 = vpop.f32.mrb[0].mxu0
        %1279 = vmatprep.mubr.f32.mxu0 0.0
        %1280 = vmatmul.mubr.f32.gmra.mrb[0].mxu0 %v1060
        %v1281 = vpop.f32.mrb[0].mxu0
        %v1282 = vadd.f32 0.0, %v1281
        %v1283 = vpop.f32.mrb[0].mxu0
        %1284 = vmatprep.mubr.f32.mxu0 0.0
        %1285 = vmatmul.mubr.f32.gmra.mrb[0].mxu0 %v1063
        %v1286 = vpop.f32.mrb[0].mxu0
        %v1287 = vadd.f32 0.0, %v1286
        %v1288 = vpop.f32.mrb[0].mxu0
        %1289 = vdwg.mxu0
        %v1291 = vsel %vm240, %v888, 0
        %v1294 = vsel %vm240, %v889, 0
        %v1297 = vsel %vm240, %v890, 0
        %v1300 = vsel %vm240, %v891, 0
        %v1303 = vsel %vm240, %v892, 0
        %v1306 = vsel %vm240, %v893, 0
        %v1309 = vsel %vm240, %v894, 0
        %v1312 = vsel %vm240, %v895, 0
        %v1315 = vsel %vm240, %v896, 0
        %v1318 = vsel %vm240, %v897, 0
        %v1321 = vsel %vm240, %v898, 0
        %v1324 = vsel %vm240, %v899, 0
        %v1327 = vsel %vm240, %v900, 0
        %v1330 = vsel %vm240, %v901, 0
        %v1333 = vsel %vm240, %v902, 0
        %v1336 = vsel %vm240, %v903, 0
        %v1339 = vsel %vm240, %v904, 0
        %v1342 = vsel %vm240, %v905, 0
        %v1345 = vsel %vm240, %v906, 0
        %v1348 = vsel %vm240, %v907, 0
        %v1351 = vsel %vm240, %v908, 0
        %v1354 = vsel %vm240, %v909, 0
        %v1357 = vsel %vm240, %v910, 0
        %v1360 = vsel %vm240, %v911, 0
        %v1363 = vsel %vm240, %v912, 0
        %v1366 = vsel %vm240, %v913, 0
        %v1369 = vsel %vm240, %v914, 0
        %v1372 = vsel %vm240, %v915, 0
        %v1375 = vsel %vm240, %v916, 0
        %v1378 = vsel %vm240, %v917, 0
        %v1381 = vsel %vm240, %v918, 0
        %v1384 = vsel %vm240, %v919, 0
        %1386 = vmatprep.subr.mxu0 0.0
        %1387 = vmatpush1.msra.mxu0 %v920
        %1388 = vmatprep.subr.mxu0 0.0
        %1389 = vmatpush1.msra.mxu0 %v921
        %1390 = vmatprep.subr.mxu0 0.0
        %1391 = vmatpush1.msra.mxu0 %v922
        %1392 = vmatprep.subr.mxu0 0.0
        %1393 = vmatpush1.msra.mxu0 %v923
        %1394 = vmatprep.subr.mxu0 0.0
        %1395 = vmatpush1.msra.mxu0 %v924
        %1396 = vmatprep.subr.mxu0 0.0
        %1397 = vmatpush1.msra.mxu0 %v925
        %1398 = vmatprep.subr.mxu0 0.0
        %1399 = vmatpush1.msra.mxu0 %v926
        %1400 = vmatprep.subr.mxu0 0.0
        %1401 = vmatpush1.msra.mxu0 %v927
        %1402 = vmatprep.subr.mxu0 0.0
        %1403 = vmatpush1.msra.mxu0 0.0
        %1404 = vmatprep.subr.mxu0 0.0
        %1405 = vmatpush1.msra.mxu0 0.0
        %1406 = vmatprep.subr.mxu0 0.0
        %1407 = vmatpush1.msra.mxu0 0.0
        %1408 = vmatprep.subr.mxu0 0.0
        %1409 = vmatpush1.msra.mxu0 0.0
        %1410 = vmatprep.subr.mxu0 0.0
        %1411 = vmatpush1.msra.mxu0 0.0
        %1412 = vmatprep.subr.mxu0 0.0
        %1413 = vmatpush1.msra.mxu0 0.0
        %1414 = vmatprep.subr.mxu0 0.0
        %1415 = vmatpush1.msra.mxu0 0.0
        %1416 = vmatprep.subr.mxu0 0.0
        %1417 = vmatpush1.msra.mxu0 0.0
        %1418 = vmatprep.subr.mxu0 0.0
        %1419 = vmatpush1.msra.mxu0 0.0
        %1420 = vmatprep.subr.mxu0 0.0
        %1421 = vmatpush1.msra.mxu0 0.0
        %1422 = vmatprep.subr.mxu0 0.0
        %1423 = vmatpush1.msra.mxu0 0.0
        %1424 = vmatprep.subr.mxu0 0.0
        %1425 = vmatpush1.msra.mxu0 0.0
        %1426 = vmatprep.subr.mxu0 0.0
        %1427 = vmatpush1.msra.mxu0 0.0
        %1428 = vmatprep.subr.mxu0 0.0
        %1429 = vmatpush1.msra.mxu0 0.0
        %1430 = vmatprep.subr.mxu0 0.0
        %1431 = vmatpush1.msra.mxu0 0.0
        %1432 = vmatprep.subr.mxu0 0.0
        %1433 = vmatpush1.msra.mxu0 0.0
        %1434 = vmatprep.subr.mxu0 0.0
        %1435 = vmatpush1.msra.mxu0 0.0
        %1436 = vmatprep.subr.mxu0 0.0
        %1437 = vmatpush1.msra.mxu0 0.0
        %1438 = vmatprep.subr.mxu0 0.0
        %1439 = vmatpush1.msra.mxu0 0.0
        %1440 = vmatprep.subr.mxu0 0.0
        %1441 = vmatpush1.msra.mxu0 0.0
        %1442 = vmatprep.subr.mxu0 0.0
        %1443 = vmatpush1.msra.mxu0 0.0
        %1444 = vmatprep.subr.mxu0 0.0
        %1445 = vmatpush1.msra.mxu0 0.0
        %1446 = vmatprep.subr.mxu0 0.0
        %1447 = vmatpush1.msra.mxu0 0.0
        %1448 = vmatprep.subr.mxu0 0.0
        %1449 = vmatpush1.msra.mxu0 0.0
        %1450 = vmatprep.mubr.f32.mxu0 0.0
        %1451 = vmatmul.mubr.f32.gmra.mrb[0].mxu0 %v1291
        %v1452 = vpop.f32.mrb[0].mxu0
        %v1453 = vadd.f32 %v1132, %v1452
        %v1454 = vpop.f32.mrb[0].mxu0
        %1455 = vmatprep.mubr.f32.mxu0 0.0
        %1456 = vmatmul.mubr.f32.gmra.mrb[0].mxu0 %v1294
        %v1457 = vpop.f32.mrb[0].mxu0
        %v1458 = vadd.f32 %v1137, %v1457
        %v1459 = vpop.f32.mrb[0].mxu0
        %1460 = vmatprep.mubr.f32.mxu0 0.0
        %1461 = vmatmul.mubr.f32.gmra.mrb[0].mxu0 %v1297
        %v1462 = vpop.f32.mrb[0].mxu0
        %v1463 = vadd.f32 %v1142, %v1462
        %v1464 = vpop.f32.mrb[0].mxu0
        %1465 = vmatprep.mubr.f32.mxu0 0.0
        %1466 = vmatmul.mubr.f32.gmra.mrb[0].mxu0 %v1300
        %v1467 = vpop.f32.mrb[0].mxu0
        %v1468 = vadd.f32 %v1147, %v1467
        %v1469 = vpop.f32.mrb[0].mxu0
        %1470 = vmatprep.mubr.f32.mxu0 0.0
        %1471 = vmatmul.mubr.f32.gmra.mrb[0].mxu0 %v1303
        %v1472 = vpop.f32.mrb[0].mxu0
        %v1473 = vadd.f32 %v1152, %v1472
        %v1474 = vpop.f32.mrb[0].mxu0
        %1475 = vmatprep.mubr.f32.mxu0 0.0
        %1476 = vmatmul.mubr.f32.gmra.mrb[0].mxu0 %v1306
        %v1477 = vpop.f32.mrb[0].mxu0
        %v1478 = vadd.f32 %v1157, %v1477
        %v1479 = vpop.f32.mrb[0].mxu0
        %1480 = vmatprep.mubr.f32.mxu0 0.0
        %1481 = vmatmul.mubr.f32.gmra.mrb[0].mxu0 %v1309
        %v1482 = vpop.f32.mrb[0].mxu0
        %v1483 = vadd.f32 %v1162, %v1482
        %v1484 = vpop.f32.mrb[0].mxu0
        %1485 = vmatprep.mubr.f32.mxu0 0.0
        %1486 = vmatmul.mubr.f32.gmra.mrb[0].mxu0 %v1312
        %v1487 = vpop.f32.mrb[0].mxu0
        %v1488 = vadd.f32 %v1167, %v1487
        %v1489 = vpop.f32.mrb[0].mxu0
        %1490 = vmatprep.mubr.f32.mxu0 0.0
        %1491 = vmatmul.mubr.f32.gmra.mrb[0].mxu0 %v1315
        %v1492 = vpop.f32.mrb[0].mxu0
        %v1493 = vadd.f32 %v1172, %v1492
        %v1494 = vpop.f32.mrb[0].mxu0
        %1495 = vmatprep.mubr.f32.mxu0 0.0
        %1496 = vmatmul.mubr.f32.gmra.mrb[0].mxu0 %v1318
        %v1497 = vpop.f32.mrb[0].mxu0
        %v1498 = vadd.f32 %v1177, %v1497
        %v1499 = vpop.f32.mrb[0].mxu0
        %1500 = vmatprep.mubr.f32.mxu0 0.0
        %1501 = vmatmul.mubr.f32.gmra.mrb[0].mxu0 %v1321
        %v1502 = vpop.f32.mrb[0].mxu0
        %v1503 = vadd.f32 %v1182, %v1502
        %v1504 = vpop.f32.mrb[0].mxu0
        %1505 = vmatprep.mubr.f32.mxu0 0.0
        %1506 = vmatmul.mubr.f32.gmra.mrb[0].mxu0 %v1324
        %v1507 = vpop.f32.mrb[0].mxu0
        %v1508 = vadd.f32 %v1187, %v1507
        %v1509 = vpop.f32.mrb[0].mxu0
        %1510 = vmatprep.mubr.f32.mxu0 0.0
        %1511 = vmatmul.mubr.f32.gmra.mrb[0].mxu0 %v1327
        %v1512 = vpop.f32.mrb[0].mxu0
        %v1513 = vadd.f32 %v1192, %v1512
        %v1514 = vpop.f32.mrb[0].mxu0
        %1515 = vmatprep.mubr.f32.mxu0 0.0
        %1516 = vmatmul.mubr.f32.gmra.mrb[0].mxu0 %v1330
        %v1517 = vpop.f32.mrb[0].mxu0
        %v1518 = vadd.f32 %v1197, %v1517
        %v1519 = vpop.f32.mrb[0].mxu0
        %1520 = vmatprep.mubr.f32.mxu0 0.0
        %1521 = vmatmul.mubr.f32.gmra.mrb[0].mxu0 %v1333
        %v1522 = vpop.f32.mrb[0].mxu0
        %v1523 = vadd.f32 %v1202, %v1522
        %v1524 = vpop.f32.mrb[0].mxu0
        %1525 = vmatprep.mubr.f32.mxu0 0.0
        %1526 = vmatmul.mubr.f32.gmra.mrb[0].mxu0 %v1336
        %v1527 = vpop.f32.mrb[0].mxu0
        %v1528 = vadd.f32 %v1207, %v1527
        %v1529 = vpop.f32.mrb[0].mxu0
        %1530 = vmatprep.mubr.f32.mxu0 0.0
        %1531 = vmatmul.mubr.f32.gmra.mrb[0].mxu0 %v1339
        %v1532 = vpop.f32.mrb[0].mxu0
        %v1533 = vadd.f32 %v1212, %v1532
        %v1534 = vpop.f32.mrb[0].mxu0
        %1535 = vmatprep.mubr.f32.mxu0 0.0
        %1536 = vmatmul.mubr.f32.gmra.mrb[0].mxu0 %v1342
        %v1537 = vpop.f32.mrb[0].mxu0
        %v1538 = vadd.f32 %v1217, %v1537
        %v1539 = vpop.f32.mrb[0].mxu0
        %1540 = vmatprep.mubr.f32.mxu0 0.0
        %1541 = vmatmul.mubr.f32.gmra.mrb[0].mxu0 %v1345
        %v1542 = vpop.f32.mrb[0].mxu0
        %v1543 = vadd.f32 %v1222, %v1542
        %v1544 = vpop.f32.mrb[0].mxu0
        %1545 = vmatprep.mubr.f32.mxu0 0.0
        %1546 = vmatmul.mubr.f32.gmra.mrb[0].mxu0 %v1348
        %v1547 = vpop.f32.mrb[0].mxu0
        %v1548 = vadd.f32 %v1227, %v1547
        %v1549 = vpop.f32.mrb[0].mxu0
        %1550 = vmatprep.mubr.f32.mxu0 0.0
        %1551 = vmatmul.mubr.f32.gmra.mrb[0].mxu0 %v1351
        %v1552 = vpop.f32.mrb[0].mxu0
        %v1553 = vadd.f32 %v1232, %v1552
        %v1554 = vpop.f32.mrb[0].mxu0
        %1555 = vmatprep.mubr.f32.mxu0 0.0
        %1556 = vmatmul.mubr.f32.gmra.mrb[0].mxu0 %v1354
        %v1557 = vpop.f32.mrb[0].mxu0
        %v1558 = vadd.f32 %v1237, %v1557
        %v1559 = vpop.f32.mrb[0].mxu0
        %1560 = vmatprep.mubr.f32.mxu0 0.0
        %1561 = vmatmul.mubr.f32.gmra.mrb[0].mxu0 %v1357
        %v1562 = vpop.f32.mrb[0].mxu0
        %v1563 = vadd.f32 %v1242, %v1562
        %v1564 = vpop.f32.mrb[0].mxu0
        %1565 = vmatprep.mubr.f32.mxu0 0.0
        %1566 = vmatmul.mubr.f32.gmra.mrb[0].mxu0 %v1360
        %v1567 = vpop.f32.mrb[0].mxu0
        %v1568 = vadd.f32 %v1247, %v1567
        %v1569 = vpop.f32.mrb[0].mxu0
        %1570 = vmatprep.mubr.f32.mxu0 0.0
        %1571 = vmatmul.mubr.f32.gmra.mrb[0].mxu0 %v1363
        %v1572 = vpop.f32.mrb[0].mxu0
        %v1573 = vadd.f32 %v1252, %v1572
        %v1574 = vpop.f32.mrb[0].mxu0
        %1575 = vmatprep.mubr.f32.mxu0 0.0
        %1576 = vmatmul.mubr.f32.gmra.mrb[0].mxu0 %v1366
        %v1577 = vpop.f32.mrb[0].mxu0
        %v1578 = vadd.f32 %v1257, %v1577
        %v1579 = vpop.f32.mrb[0].mxu0
        %1580 = vmatprep.mubr.f32.mxu0 0.0
        %1581 = vmatmul.mubr.f32.gmra.mrb[0].mxu0 %v1369
        %v1582 = vpop.f32.mrb[0].mxu0
        %v1583 = vadd.f32 %v1262, %v1582
        %v1584 = vpop.f32.mrb[0].mxu0
        %1585 = vmatprep.mubr.f32.mxu0 0.0
        %1586 = vmatmul.mubr.f32.gmra.mrb[0].mxu0 %v1372
        %v1587 = vpop.f32.mrb[0].mxu0
        %v1588 = vadd.f32 %v1267, %v1587
        %v1589 = vpop.f32.mrb[0].mxu0
        %1590 = vmatprep.mubr.f32.mxu0 0.0
        %1591 = vmatmul.mubr.f32.gmra.mrb[0].mxu0 %v1375
        %v1592 = vpop.f32.mrb[0].mxu0
        %v1593 = vadd.f32 %v1272, %v1592
        %v1594 = vpop.f32.mrb[0].mxu0
        %1595 = vmatprep.mubr.f32.mxu0 0.0
        %1596 = vmatmul.mubr.f32.gmra.mrb[0].mxu0 %v1378
        %v1597 = vpop.f32.mrb[0].mxu0
        %v1598 = vadd.f32 %v1277, %v1597
        %v1599 = vpop.f32.mrb[0].mxu0
        %1600 = vmatprep.mubr.f32.mxu0 0.0
        %1601 = vmatmul.mubr.f32.gmra.mrb[0].mxu0 %v1381
        %v1602 = vpop.f32.mrb[0].mxu0
        %v1603 = vadd.f32 %v1282, %v1602
        %v1604 = vpop.f32.mrb[0].mxu0
        %1605 = vmatprep.mubr.f32.mxu0 0.0
        %1606 = vmatmul.mubr.f32.gmra.mrb[0].mxu0 %v1384
        %v1607 = vpop.f32.mrb[0].mxu0
        %v1608 = vadd.f32 %v1287, %v1607
        %v1609 = vpop.f32.mrb[0].mxu0
        %1610 = vdwg.mxu0
        %v1611 = vld [vmem:[#allocation2 + $0x9] sm:$0xff]
        %v1612 = vld [vmem:[#allocation2 + $0x11] sm:$0xff]
        %v1613 = vld [vmem:[#allocation2 + $0x19] sm:$0xff]
        %v1614 = vld [vmem:[#allocation2 + $0x21] sm:$0xff]
        %v1615 = vld [vmem:[#allocation2 + $0x29] sm:$0xff]
        %v1616 = vld [vmem:[#allocation2 + $0x31] sm:$0xff]
        %v1617 = vld [vmem:[#allocation2 + $0x39] sm:$0xff]
        %v1618 = vld [vmem:[#allocation2 + $0x41] sm:$0xff]
        %v1619 = vld [vmem:[#allocation2 + $0x49] sm:$0xff]
        %v1620 = vld [vmem:[#allocation2 + $0x51] sm:$0xff]
        %v1621 = vld [vmem:[#allocation2 + $0x59] sm:$0xff]
        %v1622 = vld [vmem:[#allocation2 + $0x61] sm:$0xff]
        %v1623 = vld [vmem:[#allocation2 + $0x69] sm:$0xff]
        %v1624 = vld [vmem:[#allocation2 + $0x71] sm:$0xff]
        %v1625 = vld [vmem:[#allocation2 + $0x79] sm:$0xff]
        %v1626 = vld [vmem:[#allocation2 + $0x81] sm:$0xff]
        %v1627 = vld [vmem:[#allocation2 + $0x89] sm:$0xff]
        %v1628 = vld [vmem:[#allocation2 + $0x91] sm:$0xff]
        %v1629 = vld [vmem:[#allocation2 + $0x99] sm:$0xff]
        %v1630 = vld [vmem:[#allocation2 + $0xa1] sm:$0xff]
        %v1631 = vld [vmem:[#allocation2 + $0xa9] sm:$0xff]
        %v1632 = vld [vmem:[#allocation2 + $0xb1] sm:$0xff]
        %v1633 = vld [vmem:[#allocation2 + $0xb9] sm:$0xff]
        %v1634 = vld [vmem:[#allocation2 + $0xc1] sm:$0xff]
        %v1635 = vld [vmem:[#allocation2 + $0xc9] sm:$0xff]
        %v1636 = vld [vmem:[#allocation2 + $0xd1] sm:$0xff]
        %v1637 = vld [vmem:[#allocation2 + $0xd9] sm:$0xff]
        %v1638 = vld [vmem:[#allocation2 + $0xe1] sm:$0xff]
        %v1639 = vld [vmem:[#allocation2 + $0xe9] sm:$0xff]
        %v1640 = vld [vmem:[#allocation2 + $0xf1] sm:$0xff]
        %v1641 = vld [vmem:[#allocation2 + $0xf9] sm:$0xff]
        %v1642 = vld [vmem:[#allocation2 + $0x101] sm:$0xff]
        %v1643 = vsel %vm696, 1, 0
        %v1644 = vsel %vm697, 1, 0
        %v1645 = vsel %vm698, 1, 0
        %v1646 = vsel %vm699, 1, 0
        %v1647 = vsel %vm700, 1, 0
        %v1648 = vsel %vm701, 1, 0
        %v1649 = vsel %vm702, 1, 0
        %v1650 = vsel %vm703, 1, 0
        %v1651 = vsel %vm704, 1, 0
        %v1652 = vsel %vm705, 1, 0
        %v1653 = vsel %vm706, 1, 0
        %v1654 = vsel %vm707, 1, 0
        %v1655 = vsel %vm708, 1, 0
        %v1656 = vsel %vm709, 1, 0
        %v1657 = vsel %vm710, 1, 0
        %v1658 = vsel %vm711, 1, 0
        %v1659 = vsel %vm712, 1, 0
        %v1660 = vsel %vm713, 1, 0
        %v1661 = vsel %vm714, 1, 0
        %v1662 = vsel %vm715, 1, 0
        %v1663 = vsel %vm716, 1, 0
        %v1664 = vsel %vm717, 1, 0
        %v1665 = vsel %vm718, 1, 0
        %v1666 = vsel %vm719, 1, 0
        %v1667 = vsel %vm720, 1, 0
        %v1668 = vsel %vm721, 1, 0
        %v1669 = vsel %vm722, 1, 0
        %v1670 = vsel %vm723, 1, 0
        %v1671 = vsel %vm724, 1, 0
        %v1672 = vsel %vm725, 1, 0
        %v1673 = vsel %vm726, 1, 0
        %v1674 = vsel %vm727, 1, 0
        %vm1675 = vcmp.eq.s32.totalorder %v1643, 1
        %vm1676 = vcmp.eq.s32.totalorder %v1644, 1
        %vm1677 = vcmp.eq.s32.totalorder %v1645, 1
        %vm1678 = vcmp.eq.s32.totalorder %v1646, 1
        %vm1679 = vcmp.eq.s32.totalorder %v1647, 1
        %vm1680 = vcmp.eq.s32.totalorder %v1648, 1
        %vm1681 = vcmp.eq.s32.totalorder %v1649, 1
        %vm1682 = vcmp.eq.s32.totalorder %v1650, 1
        %vm1683 = vcmp.eq.s32.totalorder %v1651, 1
        %vm1684 = vcmp.eq.s32.totalorder %v1652, 1
        %vm1685 = vcmp.eq.s32.totalorder %v1653, 1
        %vm1686 = vcmp.eq.s32.totalorder %v1654, 1
        %vm1687 = vcmp.eq.s32.totalorder %v1655, 1
        %vm1688 = vcmp.eq.s32.totalorder %v1656, 1
        %vm1689 = vcmp.eq.s32.totalorder %v1657, 1
        %vm1690 = vcmp.eq.s32.totalorder %v1658, 1
        %vm1691 = vcmp.eq.s32.totalorder %v1659, 1
        %vm1692 = vcmp.eq.s32.totalorder %v1660, 1
        %vm1693 = vcmp.eq.s32.totalorder %v1661, 1
        %vm1694 = vcmp.eq.s32.totalorder %v1662, 1
        %vm1695 = vcmp.eq.s32.totalorder %v1663, 1
        %vm1696 = vcmp.eq.s32.totalorder %v1664, 1
        %vm1697 = vcmp.eq.s32.totalorder %v1665, 1
        %vm1698 = vcmp.eq.s32.totalorder %v1666, 1
        %vm1699 = vcmp.eq.s32.totalorder %v1667, 1
        %vm1700 = vcmp.eq.s32.totalorder %v1668, 1
        %vm1701 = vcmp.eq.s32.totalorder %v1669, 1
        %vm1702 = vcmp.eq.s32.totalorder %v1670, 1
        %vm1703 = vcmp.eq.s32.totalorder %v1671, 1
        %vm1704 = vcmp.eq.s32.totalorder %v1672, 1
        %vm1705 = vcmp.eq.s32.totalorder %v1673, 1
        %vm1706 = vcmp.eq.s32.totalorder %v1674, 1
        %v1707 = vsel %vm1675, %v1611, 0.0
        %v1708 = vsel %vm1676, %v1612, 0.0
        %v1709 = vsel %vm1677, %v1613, 0.0
        %v1710 = vsel %vm1678, %v1614, 0.0
        %v1711 = vsel %vm1679, %v1615, 0.0
        %v1712 = vsel %vm1680, %v1616, 0.0
        %v1713 = vsel %vm1681, %v1617, 0.0
        %v1714 = vsel %vm1682, %v1618, 0.0
        %v1715 = vsel %vm1683, %v1619, 0.0
        %v1716 = vsel %vm1684, %v1620, 0.0
        %v1717 = vsel %vm1685, %v1621, 0.0
        %v1718 = vsel %vm1686, %v1622, 0.0
        %v1719 = vsel %vm1687, %v1623, 0.0
        %v1720 = vsel %vm1688, %v1624, 0.0
        %v1721 = vsel %vm1689, %v1625, 0.0
        %v1722 = vsel %vm1690, %v1626, 0.0
        %v1723 = vsel %vm1691, %v1627, 0.0
        %v1724 = vsel %vm1692, %v1628, 0.0
        %v1725 = vsel %vm1693, %v1629, 0.0
        %v1726 = vsel %vm1694, %v1630, 0.0
        %v1727 = vsel %vm1695, %v1631, 0.0
        %v1728 = vsel %vm1696, %v1632, 0.0
        %v1729 = vsel %vm1697, %v1633, 0.0
        %v1730 = vsel %vm1698, %v1634, 0.0
        %v1731 = vsel %vm1699, %v1635, 0.0
        %v1732 = vsel %vm1700, %v1636, 0.0
        %v1733 = vsel %vm1701, %v1637, 0.0
        %v1734 = vsel %vm1702, %v1638, 0.0
        %v1735 = vsel %vm1703, %v1639, 0.0
        %v1736 = vsel %vm1704, %v1640, 0.0
        %v1737 = vsel %vm1705, %v1641, 0.0
        %v1738 = vsel %vm1706, %v1642, 0.0
        %s1739 = scalar_lea.vmem %s1, 128
        %v1740 = vld [vmem:[%s1739] sm:$0xff]
        %v1741 = vld [vmem:[%s1739 + $0x8] sm:$0xff]
        %v1742 = vld [vmem:[%s1739 + $0x10] sm:$0xff]
        %v1743 = vld [vmem:[%s1739 + $0x18] sm:$0xff]
        %v1744 = vld [vmem:[%s1739 + $0x20] sm:$0xff]
        %v1745 = vld [vmem:[%s1739 + $0x28] sm:$0xff]
        %v1746 = vld [vmem:[%s1739 + $0x30] sm:$0xff]
        %v1747 = vld [vmem:[%s1739 + $0x38] sm:$0xff]
        %v1749 = vsel %vm240, %v1707, 0
        %v1752 = vsel %vm240, %v1708, 0
        %v1755 = vsel %vm240, %v1709, 0
        %v1758 = vsel %vm240, %v1710, 0
        %v1761 = vsel %vm240, %v1711, 0
        %v1764 = vsel %vm240, %v1712, 0
        %v1767 = vsel %vm240, %v1713, 0
        %v1770 = vsel %vm240, %v1714, 0
        %v1773 = vsel %vm240, %v1715, 0
        %v1776 = vsel %vm240, %v1716, 0
        %v1779 = vsel %vm240, %v1717, 0
        %v1782 = vsel %vm240, %v1718, 0
        %v1785 = vsel %vm240, %v1719, 0
        %v1788 = vsel %vm240, %v1720, 0
        %v1791 = vsel %vm240, %v1721, 0
        %v1794 = vsel %vm240, %v1722, 0
        %v1797 = vsel %vm240, %v1723, 0
        %v1800 = vsel %vm240, %v1724, 0
        %v1803 = vsel %vm240, %v1725, 0
        %v1806 = vsel %vm240, %v1726, 0
        %v1809 = vsel %vm240, %v1727, 0
        %v1812 = vsel %vm240, %v1728, 0
        %v1815 = vsel %vm240, %v1729, 0
        %v1818 = vsel %vm240, %v1730, 0
        %v1821 = vsel %vm240, %v1731, 0
        %v1824 = vsel %vm240, %v1732, 0
        %v1827 = vsel %vm240, %v1733, 0
        %v1830 = vsel %vm240, %v1734, 0
        %v1833 = vsel %vm240, %v1735, 0
        %v1836 = vsel %vm240, %v1736, 0
        %v1839 = vsel %vm240, %v1737, 0
        %v1842 = vsel %vm240, %v1738, 0
        %1844 = vmatprep.subr.mxu0 0.0
        %1845 = vmatpush1.msra.mxu0 %v1740
        %1846 = vmatprep.subr.mxu0 0.0
        %1847 = vmatpush1.msra.mxu0 %v1741
        %1848 = vmatprep.subr.mxu0 0.0
        %1849 = vmatpush1.msra.mxu0 %v1742
        %1850 = vmatprep.subr.mxu0 0.0
        %1851 = vmatpush1.msra.mxu0 %v1743
        %1852 = vmatprep.subr.mxu0 0.0
        %1853 = vmatpush1.msra.mxu0 %v1744
        %1854 = vmatprep.subr.mxu0 0.0
        %1855 = vmatpush1.msra.mxu0 %v1745
        %1856 = vmatprep.subr.mxu0 0.0
        %1857 = vmatpush1.msra.mxu0 %v1746
        %1858 = vmatprep.subr.mxu0 0.0
        %1859 = vmatpush1.msra.mxu0 %v1747
        %1860 = vmatprep.subr.mxu0 0.0
        %1861 = vmatpush1.msra.mxu0 0.0
        %1862 = vmatprep.subr.mxu0 0.0
        %1863 = vmatpush1.msra.mxu0 0.0
        %1864 = vmatprep.subr.mxu0 0.0
        %1865 = vmatpush1.msra.mxu0 0.0
        %1866 = vmatprep.subr.mxu0 0.0
        %1867 = vmatpush1.msra.mxu0 0.0
        %1868 = vmatprep.subr.mxu0 0.0
        %1869 = vmatpush1.msra.mxu0 0.0
        %1870 = vmatprep.subr.mxu0 0.0
        %1871 = vmatpush1.msra.mxu0 0.0
        %1872 = vmatprep.subr.mxu0 0.0
        %1873 = vmatpush1.msra.mxu0 0.0
        %1874 = vmatprep.subr.mxu0 0.0
        %1875 = vmatpush1.msra.mxu0 0.0
        %1876 = vmatprep.subr.mxu0 0.0
        %1877 = vmatpush1.msra.mxu0 0.0
        %1878 = vmatprep.subr.mxu0 0.0
        %1879 = vmatpush1.msra.mxu0 0.0
        %1880 = vmatprep.subr.mxu0 0.0
        %1881 = vmatpush1.msra.mxu0 0.0
        %1882 = vmatprep.subr.mxu0 0.0
        %1883 = vmatpush1.msra.mxu0 0.0
        %1884 = vmatprep.subr.mxu0 0.0
        %1885 = vmatpush1.msra.mxu0 0.0
        %1886 = vmatprep.subr.mxu0 0.0
        %1887 = vmatpush1.msra.mxu0 0.0
        %1888 = vmatprep.subr.mxu0 0.0
        %1889 = vmatpush1.msra.mxu0 0.0
        %1890 = vmatprep.subr.mxu0 0.0
        %1891 = vmatpush1.msra.mxu0 0.0
        %1892 = vmatprep.subr.mxu0 0.0
        %1893 = vmatpush1.msra.mxu0 0.0
        %1894 = vmatprep.subr.mxu0 0.0
        %1895 = vmatpush1.msra.mxu0 0.0
        %1896 = vmatprep.subr.mxu0 0.0
        %1897 = vmatpush1.msra.mxu0 0.0
        %1898 = vmatprep.subr.mxu0 0.0
        %1899 = vmatpush1.msra.mxu0 0.0
        %1900 = vmatprep.subr.mxu0 0.0
        %1901 = vmatpush1.msra.mxu0 0.0
        %1902 = vmatprep.subr.mxu0 0.0
        %1903 = vmatpush1.msra.mxu0 0.0
        %1904 = vmatprep.subr.mxu0 0.0
        %1905 = vmatpush1.msra.mxu0 0.0
        %1906 = vmatprep.subr.mxu0 0.0
        %1907 = vmatpush1.msra.mxu0 0.0
        %1908 = vmatprep.mubr.f32.mxu0 0.0
        %1909 = vmatmul.mubr.f32.gmra.mrb[0].mxu0 %v1749
        %v1910 = vpop.f32.mrb[0].mxu0
        %v1911 = vadd.f32 0.0, %v1910
        %v1912 = vpop.f32.mrb[0].mxu0
        %1913 = vmatprep.mubr.f32.mxu0 0.0
        %1914 = vmatmul.mubr.f32.gmra.mrb[0].mxu0 %v1752
        %v1915 = vpop.f32.mrb[0].mxu0
        %v1916 = vadd.f32 0.0, %v1915
        %v1917 = vpop.f32.mrb[0].mxu0
        %1918 = vmatprep.mubr.f32.mxu0 0.0
        %1919 = vmatmul.mubr.f32.gmra.mrb[0].mxu0 %v1755
        %v1920 = vpop.f32.mrb[0].mxu0
        %v1921 = vadd.f32 0.0, %v1920
        %v1922 = vpop.f32.mrb[0].mxu0
        %1923 = vmatprep.mubr.f32.mxu0 0.0
        %1924 = vmatmul.mubr.f32.gmra.mrb[0].mxu0 %v1758
        %v1925 = vpop.f32.mrb[0].mxu0
        %v1926 = vadd.f32 0.0, %v1925
        %v1927 = vpop.f32.mrb[0].mxu0
        %1928 = vmatprep.mubr.f32.mxu0 0.0
        %1929 = vmatmul.mubr.f32.gmra.mrb[0].mxu0 %v1761
        %v1930 = vpop.f32.mrb[0].mxu0
        %v1931 = vadd.f32 0.0, %v1930
        %v1932 = vpop.f32.mrb[0].mxu0
        %1933 = vmatprep.mubr.f32.mxu0 0.0
        %1934 = vmatmul.mubr.f32.gmra.mrb[0].mxu0 %v1764
        %v1935 = vpop.f32.mrb[0].mxu0
        %v1936 = vadd.f32 0.0, %v1935
        %v1937 = vpop.f32.mrb[0].mxu0
        %1938 = vmatprep.mubr.f32.mxu0 0.0
        %1939 = vmatmul.mubr.f32.gmra.mrb[0].mxu0 %v1767
        %v1940 = vpop.f32.mrb[0].mxu0
        %v1941 = vadd.f32 0.0, %v1940
        %v1942 = vpop.f32.mrb[0].mxu0
        %1943 = vmatprep.mubr.f32.mxu0 0.0
        %1944 = vmatmul.mubr.f32.gmra.mrb[0].mxu0 %v1770
        %v1945 = vpop.f32.mrb[0].mxu0
        %v1946 = vadd.f32 0.0, %v1945
        %v1947 = vpop.f32.mrb[0].mxu0
        %1948 = vmatprep.mubr.f32.mxu0 0.0
        %1949 = vmatmul.mubr.f32.gmra.mrb[0].mxu0 %v1773
        %v1950 = vpop.f32.mrb[0].mxu0
        %v1951 = vadd.f32 0.0, %v1950
        %v1952 = vpop.f32.mrb[0].mxu0
        %1953 = vmatprep.mubr.f32.mxu0 0.0
        %1954 = vmatmul.mubr.f32.gmra.mrb[0].mxu0 %v1776
        %v1955 = vpop.f32.mrb[0].mxu0
        %v1956 = vadd.f32 0.0, %v1955
        %v1957 = vpop.f32.mrb[0].mxu0
        %1958 = vmatprep.mubr.f32.mxu0 0.0
        %1959 = vmatmul.mubr.f32.gmra.mrb[0].mxu0 %v1779
        %v1960 = vpop.f32.mrb[0].mxu0
        %v1961 = vadd.f32 0.0, %v1960
        %v1962 = vpop.f32.mrb[0].mxu0
        %1963 = vmatprep.mubr.f32.mxu0 0.0
        %1964 = vmatmul.mubr.f32.gmra.mrb[0].mxu0 %v1782
        %v1965 = vpop.f32.mrb[0].mxu0
        %v1966 = vadd.f32 0.0, %v1965
        %v1967 = vpop.f32.mrb[0].mxu0
        %1968 = vmatprep.mubr.f32.mxu0 0.0
        %1969 = vmatmul.mubr.f32.gmra.mrb[0].mxu0 %v1785
        %v1970 = vpop.f32.mrb[0].mxu0
        %v1971 = vadd.f32 0.0, %v1970
        %v1972 = vpop.f32.mrb[0].mxu0
        %1973 = vmatprep.mubr.f32.mxu0 0.0
        %1974 = vmatmul.mubr.f32.gmra.mrb[0].mxu0 %v1788
        %v1975 = vpop.f32.mrb[0].mxu0
        %v1976 = vadd.f32 0.0, %v1975
        %v1977 = vpop.f32.mrb[0].mxu0
        %1978 = vmatprep.mubr.f32.mxu0 0.0
        %1979 = vmatmul.mubr.f32.gmra.mrb[0].mxu0 %v1791
        %v1980 = vpop.f32.mrb[0].mxu0
        %v1981 = vadd.f32 0.0, %v1980
        %v1982 = vpop.f32.mrb[0].mxu0
        %1983 = vmatprep.mubr.f32.mxu0 0.0
        %1984 = vmatmul.mubr.f32.gmra.mrb[0].mxu0 %v1794
        %v1985 = vpop.f32.mrb[0].mxu0
        %v1986 = vadd.f32 0.0, %v1985
        %v1987 = vpop.f32.mrb[0].mxu0
        %1988 = vmatprep.mubr.f32.mxu0 0.0
        %1989 = vmatmul.mubr.f32.gmra.mrb[0].mxu0 %v1797
        %v1990 = vpop.f32.mrb[0].mxu0
        %v1991 = vadd.f32 0.0, %v1990
        %v1992 = vpop.f32.mrb[0].mxu0
        %1993 = vmatprep.mubr.f32.mxu0 0.0
        %1994 = vmatmul.mubr.f32.gmra.mrb[0].mxu0 %v1800
        %v1995 = vpop.f32.mrb[0].mxu0
        %v1996 = vadd.f32 0.0, %v1995
        %v1997 = vpop.f32.mrb[0].mxu0
        %1998 = vmatprep.mubr.f32.mxu0 0.0
        %1999 = vmatmul.mubr.f32.gmra.mrb[0].mxu0 %v1803
        %v2000 = vpop.f32.mrb[0].mxu0
        %v2001 = vadd.f32 0.0, %v2000
        %v2002 = vpop.f32.mrb[0].mxu0
        %2003 = vmatprep.mubr.f32.mxu0 0.0
        %2004 = vmatmul.mubr.f32.gmra.mrb[0].mxu0 %v1806
        %v2005 = vpop.f32.mrb[0].mxu0
        %v2006 = vadd.f32 0.0, %v2005
        %v2007 = vpop.f32.mrb[0].mxu0
        %2008 = vmatprep.mubr.f32.mxu0 0.0
        %2009 = vmatmul.mubr.f32.gmra.mrb[0].mxu0 %v1809
        %v2010 = vpop.f32.mrb[0].mxu0
        %v2011 = vadd.f32 0.0, %v2010
        %v2012 = vpop.f32.mrb[0].mxu0
        %2013 = vmatprep.mubr.f32.mxu0 0.0
        %2014 = vmatmul.mubr.f32.gmra.mrb[0].mxu0 %v1812
        %v2015 = vpop.f32.mrb[0].mxu0
        %v2016 = vadd.f32 0.0, %v2015
        %v2017 = vpop.f32.mrb[0].mxu0
        %2018 = vmatprep.mubr.f32.mxu0 0.0
        %2019 = vmatmul.mubr.f32.gmra.mrb[0].mxu0 %v1815
        %v2020 = vpop.f32.mrb[0].mxu0
        %v2021 = vadd.f32 0.0, %v2020
        %v2022 = vpop.f32.mrb[0].mxu0
        %2023 = vmatprep.mubr.f32.mxu0 0.0
        %2024 = vmatmul.mubr.f32.gmra.mrb[0].mxu0 %v1818
        %v2025 = vpop.f32.mrb[0].mxu0
        %v2026 = vadd.f32 0.0, %v2025
        %v2027 = vpop.f32.mrb[0].mxu0
        %2028 = vmatprep.mubr.f32.mxu0 0.0
        %2029 = vmatmul.mubr.f32.gmra.mrb[0].mxu0 %v1821
        %v2030 = vpop.f32.mrb[0].mxu0
        %v2031 = vadd.f32 0.0, %v2030
        %v2032 = vpop.f32.mrb[0].mxu0
        %2033 = vmatprep.mubr.f32.mxu0 0.0
        %2034 = vmatmul.mubr.f32.gmra.mrb[0].mxu0 %v1824
        %v2035 = vpop.f32.mrb[0].mxu0
        %v2036 = vadd.f32 0.0, %v2035
        %v2037 = vpop.f32.mrb[0].mxu0
        %2038 = vmatprep.mubr.f32.mxu0 0.0
        %2039 = vmatmul.mubr.f32.gmra.mrb[0].mxu0 %v1827
        %v2040 = vpop.f32.mrb[0].mxu0
        %v2041 = vadd.f32 0.0, %v2040
        %v2042 = vpop.f32.mrb[0].mxu0
        %2043 = vmatprep.mubr.f32.mxu0 0.0
        %2044 = vmatmul.mubr.f32.gmra.mrb[0].mxu0 %v1830
        %v2045 = vpop.f32.mrb[0].mxu0
        %v2046 = vadd.f32 0.0, %v2045
        %v2047 = vpop.f32.mrb[0].mxu0
        %2048 = vmatprep.mubr.f32.mxu0 0.0
        %2049 = vmatmul.mubr.f32.gmra.mrb[0].mxu0 %v1833
        %v2050 = vpop.f32.mrb[0].mxu0
        %v2051 = vadd.f32 0.0, %v2050
        %v2052 = vpop.f32.mrb[0].mxu0
        %2053 = vmatprep.mubr.f32.mxu0 0.0
        %2054 = vmatmul.mubr.f32.gmra.mrb[0].mxu0 %v1836
        %v2055 = vpop.f32.mrb[0].mxu0
        %v2056 = vadd.f32 0.0, %v2055
        %v2057 = vpop.f32.mrb[0].mxu0
        %2058 = vmatprep.mubr.f32.mxu0 0.0
        %2059 = vmatmul.mubr.f32.gmra.mrb[0].mxu0 %v1839
        %v2060 = vpop.f32.mrb[0].mxu0
        %v2061 = vadd.f32 0.0, %v2060
        %v2062 = vpop.f32.mrb[0].mxu0
        %2063 = vmatprep.mubr.f32.mxu0 0.0
        %2064 = vmatmul.mubr.f32.gmra.mrb[0].mxu0 %v1842
        %v2065 = vpop.f32.mrb[0].mxu0
        %v2066 = vadd.f32 0.0, %v2065
        %v2067 = vpop.f32.mrb[0].mxu0
        %2068 = vdwg.mxu0
        %v2069 = vadd.f32 %v1453, %v1911
        %v2070 = vadd.f32 %v1458, %v1916
        %v2071 = vadd.f32 %v1463, %v1921
        %v2072 = vadd.f32 %v1468, %v1926
        %v2073 = vadd.f32 %v1473, %v1931
        %v2074 = vadd.f32 %v1478, %v1936
        %v2075 = vadd.f32 %v1483, %v1941
        %v2076 = vadd.f32 %v1488, %v1946
        %v2077 = vadd.f32 %v1493, %v1951
        %v2078 = vadd.f32 %v1498, %v1956
        %v2079 = vadd.f32 %v1503, %v1961
        %v2080 = vadd.f32 %v1508, %v1966
        %v2081 = vadd.f32 %v1513, %v1971
        %v2082 = vadd.f32 %v1518, %v1976
        %v2083 = vadd.f32 %v1523, %v1981
        %v2084 = vadd.f32 %v1528, %v1986
        %v2085 = vadd.f32 %v1533, %v1991
        %v2086 = vadd.f32 %v1538, %v1996
        %v2087 = vadd.f32 %v1543, %v2001
        %v2088 = vadd.f32 %v1548, %v2006
        %v2089 = vadd.f32 %v1553, %v2011
        %v2090 = vadd.f32 %v1558, %v2016
        %v2091 = vadd.f32 %v1563, %v2021
        %v2092 = vadd.f32 %v1568, %v2026
        %v2093 = vadd.f32 %v1573, %v2031
        %v2094 = vadd.f32 %v1578, %v2036
        %v2095 = vadd.f32 %v1583, %v2041
        %v2096 = vadd.f32 %v1588, %v2046
        %v2097 = vadd.f32 %v1593, %v2051
        %v2098 = vadd.f32 %v1598, %v2056
        %v2099 = vadd.f32 %v1603, %v2061
        %v2100 = vadd.f32 %v1608, %v2066
        %v2101 = vld [vmem:[#allocation2 + $0x17] sm:$0xff]
        %v2102 = vld [vmem:[#allocation2 + $0x1f] sm:$0xff]
        %v2103 = vld [vmem:[#allocation2 + $0x27] sm:$0xff]
        %v2104 = vld [vmem:[#allocation2 + $0x2f] sm:$0xff]
        %v2105 = vld [vmem:[#allocation2 + $0x37] sm:$0xff]
        %v2106 = vld [vmem:[#allocation2 + $0x3f] sm:$0xff]
        %v2107 = vld [vmem:[#allocation2 + $0x47] sm:$0xff]
        %v2108 = vld [vmem:[#allocation2 + $0x4f] sm:$0xff]
        %v2109 = vld [vmem:[#allocation2 + $0x57] sm:$0xff]
        %v2110 = vld [vmem:[#allocation2 + $0x5f] sm:$0xff]
        %v2111 = vld [vmem:[#allocation2 + $0x67] sm:$0xff]
        %v2112 = vld [vmem:[#allocation2 + $0x6f] sm:$0xff]
        %v2113 = vld [vmem:[#allocation2 + $0x77] sm:$0xff]
        %v2114 = vld [vmem:[#allocation2 + $0x7f] sm:$0xff]
        %v2115 = vld [vmem:[#allocation2 + $0x87] sm:$0xff]
        %v2116 = vld [vmem:[#allocation2 + $0x8f] sm:$0xff]
        %v2117 = vld [vmem:[#allocation2 + $0x97] sm:$0xff]
        %v2118 = vld [vmem:[#allocation2 + $0x9f] sm:$0xff]
        %v2119 = vld [vmem:[#allocation2 + $0xa7] sm:$0xff]
        %v2120 = vld [vmem:[#allocation2 + $0xaf] sm:$0xff]
        %v2121 = vld [vmem:[#allocation2 + $0xb7] sm:$0xff]
        %v2122 = vld [vmem:[#allocation2 + $0xbf] sm:$0xff]
        %v2123 = vld [vmem:[#allocation2 + $0xc7] sm:$0xff]
        %v2124 = vld [vmem:[#allocation2 + $0xcf] sm:$0xff]
        %v2125 = vld [vmem:[#allocation2 + $0xd7] sm:$0xff]
        %v2126 = vld [vmem:[#allocation2 + $0xdf] sm:$0xff]
        %v2127 = vld [vmem:[#allocation2 + $0xe7] sm:$0xff]
        %v2128 = vld [vmem:[#allocation2 + $0xef] sm:$0xff]
        %v2129 = vld [vmem:[#allocation2 + $0xf7] sm:$0xff]
        %v2130 = vld [vmem:[#allocation2 + $0xff] sm:$0xff]
        %v2131 = vld [vmem:[#allocation2 + $0x107] sm:$0xff]
        %v2132 = vld [vmem:[#allocation2 + $0x10f] sm:$0xff]
        %v2133 = vsel %vm856, %v2101, 0.0
        %v2134 = vsel %vm857, %v2102, 0.0
        %v2135 = vsel %vm858, %v2103, 0.0
        %v2136 = vsel %vm859, %v2104, 0.0
        %v2137 = vsel %vm860, %v2105, 0.0
        %v2138 = vsel %vm861, %v2106, 0.0
        %v2139 = vsel %vm862, %v2107, 0.0
        %v2140 = vsel %vm863, %v2108, 0.0
        %v2141 = vsel %vm864, %v2109, 0.0
        %v2142 = vsel %vm865, %v2110, 0.0
        %v2143 = vsel %vm866, %v2111, 0.0
        %v2144 = vsel %vm867, %v2112, 0.0
        %v2145 = vsel %vm868, %v2113, 0.0
        %v2146 = vsel %vm869, %v2114, 0.0
        %v2147 = vsel %vm870, %v2115, 0.0
        %v2148 = vsel %vm871, %v2116, 0.0
        %v2149 = vsel %vm872, %v2117, 0.0
        %v2150 = vsel %vm873, %v2118, 0.0
        %v2151 = vsel %vm874, %v2119, 0.0
        %v2152 = vsel %vm875, %v2120, 0.0
        %v2153 = vsel %vm876, %v2121, 0.0
        %v2154 = vsel %vm877, %v2122, 0.0
        %v2155 = vsel %vm878, %v2123, 0.0
        %v2156 = vsel %vm879, %v2124, 0.0
        %v2157 = vsel %vm880, %v2125, 0.0
        %v2158 = vsel %vm881, %v2126, 0.0
        %v2159 = vsel %vm882, %v2127, 0.0
        %v2160 = vsel %vm883, %v2128, 0.0
        %v2161 = vsel %vm884, %v2129, 0.0
        %v2162 = vsel %vm885, %v2130, 0.0
        %v2163 = vsel %vm886, %v2131, 0.0
        %v2164 = vsel %vm887, %v2132, 0.0
        %s2165 = scalar_lea.vmem %s1, 192
        %v2166 = vld [vmem:[%s2165] sm:$0xff]
        %v2167 = vld [vmem:[%s2165 + $0x8] sm:$0xff]
        %v2168 = vld [vmem:[%s2165 + $0x10] sm:$0xff]
        %v2169 = vld [vmem:[%s2165 + $0x18] sm:$0xff]
        %v2170 = vld [vmem:[%s2165 + $0x20] sm:$0xff]
        %v2171 = vld [vmem:[%s2165 + $0x28] sm:$0xff]
        %v2172 = vld [vmem:[%s2165 + $0x30] sm:$0xff]
        %v2173 = vld [vmem:[%s2165 + $0x38] sm:$0xff]
        %v2175 = vsel %vm240, %v2133, 0
        %v2178 = vsel %vm240, %v2134, 0
        %v2181 = vsel %vm240, %v2135, 0
        %v2184 = vsel %vm240, %v2136, 0
        %v2187 = vsel %vm240, %v2137, 0
        %v2190 = vsel %vm240, %v2138, 0
        %v2193 = vsel %vm240, %v2139, 0
        %v2196 = vsel %vm240, %v2140, 0
        %v2199 = vsel %vm240, %v2141, 0
        %v2202 = vsel %vm240, %v2142, 0
        %v2205 = vsel %vm240, %v2143, 0
        %v2208 = vsel %vm240, %v2144, 0
        %v2211 = vsel %vm240, %v2145, 0
        %v2214 = vsel %vm240, %v2146, 0
        %v2217 = vsel %vm240, %v2147, 0
        %v2220 = vsel %vm240, %v2148, 0
        %v2223 = vsel %vm240, %v2149, 0
        %v2226 = vsel %vm240, %v2150, 0
        %v2229 = vsel %vm240, %v2151, 0
        %v2232 = vsel %vm240, %v2152, 0
        %v2235 = vsel %vm240, %v2153, 0
        %v2238 = vsel %vm240, %v2154, 0
        %v2241 = vsel %vm240, %v2155, 0
        %v2244 = vsel %vm240, %v2156, 0
        %v2247 = vsel %vm240, %v2157, 0
        %v2250 = vsel %vm240, %v2158, 0
        %v2253 = vsel %vm240, %v2159, 0
        %v2256 = vsel %vm240, %v2160, 0
        %v2259 = vsel %vm240, %v2161, 0
        %v2262 = vsel %vm240, %v2162, 0
        %v2265 = vsel %vm240, %v2163, 0
        %v2268 = vsel %vm240, %v2164, 0
        %2270 = vmatprep.subr.mxu0 0.0
        %2271 = vmatpush1.msra.mxu0 %v2166
        %2272 = vmatprep.subr.mxu0 0.0
        %2273 = vmatpush1.msra.mxu0 %v2167
        %2274 = vmatprep.subr.mxu0 0.0
        %2275 = vmatpush1.msra.mxu0 %v2168
        %2276 = vmatprep.subr.mxu0 0.0
        %2277 = vmatpush1.msra.mxu0 %v2169
        %2278 = vmatprep.subr.mxu0 0.0
        %2279 = vmatpush1.msra.mxu0 %v2170
        %2280 = vmatprep.subr.mxu0 0.0
        %2281 = vmatpush1.msra.mxu0 %v2171
        %2282 = vmatprep.subr.mxu0 0.0
        %2283 = vmatpush1.msra.mxu0 %v2172
        %2284 = vmatprep.subr.mxu0 0.0
        %2285 = vmatpush1.msra.mxu0 %v2173
        %2286 = vmatprep.subr.mxu0 0.0
        %2287 = vmatpush1.msra.mxu0 0.0
        %2288 = vmatprep.subr.mxu0 0.0
        %2289 = vmatpush1.msra.mxu0 0.0
        %2290 = vmatprep.subr.mxu0 0.0
        %2291 = vmatpush1.msra.mxu0 0.0
        %2292 = vmatprep.subr.mxu0 0.0
        %2293 = vmatpush1.msra.mxu0 0.0
        %2294 = vmatprep.subr.mxu0 0.0
        %2295 = vmatpush1.msra.mxu0 0.0
        %2296 = vmatprep.subr.mxu0 0.0
        %2297 = vmatpush1.msra.mxu0 0.0
        %2298 = vmatprep.subr.mxu0 0.0
        %2299 = vmatpush1.msra.mxu0 0.0
        %2300 = vmatprep.subr.mxu0 0.0
        %2301 = vmatpush1.msra.mxu0 0.0
        %2302 = vmatprep.subr.mxu0 0.0
        %2303 = vmatpush1.msra.mxu0 0.0
        %2304 = vmatprep.subr.mxu0 0.0
        %2305 = vmatpush1.msra.mxu0 0.0
        %2306 = vmatprep.subr.mxu0 0.0
        %2307 = vmatpush1.msra.mxu0 0.0
        %2308 = vmatprep.subr.mxu0 0.0
        %2309 = vmatpush1.msra.mxu0 0.0
        %2310 = vmatprep.subr.mxu0 0.0
        %2311 = vmatpush1.msra.mxu0 0.0
        %2312 = vmatprep.subr.mxu0 0.0
        %2313 = vmatpush1.msra.mxu0 0.0
        %2314 = vmatprep.subr.mxu0 0.0
        %2315 = vmatpush1.msra.mxu0 0.0
        %2316 = vmatprep.subr.mxu0 0.0
        %2317 = vmatpush1.msra.mxu0 0.0
        %2318 = vmatprep.subr.mxu0 0.0
        %2319 = vmatpush1.msra.mxu0 0.0
        %2320 = vmatprep.subr.mxu0 0.0
        %2321 = vmatpush1.msra.mxu0 0.0
        %2322 = vmatprep.subr.mxu0 0.0
        %2323 = vmatpush1.msra.mxu0 0.0
        %2324 = vmatprep.subr.mxu0 0.0
        %2325 = vmatpush1.msra.mxu0 0.0
        %2326 = vmatprep.subr.mxu0 0.0
        %2327 = vmatpush1.msra.mxu0 0.0
        %2328 = vmatprep.subr.mxu0 0.0
        %2329 = vmatpush1.msra.mxu0 0.0
        %2330 = vmatprep.subr.mxu0 0.0
        %2331 = vmatpush1.msra.mxu0 0.0
        %2332 = vmatprep.subr.mxu0 0.0
        %2333 = vmatpush1.msra.mxu0 0.0
        %2334 = vmatprep.mubr.f32.mxu0 0.0
        %2335 = vmatmul.mubr.f32.gmra.mrb[0].mxu0 %v2175
        %v2336 = vpop.f32.mrb[0].mxu0
        %v2337 = vadd.f32 0.0, %v2336
        %v2338 = vpop.f32.mrb[0].mxu0
        %2339 = vmatprep.mubr.f32.mxu0 0.0
        %2340 = vmatmul.mubr.f32.gmra.mrb[0].mxu0 %v2178
        %v2341 = vpop.f32.mrb[0].mxu0
        %v2342 = vadd.f32 0.0, %v2341
        %v2343 = vpop.f32.mrb[0].mxu0
        %2344 = vmatprep.mubr.f32.mxu0 0.0
        %2345 = vmatmul.mubr.f32.gmra.mrb[0].mxu0 %v2181
        %v2346 = vpop.f32.mrb[0].mxu0
        %v2347 = vadd.f32 0.0, %v2346
        %v2348 = vpop.f32.mrb[0].mxu0
        %2349 = vmatprep.mubr.f32.mxu0 0.0
        %2350 = vmatmul.mubr.f32.gmra.mrb[0].mxu0 %v2184
        %v2351 = vpop.f32.mrb[0].mxu0
        %v2352 = vadd.f32 0.0, %v2351
        %v2353 = vpop.f32.mrb[0].mxu0
        %2354 = vmatprep.mubr.f32.mxu0 0.0
        %2355 = vmatmul.mubr.f32.gmra.mrb[0].mxu0 %v2187
        %v2356 = vpop.f32.mrb[0].mxu0
        %v2357 = vadd.f32 0.0, %v2356
        %v2358 = vpop.f32.mrb[0].mxu0
        %2359 = vmatprep.mubr.f32.mxu0 0.0
        %2360 = vmatmul.mubr.f32.gmra.mrb[0].mxu0 %v2190
        %v2361 = vpop.f32.mrb[0].mxu0
        %v2362 = vadd.f32 0.0, %v2361
        %v2363 = vpop.f32.mrb[0].mxu0
        %2364 = vmatprep.mubr.f32.mxu0 0.0
        %2365 = vmatmul.mubr.f32.gmra.mrb[0].mxu0 %v2193
        %v2366 = vpop.f32.mrb[0].mxu0
        %v2367 = vadd.f32 0.0, %v2366
        %v2368 = vpop.f32.mrb[0].mxu0
        %2369 = vmatprep.mubr.f32.mxu0 0.0
        %2370 = vmatmul.mubr.f32.gmra.mrb[0].mxu0 %v2196
        %v2371 = vpop.f32.mrb[0].mxu0
        %v2372 = vadd.f32 0.0, %v2371
        %v2373 = vpop.f32.mrb[0].mxu0
        %2374 = vmatprep.mubr.f32.mxu0 0.0
        %2375 = vmatmul.mubr.f32.gmra.mrb[0].mxu0 %v2199
        %v2376 = vpop.f32.mrb[0].mxu0
        %v2377 = vadd.f32 0.0, %v2376
        %v2378 = vpop.f32.mrb[0].mxu0
        %2379 = vmatprep.mubr.f32.mxu0 0.0
        %2380 = vmatmul.mubr.f32.gmra.mrb[0].mxu0 %v2202
        %v2381 = vpop.f32.mrb[0].mxu0
        %v2382 = vadd.f32 0.0, %v2381
        %v2383 = vpop.f32.mrb[0].mxu0
        %2384 = vmatprep.mubr.f32.mxu0 0.0
        %2385 = vmatmul.mubr.f32.gmra.mrb[0].mxu0 %v2205
        %v2386 = vpop.f32.mrb[0].mxu0
        %v2387 = vadd.f32 0.0, %v2386
        %v2388 = vpop.f32.mrb[0].mxu0
        %2389 = vmatprep.mubr.f32.mxu0 0.0
        %2390 = vmatmul.mubr.f32.gmra.mrb[0].mxu0 %v2208
        %v2391 = vpop.f32.mrb[0].mxu0
        %v2392 = vadd.f32 0.0, %v2391
        %v2393 = vpop.f32.mrb[0].mxu0
        %2394 = vmatprep.mubr.f32.mxu0 0.0
        %2395 = vmatmul.mubr.f32.gmra.mrb[0].mxu0 %v2211
        %v2396 = vpop.f32.mrb[0].mxu0
        %v2397 = vadd.f32 0.0, %v2396
        %v2398 = vpop.f32.mrb[0].mxu0
        %2399 = vmatprep.mubr.f32.mxu0 0.0
        %2400 = vmatmul.mubr.f32.gmra.mrb[0].mxu0 %v2214
        %v2401 = vpop.f32.mrb[0].mxu0
        %v2402 = vadd.f32 0.0, %v2401
        %v2403 = vpop.f32.mrb[0].mxu0
        %2404 = vmatprep.mubr.f32.mxu0 0.0
        %2405 = vmatmul.mubr.f32.gmra.mrb[0].mxu0 %v2217
        %v2406 = vpop.f32.mrb[0].mxu0
        %v2407 = vadd.f32 0.0, %v2406
        %v2408 = vpop.f32.mrb[0].mxu0
        %2409 = vmatprep.mubr.f32.mxu0 0.0
        %2410 = vmatmul.mubr.f32.gmra.mrb[0].mxu0 %v2220
        %v2411 = vpop.f32.mrb[0].mxu0
        %v2412 = vadd.f32 0.0, %v2411
        %v2413 = vpop.f32.mrb[0].mxu0
        %2414 = vmatprep.mubr.f32.mxu0 0.0
        %2415 = vmatmul.mubr.f32.gmra.mrb[0].mxu0 %v2223
        %v2416 = vpop.f32.mrb[0].mxu0
        %v2417 = vadd.f32 0.0, %v2416
        %v2418 = vpop.f32.mrb[0].mxu0
        %2419 = vmatprep.mubr.f32.mxu0 0.0
        %2420 = vmatmul.mubr.f32.gmra.mrb[0].mxu0 %v2226
        %v2421 = vpop.f32.mrb[0].mxu0
        %v2422 = vadd.f32 0.0, %v2421
        %v2423 = vpop.f32.mrb[0].mxu0
        %2424 = vmatprep.mubr.f32.mxu0 0.0
        %2425 = vmatmul.mubr.f32.gmra.mrb[0].mxu0 %v2229
        %v2426 = vpop.f32.mrb[0].mxu0
        %v2427 = vadd.f32 0.0, %v2426
        %v2428 = vpop.f32.mrb[0].mxu0
        %2429 = vmatprep.mubr.f32.mxu0 0.0
        %2430 = vmatmul.mubr.f32.gmra.mrb[0].mxu0 %v2232
        %v2431 = vpop.f32.mrb[0].mxu0
        %v2432 = vadd.f32 0.0, %v2431
        %v2433 = vpop.f32.mrb[0].mxu0
        %2434 = vmatprep.mubr.f32.mxu0 0.0
        %2435 = vmatmul.mubr.f32.gmra.mrb[0].mxu0 %v2235
        %v2436 = vpop.f32.mrb[0].mxu0
        %v2437 = vadd.f32 0.0, %v2436
        %v2438 = vpop.f32.mrb[0].mxu0
        %2439 = vmatprep.mubr.f32.mxu0 0.0
        %2440 = vmatmul.mubr.f32.gmra.mrb[0].mxu0 %v2238
        %v2441 = vpop.f32.mrb[0].mxu0
        %v2442 = vadd.f32 0.0, %v2441
        %v2443 = vpop.f32.mrb[0].mxu0
        %2444 = vmatprep.mubr.f32.mxu0 0.0
        %2445 = vmatmul.mubr.f32.gmra.mrb[0].mxu0 %v2241
        %v2446 = vpop.f32.mrb[0].mxu0
        %v2447 = vadd.f32 0.0, %v2446
        %v2448 = vpop.f32.mrb[0].mxu0
        %2449 = vmatprep.mubr.f32.mxu0 0.0
        %2450 = vmatmul.mubr.f32.gmra.mrb[0].mxu0 %v2244
        %v2451 = vpop.f32.mrb[0].mxu0
        %v2452 = vadd.f32 0.0, %v2451
        %v2453 = vpop.f32.mrb[0].mxu0
        %2454 = vmatprep.mubr.f32.mxu0 0.0
        %2455 = vmatmul.mubr.f32.gmra.mrb[0].mxu0 %v2247
        %v2456 = vpop.f32.mrb[0].mxu0
        %v2457 = vadd.f32 0.0, %v2456
        %v2458 = vpop.f32.mrb[0].mxu0
        %2459 = vmatprep.mubr.f32.mxu0 0.0
        %2460 = vmatmul.mubr.f32.gmra.mrb[0].mxu0 %v2250
        %v2461 = vpop.f32.mrb[0].mxu0
        %v2462 = vadd.f32 0.0, %v2461
        %v2463 = vpop.f32.mrb[0].mxu0
        %2464 = vmatprep.mubr.f32.mxu0 0.0
        %2465 = vmatmul.mubr.f32.gmra.mrb[0].mxu0 %v2253
        %v2466 = vpop.f32.mrb[0].mxu0
        %v2467 = vadd.f32 0.0, %v2466
        %v2468 = vpop.f32.mrb[0].mxu0
        %2469 = vmatprep.mubr.f32.mxu0 0.0
        %2470 = vmatmul.mubr.f32.gmra.mrb[0].mxu0 %v2256
        %v2471 = vpop.f32.mrb[0].mxu0
        %v2472 = vadd.f32 0.0, %v2471
        %v2473 = vpop.f32.mrb[0].mxu0
        %2474 = vmatprep.mubr.f32.mxu0 0.0
        %2475 = vmatmul.mubr.f32.gmra.mrb[0].mxu0 %v2259
        %v2476 = vpop.f32.mrb[0].mxu0
        %v2477 = vadd.f32 0.0, %v2476
        %v2478 = vpop.f32.mrb[0].mxu0
        %2479 = vmatprep.mubr.f32.mxu0 0.0
        %2480 = vmatmul.mubr.f32.gmra.mrb[0].mxu0 %v2262
        %v2481 = vpop.f32.mrb[0].mxu0
        %v2482 = vadd.f32 0.0, %v2481
        %v2483 = vpop.f32.mrb[0].mxu0
        %2484 = vmatprep.mubr.f32.mxu0 0.0
        %2485 = vmatmul.mubr.f32.gmra.mrb[0].mxu0 %v2265
        %v2486 = vpop.f32.mrb[0].mxu0
        %v2487 = vadd.f32 0.0, %v2486
        %v2488 = vpop.f32.mrb[0].mxu0
        %2489 = vmatprep.mubr.f32.mxu0 0.0
        %2490 = vmatmul.mubr.f32.gmra.mrb[0].mxu0 %v2268
        %v2491 = vpop.f32.mrb[0].mxu0
        %v2492 = vadd.f32 0.0, %v2491
        %v2493 = vpop.f32.mrb[0].mxu0
        %2494 = vdwg.mxu0
        %v2495 = vadd.f32 %v2069, %v2337
        %v2496 = vadd.f32 %v2070, %v2342
        %v2497 = vadd.f32 %v2071, %v2347
        %v2498 = vadd.f32 %v2072, %v2352
        %v2499 = vadd.f32 %v2073, %v2357
        %v2500 = vadd.f32 %v2074, %v2362
        %v2501 = vadd.f32 %v2075, %v2367
        %v2502 = vadd.f32 %v2076, %v2372
        %v2503 = vadd.f32 %v2077, %v2377
        %v2504 = vadd.f32 %v2078, %v2382
        %v2505 = vadd.f32 %v2079, %v2387
        %v2506 = vadd.f32 %v2080, %v2392
        %v2507 = vadd.f32 %v2081, %v2397
        %v2508 = vadd.f32 %v2082, %v2402
        %v2509 = vadd.f32 %v2083, %v2407
        %v2510 = vadd.f32 %v2084, %v2412
        %v2511 = vadd.f32 %v2085, %v2417
        %v2512 = vadd.f32 %v2086, %v2422
        %v2513 = vadd.f32 %v2087, %v2427
        %v2514 = vadd.f32 %v2088, %v2432
        %v2515 = vadd.f32 %v2089, %v2437
        %v2516 = vadd.f32 %v2090, %v2442
        %v2517 = vadd.f32 %v2091, %v2447
        %v2518 = vadd.f32 %v2092, %v2452
        %v2519 = vadd.f32 %v2093, %v2457
        %v2520 = vadd.f32 %v2094, %v2462
        %v2521 = vadd.f32 %v2095, %v2467
        %v2522 = vadd.f32 %v2096, %v2472
        %v2523 = vadd.f32 %v2097, %v2477
        %v2524 = vadd.f32 %v2098, %v2482
        %v2525 = vadd.f32 %v2099, %v2487
        %v2526 = vadd.f32 %v2100, %v2492
        %v2527 = vld [vmem:[#allocation2 + $0x18] sm:$0xff]
        %v2528 = vld [vmem:[#allocation2 + $0x20] sm:$0xff]
        %v2529 = vld [vmem:[#allocation2 + $0x28] sm:$0xff]
        %v2530 = vld [vmem:[#allocation2 + $0x30] sm:$0xff]
        %v2531 = vld [vmem:[#allocation2 + $0x38] sm:$0xff]
        %v2532 = vld [vmem:[#allocation2 + $0x40] sm:$0xff]
        %v2533 = vld [vmem:[#allocation2 + $0x48] sm:$0xff]
        %v2534 = vld [vmem:[#allocation2 + $0x50] sm:$0xff]
        %v2535 = vld [vmem:[#allocation2 + $0x58] sm:$0xff]
        %v2536 = vld [vmem:[#allocation2 + $0x60] sm:$0xff]
        %v2537 = vld [vmem:[#allocation2 + $0x68] sm:$0xff]
        %v2538 = vld [vmem:[#allocation2 + $0x70] sm:$0xff]
        %v2539 = vld [vmem:[#allocation2 + $0x78] sm:$0xff]
        %v2540 = vld [vmem:[#allocation2 + $0x80] sm:$0xff]
        %v2541 = vld [vmem:[#allocation2 + $0x88] sm:$0xff]
        %v2542 = vld [vmem:[#allocation2 + $0x90] sm:$0xff]
        %v2543 = vld [vmem:[#allocation2 + $0x98] sm:$0xff]
        %v2544 = vld [vmem:[#allocation2 + $0xa0] sm:$0xff]
        %v2545 = vld [vmem:[#allocation2 + $0xa8] sm:$0xff]
        %v2546 = vld [vmem:[#allocation2 + $0xb0] sm:$0xff]
        %v2547 = vld [vmem:[#allocation2 + $0xb8] sm:$0xff]
        %v2548 = vld [vmem:[#allocation2 + $0xc0] sm:$0xff]
        %v2549 = vld [vmem:[#allocation2 + $0xc8] sm:$0xff]
        %v2550 = vld [vmem:[#allocation2 + $0xd0] sm:$0xff]
        %v2551 = vld [vmem:[#allocation2 + $0xd8] sm:$0xff]
        %v2552 = vld [vmem:[#allocation2 + $0xe0] sm:$0xff]
        %v2553 = vld [vmem:[#allocation2 + $0xe8] sm:$0xff]
        %v2554 = vld [vmem:[#allocation2 + $0xf0] sm:$0xff]
        %v2555 = vld [vmem:[#allocation2 + $0xf8] sm:$0xff]
        %v2556 = vld [vmem:[#allocation2 + $0x100] sm:$0xff]
        %v2557 = vld [vmem:[#allocation2 + $0x108] sm:$0xff]
        %v2558 = vld [vmem:[#allocation2 + $0x110] sm:$0xff]
        %s2559 = scalar_lea.vmem %s1, 256
        %v2560 = vld [vmem:[%s2559] sm:$0xff]
        %v2561 = vld [vmem:[%s2559 + $0x8] sm:$0xff]
        %v2562 = vld [vmem:[%s2559 + $0x10] sm:$0xff]
        %v2563 = vld [vmem:[%s2559 + $0x18] sm:$0xff]
        %v2564 = vld [vmem:[%s2559 + $0x20] sm:$0xff]
        %v2565 = vld [vmem:[%s2559 + $0x28] sm:$0xff]
        %v2566 = vld [vmem:[%s2559 + $0x30] sm:$0xff]
        %v2567 = vld [vmem:[%s2559 + $0x38] sm:$0xff]
        %v2569 = vsel %vm240, %v2527, 0
        %v2572 = vsel %vm240, %v2528, 0
        %v2575 = vsel %vm240, %v2529, 0
        %v2578 = vsel %vm240, %v2530, 0
        %v2581 = vsel %vm240, %v2531, 0
        %v2584 = vsel %vm240, %v2532, 0
        %v2587 = vsel %vm240, %v2533, 0
        %v2590 = vsel %vm240, %v2534, 0
        %v2593 = vsel %vm240, %v2535, 0
        %v2596 = vsel %vm240, %v2536, 0
        %v2599 = vsel %vm240, %v2537, 0
        %v2602 = vsel %vm240, %v2538, 0
        %v2605 = vsel %vm240, %v2539, 0
        %v2608 = vsel %vm240, %v2540, 0
        %v2611 = vsel %vm240, %v2541, 0
        %v2614 = vsel %vm240, %v2542, 0
        %v2617 = vsel %vm240, %v2543, 0
        %v2620 = vsel %vm240, %v2544, 0
        %v2623 = vsel %vm240, %v2545, 0
        %v2626 = vsel %vm240, %v2546, 0
        %v2629 = vsel %vm240, %v2547, 0
        %v2632 = vsel %vm240, %v2548, 0
        %v2635 = vsel %vm240, %v2549, 0
        %v2638 = vsel %vm240, %v2550, 0
        %v2641 = vsel %vm240, %v2551, 0
        %v2644 = vsel %vm240, %v2552, 0
        %v2647 = vsel %vm240, %v2553, 0
        %v2650 = vsel %vm240, %v2554, 0
        %v2653 = vsel %vm240, %v2555, 0
        %v2656 = vsel %vm240, %v2556, 0
        %v2659 = vsel %vm240, %v2557, 0
        %v2662 = vsel %vm240, %v2558, 0
        %2664 = vmatprep.subr.mxu0 0.0
        %2665 = vmatpush1.msra.mxu0 %v2560
        %2666 = vmatprep.subr.mxu0 0.0
        %2667 = vmatpush1.msra.mxu0 %v2561
        %2668 = vmatprep.subr.mxu0 0.0
        %2669 = vmatpush1.msra.mxu0 %v2562
        %2670 = vmatprep.subr.mxu0 0.0
        %2671 = vmatpush1.msra.mxu0 %v2563
        %2672 = vmatprep.subr.mxu0 0.0
        %2673 = vmatpush1.msra.mxu0 %v2564
        %2674 = vmatprep.subr.mxu0 0.0
        %2675 = vmatpush1.msra.mxu0 %v2565
        %2676 = vmatprep.subr.mxu0 0.0
        %2677 = vmatpush1.msra.mxu0 %v2566
        %2678 = vmatprep.subr.mxu0 0.0
        %2679 = vmatpush1.msra.mxu0 %v2567
        %2680 = vmatprep.subr.mxu0 0.0
        %2681 = vmatpush1.msra.mxu0 0.0
        %2682 = vmatprep.subr.mxu0 0.0
        %2683 = vmatpush1.msra.mxu0 0.0
        %2684 = vmatprep.subr.mxu0 0.0
        %2685 = vmatpush1.msra.mxu0 0.0
        %2686 = vmatprep.subr.mxu0 0.0
        %2687 = vmatpush1.msra.mxu0 0.0
        %2688 = vmatprep.subr.mxu0 0.0
        %2689 = vmatpush1.msra.mxu0 0.0
        %2690 = vmatprep.subr.mxu0 0.0
        %2691 = vmatpush1.msra.mxu0 0.0
        %2692 = vmatprep.subr.mxu0 0.0
        %2693 = vmatpush1.msra.mxu0 0.0
        %2694 = vmatprep.subr.mxu0 0.0
        %2695 = vmatpush1.msra.mxu0 0.0
        %2696 = vmatprep.subr.mxu0 0.0
        %2697 = vmatpush1.msra.mxu0 0.0
        %2698 = vmatprep.subr.mxu0 0.0
        %2699 = vmatpush1.msra.mxu0 0.0
        %2700 = vmatprep.subr.mxu0 0.0
        %2701 = vmatpush1.msra.mxu0 0.0
        %2702 = vmatprep.subr.mxu0 0.0
        %2703 = vmatpush1.msra.mxu0 0.0
        %2704 = vmatprep.subr.mxu0 0.0
        %2705 = vmatpush1.msra.mxu0 0.0
        %2706 = vmatprep.subr.mxu0 0.0
        %2707 = vmatpush1.msra.mxu0 0.0
        %2708 = vmatprep.subr.mxu0 0.0
        %2709 = vmatpush1.msra.mxu0 0.0
        %2710 = vmatprep.subr.mxu0 0.0
        %2711 = vmatpush1.msra.mxu0 0.0
        %2712 = vmatprep.subr.mxu0 0.0
        %2713 = vmatpush1.msra.mxu0 0.0
        %2714 = vmatprep.subr.mxu0 0.0
        %2715 = vmatpush1.msra.mxu0 0.0
        %2716 = vmatprep.subr.mxu0 0.0
        %2717 = vmatpush1.msra.mxu0 0.0
        %2718 = vmatprep.subr.mxu0 0.0
        %2719 = vmatpush1.msra.mxu0 0.0
        %2720 = vmatprep.subr.mxu0 0.0
        %2721 = vmatpush1.msra.mxu0 0.0
        %2722 = vmatprep.subr.mxu0 0.0
        %2723 = vmatpush1.msra.mxu0 0.0
        %2724 = vmatprep.subr.mxu0 0.0
        %2725 = vmatpush1.msra.mxu0 0.0
        %2726 = vmatprep.subr.mxu0 0.0
        %2727 = vmatpush1.msra.mxu0 0.0
        %2728 = vmatprep.mubr.f32.mxu0 0.0
        %2729 = vmatmul.mubr.f32.gmra.mrb[0].mxu0 %v2569
        %v2730 = vpop.f32.mrb[0].mxu0
        %v2731 = vadd.f32 0.0, %v2730
        %v2732 = vpop.f32.mrb[0].mxu0
        %2733 = vmatprep.mubr.f32.mxu0 0.0
        %2734 = vmatmul.mubr.f32.gmra.mrb[0].mxu0 %v2572
        %v2735 = vpop.f32.mrb[0].mxu0
        %v2736 = vadd.f32 0.0, %v2735
        %v2737 = vpop.f32.mrb[0].mxu0
        %2738 = vmatprep.mubr.f32.mxu0 0.0
        %2739 = vmatmul.mubr.f32.gmra.mrb[0].mxu0 %v2575
        %v2740 = vpop.f32.mrb[0].mxu0
        %v2741 = vadd.f32 0.0, %v2740
        %v2742 = vpop.f32.mrb[0].mxu0
        %2743 = vmatprep.mubr.f32.mxu0 0.0
        %2744 = vmatmul.mubr.f32.gmra.mrb[0].mxu0 %v2578
        %v2745 = vpop.f32.mrb[0].mxu0
        %v2746 = vadd.f32 0.0, %v2745
        %v2747 = vpop.f32.mrb[0].mxu0
        %2748 = vmatprep.mubr.f32.mxu0 0.0
        %2749 = vmatmul.mubr.f32.gmra.mrb[0].mxu0 %v2581
        %v2750 = vpop.f32.mrb[0].mxu0
        %v2751 = vadd.f32 0.0, %v2750
        %v2752 = vpop.f32.mrb[0].mxu0
        %2753 = vmatprep.mubr.f32.mxu0 0.0
        %2754 = vmatmul.mubr.f32.gmra.mrb[0].mxu0 %v2584
        %v2755 = vpop.f32.mrb[0].mxu0
        %v2756 = vadd.f32 0.0, %v2755
        %v2757 = vpop.f32.mrb[0].mxu0
        %2758 = vmatprep.mubr.f32.mxu0 0.0
        %2759 = vmatmul.mubr.f32.gmra.mrb[0].mxu0 %v2587
        %v2760 = vpop.f32.mrb[0].mxu0
        %v2761 = vadd.f32 0.0, %v2760
        %v2762 = vpop.f32.mrb[0].mxu0
        %2763 = vmatprep.mubr.f32.mxu0 0.0
        %2764 = vmatmul.mubr.f32.gmra.mrb[0].mxu0 %v2590
        %v2765 = vpop.f32.mrb[0].mxu0
        %v2766 = vadd.f32 0.0, %v2765
        %v2767 = vpop.f32.mrb[0].mxu0
        %2768 = vmatprep.mubr.f32.mxu0 0.0
        %2769 = vmatmul.mubr.f32.gmra.mrb[0].mxu0 %v2593
        %v2770 = vpop.f32.mrb[0].mxu0
        %v2771 = vadd.f32 0.0, %v2770
        %v2772 = vpop.f32.mrb[0].mxu0
        %2773 = vmatprep.mubr.f32.mxu0 0.0
        %2774 = vmatmul.mubr.f32.gmra.mrb[0].mxu0 %v2596
        %v2775 = vpop.f32.mrb[0].mxu0
        %v2776 = vadd.f32 0.0, %v2775
        %v2777 = vpop.f32.mrb[0].mxu0
        %2778 = vmatprep.mubr.f32.mxu0 0.0
        %2779 = vmatmul.mubr.f32.gmra.mrb[0].mxu0 %v2599
        %v2780 = vpop.f32.mrb[0].mxu0
        %v2781 = vadd.f32 0.0, %v2780
        %v2782 = vpop.f32.mrb[0].mxu0
        %2783 = vmatprep.mubr.f32.mxu0 0.0
        %2784 = vmatmul.mubr.f32.gmra.mrb[0].mxu0 %v2602
        %v2785 = vpop.f32.mrb[0].mxu0
        %v2786 = vadd.f32 0.0, %v2785
        %v2787 = vpop.f32.mrb[0].mxu0
        %2788 = vmatprep.mubr.f32.mxu0 0.0
        %2789 = vmatmul.mubr.f32.gmra.mrb[0].mxu0 %v2605
        %v2790 = vpop.f32.mrb[0].mxu0
        %v2791 = vadd.f32 0.0, %v2790
        %v2792 = vpop.f32.mrb[0].mxu0
        %2793 = vmatprep.mubr.f32.mxu0 0.0
        %2794 = vmatmul.mubr.f32.gmra.mrb[0].mxu0 %v2608
        %v2795 = vpop.f32.mrb[0].mxu0
        %v2796 = vadd.f32 0.0, %v2795
        %v2797 = vpop.f32.mrb[0].mxu0
        %2798 = vmatprep.mubr.f32.mxu0 0.0
        %2799 = vmatmul.mubr.f32.gmra.mrb[0].mxu0 %v2611
        %v2800 = vpop.f32.mrb[0].mxu0
        %v2801 = vadd.f32 0.0, %v2800
        %v2802 = vpop.f32.mrb[0].mxu0
        %2803 = vmatprep.mubr.f32.mxu0 0.0
        %2804 = vmatmul.mubr.f32.gmra.mrb[0].mxu0 %v2614
        %v2805 = vpop.f32.mrb[0].mxu0
        %v2806 = vadd.f32 0.0, %v2805
        %v2807 = vpop.f32.mrb[0].mxu0
        %2808 = vmatprep.mubr.f32.mxu0 0.0
        %2809 = vmatmul.mubr.f32.gmra.mrb[0].mxu0 %v2617
        %v2810 = vpop.f32.mrb[0].mxu0
        %v2811 = vadd.f32 0.0, %v2810
        %v2812 = vpop.f32.mrb[0].mxu0
        %2813 = vmatprep.mubr.f32.mxu0 0.0
        %2814 = vmatmul.mubr.f32.gmra.mrb[0].mxu0 %v2620
        %v2815 = vpop.f32.mrb[0].mxu0
        %v2816 = vadd.f32 0.0, %v2815
        %v2817 = vpop.f32.mrb[0].mxu0
        %2818 = vmatprep.mubr.f32.mxu0 0.0
        %2819 = vmatmul.mubr.f32.gmra.mrb[0].mxu0 %v2623
        %v2820 = vpop.f32.mrb[0].mxu0
        %v2821 = vadd.f32 0.0, %v2820
        %v2822 = vpop.f32.mrb[0].mxu0
        %2823 = vmatprep.mubr.f32.mxu0 0.0
        %2824 = vmatmul.mubr.f32.gmra.mrb[0].mxu0 %v2626
        %v2825 = vpop.f32.mrb[0].mxu0
        %v2826 = vadd.f32 0.0, %v2825
        %v2827 = vpop.f32.mrb[0].mxu0
        %2828 = vmatprep.mubr.f32.mxu0 0.0
        %2829 = vmatmul.mubr.f32.gmra.mrb[0].mxu0 %v2629
        %v2830 = vpop.f32.mrb[0].mxu0
        %v2831 = vadd.f32 0.0, %v2830
        %v2832 = vpop.f32.mrb[0].mxu0
        %2833 = vmatprep.mubr.f32.mxu0 0.0
        %2834 = vmatmul.mubr.f32.gmra.mrb[0].mxu0 %v2632
        %v2835 = vpop.f32.mrb[0].mxu0
        %v2836 = vadd.f32 0.0, %v2835
        %v2837 = vpop.f32.mrb[0].mxu0
        %2838 = vmatprep.mubr.f32.mxu0 0.0
        %2839 = vmatmul.mubr.f32.gmra.mrb[0].mxu0 %v2635
        %v2840 = vpop.f32.mrb[0].mxu0
        %v2841 = vadd.f32 0.0, %v2840
        %v2842 = vpop.f32.mrb[0].mxu0
        %2843 = vmatprep.mubr.f32.mxu0 0.0
        %2844 = vmatmul.mubr.f32.gmra.mrb[0].mxu0 %v2638
        %v2845 = vpop.f32.mrb[0].mxu0
        %v2846 = vadd.f32 0.0, %v2845
        %v2847 = vpop.f32.mrb[0].mxu0
        %2848 = vmatprep.mubr.f32.mxu0 0.0
        %2849 = vmatmul.mubr.f32.gmra.mrb[0].mxu0 %v2641
        %v2850 = vpop.f32.mrb[0].mxu0
        %v2851 = vadd.f32 0.0, %v2850
        %v2852 = vpop.f32.mrb[0].mxu0
        %2853 = vmatprep.mubr.f32.mxu0 0.0
        %2854 = vmatmul.mubr.f32.gmra.mrb[0].mxu0 %v2644
        %v2855 = vpop.f32.mrb[0].mxu0
        %v2856 = vadd.f32 0.0, %v2855
        %v2857 = vpop.f32.mrb[0].mxu0
        %2858 = vmatprep.mubr.f32.mxu0 0.0
        %2859 = vmatmul.mubr.f32.gmra.mrb[0].mxu0 %v2647
        %v2860 = vpop.f32.mrb[0].mxu0
        %v2861 = vadd.f32 0.0, %v2860
        %v2862 = vpop.f32.mrb[0].mxu0
        %2863 = vmatprep.mubr.f32.mxu0 0.0
        %2864 = vmatmul.mubr.f32.gmra.mrb[0].mxu0 %v2650
        %v2865 = vpop.f32.mrb[0].mxu0
        %v2866 = vadd.f32 0.0, %v2865
        %v2867 = vpop.f32.mrb[0].mxu0
        %2868 = vmatprep.mubr.f32.mxu0 0.0
        %2869 = vmatmul.mubr.f32.gmra.mrb[0].mxu0 %v2653
        %v2870 = vpop.f32.mrb[0].mxu0
        %v2871 = vadd.f32 0.0, %v2870
        %v2872 = vpop.f32.mrb[0].mxu0
        %2873 = vmatprep.mubr.f32.mxu0 0.0
        %2874 = vmatmul.mubr.f32.gmra.mrb[0].mxu0 %v2656
        %v2875 = vpop.f32.mrb[0].mxu0
        %v2876 = vadd.f32 0.0, %v2875
        %v2877 = vpop.f32.mrb[0].mxu0
        %2878 = vmatprep.mubr.f32.mxu0 0.0
        %2879 = vmatmul.mubr.f32.gmra.mrb[0].mxu0 %v2659
        %v2880 = vpop.f32.mrb[0].mxu0
        %v2881 = vadd.f32 0.0, %v2880
        %v2882 = vpop.f32.mrb[0].mxu0
        %2883 = vmatprep.mubr.f32.mxu0 0.0
        %2884 = vmatmul.mubr.f32.gmra.mrb[0].mxu0 %v2662
        %v2885 = vpop.f32.mrb[0].mxu0
        %v2886 = vadd.f32 0.0, %v2885
        %v2887 = vpop.f32.mrb[0].mxu0
        %2888 = vdwg.mxu0
        %v2889 = vadd.f32 %v2495, %v2731
        %v2890 = vadd.f32 %v2496, %v2736
        %v2891 = vadd.f32 %v2497, %v2741
        %v2892 = vadd.f32 %v2498, %v2746
        %v2893 = vadd.f32 %v2499, %v2751
        %v2894 = vadd.f32 %v2500, %v2756
        %v2895 = vadd.f32 %v2501, %v2761
        %v2896 = vadd.f32 %v2502, %v2766
        %v2897 = vadd.f32 %v2503, %v2771
        %v2898 = vadd.f32 %v2504, %v2776
        %v2899 = vadd.f32 %v2505, %v2781
        %v2900 = vadd.f32 %v2506, %v2786
        %v2901 = vadd.f32 %v2507, %v2791
        %v2902 = vadd.f32 %v2508, %v2796
        %v2903 = vadd.f32 %v2509, %v2801
        %v2904 = vadd.f32 %v2510, %v2806
        %v2905 = vadd.f32 %v2511, %v2811
        %v2906 = vadd.f32 %v2512, %v2816
        %v2907 = vadd.f32 %v2513, %v2821
        %v2908 = vadd.f32 %v2514, %v2826
        %v2909 = vadd.f32 %v2515, %v2831
        %v2910 = vadd.f32 %v2516, %v2836
        %v2911 = vadd.f32 %v2517, %v2841
        %v2912 = vadd.f32 %v2518, %v2846
        %v2913 = vadd.f32 %v2519, %v2851
        %v2914 = vadd.f32 %v2520, %v2856
        %v2915 = vadd.f32 %v2521, %v2861
        %v2916 = vadd.f32 %v2522, %v2866
        %v2917 = vadd.f32 %v2523, %v2871
        %v2918 = vadd.f32 %v2524, %v2876
        %v2919 = vadd.f32 %v2525, %v2881
        %v2920 = vadd.f32 %v2526, %v2886
        %v2921 = vld [vmem:[#allocation2 + $0x19] sm:$0xff]
        %v2922 = vld [vmem:[#allocation2 + $0x21] sm:$0xff]
        %v2923 = vld [vmem:[#allocation2 + $0x29] sm:$0xff]
        %v2924 = vld [vmem:[#allocation2 + $0x31] sm:$0xff]
        %v2925 = vld [vmem:[#allocation2 + $0x39] sm:$0xff]
        %v2926 = vld [vmem:[#allocation2 + $0x41] sm:$0xff]
        %v2927 = vld [vmem:[#allocation2 + $0x49] sm:$0xff]
        %v2928 = vld [vmem:[#allocation2 + $0x51] sm:$0xff]
        %v2929 = vld [vmem:[#allocation2 + $0x59] sm:$0xff]
        %v2930 = vld [vmem:[#allocation2 + $0x61] sm:$0xff]
        %v2931 = vld [vmem:[#allocation2 + $0x69] sm:$0xff]
        %v2932 = vld [vmem:[#allocation2 + $0x71] sm:$0xff]
        %v2933 = vld [vmem:[#allocation2 + $0x79] sm:$0xff]
        %v2934 = vld [vmem:[#allocation2 + $0x81] sm:$0xff]
        %v2935 = vld [vmem:[#allocation2 + $0x89] sm:$0xff]
        %v2936 = vld [vmem:[#allocation2 + $0x91] sm:$0xff]
        %v2937 = vld [vmem:[#allocation2 + $0x99] sm:$0xff]
        %v2938 = vld [vmem:[#allocation2 + $0xa1] sm:$0xff]
        %v2939 = vld [vmem:[#allocation2 + $0xa9] sm:$0xff]
        %v2940 = vld [vmem:[#allocation2 + $0xb1] sm:$0xff]
        %v2941 = vld [vmem:[#allocation2 + $0xb9] sm:$0xff]
        %v2942 = vld [vmem:[#allocation2 + $0xc1] sm:$0xff]
        %v2943 = vld [vmem:[#allocation2 + $0xc9] sm:$0xff]
        %v2944 = vld [vmem:[#allocation2 + $0xd1] sm:$0xff]
        %v2945 = vld [vmem:[#allocation2 + $0xd9] sm:$0xff]
        %v2946 = vld [vmem:[#allocation2 + $0xe1] sm:$0xff]
        %v2947 = vld [vmem:[#allocation2 + $0xe9] sm:$0xff]
        %v2948 = vld [vmem:[#allocation2 + $0xf1] sm:$0xff]
        %v2949 = vld [vmem:[#allocation2 + $0xf9] sm:$0xff]
        %v2950 = vld [vmem:[#allocation2 + $0x101] sm:$0xff]
        %v2951 = vld [vmem:[#allocation2 + $0x109] sm:$0xff]
        %v2952 = vld [vmem:[#allocation2 + $0x111] sm:$0xff]
        %v2953 = vsel %vm1675, %v2921, 0.0
        %v2954 = vsel %vm1676, %v2922, 0.0
        %v2955 = vsel %vm1677, %v2923, 0.0
        %v2956 = vsel %vm1678, %v2924, 0.0
        %v2957 = vsel %vm1679, %v2925, 0.0
        %v2958 = vsel %vm1680, %v2926, 0.0
        %v2959 = vsel %vm1681, %v2927, 0.0
        %v2960 = vsel %vm1682, %v2928, 0.0
        %v2961 = vsel %vm1683, %v2929, 0.0
        %v2962 = vsel %vm1684, %v2930, 0.0
        %v2963 = vsel %vm1685, %v2931, 0.0
        %v2964 = vsel %vm1686, %v2932, 0.0
        %v2965 = vsel %vm1687, %v2933, 0.0
        %v2966 = vsel %vm1688, %v2934, 0.0
        %v2967 = vsel %vm1689, %v2935, 0.0
        %v2968 = vsel %vm1690, %v2936, 0.0
        %v2969 = vsel %vm1691, %v2937, 0.0
        %v2970 = vsel %vm1692, %v2938, 0.0
        %v2971 = vsel %vm1693, %v2939, 0.0
        %v2972 = vsel %vm1694, %v2940, 0.0
        %v2973 = vsel %vm1695, %v2941, 0.0
        %v2974 = vsel %vm1696, %v2942, 0.0
        %v2975 = vsel %vm1697, %v2943, 0.0
        %v2976 = vsel %vm1698, %v2944, 0.0
        %v2977 = vsel %vm1699, %v2945, 0.0
        %v2978 = vsel %vm1700, %v2946, 0.0
        %v2979 = vsel %vm1701, %v2947, 0.0
        %v2980 = vsel %vm1702, %v2948, 0.0
        %v2981 = vsel %vm1703, %v2949, 0.0
        %v2982 = vsel %vm1704, %v2950, 0.0
        %v2983 = vsel %vm1705, %v2951, 0.0
        %v2984 = vsel %vm1706, %v2952, 0.0
        %s2985 = scalar_lea.vmem %s1, 320
        %v2986 = vld [vmem:[%s2985] sm:$0xff]
        %v2987 = vld [vmem:[%s2985 + $0x8] sm:$0xff]
        %v2988 = vld [vmem:[%s2985 + $0x10] sm:$0xff]
        %v2989 = vld [vmem:[%s2985 + $0x18] sm:$0xff]
        %v2990 = vld [vmem:[%s2985 + $0x20] sm:$0xff]
        %v2991 = vld [vmem:[%s2985 + $0x28] sm:$0xff]
        %v2992 = vld [vmem:[%s2985 + $0x30] sm:$0xff]
        %v2993 = vld [vmem:[%s2985 + $0x38] sm:$0xff]
        %v2995 = vsel %vm240, %v2953, 0
        %v2998 = vsel %vm240, %v2954, 0
        %v3001 = vsel %vm240, %v2955, 0
        %v3004 = vsel %vm240, %v2956, 0
        %v3007 = vsel %vm240, %v2957, 0
        %v3010 = vsel %vm240, %v2958, 0
        %v3013 = vsel %vm240, %v2959, 0
        %v3016 = vsel %vm240, %v2960, 0
        %v3019 = vsel %vm240, %v2961, 0
        %v3022 = vsel %vm240, %v2962, 0
        %v3025 = vsel %vm240, %v2963, 0
        %v3028 = vsel %vm240, %v2964, 0
        %v3031 = vsel %vm240, %v2965, 0
        %v3034 = vsel %vm240, %v2966, 0
        %v3037 = vsel %vm240, %v2967, 0
        %v3040 = vsel %vm240, %v2968, 0
        %v3043 = vsel %vm240, %v2969, 0
        %v3046 = vsel %vm240, %v2970, 0
        %v3049 = vsel %vm240, %v2971, 0
        %v3052 = vsel %vm240, %v2972, 0
        %v3055 = vsel %vm240, %v2973, 0
        %v3058 = vsel %vm240, %v2974, 0
        %v3061 = vsel %vm240, %v2975, 0
        %v3064 = vsel %vm240, %v2976, 0
        %v3067 = vsel %vm240, %v2977, 0
        %v3070 = vsel %vm240, %v2978, 0
        %v3073 = vsel %vm240, %v2979, 0
        %v3076 = vsel %vm240, %v2980, 0
        %v3079 = vsel %vm240, %v2981, 0
        %v3082 = vsel %vm240, %v2982, 0
        %v3085 = vsel %vm240, %v2983, 0
        %v3088 = vsel %vm240, %v2984, 0
        %3090 = vmatprep.subr.mxu0 0.0
        %3091 = vmatpush1.msra.mxu0 %v2986
        %3092 = vmatprep.subr.mxu0 0.0
        %3093 = vmatpush1.msra.mxu0 %v2987
        %3094 = vmatprep.subr.mxu0 0.0
        %3095 = vmatpush1.msra.mxu0 %v2988
        %3096 = vmatprep.subr.mxu0 0.0
        %3097 = vmatpush1.msra.mxu0 %v2989
        %3098 = vmatprep.subr.mxu0 0.0
        %3099 = vmatpush1.msra.mxu0 %v2990
        %3100 = vmatprep.subr.mxu0 0.0
        %3101 = vmatpush1.msra.mxu0 %v2991
        %3102 = vmatprep.subr.mxu0 0.0
        %3103 = vmatpush1.msra.mxu0 %v2992
        %3104 = vmatprep.subr.mxu0 0.0
        %3105 = vmatpush1.msra.mxu0 %v2993
        %3106 = vmatprep.subr.mxu0 0.0
        %3107 = vmatpush1.msra.mxu0 0.0
        %3108 = vmatprep.subr.mxu0 0.0
        %3109 = vmatpush1.msra.mxu0 0.0
        %3110 = vmatprep.subr.mxu0 0.0
        %3111 = vmatpush1.msra.mxu0 0.0
        %3112 = vmatprep.subr.mxu0 0.0
        %3113 = vmatpush1.msra.mxu0 0.0
        %3114 = vmatprep.subr.mxu0 0.0
        %3115 = vmatpush1.msra.mxu0 0.0
        %3116 = vmatprep.subr.mxu0 0.0
        %3117 = vmatpush1.msra.mxu0 0.0
        %3118 = vmatprep.subr.mxu0 0.0
        %3119 = vmatpush1.msra.mxu0 0.0
        %3120 = vmatprep.subr.mxu0 0.0
        %3121 = vmatpush1.msra.mxu0 0.0
        %3122 = vmatprep.subr.mxu0 0.0
        %3123 = vmatpush1.msra.mxu0 0.0
        %3124 = vmatprep.subr.mxu0 0.0
        %3125 = vmatpush1.msra.mxu0 0.0
        %3126 = vmatprep.subr.mxu0 0.0
        %3127 = vmatpush1.msra.mxu0 0.0
        %3128 = vmatprep.subr.mxu0 0.0
        %3129 = vmatpush1.msra.mxu0 0.0
        %3130 = vmatprep.subr.mxu0 0.0
        %3131 = vmatpush1.msra.mxu0 0.0
        %3132 = vmatprep.subr.mxu0 0.0
        %3133 = vmatpush1.msra.mxu0 0.0
        %3134 = vmatprep.subr.mxu0 0.0
        %3135 = vmatpush1.msra.mxu0 0.0
        %3136 = vmatprep.subr.mxu0 0.0
        %3137 = vmatpush1.msra.mxu0 0.0
        %3138 = vmatprep.subr.mxu0 0.0
        %3139 = vmatpush1.msra.mxu0 0.0
        %3140 = vmatprep.subr.mxu0 0.0
        %3141 = vmatpush1.msra.mxu0 0.0
        %3142 = vmatprep.subr.mxu0 0.0
        %3143 = vmatpush1.msra.mxu0 0.0
        %3144 = vmatprep.subr.mxu0 0.0
        %3145 = vmatpush1.msra.mxu0 0.0
        %3146 = vmatprep.subr.mxu0 0.0
        %3147 = vmatpush1.msra.mxu0 0.0
        %3148 = vmatprep.subr.mxu0 0.0
        %3149 = vmatpush1.msra.mxu0 0.0
        %3150 = vmatprep.subr.mxu0 0.0
        %3151 = vmatpush1.msra.mxu0 0.0
        %3152 = vmatprep.subr.mxu0 0.0
        %3153 = vmatpush1.msra.mxu0 0.0
        %3154 = vmatprep.mubr.f32.mxu0 0.0
        %3155 = vmatmul.mubr.f32.gmra.mrb[0].mxu0 %v2995
        %v3156 = vpop.f32.mrb[0].mxu0
        %v3157 = vadd.f32 0.0, %v3156
        %v3158 = vpop.f32.mrb[0].mxu0
        %3159 = vmatprep.mubr.f32.mxu0 0.0
        %3160 = vmatmul.mubr.f32.gmra.mrb[0].mxu0 %v2998
        %v3161 = vpop.f32.mrb[0].mxu0
        %v3162 = vadd.f32 0.0, %v3161
        %v3163 = vpop.f32.mrb[0].mxu0
        %3164 = vmatprep.mubr.f32.mxu0 0.0
        %3165 = vmatmul.mubr.f32.gmra.mrb[0].mxu0 %v3001
        %v3166 = vpop.f32.mrb[0].mxu0
        %v3167 = vadd.f32 0.0, %v3166
        %v3168 = vpop.f32.mrb[0].mxu0
        %3169 = vmatprep.mubr.f32.mxu0 0.0
        %3170 = vmatmul.mubr.f32.gmra.mrb[0].mxu0 %v3004
        %v3171 = vpop.f32.mrb[0].mxu0
        %v3172 = vadd.f32 0.0, %v3171
        %v3173 = vpop.f32.mrb[0].mxu0
        %3174 = vmatprep.mubr.f32.mxu0 0.0
        %3175 = vmatmul.mubr.f32.gmra.mrb[0].mxu0 %v3007
        %v3176 = vpop.f32.mrb[0].mxu0
        %v3177 = vadd.f32 0.0, %v3176
        %v3178 = vpop.f32.mrb[0].mxu0
        %3179 = vmatprep.mubr.f32.mxu0 0.0
        %3180 = vmatmul.mubr.f32.gmra.mrb[0].mxu0 %v3010
        %v3181 = vpop.f32.mrb[0].mxu0
        %v3182 = vadd.f32 0.0, %v3181
        %v3183 = vpop.f32.mrb[0].mxu0
        %3184 = vmatprep.mubr.f32.mxu0 0.0
        %3185 = vmatmul.mubr.f32.gmra.mrb[0].mxu0 %v3013
        %v3186 = vpop.f32.mrb[0].mxu0
        %v3187 = vadd.f32 0.0, %v3186
        %v3188 = vpop.f32.mrb[0].mxu0
        %3189 = vmatprep.mubr.f32.mxu0 0.0
        %3190 = vmatmul.mubr.f32.gmra.mrb[0].mxu0 %v3016
        %v3191 = vpop.f32.mrb[0].mxu0
        %v3192 = vadd.f32 0.0, %v3191
        %v3193 = vpop.f32.mrb[0].mxu0
        %3194 = vmatprep.mubr.f32.mxu0 0.0
        %3195 = vmatmul.mubr.f32.gmra.mrb[0].mxu0 %v3019
        %v3196 = vpop.f32.mrb[0].mxu0
        %v3197 = vadd.f32 0.0, %v3196
        %v3198 = vpop.f32.mrb[0].mxu0
        %3199 = vmatprep.mubr.f32.mxu0 0.0
        %3200 = vmatmul.mubr.f32.gmra.mrb[0].mxu0 %v3022
        %v3201 = vpop.f32.mrb[0].mxu0
        %v3202 = vadd.f32 0.0, %v3201
        %v3203 = vpop.f32.mrb[0].mxu0
        %3204 = vmatprep.mubr.f32.mxu0 0.0
        %3205 = vmatmul.mubr.f32.gmra.mrb[0].mxu0 %v3025
        %v3206 = vpop.f32.mrb[0].mxu0
        %v3207 = vadd.f32 0.0, %v3206
        %v3208 = vpop.f32.mrb[0].mxu0
        %3209 = vmatprep.mubr.f32.mxu0 0.0
        %3210 = vmatmul.mubr.f32.gmra.mrb[0].mxu0 %v3028
        %v3211 = vpop.f32.mrb[0].mxu0
        %v3212 = vadd.f32 0.0, %v3211
        %v3213 = vpop.f32.mrb[0].mxu0
        %3214 = vmatprep.mubr.f32.mxu0 0.0
        %3215 = vmatmul.mubr.f32.gmra.mrb[0].mxu0 %v3031
        %v3216 = vpop.f32.mrb[0].mxu0
        %v3217 = vadd.f32 0.0, %v3216
        %v3218 = vpop.f32.mrb[0].mxu0
        %3219 = vmatprep.mubr.f32.mxu0 0.0
        %3220 = vmatmul.mubr.f32.gmra.mrb[0].mxu0 %v3034
        %v3221 = vpop.f32.mrb[0].mxu0
        %v3222 = vadd.f32 0.0, %v3221
        %v3223 = vpop.f32.mrb[0].mxu0
        %3224 = vmatprep.mubr.f32.mxu0 0.0
        %3225 = vmatmul.mubr.f32.gmra.mrb[0].mxu0 %v3037
        %v3226 = vpop.f32.mrb[0].mxu0
        %v3227 = vadd.f32 0.0, %v3226
        %v3228 = vpop.f32.mrb[0].mxu0
        %3229 = vmatprep.mubr.f32.mxu0 0.0
        %3230 = vmatmul.mubr.f32.gmra.mrb[0].mxu0 %v3040
        %v3231 = vpop.f32.mrb[0].mxu0
        %v3232 = vadd.f32 0.0, %v3231
        %v3233 = vpop.f32.mrb[0].mxu0
        %3234 = vmatprep.mubr.f32.mxu0 0.0
        %3235 = vmatmul.mubr.f32.gmra.mrb[0].mxu0 %v3043
        %v3236 = vpop.f32.mrb[0].mxu0
        %v3237 = vadd.f32 0.0, %v3236
        %v3238 = vpop.f32.mrb[0].mxu0
        %3239 = vmatprep.mubr.f32.mxu0 0.0
        %3240 = vmatmul.mubr.f32.gmra.mrb[0].mxu0 %v3046
        %v3241 = vpop.f32.mrb[0].mxu0
        %v3242 = vadd.f32 0.0, %v3241
        %v3243 = vpop.f32.mrb[0].mxu0
        %3244 = vmatprep.mubr.f32.mxu0 0.0
        %3245 = vmatmul.mubr.f32.gmra.mrb[0].mxu0 %v3049
        %v3246 = vpop.f32.mrb[0].mxu0
        %v3247 = vadd.f32 0.0, %v3246
        %v3248 = vpop.f32.mrb[0].mxu0
        %3249 = vmatprep.mubr.f32.mxu0 0.0
        %3250 = vmatmul.mubr.f32.gmra.mrb[0].mxu0 %v3052
        %v3251 = vpop.f32.mrb[0].mxu0
        %v3252 = vadd.f32 0.0, %v3251
        %v3253 = vpop.f32.mrb[0].mxu0
        %3254 = vmatprep.mubr.f32.mxu0 0.0
        %3255 = vmatmul.mubr.f32.gmra.mrb[0].mxu0 %v3055
        %v3256 = vpop.f32.mrb[0].mxu0
        %v3257 = vadd.f32 0.0, %v3256
        %v3258 = vpop.f32.mrb[0].mxu0
        %3259 = vmatprep.mubr.f32.mxu0 0.0
        %3260 = vmatmul.mubr.f32.gmra.mrb[0].mxu0 %v3058
        %v3261 = vpop.f32.mrb[0].mxu0
        %v3262 = vadd.f32 0.0, %v3261
        %v3263 = vpop.f32.mrb[0].mxu0
        %3264 = vmatprep.mubr.f32.mxu0 0.0
        %3265 = vmatmul.mubr.f32.gmra.mrb[0].mxu0 %v3061
        %v3266 = vpop.f32.mrb[0].mxu0
        %v3267 = vadd.f32 0.0, %v3266
        %v3268 = vpop.f32.mrb[0].mxu0
        %3269 = vmatprep.mubr.f32.mxu0 0.0
        %3270 = vmatmul.mubr.f32.gmra.mrb[0].mxu0 %v3064
        %v3271 = vpop.f32.mrb[0].mxu0
        %v3272 = vadd.f32 0.0, %v3271
        %v3273 = vpop.f32.mrb[0].mxu0
        %3274 = vmatprep.mubr.f32.mxu0 0.0
        %3275 = vmatmul.mubr.f32.gmra.mrb[0].mxu0 %v3067
        %v3276 = vpop.f32.mrb[0].mxu0
        %v3277 = vadd.f32 0.0, %v3276
        %v3278 = vpop.f32.mrb[0].mxu0
        %3279 = vmatprep.mubr.f32.mxu0 0.0
        %3280 = vmatmul.mubr.f32.gmra.mrb[0].mxu0 %v3070
        %v3281 = vpop.f32.mrb[0].mxu0
        %v3282 = vadd.f32 0.0, %v3281
        %v3283 = vpop.f32.mrb[0].mxu0
        %3284 = vmatprep.mubr.f32.mxu0 0.0
        %3285 = vmatmul.mubr.f32.gmra.mrb[0].mxu0 %v3073
        %v3286 = vpop.f32.mrb[0].mxu0
        %v3287 = vadd.f32 0.0, %v3286
        %v3288 = vpop.f32.mrb[0].mxu0
        %3289 = vmatprep.mubr.f32.mxu0 0.0
        %3290 = vmatmul.mubr.f32.gmra.mrb[0].mxu0 %v3076
        %v3291 = vpop.f32.mrb[0].mxu0
        %v3292 = vadd.f32 0.0, %v3291
        %v3293 = vpop.f32.mrb[0].mxu0
        %3294 = vmatprep.mubr.f32.mxu0 0.0
        %3295 = vmatmul.mubr.f32.gmra.mrb[0].mxu0 %v3079
        %v3296 = vpop.f32.mrb[0].mxu0
        %v3297 = vadd.f32 0.0, %v3296
        %v3298 = vpop.f32.mrb[0].mxu0
        %3299 = vmatprep.mubr.f32.mxu0 0.0
        %3300 = vmatmul.mubr.f32.gmra.mrb[0].mxu0 %v3082
        %v3301 = vpop.f32.mrb[0].mxu0
        %v3302 = vadd.f32 0.0, %v3301
        %v3303 = vpop.f32.mrb[0].mxu0
        %3304 = vmatprep.mubr.f32.mxu0 0.0
        %3305 = vmatmul.mubr.f32.gmra.mrb[0].mxu0 %v3085
        %v3306 = vpop.f32.mrb[0].mxu0
        %v3307 = vadd.f32 0.0, %v3306
        %v3308 = vpop.f32.mrb[0].mxu0
        %3309 = vmatprep.mubr.f32.mxu0 0.0
        %3310 = vmatmul.mubr.f32.gmra.mrb[0].mxu0 %v3088
        %v3311 = vpop.f32.mrb[0].mxu0
        %v3312 = vadd.f32 0.0, %v3311
        %v3313 = vpop.f32.mrb[0].mxu0
        %3314 = vdwg.mxu0
        %v3315 = vadd.f32 %v2889, %v3157
        %v3316 = vadd.f32 %v2890, %v3162
        %v3317 = vadd.f32 %v2891, %v3167
        %v3318 = vadd.f32 %v2892, %v3172
        %v3319 = vadd.f32 %v2893, %v3177
        %v3320 = vadd.f32 %v2894, %v3182
        %v3321 = vadd.f32 %v2895, %v3187
        %v3322 = vadd.f32 %v2896, %v3192
        %v3323 = vadd.f32 %v2897, %v3197
        %v3324 = vadd.f32 %v2898, %v3202
        %v3325 = vadd.f32 %v2899, %v3207
        %v3326 = vadd.f32 %v2900, %v3212
        %v3327 = vadd.f32 %v2901, %v3217
        %v3328 = vadd.f32 %v2902, %v3222
        %v3329 = vadd.f32 %v2903, %v3227
        %v3330 = vadd.f32 %v2904, %v3232
        %v3331 = vadd.f32 %v2905, %v3237
        %v3332 = vadd.f32 %v2906, %v3242
        %v3333 = vadd.f32 %v2907, %v3247
        %v3334 = vadd.f32 %v2908, %v3252
        %v3335 = vadd.f32 %v2909, %v3257
        %v3336 = vadd.f32 %v2910, %v3262
        %v3337 = vadd.f32 %v2911, %v3267
        %v3338 = vadd.f32 %v2912, %v3272
        %v3339 = vadd.f32 %v2913, %v3277
        %v3340 = vadd.f32 %v2914, %v3282
        %v3341 = vadd.f32 %v2915, %v3287
        %v3342 = vadd.f32 %v2916, %v3292
        %v3343 = vadd.f32 %v2917, %v3297
        %v3344 = vadd.f32 %v2918, %v3302
        %v3345 = vadd.f32 %v2919, %v3307
        %v3346 = vadd.f32 %v2920, %v3312
        %v3347 = vld [vmem:[#allocation2 + $0x27] sm:$0xff]
        %v3348 = vld [vmem:[#allocation2 + $0x2f] sm:$0xff]
        %v3349 = vld [vmem:[#allocation2 + $0x37] sm:$0xff]
        %v3350 = vld [vmem:[#allocation2 + $0x3f] sm:$0xff]
        %v3351 = vld [vmem:[#allocation2 + $0x47] sm:$0xff]
        %v3352 = vld [vmem:[#allocation2 + $0x4f] sm:$0xff]
        %v3353 = vld [vmem:[#allocation2 + $0x57] sm:$0xff]
        %v3354 = vld [vmem:[#allocation2 + $0x5f] sm:$0xff]
        %v3355 = vld [vmem:[#allocation2 + $0x67] sm:$0xff]
        %v3356 = vld [vmem:[#allocation2 + $0x6f] sm:$0xff]
        %v3357 = vld [vmem:[#allocation2 + $0x77] sm:$0xff]
        %v3358 = vld [vmem:[#allocation2 + $0x7f] sm:$0xff]
        %v3359 = vld [vmem:[#allocation2 + $0x87] sm:$0xff]
        %v3360 = vld [vmem:[#allocation2 + $0x8f] sm:$0xff]
        %v3361 = vld [vmem:[#allocation2 + $0x97] sm:$0xff]
        %v3362 = vld [vmem:[#allocation2 + $0x9f] sm:$0xff]
        %v3363 = vld [vmem:[#allocation2 + $0xa7] sm:$0xff]
        %v3364 = vld [vmem:[#allocation2 + $0xaf] sm:$0xff]
        %v3365 = vld [vmem:[#allocation2 + $0xb7] sm:$0xff]
        %v3366 = vld [vmem:[#allocation2 + $0xbf] sm:$0xff]
        %v3367 = vld [vmem:[#allocation2 + $0xc7] sm:$0xff]
        %v3368 = vld [vmem:[#allocation2 + $0xcf] sm:$0xff]
        %v3369 = vld [vmem:[#allocation2 + $0xd7] sm:$0xff]
        %v3370 = vld [vmem:[#allocation2 + $0xdf] sm:$0xff]
        %v3371 = vld [vmem:[#allocation2 + $0xe7] sm:$0xff]
        %v3372 = vld [vmem:[#allocation2 + $0xef] sm:$0xff]
        %v3373 = vld [vmem:[#allocation2 + $0xf7] sm:$0xff]
        %v3374 = vld [vmem:[#allocation2 + $0xff] sm:$0xff]
        %v3375 = vld [vmem:[#allocation2 + $0x107] sm:$0xff]
        %v3376 = vld [vmem:[#allocation2 + $0x10f] sm:$0xff]
        %v3377 = vld [vmem:[#allocation2 + $0x117] sm:$0xff]
        %v3378 = vld [vmem:[#allocation2 + $0x11f] sm:$0xff]
        %v3379 = vsel %vm856, %v3347, 0.0
        %v3380 = vsel %vm857, %v3348, 0.0
        %v3381 = vsel %vm858, %v3349, 0.0
        %v3382 = vsel %vm859, %v3350, 0.0
        %v3383 = vsel %vm860, %v3351, 0.0
        %v3384 = vsel %vm861, %v3352, 0.0
        %v3385 = vsel %vm862, %v3353, 0.0
        %v3386 = vsel %vm863, %v3354, 0.0
        %v3387 = vsel %vm864, %v3355, 0.0
        %v3388 = vsel %vm865, %v3356, 0.0
        %v3389 = vsel %vm866, %v3357, 0.0
        %v3390 = vsel %vm867, %v3358, 0.0
        %v3391 = vsel %vm868, %v3359, 0.0
        %v3392 = vsel %vm869, %v3360, 0.0
        %v3393 = vsel %vm870, %v3361, 0.0
        %v3394 = vsel %vm871, %v3362, 0.0
        %v3395 = vsel %vm872, %v3363, 0.0
        %v3396 = vsel %vm873, %v3364, 0.0
        %v3397 = vsel %vm874, %v3365, 0.0
        %v3398 = vsel %vm875, %v3366, 0.0
        %v3399 = vsel %vm876, %v3367, 0.0
        %v3400 = vsel %vm877, %v3368, 0.0
        %v3401 = vsel %vm878, %v3369, 0.0
        %v3402 = vsel %vm879, %v3370, 0.0
        %v3403 = vsel %vm880, %v3371, 0.0
        %v3404 = vsel %vm881, %v3372, 0.0
        %v3405 = vsel %vm882, %v3373, 0.0
        %v3406 = vsel %vm883, %v3374, 0.0
        %v3407 = vsel %vm884, %v3375, 0.0
        %v3408 = vsel %vm885, %v3376, 0.0
        %v3409 = vsel %vm886, %v3377, 0.0
        %v3410 = vsel %vm887, %v3378, 0.0
        %s3411 = scalar_lea.vmem %s1, 384
        %v3412 = vld [vmem:[%s3411] sm:$0xff]
        %v3413 = vld [vmem:[%s3411 + $0x8] sm:$0xff]
        %v3414 = vld [vmem:[%s3411 + $0x10] sm:$0xff]
        %v3415 = vld [vmem:[%s3411 + $0x18] sm:$0xff]
        %v3416 = vld [vmem:[%s3411 + $0x20] sm:$0xff]
        %v3417 = vld [vmem:[%s3411 + $0x28] sm:$0xff]
        %v3418 = vld [vmem:[%s3411 + $0x30] sm:$0xff]
        %v3419 = vld [vmem:[%s3411 + $0x38] sm:$0xff]
        %v3421 = vsel %vm240, %v3379, 0
        %v3424 = vsel %vm240, %v3380, 0
        %v3427 = vsel %vm240, %v3381, 0
        %v3430 = vsel %vm240, %v3382, 0
        %v3433 = vsel %vm240, %v3383, 0
        %v3436 = vsel %vm240, %v3384, 0
        %v3439 = vsel %vm240, %v3385, 0
        %v3442 = vsel %vm240, %v3386, 0
        %v3445 = vsel %vm240, %v3387, 0
        %v3448 = vsel %vm240, %v3388, 0
        %v3451 = vsel %vm240, %v3389, 0
        %v3454 = vsel %vm240, %v3390, 0
        %v3457 = vsel %vm240, %v3391, 0
        %v3460 = vsel %vm240, %v3392, 0
        %v3463 = vsel %vm240, %v3393, 0
        %v3466 = vsel %vm240, %v3394, 0
        %v3469 = vsel %vm240, %v3395, 0
        %v3472 = vsel %vm240, %v3396, 0
        %v3475 = vsel %vm240, %v3397, 0
        %v3478 = vsel %vm240, %v3398, 0
        %v3481 = vsel %vm240, %v3399, 0
        %v3484 = vsel %vm240, %v3400, 0
        %v3487 = vsel %vm240, %v3401, 0
        %v3490 = vsel %vm240, %v3402, 0
        %v3493 = vsel %vm240, %v3403, 0
        %v3496 = vsel %vm240, %v3404, 0
        %v3499 = vsel %vm240, %v3405, 0
        %v3502 = vsel %vm240, %v3406, 0
        %v3505 = vsel %vm240, %v3407, 0
        %v3508 = vsel %vm240, %v3408, 0
        %v3511 = vsel %vm240, %v3409, 0
        %v3514 = vsel %vm240, %v3410, 0
        %3516 = vmatprep.subr.mxu0 0.0
        %3517 = vmatpush1.msra.mxu0 %v3412
        %3518 = vmatprep.subr.mxu0 0.0
        %3519 = vmatpush1.msra.mxu0 %v3413
        %3520 = vmatprep.subr.mxu0 0.0
        %3521 = vmatpush1.msra.mxu0 %v3414
        %3522 = vmatprep.subr.mxu0 0.0
        %3523 = vmatpush1.msra.mxu0 %v3415
        %3524 = vmatprep.subr.mxu0 0.0
        %3525 = vmatpush1.msra.mxu0 %v3416
        %3526 = vmatprep.subr.mxu0 0.0
        %3527 = vmatpush1.msra.mxu0 %v3417
        %3528 = vmatprep.subr.mxu0 0.0
        %3529 = vmatpush1.msra.mxu0 %v3418
        %3530 = vmatprep.subr.mxu0 0.0
        %3531 = vmatpush1.msra.mxu0 %v3419
        %3532 = vmatprep.subr.mxu0 0.0
        %3533 = vmatpush1.msra.mxu0 0.0
        %3534 = vmatprep.subr.mxu0 0.0
        %3535 = vmatpush1.msra.mxu0 0.0
        %3536 = vmatprep.subr.mxu0 0.0
        %3537 = vmatpush1.msra.mxu0 0.0
        %3538 = vmatprep.subr.mxu0 0.0
        %3539 = vmatpush1.msra.mxu0 0.0
        %3540 = vmatprep.subr.mxu0 0.0
        %3541 = vmatpush1.msra.mxu0 0.0
        %3542 = vmatprep.subr.mxu0 0.0
        %3543 = vmatpush1.msra.mxu0 0.0
        %3544 = vmatprep.subr.mxu0 0.0
        %3545 = vmatpush1.msra.mxu0 0.0
        %3546 = vmatprep.subr.mxu0 0.0
        %3547 = vmatpush1.msra.mxu0 0.0
        %3548 = vmatprep.subr.mxu0 0.0
        %3549 = vmatpush1.msra.mxu0 0.0
        %3550 = vmatprep.subr.mxu0 0.0
        %3551 = vmatpush1.msra.mxu0 0.0
        %3552 = vmatprep.subr.mxu0 0.0
        %3553 = vmatpush1.msra.mxu0 0.0
        %3554 = vmatprep.subr.mxu0 0.0
        %3555 = vmatpush1.msra.mxu0 0.0
        %3556 = vmatprep.subr.mxu0 0.0
        %3557 = vmatpush1.msra.mxu0 0.0
        %3558 = vmatprep.subr.mxu0 0.0
        %3559 = vmatpush1.msra.mxu0 0.0
        %3560 = vmatprep.subr.mxu0 0.0
        %3561 = vmatpush1.msra.mxu0 0.0
        %3562 = vmatprep.subr.mxu0 0.0
        %3563 = vmatpush1.msra.mxu0 0.0
        %3564 = vmatprep.subr.mxu0 0.0
        %3565 = vmatpush1.msra.mxu0 0.0
        %3566 = vmatprep.subr.mxu0 0.0
        %3567 = vmatpush1.msra.mxu0 0.0
        %3568 = vmatprep.subr.mxu0 0.0
        %3569 = vmatpush1.msra.mxu0 0.0
        %3570 = vmatprep.subr.mxu0 0.0
        %3571 = vmatpush1.msra.mxu0 0.0
        %3572 = vmatprep.subr.mxu0 0.0
        %3573 = vmatpush1.msra.mxu0 0.0
        %3574 = vmatprep.subr.mxu0 0.0
        %3575 = vmatpush1.msra.mxu0 0.0
        %3576 = vmatprep.subr.mxu0 0.0
        %3577 = vmatpush1.msra.mxu0 0.0
        %3578 = vmatprep.subr.mxu0 0.0
        %3579 = vmatpush1.msra.mxu0 0.0
        %3580 = vmatprep.mubr.f32.mxu0 0.0
        %3581 = vmatmul.mubr.f32.gmra.mrb[0].mxu0 %v3421
        %v3582 = vpop.f32.mrb[0].mxu0
        %v3583 = vadd.f32 0.0, %v3582
        %v3584 = vpop.f32.mrb[0].mxu0
        %3585 = vmatprep.mubr.f32.mxu0 0.0
        %3586 = vmatmul.mubr.f32.gmra.mrb[0].mxu0 %v3424
        %v3587 = vpop.f32.mrb[0].mxu0
        %v3588 = vadd.f32 0.0, %v3587
        %v3589 = vpop.f32.mrb[0].mxu0
        %3590 = vmatprep.mubr.f32.mxu0 0.0
        %3591 = vmatmul.mubr.f32.gmra.mrb[0].mxu0 %v3427
        %v3592 = vpop.f32.mrb[0].mxu0
        %v3593 = vadd.f32 0.0, %v3592
        %v3594 = vpop.f32.mrb[0].mxu0
        %3595 = vmatprep.mubr.f32.mxu0 0.0
        %3596 = vmatmul.mubr.f32.gmra.mrb[0].mxu0 %v3430
        %v3597 = vpop.f32.mrb[0].mxu0
        %v3598 = vadd.f32 0.0, %v3597
        %v3599 = vpop.f32.mrb[0].mxu0
        %3600 = vmatprep.mubr.f32.mxu0 0.0
        %3601 = vmatmul.mubr.f32.gmra.mrb[0].mxu0 %v3433
        %v3602 = vpop.f32.mrb[0].mxu0
        %v3603 = vadd.f32 0.0, %v3602
        %v3604 = vpop.f32.mrb[0].mxu0
        %3605 = vmatprep.mubr.f32.mxu0 0.0
        %3606 = vmatmul.mubr.f32.gmra.mrb[0].mxu0 %v3436
        %v3607 = vpop.f32.mrb[0].mxu0
        %v3608 = vadd.f32 0.0, %v3607
        %v3609 = vpop.f32.mrb[0].mxu0
        %3610 = vmatprep.mubr.f32.mxu0 0.0
        %3611 = vmatmul.mubr.f32.gmra.mrb[0].mxu0 %v3439
        %v3612 = vpop.f32.mrb[0].mxu0
        %v3613 = vadd.f32 0.0, %v3612
        %v3614 = vpop.f32.mrb[0].mxu0
        %3615 = vmatprep.mubr.f32.mxu0 0.0
        %3616 = vmatmul.mubr.f32.gmra.mrb[0].mxu0 %v3442
        %v3617 = vpop.f32.mrb[0].mxu0
        %v3618 = vadd.f32 0.0, %v3617
        %v3619 = vpop.f32.mrb[0].mxu0
        %3620 = vmatprep.mubr.f32.mxu0 0.0
        %3621 = vmatmul.mubr.f32.gmra.mrb[0].mxu0 %v3445
        %v3622 = vpop.f32.mrb[0].mxu0
        %v3623 = vadd.f32 0.0, %v3622
        %v3624 = vpop.f32.mrb[0].mxu0
        %3625 = vmatprep.mubr.f32.mxu0 0.0
        %3626 = vmatmul.mubr.f32.gmra.mrb[0].mxu0 %v3448
        %v3627 = vpop.f32.mrb[0].mxu0
        %v3628 = vadd.f32 0.0, %v3627
        %v3629 = vpop.f32.mrb[0].mxu0
        %3630 = vmatprep.mubr.f32.mxu0 0.0
        %3631 = vmatmul.mubr.f32.gmra.mrb[0].mxu0 %v3451
        %v3632 = vpop.f32.mrb[0].mxu0
        %v3633 = vadd.f32 0.0, %v3632
        %v3634 = vpop.f32.mrb[0].mxu0
        %3635 = vmatprep.mubr.f32.mxu0 0.0
        %3636 = vmatmul.mubr.f32.gmra.mrb[0].mxu0 %v3454
        %v3637 = vpop.f32.mrb[0].mxu0
        %v3638 = vadd.f32 0.0, %v3637
        %v3639 = vpop.f32.mrb[0].mxu0
        %3640 = vmatprep.mubr.f32.mxu0 0.0
        %3641 = vmatmul.mubr.f32.gmra.mrb[0].mxu0 %v3457
        %v3642 = vpop.f32.mrb[0].mxu0
        %v3643 = vadd.f32 0.0, %v3642
        %v3644 = vpop.f32.mrb[0].mxu0
        %3645 = vmatprep.mubr.f32.mxu0 0.0
        %3646 = vmatmul.mubr.f32.gmra.mrb[0].mxu0 %v3460
        %v3647 = vpop.f32.mrb[0].mxu0
        %v3648 = vadd.f32 0.0, %v3647
        %v3649 = vpop.f32.mrb[0].mxu0
        %3650 = vmatprep.mubr.f32.mxu0 0.0
        %3651 = vmatmul.mubr.f32.gmra.mrb[0].mxu0 %v3463
        %v3652 = vpop.f32.mrb[0].mxu0
        %v3653 = vadd.f32 0.0, %v3652
        %v3654 = vpop.f32.mrb[0].mxu0
        %3655 = vmatprep.mubr.f32.mxu0 0.0
        %3656 = vmatmul.mubr.f32.gmra.mrb[0].mxu0 %v3466
        %v3657 = vpop.f32.mrb[0].mxu0
        %v3658 = vadd.f32 0.0, %v3657
        %v3659 = vpop.f32.mrb[0].mxu0
        %3660 = vmatprep.mubr.f32.mxu0 0.0
        %3661 = vmatmul.mubr.f32.gmra.mrb[0].mxu0 %v3469
        %v3662 = vpop.f32.mrb[0].mxu0
        %v3663 = vadd.f32 0.0, %v3662
        %v3664 = vpop.f32.mrb[0].mxu0
        %3665 = vmatprep.mubr.f32.mxu0 0.0
        %3666 = vmatmul.mubr.f32.gmra.mrb[0].mxu0 %v3472
        %v3667 = vpop.f32.mrb[0].mxu0
        %v3668 = vadd.f32 0.0, %v3667
        %v3669 = vpop.f32.mrb[0].mxu0
        %3670 = vmatprep.mubr.f32.mxu0 0.0
        %3671 = vmatmul.mubr.f32.gmra.mrb[0].mxu0 %v3475
        %v3672 = vpop.f32.mrb[0].mxu0
        %v3673 = vadd.f32 0.0, %v3672
        %v3674 = vpop.f32.mrb[0].mxu0
        %3675 = vmatprep.mubr.f32.mxu0 0.0
        %3676 = vmatmul.mubr.f32.gmra.mrb[0].mxu0 %v3478
        %v3677 = vpop.f32.mrb[0].mxu0
        %v3678 = vadd.f32 0.0, %v3677
        %v3679 = vpop.f32.mrb[0].mxu0
        %3680 = vmatprep.mubr.f32.mxu0 0.0
        %3681 = vmatmul.mubr.f32.gmra.mrb[0].mxu0 %v3481
        %v3682 = vpop.f32.mrb[0].mxu0
        %v3683 = vadd.f32 0.0, %v3682
        %v3684 = vpop.f32.mrb[0].mxu0
        %3685 = vmatprep.mubr.f32.mxu0 0.0
        %3686 = vmatmul.mubr.f32.gmra.mrb[0].mxu0 %v3484
        %v3687 = vpop.f32.mrb[0].mxu0
        %v3688 = vadd.f32 0.0, %v3687
        %v3689 = vpop.f32.mrb[0].mxu0
        %3690 = vmatprep.mubr.f32.mxu0 0.0
        %3691 = vmatmul.mubr.f32.gmra.mrb[0].mxu0 %v3487
        %v3692 = vpop.f32.mrb[0].mxu0
        %v3693 = vadd.f32 0.0, %v3692
        %v3694 = vpop.f32.mrb[0].mxu0
        %3695 = vmatprep.mubr.f32.mxu0 0.0
        %3696 = vmatmul.mubr.f32.gmra.mrb[0].mxu0 %v3490
        %v3697 = vpop.f32.mrb[0].mxu0
        %v3698 = vadd.f32 0.0, %v3697
        %v3699 = vpop.f32.mrb[0].mxu0
        %3700 = vmatprep.mubr.f32.mxu0 0.0
        %3701 = vmatmul.mubr.f32.gmra.mrb[0].mxu0 %v3493
        %v3702 = vpop.f32.mrb[0].mxu0
        %v3703 = vadd.f32 0.0, %v3702
        %v3704 = vpop.f32.mrb[0].mxu0
        %3705 = vmatprep.mubr.f32.mxu0 0.0
        %3706 = vmatmul.mubr.f32.gmra.mrb[0].mxu0 %v3496
        %v3707 = vpop.f32.mrb[0].mxu0
        %v3708 = vadd.f32 0.0, %v3707
        %v3709 = vpop.f32.mrb[0].mxu0
        %3710 = vmatprep.mubr.f32.mxu0 0.0
        %3711 = vmatmul.mubr.f32.gmra.mrb[0].mxu0 %v3499
        %v3712 = vpop.f32.mrb[0].mxu0
        %v3713 = vadd.f32 0.0, %v3712
        %v3714 = vpop.f32.mrb[0].mxu0
        %3715 = vmatprep.mubr.f32.mxu0 0.0
        %3716 = vmatmul.mubr.f32.gmra.mrb[0].mxu0 %v3502
        %v3717 = vpop.f32.mrb[0].mxu0
        %v3718 = vadd.f32 0.0, %v3717
        %v3719 = vpop.f32.mrb[0].mxu0
        %3720 = vmatprep.mubr.f32.mxu0 0.0
        %3721 = vmatmul.mubr.f32.gmra.mrb[0].mxu0 %v3505
        %v3722 = vpop.f32.mrb[0].mxu0
        %v3723 = vadd.f32 0.0, %v3722
        %v3724 = vpop.f32.mrb[0].mxu0
        %3725 = vmatprep.mubr.f32.mxu0 0.0
        %3726 = vmatmul.mubr.f32.gmra.mrb[0].mxu0 %v3508
        %v3727 = vpop.f32.mrb[0].mxu0
        %v3728 = vadd.f32 0.0, %v3727
        %v3729 = vpop.f32.mrb[0].mxu0
        %3730 = vmatprep.mubr.f32.mxu0 0.0
        %3731 = vmatmul.mubr.f32.gmra.mrb[0].mxu0 %v3511
        %v3732 = vpop.f32.mrb[0].mxu0
        %v3733 = vadd.f32 0.0, %v3732
        %v3734 = vpop.f32.mrb[0].mxu0
        %3735 = vmatprep.mubr.f32.mxu0 0.0
        %3736 = vmatmul.mubr.f32.gmra.mrb[0].mxu0 %v3514
        %v3737 = vpop.f32.mrb[0].mxu0
        %v3738 = vadd.f32 0.0, %v3737
        %v3739 = vpop.f32.mrb[0].mxu0
        %3740 = vdwg.mxu0
        %v3741 = vadd.f32 %v3315, %v3583
        %v3742 = vadd.f32 %v3316, %v3588
        %v3743 = vadd.f32 %v3317, %v3593
        %v3744 = vadd.f32 %v3318, %v3598
        %v3745 = vadd.f32 %v3319, %v3603
        %v3746 = vadd.f32 %v3320, %v3608
        %v3747 = vadd.f32 %v3321, %v3613
        %v3748 = vadd.f32 %v3322, %v3618
        %v3749 = vadd.f32 %v3323, %v3623
        %v3750 = vadd.f32 %v3324, %v3628
        %v3751 = vadd.f32 %v3325, %v3633
        %v3752 = vadd.f32 %v3326, %v3638
        %v3753 = vadd.f32 %v3327, %v3643
        %v3754 = vadd.f32 %v3328, %v3648
        %v3755 = vadd.f32 %v3329, %v3653
        %v3756 = vadd.f32 %v3330, %v3658
        %v3757 = vadd.f32 %v3331, %v3663
        %v3758 = vadd.f32 %v3332, %v3668
        %v3759 = vadd.f32 %v3333, %v3673
        %v3760 = vadd.f32 %v3334, %v3678
        %v3761 = vadd.f32 %v3335, %v3683
        %v3762 = vadd.f32 %v3336, %v3688
        %v3763 = vadd.f32 %v3337, %v3693
        %v3764 = vadd.f32 %v3338, %v3698
        %v3765 = vadd.f32 %v3339, %v3703
        %v3766 = vadd.f32 %v3340, %v3708
        %v3767 = vadd.f32 %v3341, %v3713
        %v3768 = vadd.f32 %v3342, %v3718
        %v3769 = vadd.f32 %v3343, %v3723
        %v3770 = vadd.f32 %v3344, %v3728
        %v3771 = vadd.f32 %v3345, %v3733
        %v3772 = vadd.f32 %v3346, %v3738
        %v3773 = vld [vmem:[#allocation2 + $0x28] sm:$0xff]
        %v3774 = vld [vmem:[#allocation2 + $0x30] sm:$0xff]
        %v3775 = vld [vmem:[#allocation2 + $0x38] sm:$0xff]
        %v3776 = vld [vmem:[#allocation2 + $0x40] sm:$0xff]
        %v3777 = vld [vmem:[#allocation2 + $0x48] sm:$0xff]
        %v3778 = vld [vmem:[#allocation2 + $0x50] sm:$0xff]
        %v3779 = vld [vmem:[#allocation2 + $0x58] sm:$0xff]
        %v3780 = vld [vmem:[#allocation2 + $0x60] sm:$0xff]
        %v3781 = vld [vmem:[#allocation2 + $0x68] sm:$0xff]
        %v3782 = vld [vmem:[#allocation2 + $0x70] sm:$0xff]
        %v3783 = vld [vmem:[#allocation2 + $0x78] sm:$0xff]
        %v3784 = vld [vmem:[#allocation2 + $0x80] sm:$0xff]
        %v3785 = vld [vmem:[#allocation2 + $0x88] sm:$0xff]
        %v3786 = vld [vmem:[#allocation2 + $0x90] sm:$0xff]
        %v3787 = vld [vmem:[#allocation2 + $0x98] sm:$0xff]
        %v3788 = vld [vmem:[#allocation2 + $0xa0] sm:$0xff]
        %v3789 = vld [vmem:[#allocation2 + $0xa8] sm:$0xff]
        %v3790 = vld [vmem:[#allocation2 + $0xb0] sm:$0xff]
        %v3791 = vld [vmem:[#allocation2 + $0xb8] sm:$0xff]
        %v3792 = vld [vmem:[#allocation2 + $0xc0] sm:$0xff]
        %v3793 = vld [vmem:[#allocation2 + $0xc8] sm:$0xff]
        %v3794 = vld [vmem:[#allocation2 + $0xd0] sm:$0xff]
        %v3795 = vld [vmem:[#allocation2 + $0xd8] sm:$0xff]
        %v3796 = vld [vmem:[#allocation2 + $0xe0] sm:$0xff]
        %v3797 = vld [vmem:[#allocation2 + $0xe8] sm:$0xff]
        %v3798 = vld [vmem:[#allocation2 + $0xf0] sm:$0xff]
        %v3799 = vld [vmem:[#allocation2 + $0xf8] sm:$0xff]
        %v3800 = vld [vmem:[#allocation2 + $0x100] sm:$0xff]
        %v3801 = vld [vmem:[#allocation2 + $0x108] sm:$0xff]
        %v3802 = vld [vmem:[#allocation2 + $0x110] sm:$0xff]
        %v3803 = vld [vmem:[#allocation2 + $0x118] sm:$0xff]
        %v3804 = vld [vmem:[#allocation2 + $0x120] sm:$0xff]
        %s3805 = scalar_lea.vmem %s1, 448
        %v3806 = vld [vmem:[%s3805] sm:$0xff]
        %v3807 = vld [vmem:[%s3805 + $0x8] sm:$0xff]
        %v3808 = vld [vmem:[%s3805 + $0x10] sm:$0xff]
        %v3809 = vld [vmem:[%s3805 + $0x18] sm:$0xff]
        %v3810 = vld [vmem:[%s3805 + $0x20] sm:$0xff]
        %v3811 = vld [vmem:[%s3805 + $0x28] sm:$0xff]
        %v3812 = vld [vmem:[%s3805 + $0x30] sm:$0xff]
        %v3813 = vld [vmem:[%s3805 + $0x38] sm:$0xff]
        %v3815 = vsel %vm240, %v3773, 0
        %v3818 = vsel %vm240, %v3774, 0
        %v3821 = vsel %vm240, %v3775, 0
        %v3824 = vsel %vm240, %v3776, 0
        %v3827 = vsel %vm240, %v3777, 0
        %v3830 = vsel %vm240, %v3778, 0
        %v3833 = vsel %vm240, %v3779, 0
        %v3836 = vsel %vm240, %v3780, 0
        %v3839 = vsel %vm240, %v3781, 0
        %v3842 = vsel %vm240, %v3782, 0
        %v3845 = vsel %vm240, %v3783, 0
        %v3848 = vsel %vm240, %v3784, 0
        %v3851 = vsel %vm240, %v3785, 0
        %v3854 = vsel %vm240, %v3786, 0
        %v3857 = vsel %vm240, %v3787, 0
        %v3860 = vsel %vm240, %v3788, 0
        %v3863 = vsel %vm240, %v3789, 0
        %v3866 = vsel %vm240, %v3790, 0
        %v3869 = vsel %vm240, %v3791, 0
        %v3872 = vsel %vm240, %v3792, 0
        %v3875 = vsel %vm240, %v3793, 0
        %v3878 = vsel %vm240, %v3794, 0
        %v3881 = vsel %vm240, %v3795, 0
        %v3884 = vsel %vm240, %v3796, 0
        %v3887 = vsel %vm240, %v3797, 0
        %v3890 = vsel %vm240, %v3798, 0
        %v3893 = vsel %vm240, %v3799, 0
        %v3896 = vsel %vm240, %v3800, 0
        %v3899 = vsel %vm240, %v3801, 0
        %v3902 = vsel %vm240, %v3802, 0
        %v3905 = vsel %vm240, %v3803, 0
        %v3908 = vsel %vm240, %v3804, 0
        %3910 = vmatprep.subr.mxu0 0.0
        %3911 = vmatpush1.msra.mxu0 %v3806
        %3912 = vmatprep.subr.mxu0 0.0
        %3913 = vmatpush1.msra.mxu0 %v3807
        %3914 = vmatprep.subr.mxu0 0.0
        %3915 = vmatpush1.msra.mxu0 %v3808
        %3916 = vmatprep.subr.mxu0 0.0
        %3917 = vmatpush1.msra.mxu0 %v3809
        %3918 = vmatprep.subr.mxu0 0.0
        %3919 = vmatpush1.msra.mxu0 %v3810
        %3920 = vmatprep.subr.mxu0 0.0
        %3921 = vmatpush1.msra.mxu0 %v3811
        %3922 = vmatprep.subr.mxu0 0.0
        %3923 = vmatpush1.msra.mxu0 %v3812
        %3924 = vmatprep.subr.mxu0 0.0
        %3925 = vmatpush1.msra.mxu0 %v3813
        %3926 = vmatprep.subr.mxu0 0.0
        %3927 = vmatpush1.msra.mxu0 0.0
        %3928 = vmatprep.subr.mxu0 0.0
        %3929 = vmatpush1.msra.mxu0 0.0
        %3930 = vmatprep.subr.mxu0 0.0
        %3931 = vmatpush1.msra.mxu0 0.0
        %3932 = vmatprep.subr.mxu0 0.0
        %3933 = vmatpush1.msra.mxu0 0.0
        %3934 = vmatprep.subr.mxu0 0.0
        %3935 = vmatpush1.msra.mxu0 0.0
        %3936 = vmatprep.subr.mxu0 0.0
        %3937 = vmatpush1.msra.mxu0 0.0
        %3938 = vmatprep.subr.mxu0 0.0
        %3939 = vmatpush1.msra.mxu0 0.0
        %3940 = vmatprep.subr.mxu0 0.0
        %3941 = vmatpush1.msra.mxu0 0.0
        %3942 = vmatprep.subr.mxu0 0.0
        %3943 = vmatpush1.msra.mxu0 0.0
        %3944 = vmatprep.subr.mxu0 0.0
        %3945 = vmatpush1.msra.mxu0 0.0
        %3946 = vmatprep.subr.mxu0 0.0
        %3947 = vmatpush1.msra.mxu0 0.0
        %3948 = vmatprep.subr.mxu0 0.0
        %3949 = vmatpush1.msra.mxu0 0.0
        %3950 = vmatprep.subr.mxu0 0.0
        %3951 = vmatpush1.msra.mxu0 0.0
        %3952 = vmatprep.subr.mxu0 0.0
        %3953 = vmatpush1.msra.mxu0 0.0
        %3954 = vmatprep.subr.mxu0 0.0
        %3955 = vmatpush1.msra.mxu0 0.0
        %3956 = vmatprep.subr.mxu0 0.0
        %3957 = vmatpush1.msra.mxu0 0.0
        %3958 = vmatprep.subr.mxu0 0.0
        %3959 = vmatpush1.msra.mxu0 0.0
        %3960 = vmatprep.subr.mxu0 0.0
        %3961 = vmatpush1.msra.mxu0 0.0
        %3962 = vmatprep.subr.mxu0 0.0
        %3963 = vmatpush1.msra.mxu0 0.0
        %3964 = vmatprep.subr.mxu0 0.0
        %3965 = vmatpush1.msra.mxu0 0.0
        %3966 = vmatprep.subr.mxu0 0.0
        %3967 = vmatpush1.msra.mxu0 0.0
        %3968 = vmatprep.subr.mxu0 0.0
        %3969 = vmatpush1.msra.mxu0 0.0
        %3970 = vmatprep.subr.mxu0 0.0
        %3971 = vmatpush1.msra.mxu0 0.0
        %3972 = vmatprep.subr.mxu0 0.0
        %3973 = vmatpush1.msra.mxu0 0.0
        %3974 = vmatprep.mubr.f32.mxu0 0.0
        %3975 = vmatmul.mubr.f32.gmra.mrb[0].mxu0 %v3815
        %v3976 = vpop.f32.mrb[0].mxu0
        %v3977 = vadd.f32 0.0, %v3976
        %v3978 = vpop.f32.mrb[0].mxu0
        %3979 = vmatprep.mubr.f32.mxu0 0.0
        %3980 = vmatmul.mubr.f32.gmra.mrb[0].mxu0 %v3818
        %v3981 = vpop.f32.mrb[0].mxu0
        %v3982 = vadd.f32 0.0, %v3981
        %v3983 = vpop.f32.mrb[0].mxu0
        %3984 = vmatprep.mubr.f32.mxu0 0.0
        %3985 = vmatmul.mubr.f32.gmra.mrb[0].mxu0 %v3821
        %v3986 = vpop.f32.mrb[0].mxu0
        %v3987 = vadd.f32 0.0, %v3986
        %v3988 = vpop.f32.mrb[0].mxu0
        %3989 = vmatprep.mubr.f32.mxu0 0.0
        %3990 = vmatmul.mubr.f32.gmra.mrb[0].mxu0 %v3824
        %v3991 = vpop.f32.mrb[0].mxu0
        %v3992 = vadd.f32 0.0, %v3991
        %v3993 = vpop.f32.mrb[0].mxu0
        %3994 = vmatprep.mubr.f32.mxu0 0.0
        %3995 = vmatmul.mubr.f32.gmra.mrb[0].mxu0 %v3827
        %v3996 = vpop.f32.mrb[0].mxu0
        %v3997 = vadd.f32 0.0, %v3996
        %v3998 = vpop.f32.mrb[0].mxu0
        %3999 = vmatprep.mubr.f32.mxu0 0.0
        %4000 = vmatmul.mubr.f32.gmra.mrb[0].mxu0 %v3830
        %v4001 = vpop.f32.mrb[0].mxu0
        %v4002 = vadd.f32 0.0, %v4001
        %v4003 = vpop.f32.mrb[0].mxu0
        %4004 = vmatprep.mubr.f32.mxu0 0.0
        %4005 = vmatmul.mubr.f32.gmra.mrb[0].mxu0 %v3833
        %v4006 = vpop.f32.mrb[0].mxu0
        %v4007 = vadd.f32 0.0, %v4006
        %v4008 = vpop.f32.mrb[0].mxu0
        %4009 = vmatprep.mubr.f32.mxu0 0.0
        %4010 = vmatmul.mubr.f32.gmra.mrb[0].mxu0 %v3836
        %v4011 = vpop.f32.mrb[0].mxu0
        %v4012 = vadd.f32 0.0, %v4011
        %v4013 = vpop.f32.mrb[0].mxu0
        %4014 = vmatprep.mubr.f32.mxu0 0.0
        %4015 = vmatmul.mubr.f32.gmra.mrb[0].mxu0 %v3839
        %v4016 = vpop.f32.mrb[0].mxu0
        %v4017 = vadd.f32 0.0, %v4016
        %v4018 = vpop.f32.mrb[0].mxu0
        %4019 = vmatprep.mubr.f32.mxu0 0.0
        %4020 = vmatmul.mubr.f32.gmra.mrb[0].mxu0 %v3842
        %v4021 = vpop.f32.mrb[0].mxu0
        %v4022 = vadd.f32 0.0, %v4021
        %v4023 = vpop.f32.mrb[0].mxu0
        %4024 = vmatprep.mubr.f32.mxu0 0.0
        %4025 = vmatmul.mubr.f32.gmra.mrb[0].mxu0 %v3845
        %v4026 = vpop.f32.mrb[0].mxu0
        %v4027 = vadd.f32 0.0, %v4026
        %v4028 = vpop.f32.mrb[0].mxu0
        %4029 = vmatprep.mubr.f32.mxu0 0.0
        %4030 = vmatmul.mubr.f32.gmra.mrb[0].mxu0 %v3848
        %v4031 = vpop.f32.mrb[0].mxu0
        %v4032 = vadd.f32 0.0, %v4031
        %v4033 = vpop.f32.mrb[0].mxu0
        %4034 = vmatprep.mubr.f32.mxu0 0.0
        %4035 = vmatmul.mubr.f32.gmra.mrb[0].mxu0 %v3851
        %v4036 = vpop.f32.mrb[0].mxu0
        %v4037 = vadd.f32 0.0, %v4036
        %v4038 = vpop.f32.mrb[0].mxu0
        %4039 = vmatprep.mubr.f32.mxu0 0.0
        %4040 = vmatmul.mubr.f32.gmra.mrb[0].mxu0 %v3854
        %v4041 = vpop.f32.mrb[0].mxu0
        %v4042 = vadd.f32 0.0, %v4041
        %v4043 = vpop.f32.mrb[0].mxu0
        %4044 = vmatprep.mubr.f32.mxu0 0.0
        %4045 = vmatmul.mubr.f32.gmra.mrb[0].mxu0 %v3857
        %v4046 = vpop.f32.mrb[0].mxu0
        %v4047 = vadd.f32 0.0, %v4046
        %v4048 = vpop.f32.mrb[0].mxu0
        %4049 = vmatprep.mubr.f32.mxu0 0.0
        %4050 = vmatmul.mubr.f32.gmra.mrb[0].mxu0 %v3860
        %v4051 = vpop.f32.mrb[0].mxu0
        %v4052 = vadd.f32 0.0, %v4051
        %v4053 = vpop.f32.mrb[0].mxu0
        %4054 = vmatprep.mubr.f32.mxu0 0.0
        %4055 = vmatmul.mubr.f32.gmra.mrb[0].mxu0 %v3863
        %v4056 = vpop.f32.mrb[0].mxu0
        %v4057 = vadd.f32 0.0, %v4056
        %v4058 = vpop.f32.mrb[0].mxu0
        %4059 = vmatprep.mubr.f32.mxu0 0.0
        %4060 = vmatmul.mubr.f32.gmra.mrb[0].mxu0 %v3866
        %v4061 = vpop.f32.mrb[0].mxu0
        %v4062 = vadd.f32 0.0, %v4061
        %v4063 = vpop.f32.mrb[0].mxu0
        %4064 = vmatprep.mubr.f32.mxu0 0.0
        %4065 = vmatmul.mubr.f32.gmra.mrb[0].mxu0 %v3869
        %v4066 = vpop.f32.mrb[0].mxu0
        %v4067 = vadd.f32 0.0, %v4066
        %v4068 = vpop.f32.mrb[0].mxu0
        %4069 = vmatprep.mubr.f32.mxu0 0.0
        %4070 = vmatmul.mubr.f32.gmra.mrb[0].mxu0 %v3872
        %v4071 = vpop.f32.mrb[0].mxu0
        %v4072 = vadd.f32 0.0, %v4071
        %v4073 = vpop.f32.mrb[0].mxu0
        %4074 = vmatprep.mubr.f32.mxu0 0.0
        %4075 = vmatmul.mubr.f32.gmra.mrb[0].mxu0 %v3875
        %v4076 = vpop.f32.mrb[0].mxu0
        %v4077 = vadd.f32 0.0, %v4076
        %v4078 = vpop.f32.mrb[0].mxu0
        %4079 = vmatprep.mubr.f32.mxu0 0.0
        %4080 = vmatmul.mubr.f32.gmra.mrb[0].mxu0 %v3878
        %v4081 = vpop.f32.mrb[0].mxu0
        %v4082 = vadd.f32 0.0, %v4081
        %v4083 = vpop.f32.mrb[0].mxu0
        %4084 = vmatprep.mubr.f32.mxu0 0.0
        %4085 = vmatmul.mubr.f32.gmra.mrb[0].mxu0 %v3881
        %v4086 = vpop.f32.mrb[0].mxu0
        %v4087 = vadd.f32 0.0, %v4086
        %v4088 = vpop.f32.mrb[0].mxu0
        %4089 = vmatprep.mubr.f32.mxu0 0.0
        %4090 = vmatmul.mubr.f32.gmra.mrb[0].mxu0 %v3884
        %v4091 = vpop.f32.mrb[0].mxu0
        %v4092 = vadd.f32 0.0, %v4091
        %v4093 = vpop.f32.mrb[0].mxu0
        %4094 = vmatprep.mubr.f32.mxu0 0.0
        %4095 = vmatmul.mubr.f32.gmra.mrb[0].mxu0 %v3887
        %v4096 = vpop.f32.mrb[0].mxu0
        %v4097 = vadd.f32 0.0, %v4096
        %v4098 = vpop.f32.mrb[0].mxu0
        %4099 = vmatprep.mubr.f32.mxu0 0.0
        %4100 = vmatmul.mubr.f32.gmra.mrb[0].mxu0 %v3890
        %v4101 = vpop.f32.mrb[0].mxu0
        %v4102 = vadd.f32 0.0, %v4101
        %v4103 = vpop.f32.mrb[0].mxu0
        %4104 = vmatprep.mubr.f32.mxu0 0.0
        %4105 = vmatmul.mubr.f32.gmra.mrb[0].mxu0 %v3893
        %v4106 = vpop.f32.mrb[0].mxu0
        %v4107 = vadd.f32 0.0, %v4106
        %v4108 = vpop.f32.mrb[0].mxu0
        %4109 = vmatprep.mubr.f32.mxu0 0.0
        %4110 = vmatmul.mubr.f32.gmra.mrb[0].mxu0 %v3896
        %v4111 = vpop.f32.mrb[0].mxu0
        %v4112 = vadd.f32 0.0, %v4111
        %v4113 = vpop.f32.mrb[0].mxu0
        %4114 = vmatprep.mubr.f32.mxu0 0.0
        %4115 = vmatmul.mubr.f32.gmra.mrb[0].mxu0 %v3899
        %v4116 = vpop.f32.mrb[0].mxu0
        %v4117 = vadd.f32 0.0, %v4116
        %v4118 = vpop.f32.mrb[0].mxu0
        %4119 = vmatprep.mubr.f32.mxu0 0.0
        %4120 = vmatmul.mubr.f32.gmra.mrb[0].mxu0 %v3902
        %v4121 = vpop.f32.mrb[0].mxu0
        %v4122 = vadd.f32 0.0, %v4121
        %v4123 = vpop.f32.mrb[0].mxu0
        %4124 = vmatprep.mubr.f32.mxu0 0.0
        %4125 = vmatmul.mubr.f32.gmra.mrb[0].mxu0 %v3905
        %v4126 = vpop.f32.mrb[0].mxu0
        %v4127 = vadd.f32 0.0, %v4126
        %v4128 = vpop.f32.mrb[0].mxu0
        %4129 = vmatprep.mubr.f32.mxu0 0.0
        %4130 = vmatmul.mubr.f32.gmra.mrb[0].mxu0 %v3908
        %v4131 = vpop.f32.mrb[0].mxu0
        %v4132 = vadd.f32 0.0, %v4131
        %v4133 = vpop.f32.mrb[0].mxu0
        %4134 = vdwg.mxu0
        %v4135 = vadd.f32 %v3741, %v3977
        %v4136 = vadd.f32 %v3742, %v3982
        %v4137 = vadd.f32 %v3743, %v3987
        %v4138 = vadd.f32 %v3744, %v3992
        %v4139 = vadd.f32 %v3745, %v3997
        %v4140 = vadd.f32 %v3746, %v4002
        %v4141 = vadd.f32 %v3747, %v4007
        %v4142 = vadd.f32 %v3748, %v4012
        %v4143 = vadd.f32 %v3749, %v4017
        %v4144 = vadd.f32 %v3750, %v4022
        %v4145 = vadd.f32 %v3751, %v4027
        %v4146 = vadd.f32 %v3752, %v4032
        %v4147 = vadd.f32 %v3753, %v4037
        %v4148 = vadd.f32 %v3754, %v4042
        %v4149 = vadd.f32 %v3755, %v4047
        %v4150 = vadd.f32 %v3756, %v4052
        %v4151 = vadd.f32 %v3757, %v4057
        %v4152 = vadd.f32 %v3758, %v4062
        %v4153 = vadd.f32 %v3759, %v4067
        %v4154 = vadd.f32 %v3760, %v4072
        %v4155 = vadd.f32 %v3761, %v4077
        %v4156 = vadd.f32 %v3762, %v4082
        %v4157 = vadd.f32 %v3763, %v4087
        %v4158 = vadd.f32 %v3764, %v4092
        %v4159 = vadd.f32 %v3765, %v4097
        %v4160 = vadd.f32 %v3766, %v4102
        %v4161 = vadd.f32 %v3767, %v4107
        %v4162 = vadd.f32 %v3768, %v4112
        %v4163 = vadd.f32 %v3769, %v4117
        %v4164 = vadd.f32 %v3770, %v4122
        %v4165 = vadd.f32 %v3771, %v4127
        %v4166 = vadd.f32 %v3772, %v4132
        %v4167 = vld [vmem:[#allocation2 + $0x29] sm:$0xff]
        %v4168 = vld [vmem:[#allocation2 + $0x31] sm:$0xff]
        %v4169 = vld [vmem:[#allocation2 + $0x39] sm:$0xff]
        %v4170 = vld [vmem:[#allocation2 + $0x41] sm:$0xff]
        %v4171 = vld [vmem:[#allocation2 + $0x49] sm:$0xff]
        %v4172 = vld [vmem:[#allocation2 + $0x51] sm:$0xff]
        %v4173 = vld [vmem:[#allocation2 + $0x59] sm:$0xff]
        %v4174 = vld [vmem:[#allocation2 + $0x61] sm:$0xff]
        %v4175 = vld [vmem:[#allocation2 + $0x69] sm:$0xff]
        %v4176 = vld [vmem:[#allocation2 + $0x71] sm:$0xff]
        %v4177 = vld [vmem:[#allocation2 + $0x79] sm:$0xff]
        %v4178 = vld [vmem:[#allocation2 + $0x81] sm:$0xff]
        %v4179 = vld [vmem:[#allocation2 + $0x89] sm:$0xff]
        %v4180 = vld [vmem:[#allocation2 + $0x91] sm:$0xff]
        %v4181 = vld [vmem:[#allocation2 + $0x99] sm:$0xff]
        %v4182 = vld [vmem:[#allocation2 + $0xa1] sm:$0xff]
        %v4183 = vld [vmem:[#allocation2 + $0xa9] sm:$0xff]
        %v4184 = vld [vmem:[#allocation2 + $0xb1] sm:$0xff]
        %v4185 = vld [vmem:[#allocation2 + $0xb9] sm:$0xff]
        %v4186 = vld [vmem:[#allocation2 + $0xc1] sm:$0xff]
        %v4187 = vld [vmem:[#allocation2 + $0xc9] sm:$0xff]
        %v4188 = vld [vmem:[#allocation2 + $0xd1] sm:$0xff]
        %v4189 = vld [vmem:[#allocation2 + $0xd9] sm:$0xff]
        %v4190 = vld [vmem:[#allocation2 + $0xe1] sm:$0xff]
        %v4191 = vld [vmem:[#allocation2 + $0xe9] sm:$0xff]
        %v4192 = vld [vmem:[#allocation2 + $0xf1] sm:$0xff]
        %v4193 = vld [vmem:[#allocation2 + $0xf9] sm:$0xff]
        %v4194 = vld [vmem:[#allocation2 + $0x101] sm:$0xff]
        %v4195 = vld [vmem:[#allocation2 + $0x109] sm:$0xff]
        %v4196 = vld [vmem:[#allocation2 + $0x111] sm:$0xff]
        %v4197 = vld [vmem:[#allocation2 + $0x119] sm:$0xff]
        %v4198 = vld [vmem:[#allocation2 + $0x121] sm:$0xff]
        %v4199 = vsel %vm1675, %v4167, 0.0
        %v4200 = vsel %vm1676, %v4168, 0.0
        %v4201 = vsel %vm1677, %v4169, 0.0
        %v4202 = vsel %vm1678, %v4170, 0.0
        %v4203 = vsel %vm1679, %v4171, 0.0
        %v4204 = vsel %vm1680, %v4172, 0.0
        %v4205 = vsel %vm1681, %v4173, 0.0
        %v4206 = vsel %vm1682, %v4174, 0.0
        %v4207 = vsel %vm1683, %v4175, 0.0
        %v4208 = vsel %vm1684, %v4176, 0.0
        %v4209 = vsel %vm1685, %v4177, 0.0
        %v4210 = vsel %vm1686, %v4178, 0.0
        %v4211 = vsel %vm1687, %v4179, 0.0
        %v4212 = vsel %vm1688, %v4180, 0.0
        %v4213 = vsel %vm1689, %v4181, 0.0
        %v4214 = vsel %vm1690, %v4182, 0.0
        %v4215 = vsel %vm1691, %v4183, 0.0
        %v4216 = vsel %vm1692, %v4184, 0.0
        %v4217 = vsel %vm1693, %v4185, 0.0
        %v4218 = vsel %vm1694, %v4186, 0.0
        %v4219 = vsel %vm1695, %v4187, 0.0
        %v4220 = vsel %vm1696, %v4188, 0.0
        %v4221 = vsel %vm1697, %v4189, 0.0
        %v4222 = vsel %vm1698, %v4190, 0.0
        %v4223 = vsel %vm1699, %v4191, 0.0
        %v4224 = vsel %vm1700, %v4192, 0.0
        %v4225 = vsel %vm1701, %v4193, 0.0
        %v4226 = vsel %vm1702, %v4194, 0.0
        %v4227 = vsel %vm1703, %v4195, 0.0
        %v4228 = vsel %vm1704, %v4196, 0.0
        %v4229 = vsel %vm1705, %v4197, 0.0
        %v4230 = vsel %vm1706, %v4198, 0.0
        %s4231 = scalar_lea.vmem %s1, 512
        %v4232 = vld [vmem:[%s4231] sm:$0xff]
        %v4233 = vld [vmem:[%s4231 + $0x8] sm:$0xff]
        %v4234 = vld [vmem:[%s4231 + $0x10] sm:$0xff]
        %v4235 = vld [vmem:[%s4231 + $0x18] sm:$0xff]
        %v4236 = vld [vmem:[%s4231 + $0x20] sm:$0xff]
        %v4237 = vld [vmem:[%s4231 + $0x28] sm:$0xff]
        %v4238 = vld [vmem:[%s4231 + $0x30] sm:$0xff]
        %v4239 = vld [vmem:[%s4231 + $0x38] sm:$0xff]
        %v4241 = vsel %vm240, %v4199, 0
        %v4244 = vsel %vm240, %v4200, 0
        %v4247 = vsel %vm240, %v4201, 0
        %v4250 = vsel %vm240, %v4202, 0
        %v4253 = vsel %vm240, %v4203, 0
        %v4256 = vsel %vm240, %v4204, 0
        %v4259 = vsel %vm240, %v4205, 0
        %v4262 = vsel %vm240, %v4206, 0
        %v4265 = vsel %vm240, %v4207, 0
        %v4268 = vsel %vm240, %v4208, 0
        %v4271 = vsel %vm240, %v4209, 0
        %v4274 = vsel %vm240, %v4210, 0
        %v4277 = vsel %vm240, %v4211, 0
        %v4280 = vsel %vm240, %v4212, 0
        %v4283 = vsel %vm240, %v4213, 0
        %v4286 = vsel %vm240, %v4214, 0
        %v4289 = vsel %vm240, %v4215, 0
        %v4292 = vsel %vm240, %v4216, 0
        %v4295 = vsel %vm240, %v4217, 0
        %v4298 = vsel %vm240, %v4218, 0
        %v4301 = vsel %vm240, %v4219, 0
        %v4304 = vsel %vm240, %v4220, 0
        %v4307 = vsel %vm240, %v4221, 0
        %v4310 = vsel %vm240, %v4222, 0
        %v4313 = vsel %vm240, %v4223, 0
        %v4316 = vsel %vm240, %v4224, 0
        %v4319 = vsel %vm240, %v4225, 0
        %v4322 = vsel %vm240, %v4226, 0
        %v4325 = vsel %vm240, %v4227, 0
        %v4328 = vsel %vm240, %v4228, 0
        %v4331 = vsel %vm240, %v4229, 0
        %v4334 = vsel %vm240, %v4230, 0
        %4336 = vmatprep.subr.mxu0 0.0
        %4337 = vmatpush1.msra.mxu0 %v4232
        %4338 = vmatprep.subr.mxu0 0.0
        %4339 = vmatpush1.msra.mxu0 %v4233
        %4340 = vmatprep.subr.mxu0 0.0
        %4341 = vmatpush1.msra.mxu0 %v4234
        %4342 = vmatprep.subr.mxu0 0.0
        %4343 = vmatpush1.msra.mxu0 %v4235
        %4344 = vmatprep.subr.mxu0 0.0
        %4345 = vmatpush1.msra.mxu0 %v4236
        %4346 = vmatprep.subr.mxu0 0.0
        %4347 = vmatpush1.msra.mxu0 %v4237
        %4348 = vmatprep.subr.mxu0 0.0
        %4349 = vmatpush1.msra.mxu0 %v4238
        %4350 = vmatprep.subr.mxu0 0.0
        %4351 = vmatpush1.msra.mxu0 %v4239
        %4352 = vmatprep.subr.mxu0 0.0
        %4353 = vmatpush1.msra.mxu0 0.0
        %4354 = vmatprep.subr.mxu0 0.0
        %4355 = vmatpush1.msra.mxu0 0.0
        %4356 = vmatprep.subr.mxu0 0.0
        %4357 = vmatpush1.msra.mxu0 0.0
        %4358 = vmatprep.subr.mxu0 0.0
        %4359 = vmatpush1.msra.mxu0 0.0
        %4360 = vmatprep.subr.mxu0 0.0
        %4361 = vmatpush1.msra.mxu0 0.0
        %4362 = vmatprep.subr.mxu0 0.0
        %4363 = vmatpush1.msra.mxu0 0.0
        %4364 = vmatprep.subr.mxu0 0.0
        %4365 = vmatpush1.msra.mxu0 0.0
        %4366 = vmatprep.subr.mxu0 0.0
        %4367 = vmatpush1.msra.mxu0 0.0
        %4368 = vmatprep.subr.mxu0 0.0
        %4369 = vmatpush1.msra.mxu0 0.0
        %4370 = vmatprep.subr.mxu0 0.0
        %4371 = vmatpush1.msra.mxu0 0.0
        %4372 = vmatprep.subr.mxu0 0.0
        %4373 = vmatpush1.msra.mxu0 0.0
        %4374 = vmatprep.subr.mxu0 0.0
        %4375 = vmatpush1.msra.mxu0 0.0
        %4376 = vmatprep.subr.mxu0 0.0
        %4377 = vmatpush1.msra.mxu0 0.0
        %4378 = vmatprep.subr.mxu0 0.0
        %4379 = vmatpush1.msra.mxu0 0.0
        %4380 = vmatprep.subr.mxu0 0.0
        %4381 = vmatpush1.msra.mxu0 0.0
        %4382 = vmatprep.subr.mxu0 0.0
        %4383 = vmatpush1.msra.mxu0 0.0
        %4384 = vmatprep.subr.mxu0 0.0
        %4385 = vmatpush1.msra.mxu0 0.0
        %4386 = vmatprep.subr.mxu0 0.0
        %4387 = vmatpush1.msra.mxu0 0.0
        %4388 = vmatprep.subr.mxu0 0.0
        %4389 = vmatpush1.msra.mxu0 0.0
        %4390 = vmatprep.subr.mxu0 0.0
        %4391 = vmatpush1.msra.mxu0 0.0
        %4392 = vmatprep.subr.mxu0 0.0
        %4393 = vmatpush1.msra.mxu0 0.0
        %4394 = vmatprep.subr.mxu0 0.0
        %4395 = vmatpush1.msra.mxu0 0.0
        %4396 = vmatprep.subr.mxu0 0.0
        %4397 = vmatpush1.msra.mxu0 0.0
        %4398 = vmatprep.subr.mxu0 0.0
        %4399 = vmatpush1.msra.mxu0 0.0
        %4400 = vmatprep.mubr.f32.mxu0 0.0
        %4401 = vmatmul.mubr.f32.gmra.mrb[0].mxu0 %v4241
        %v4402 = vpop.f32.mrb[0].mxu0
        %v4403 = vadd.f32 0.0, %v4402
        %v4404 = vpop.f32.mrb[0].mxu0
        %4405 = vmatprep.mubr.f32.mxu0 0.0
        %4406 = vmatmul.mubr.f32.gmra.mrb[0].mxu0 %v4244
        %v4407 = vpop.f32.mrb[0].mxu0
        %v4408 = vadd.f32 0.0, %v4407
        %v4409 = vpop.f32.mrb[0].mxu0
        %4410 = vmatprep.mubr.f32.mxu0 0.0
        %4411 = vmatmul.mubr.f32.gmra.mrb[0].mxu0 %v4247
        %v4412 = vpop.f32.mrb[0].mxu0
        %v4413 = vadd.f32 0.0, %v4412
        %v4414 = vpop.f32.mrb[0].mxu0
        %4415 = vmatprep.mubr.f32.mxu0 0.0
        %4416 = vmatmul.mubr.f32.gmra.mrb[0].mxu0 %v4250
        %v4417 = vpop.f32.mrb[0].mxu0
        %v4418 = vadd.f32 0.0, %v4417
        %v4419 = vpop.f32.mrb[0].mxu0
        %4420 = vmatprep.mubr.f32.mxu0 0.0
        %4421 = vmatmul.mubr.f32.gmra.mrb[0].mxu0 %v4253
        %v4422 = vpop.f32.mrb[0].mxu0
        %v4423 = vadd.f32 0.0, %v4422
        %v4424 = vpop.f32.mrb[0].mxu0
        %4425 = vmatprep.mubr.f32.mxu0 0.0
        %4426 = vmatmul.mubr.f32.gmra.mrb[0].mxu0 %v4256
        %v4427 = vpop.f32.mrb[0].mxu0
        %v4428 = vadd.f32 0.0, %v4427
        %v4429 = vpop.f32.mrb[0].mxu0
        %4430 = vmatprep.mubr.f32.mxu0 0.0
        %4431 = vmatmul.mubr.f32.gmra.mrb[0].mxu0 %v4259
        %v4432 = vpop.f32.mrb[0].mxu0
        %v4433 = vadd.f32 0.0, %v4432
        %v4434 = vpop.f32.mrb[0].mxu0
        %4435 = vmatprep.mubr.f32.mxu0 0.0
        %4436 = vmatmul.mubr.f32.gmra.mrb[0].mxu0 %v4262
        %v4437 = vpop.f32.mrb[0].mxu0
        %v4438 = vadd.f32 0.0, %v4437
        %v4439 = vpop.f32.mrb[0].mxu0
        %4440 = vmatprep.mubr.f32.mxu0 0.0
        %4441 = vmatmul.mubr.f32.gmra.mrb[0].mxu0 %v4265
        %v4442 = vpop.f32.mrb[0].mxu0
        %v4443 = vadd.f32 0.0, %v4442
        %v4444 = vpop.f32.mrb[0].mxu0
        %4445 = vmatprep.mubr.f32.mxu0 0.0
        %4446 = vmatmul.mubr.f32.gmra.mrb[0].mxu0 %v4268
        %v4447 = vpop.f32.mrb[0].mxu0
        %v4448 = vadd.f32 0.0, %v4447
        %v4449 = vpop.f32.mrb[0].mxu0
        %4450 = vmatprep.mubr.f32.mxu0 0.0
        %4451 = vmatmul.mubr.f32.gmra.mrb[0].mxu0 %v4271
        %v4452 = vpop.f32.mrb[0].mxu0
        %v4453 = vadd.f32 0.0, %v4452
        %v4454 = vpop.f32.mrb[0].mxu0
        %4455 = vmatprep.mubr.f32.mxu0 0.0
        %4456 = vmatmul.mubr.f32.gmra.mrb[0].mxu0 %v4274
        %v4457 = vpop.f32.mrb[0].mxu0
        %v4458 = vadd.f32 0.0, %v4457
        %v4459 = vpop.f32.mrb[0].mxu0
        %4460 = vmatprep.mubr.f32.mxu0 0.0
        %4461 = vmatmul.mubr.f32.gmra.mrb[0].mxu0 %v4277
        %v4462 = vpop.f32.mrb[0].mxu0
        %v4463 = vadd.f32 0.0, %v4462
        %v4464 = vpop.f32.mrb[0].mxu0
        %4465 = vmatprep.mubr.f32.mxu0 0.0
        %4466 = vmatmul.mubr.f32.gmra.mrb[0].mxu0 %v4280
        %v4467 = vpop.f32.mrb[0].mxu0
        %v4468 = vadd.f32 0.0, %v4467
        %v4469 = vpop.f32.mrb[0].mxu0
        %4470 = vmatprep.mubr.f32.mxu0 0.0
        %4471 = vmatmul.mubr.f32.gmra.mrb[0].mxu0 %v4283
        %v4472 = vpop.f32.mrb[0].mxu0
        %v4473 = vadd.f32 0.0, %v4472
        %v4474 = vpop.f32.mrb[0].mxu0
        %4475 = vmatprep.mubr.f32.mxu0 0.0
        %4476 = vmatmul.mubr.f32.gmra.mrb[0].mxu0 %v4286
        %v4477 = vpop.f32.mrb[0].mxu0
        %v4478 = vadd.f32 0.0, %v4477
        %v4479 = vpop.f32.mrb[0].mxu0
        %4480 = vmatprep.mubr.f32.mxu0 0.0
        %4481 = vmatmul.mubr.f32.gmra.mrb[0].mxu0 %v4289
        %v4482 = vpop.f32.mrb[0].mxu0
        %v4483 = vadd.f32 0.0, %v4482
        %v4484 = vpop.f32.mrb[0].mxu0
        %4485 = vmatprep.mubr.f32.mxu0 0.0
        %4486 = vmatmul.mubr.f32.gmra.mrb[0].mxu0 %v4292
        %v4487 = vpop.f32.mrb[0].mxu0
        %v4488 = vadd.f32 0.0, %v4487
        %v4489 = vpop.f32.mrb[0].mxu0
        %4490 = vmatprep.mubr.f32.mxu0 0.0
        %4491 = vmatmul.mubr.f32.gmra.mrb[0].mxu0 %v4295
        %v4492 = vpop.f32.mrb[0].mxu0
        %v4493 = vadd.f32 0.0, %v4492
        %v4494 = vpop.f32.mrb[0].mxu0
        %4495 = vmatprep.mubr.f32.mxu0 0.0
        %4496 = vmatmul.mubr.f32.gmra.mrb[0].mxu0 %v4298
        %v4497 = vpop.f32.mrb[0].mxu0
        %v4498 = vadd.f32 0.0, %v4497
        %v4499 = vpop.f32.mrb[0].mxu0
        %4500 = vmatprep.mubr.f32.mxu0 0.0
        %4501 = vmatmul.mubr.f32.gmra.mrb[0].mxu0 %v4301
        %v4502 = vpop.f32.mrb[0].mxu0
        %v4503 = vadd.f32 0.0, %v4502
        %v4504 = vpop.f32.mrb[0].mxu0
        %4505 = vmatprep.mubr.f32.mxu0 0.0
        %4506 = vmatmul.mubr.f32.gmra.mrb[0].mxu0 %v4304
        %v4507 = vpop.f32.mrb[0].mxu0
        %v4508 = vadd.f32 0.0, %v4507
        %v4509 = vpop.f32.mrb[0].mxu0
        %4510 = vmatprep.mubr.f32.mxu0 0.0
        %4511 = vmatmul.mubr.f32.gmra.mrb[0].mxu0 %v4307
        %v4512 = vpop.f32.mrb[0].mxu0
        %v4513 = vadd.f32 0.0, %v4512
        %v4514 = vpop.f32.mrb[0].mxu0
        %4515 = vmatprep.mubr.f32.mxu0 0.0
        %4516 = vmatmul.mubr.f32.gmra.mrb[0].mxu0 %v4310
        %v4517 = vpop.f32.mrb[0].mxu0
        %v4518 = vadd.f32 0.0, %v4517
        %v4519 = vpop.f32.mrb[0].mxu0
        %4520 = vmatprep.mubr.f32.mxu0 0.0
        %4521 = vmatmul.mubr.f32.gmra.mrb[0].mxu0 %v4313
        %v4522 = vpop.f32.mrb[0].mxu0
        %v4523 = vadd.f32 0.0, %v4522
        %v4524 = vpop.f32.mrb[0].mxu0
        %4525 = vmatprep.mubr.f32.mxu0 0.0
        %4526 = vmatmul.mubr.f32.gmra.mrb[0].mxu0 %v4316
        %v4527 = vpop.f32.mrb[0].mxu0
        %v4528 = vadd.f32 0.0, %v4527
        %v4529 = vpop.f32.mrb[0].mxu0
        %4530 = vmatprep.mubr.f32.mxu0 0.0
        %4531 = vmatmul.mubr.f32.gmra.mrb[0].mxu0 %v4319
        %v4532 = vpop.f32.mrb[0].mxu0
        %v4533 = vadd.f32 0.0, %v4532
        %v4534 = vpop.f32.mrb[0].mxu0
        %4535 = vmatprep.mubr.f32.mxu0 0.0
        %4536 = vmatmul.mubr.f32.gmra.mrb[0].mxu0 %v4322
        %v4537 = vpop.f32.mrb[0].mxu0
        %v4538 = vadd.f32 0.0, %v4537
        %v4539 = vpop.f32.mrb[0].mxu0
        %4540 = vmatprep.mubr.f32.mxu0 0.0
        %4541 = vmatmul.mubr.f32.gmra.mrb[0].mxu0 %v4325
        %v4542 = vpop.f32.mrb[0].mxu0
        %v4543 = vadd.f32 0.0, %v4542
        %v4544 = vpop.f32.mrb[0].mxu0
        %4545 = vmatprep.mubr.f32.mxu0 0.0
        %4546 = vmatmul.mubr.f32.gmra.mrb[0].mxu0 %v4328
        %v4547 = vpop.f32.mrb[0].mxu0
        %v4548 = vadd.f32 0.0, %v4547
        %v4549 = vpop.f32.mrb[0].mxu0
        %4550 = vmatprep.mubr.f32.mxu0 0.0
        %4551 = vmatmul.mubr.f32.gmra.mrb[0].mxu0 %v4331
        %v4552 = vpop.f32.mrb[0].mxu0
        %v4553 = vadd.f32 0.0, %v4552
        %v4554 = vpop.f32.mrb[0].mxu0
        %4555 = vmatprep.mubr.f32.mxu0 0.0
        %4556 = vmatmul.mubr.f32.gmra.mrb[0].mxu0 %v4334
        %v4557 = vpop.f32.mrb[0].mxu0
        %v4558 = vadd.f32 0.0, %v4557
        %v4559 = vpop.f32.mrb[0].mxu0
        %4560 = vdwg.mxu0
        %v4561 = vadd.f32 %v4135, %v4403
        %v4562 = vadd.f32 %v4136, %v4408
        %v4563 = vadd.f32 %v4137, %v4413
        %v4564 = vadd.f32 %v4138, %v4418
        %v4565 = vadd.f32 %v4139, %v4423
        %v4566 = vadd.f32 %v4140, %v4428
        %v4567 = vadd.f32 %v4141, %v4433
        %v4568 = vadd.f32 %v4142, %v4438
        %v4569 = vadd.f32 %v4143, %v4443
        %v4570 = vadd.f32 %v4144, %v4448
        %v4571 = vadd.f32 %v4145, %v4453
        %v4572 = vadd.f32 %v4146, %v4458
        %v4573 = vadd.f32 %v4147, %v4463
        %v4574 = vadd.f32 %v4148, %v4468
        %v4575 = vadd.f32 %v4149, %v4473
        %v4576 = vadd.f32 %v4150, %v4478
        %v4577 = vadd.f32 %v4151, %v4483
        %v4578 = vadd.f32 %v4152, %v4488
        %v4579 = vadd.f32 %v4153, %v4493
        %v4580 = vadd.f32 %v4154, %v4498
        %v4581 = vadd.f32 %v4155, %v4503
        %v4582 = vadd.f32 %v4156, %v4508
        %v4583 = vadd.f32 %v4157, %v4513
        %v4584 = vadd.f32 %v4158, %v4518
        %v4585 = vadd.f32 %v4159, %v4523
        %v4586 = vadd.f32 %v4160, %v4528
        %v4587 = vadd.f32 %v4161, %v4533
        %v4588 = vadd.f32 %v4162, %v4538
        %v4589 = vadd.f32 %v4163, %v4543
        %v4590 = vadd.f32 %v4164, %v4548
        %v4591 = vadd.f32 %v4165, %v4553
        %v4592 = vadd.f32 %v4166, %v4558
        %v4593 = vld [vmem:[%s2] sm:$0x1]
        %v4595 = vlaneseq
        %v4596 = vshrl.u32 %v4595, 7
        %v4597 = vsub.s32 0, %v4596
        %v4598 = vrot.slane %v4593, %v4597
        %v4600 = vadd.f32 %v4561, %v4598
        %v4601 = vadd.f32 %v4562, %v4598
        %v4602 = vadd.f32 %v4563, %v4598
        %v4603 = vadd.f32 %v4564, %v4598
        %v4604 = vadd.f32 %v4565, %v4598
        %v4605 = vadd.f32 %v4566, %v4598
        %v4606 = vadd.f32 %v4567, %v4598
        %v4607 = vadd.f32 %v4568, %v4598
        %v4608 = vadd.f32 %v4569, %v4598
        %v4609 = vadd.f32 %v4570, %v4598
        %v4610 = vadd.f32 %v4571, %v4598
        %v4611 = vadd.f32 %v4572, %v4598
        %v4612 = vadd.f32 %v4573, %v4598
        %v4613 = vadd.f32 %v4574, %v4598
        %v4614 = vadd.f32 %v4575, %v4598
        %v4615 = vadd.f32 %v4576, %v4598
        %v4616 = vadd.f32 %v4577, %v4598
        %v4617 = vadd.f32 %v4578, %v4598
        %v4618 = vadd.f32 %v4579, %v4598
        %v4619 = vadd.f32 %v4580, %v4598
        %v4620 = vadd.f32 %v4581, %v4598
        %v4621 = vadd.f32 %v4582, %v4598
        %v4622 = vadd.f32 %v4583, %v4598
        %v4623 = vadd.f32 %v4584, %v4598
        %v4624 = vadd.f32 %v4585, %v4598
        %v4625 = vadd.f32 %v4586, %v4598
        %v4626 = vadd.f32 %v4587, %v4598
        %v4627 = vadd.f32 %v4588, %v4598
        %v4628 = vadd.f32 %v4589, %v4598
        %v4629 = vadd.f32 %v4590, %v4598
        %v4630 = vadd.f32 %v4591, %v4598
        %v4631 = vadd.f32 %v4592, %v4598
        %v4632 = vmax.f32 %v4600, 0.0
        %v4633 = vmax.f32 %v4601, 0.0
        %v4634 = vmax.f32 %v4602, 0.0
        %v4635 = vmax.f32 %v4603, 0.0
        %v4636 = vmax.f32 %v4604, 0.0
        %v4637 = vmax.f32 %v4605, 0.0
        %v4638 = vmax.f32 %v4606, 0.0
        %v4639 = vmax.f32 %v4607, 0.0
        %v4640 = vmax.f32 %v4608, 0.0
        %v4641 = vmax.f32 %v4609, 0.0
        %v4642 = vmax.f32 %v4610, 0.0
        %v4643 = vmax.f32 %v4611, 0.0
        %v4644 = vmax.f32 %v4612, 0.0
        %v4645 = vmax.f32 %v4613, 0.0
        %v4646 = vmax.f32 %v4614, 0.0
        %v4647 = vmax.f32 %v4615, 0.0
        %v4648 = vmax.f32 %v4616, 0.0
        %v4649 = vmax.f32 %v4617, 0.0
        %v4650 = vmax.f32 %v4618, 0.0
        %v4651 = vmax.f32 %v4619, 0.0
        %v4652 = vmax.f32 %v4620, 0.0
        %v4653 = vmax.f32 %v4621, 0.0
        %v4654 = vmax.f32 %v4622, 0.0
        %v4655 = vmax.f32 %v4623, 0.0
        %v4656 = vmax.f32 %v4624, 0.0
        %v4657 = vmax.f32 %v4625, 0.0
        %v4658 = vmax.f32 %v4626, 0.0
        %v4659 = vmax.f32 %v4627, 0.0
        %v4660 = vmax.f32 %v4628, 0.0
        %v4661 = vmax.f32 %v4629, 0.0
        %v4662 = vmax.f32 %v4630, 0.0
        %v4663 = vmax.f32 %v4631, 0.0
        %4664 = vst.msk [vmem:[#allocation2 + $0x18] sm:$0xff] %vm240, %v4632
        %4665 = vst.msk [vmem:[#allocation2 + $0x20] sm:$0xff] %vm240, %v4633
        %4666 = vst.msk [vmem:[#allocation2 + $0x28] sm:$0xff] %vm240, %v4634
        %4667 = vst.msk [vmem:[#allocation2 + $0x30] sm:$0xff] %vm240, %v4635
        %4668 = vst.msk [vmem:[#allocation2 + $0x38] sm:$0xff] %vm240, %v4636
        %4669 = vst.msk [vmem:[#allocation2 + $0x40] sm:$0xff] %vm240, %v4637
        %4670 = vst.msk [vmem:[#allocation2 + $0x48] sm:$0xff] %vm240, %v4638
        %4671 = vst.msk [vmem:[#allocation2 + $0x50] sm:$0xff] %vm240, %v4639
        %4672 = vst.msk [vmem:[#allocation2 + $0x58] sm:$0xff] %vm240, %v4640
        %4673 = vst.msk [vmem:[#allocation2 + $0x60] sm:$0xff] %vm240, %v4641
        %4674 = vst.msk [vmem:[#allocation2 + $0x68] sm:$0xff] %vm240, %v4642
        %4675 = vst.msk [vmem:[#allocation2 + $0x70] sm:$0xff] %vm240, %v4643
        %4676 = vst.msk [vmem:[#allocation2 + $0x78] sm:$0xff] %vm240, %v4644
        %4677 = vst.msk [vmem:[#allocation2 + $0x80] sm:$0xff] %vm240, %v4645
        %4678 = vst.msk [vmem:[#allocation2 + $0x88] sm:$0xff] %vm240, %v4646
        %4679 = vst.msk [vmem:[#allocation2 + $0x90] sm:$0xff] %vm240, %v4647
        %4680 = vst.msk [vmem:[#allocation2 + $0x98] sm:$0xff] %vm240, %v4648
        %4681 = vst.msk [vmem:[#allocation2 + $0xa0] sm:$0xff] %vm240, %v4649
        %4682 = vst.msk [vmem:[#allocation2 + $0xa8] sm:$0xff] %vm240, %v4650
        %4683 = vst.msk [vmem:[#allocation2 + $0xb0] sm:$0xff] %vm240, %v4651
        %4684 = vst.msk [vmem:[#allocation2 + $0xb8] sm:$0xff] %vm240, %v4652
        %4685 = vst.msk [vmem:[#allocation2 + $0xc0] sm:$0xff] %vm240, %v4653
        %4686 = vst.msk [vmem:[#allocation2 + $0xc8] sm:$0xff] %vm240, %v4654
        %4687 = vst.msk [vmem:[#allocation2 + $0xd0] sm:$0xff] %vm240, %v4655
        %4688 = vst.msk [vmem:[#allocation2 + $0xd8] sm:$0xff] %vm240, %v4656
        %4689 = vst.msk [vmem:[#allocation2 + $0xe0] sm:$0xff] %vm240, %v4657
        %4690 = vst.msk [vmem:[#allocation2 + $0xe8] sm:$0xff] %vm240, %v4658
        %4691 = vst.msk [vmem:[#allocation2 + $0xf0] sm:$0xff] %vm240, %v4659
        %4692 = vst.msk [vmem:[#allocation2 + $0xf8] sm:$0xff] %vm240, %v4660
        %4693 = vst.msk [vmem:[#allocation2 + $0x100] sm:$0xff] %vm240, %v4661
        %4694 = vst.msk [vmem:[#allocation2 + $0x108] sm:$0xff] %vm240, %v4662
        %4695 = vst.msk [vmem:[#allocation2 + $0x110] sm:$0xff] %vm240, %v4663
        %v4696 = vld [vmem:[#allocation2 + $0x7] sm:$0xff]
        %v4697 = vld [vmem:[#allocation2 + $0xf] sm:$0xff]
        %v4698 = vld [vmem:[#allocation2 + $0x17] sm:$0xff]
        %v4699 = vld [vmem:[#allocation2 + $0x1f] sm:$0xff]
        %v4700 = vld [vmem:[#allocation2 + $0x27] sm:$0xff]
        %v4701 = vld [vmem:[#allocation2 + $0x2f] sm:$0xff]
        %v4702 = vld [vmem:[#allocation2 + $0x37] sm:$0xff]
        %v4703 = vld [vmem:[#allocation2 + $0x3f] sm:$0xff]
        %v4704 = vld [vmem:[#allocation2 + $0x47] sm:$0xff]
        %v4705 = vld [vmem:[#allocation2 + $0x4f] sm:$0xff]
        %v4706 = vld [vmem:[#allocation2 + $0x57] sm:$0xff]
        %v4707 = vld [vmem:[#allocation2 + $0x5f] sm:$0xff]
        %v4708 = vld [vmem:[#allocation2 + $0x67] sm:$0xff]
        %v4709 = vld [vmem:[#allocation2 + $0x6f] sm:$0xff]
        %v4710 = vld [vmem:[#allocation2 + $0x77] sm:$0xff]
        %v4711 = vld [vmem:[#allocation2 + $0x7f] sm:$0xff]
        %v4712 = vld [vmem:[#allocation2 + $0x87] sm:$0xff]
        %v4713 = vld [vmem:[#allocation2 + $0x8f] sm:$0xff]
        %v4714 = vld [vmem:[#allocation2 + $0x97] sm:$0xff]
        %v4715 = vld [vmem:[#allocation2 + $0x9f] sm:$0xff]
        %v4716 = vld [vmem:[#allocation2 + $0xa7] sm:$0xff]
        %v4717 = vld [vmem:[#allocation2 + $0xaf] sm:$0xff]
        %v4718 = vld [vmem:[#allocation2 + $0xb7] sm:$0xff]
        %v4719 = vld [vmem:[#allocation2 + $0xbf] sm:$0xff]
        %v4720 = vld [vmem:[#allocation2 + $0xc7] sm:$0xff]
        %v4721 = vld [vmem:[#allocation2 + $0xcf] sm:$0xff]
        %v4722 = vld [vmem:[#allocation2 + $0xd7] sm:$0xff]
        %v4723 = vld [vmem:[#allocation2 + $0xdf] sm:$0xff]
        %v4724 = vld [vmem:[#allocation2 + $0xe7] sm:$0xff]
        %v4725 = vld [vmem:[#allocation2 + $0xef] sm:$0xff]
        %v4726 = vld [vmem:[#allocation2 + $0xf7] sm:$0xff]
        %v4727 = vld [vmem:[#allocation2 + $0xff] sm:$0xff]
        %v4728 = vsel %vm856, %v4696, 0.0
        %v4729 = vsel %vm857, %v4697, 0.0
        %v4730 = vsel %vm858, %v4698, 0.0
        %v4731 = vsel %vm859, %v4699, 0.0
        %v4732 = vsel %vm860, %v4700, 0.0
        %v4733 = vsel %vm861, %v4701, 0.0
        %v4734 = vsel %vm862, %v4702, 0.0
        %v4735 = vsel %vm863, %v4703, 0.0
        %v4736 = vsel %vm864, %v4704, 0.0
        %v4737 = vsel %vm865, %v4705, 0.0
        %v4738 = vsel %vm866, %v4706, 0.0
        %v4739 = vsel %vm867, %v4707, 0.0
        %v4740 = vsel %vm868, %v4708, 0.0
        %v4741 = vsel %vm869, %v4709, 0.0
        %v4742 = vsel %vm870, %v4710, 0.0
        %v4743 = vsel %vm871, %v4711, 0.0
        %v4744 = vsel %vm872, %v4712, 0.0
        %v4745 = vsel %vm873, %v4713, 0.0
        %v4746 = vsel %vm874, %v4714, 0.0
        %v4747 = vsel %vm875, %v4715, 0.0
        %v4748 = vsel %vm876, %v4716, 0.0
        %v4749 = vsel %vm877, %v4717, 0.0
        %v4750 = vsel %vm878, %v4718, 0.0
        %v4751 = vsel %vm879, %v4719, 0.0
        %v4752 = vsel %vm880, %v4720, 0.0
        %v4753 = vsel %vm881, %v4721, 0.0
        %v4754 = vsel %vm882, %v4722, 0.0
        %v4755 = vsel %vm883, %v4723, 0.0
        %v4756 = vsel %vm884, %v4724, 0.0
        %v4757 = vsel %vm885, %v4725, 0.0
        %v4758 = vsel %vm886, %v4726, 0.0
        %v4759 = vsel %vm887, %v4727, 0.0
        %v4760 = vld [vmem:[#allocation3] sm:$0xff]
        %v4761 = vld [vmem:[#allocation3 + $0x8] sm:$0xff]
        %v4762 = vld [vmem:[#allocation3 + $0x10] sm:$0xff]
        %v4763 = vld [vmem:[#allocation3 + $0x18] sm:$0xff]
        %v4764 = vld [vmem:[#allocation3 + $0x20] sm:$0xff]
        %v4765 = vld [vmem:[#allocation3 + $0x28] sm:$0xff]
        %v4766 = vld [vmem:[#allocation3 + $0x30] sm:$0xff]
        %v4767 = vld [vmem:[#allocation3 + $0x38] sm:$0xff]
        %v4768 = vld [vmem:[#allocation2 + $0x8] sm:$0xff]
        %v4769 = vld [vmem:[#allocation2 + $0x10] sm:$0xff]
        %v4770 = vld [vmem:[#allocation2 + $0x18] sm:$0xff]
        %v4771 = vld [vmem:[#allocation2 + $0x20] sm:$0xff]
        %v4772 = vld [vmem:[#allocation2 + $0x28] sm:$0xff]
        %v4773 = vld [vmem:[#allocation2 + $0x30] sm:$0xff]
        %v4774 = vld [vmem:[#allocation2 + $0x38] sm:$0xff]
        %v4775 = vld [vmem:[#allocation2 + $0x40] sm:$0xff]
        %v4776 = vld [vmem:[#allocation2 + $0x48] sm:$0xff]
        %v4777 = vld [vmem:[#allocation2 + $0x50] sm:$0xff]
        %v4778 = vld [vmem:[#allocation2 + $0x58] sm:$0xff]
        %v4779 = vld [vmem:[#allocation2 + $0x60] sm:$0xff]
        %v4780 = vld [vmem:[#allocation2 + $0x68] sm:$0xff]
        %v4781 = vld [vmem:[#allocation2 + $0x70] sm:$0xff]
        %v4782 = vld [vmem:[#allocation2 + $0x78] sm:$0xff]
        %v4783 = vld [vmem:[#allocation2 + $0x80] sm:$0xff]
        %v4784 = vld [vmem:[#allocation2 + $0x88] sm:$0xff]
        %v4785 = vld [vmem:[#allocation2 + $0x90] sm:$0xff]
        %v4786 = vld [vmem:[#allocation2 + $0x98] sm:$0xff]
        %v4787 = vld [vmem:[#allocation2 + $0xa0] sm:$0xff]
        %v4788 = vld [vmem:[#allocation2 + $0xa8] sm:$0xff]
        %v4789 = vld [vmem:[#allocation2 + $0xb0] sm:$0xff]
        %v4790 = vld [vmem:[#allocation2 + $0xb8] sm:$0xff]
        %v4791 = vld [vmem:[#allocation2 + $0xc0] sm:$0xff]
        %v4792 = vld [vmem:[#allocation2 + $0xc8] sm:$0xff]
        %v4793 = vld [vmem:[#allocation2 + $0xd0] sm:$0xff]
        %v4794 = vld [vmem:[#allocation2 + $0xd8] sm:$0xff]
        %v4795 = vld [vmem:[#allocation2 + $0xe0] sm:$0xff]
        %v4796 = vld [vmem:[#allocation2 + $0xe8] sm:$0xff]
        %v4797 = vld [vmem:[#allocation2 + $0xf0] sm:$0xff]
        %v4798 = vld [vmem:[#allocation2 + $0xf8] sm:$0xff]
        %v4799 = vld [vmem:[#allocation2 + $0x100] sm:$0xff]
        %s4800 = scalar_lea.vmem [#allocation3], 64
        %v4801 = vld [vmem:[%s4800] sm:$0xff]
        %v4802 = vld [vmem:[%s4800 + $0x8] sm:$0xff]
        %v4803 = vld [vmem:[%s4800 + $0x10] sm:$0xff]
        %v4804 = vld [vmem:[%s4800 + $0x18] sm:$0xff]
        %v4805 = vld [vmem:[%s4800 + $0x20] sm:$0xff]
        %v4806 = vld [vmem:[%s4800 + $0x28] sm:$0xff]
        %v4807 = vld [vmem:[%s4800 + $0x30] sm:$0xff]
        %v4808 = vld [vmem:[%s4800 + $0x38] sm:$0xff]
        %v4810 = vsel %vm240, %v4768, 0
        %v4813 = vsel %vm240, %v4769, 0
        %v4816 = vsel %vm240, %v4770, 0
        %v4819 = vsel %vm240, %v4771, 0
        %v4822 = vsel %vm240, %v4772, 0
        %v4825 = vsel %vm240, %v4773, 0
        %v4828 = vsel %vm240, %v4774, 0
        %v4831 = vsel %vm240, %v4775, 0
        %v4834 = vsel %vm240, %v4776, 0
        %v4837 = vsel %vm240, %v4777, 0
        %v4840 = vsel %vm240, %v4778, 0
        %v4843 = vsel %vm240, %v4779, 0
        %v4846 = vsel %vm240, %v4780, 0
        %v4849 = vsel %vm240, %v4781, 0
        %v4852 = vsel %vm240, %v4782, 0
        %v4855 = vsel %vm240, %v4783, 0
        %v4858 = vsel %vm240, %v4784, 0
        %v4861 = vsel %vm240, %v4785, 0
        %v4864 = vsel %vm240, %v4786, 0
        %v4867 = vsel %vm240, %v4787, 0
        %v4870 = vsel %vm240, %v4788, 0
        %v4873 = vsel %vm240, %v4789, 0
        %v4876 = vsel %vm240, %v4790, 0
        %v4879 = vsel %vm240, %v4791, 0
        %v4882 = vsel %vm240, %v4792, 0
        %v4885 = vsel %vm240, %v4793, 0
        %v4888 = vsel %vm240, %v4794, 0
        %v4891 = vsel %vm240, %v4795, 0
        %v4894 = vsel %vm240, %v4796, 0
        %v4897 = vsel %vm240, %v4797, 0
        %v4900 = vsel %vm240, %v4798, 0
        %v4903 = vsel %vm240, %v4799, 0
        %4905 = vmatprep.subr.mxu0 0.0
        %4906 = vmatpush1.msra.mxu0 %v4801
        %4907 = vmatprep.subr.mxu0 0.0
        %4908 = vmatpush1.msra.mxu0 %v4802
        %4909 = vmatprep.subr.mxu0 0.0
        %4910 = vmatpush1.msra.mxu0 %v4803
        %4911 = vmatprep.subr.mxu0 0.0
        %4912 = vmatpush1.msra.mxu0 %v4804
        %4913 = vmatprep.subr.mxu0 0.0
        %4914 = vmatpush1.msra.mxu0 %v4805
        %4915 = vmatprep.subr.mxu0 0.0
        %4916 = vmatpush1.msra.mxu0 %v4806
        %4917 = vmatprep.subr.mxu0 0.0
        %4918 = vmatpush1.msra.mxu0 %v4807
        %4919 = vmatprep.subr.mxu0 0.0
        %4920 = vmatpush1.msra.mxu0 %v4808
        %4921 = vmatprep.subr.mxu0 0.0
        %4922 = vmatpush1.msra.mxu0 0.0
        %4923 = vmatprep.subr.mxu0 0.0
        %4924 = vmatpush1.msra.mxu0 0.0
        %4925 = vmatprep.subr.mxu0 0.0
        %4926 = vmatpush1.msra.mxu0 0.0
        %4927 = vmatprep.subr.mxu0 0.0
        %4928 = vmatpush1.msra.mxu0 0.0
        %4929 = vmatprep.subr.mxu0 0.0
        %4930 = vmatpush1.msra.mxu0 0.0
        %4931 = vmatprep.subr.mxu0 0.0
        %4932 = vmatpush1.msra.mxu0 0.0
        %4933 = vmatprep.subr.mxu0 0.0
        %4934 = vmatpush1.msra.mxu0 0.0
        %4935 = vmatprep.subr.mxu0 0.0
        %4936 = vmatpush1.msra.mxu0 0.0
        %4937 = vmatprep.subr.mxu0 0.0
        %4938 = vmatpush1.msra.mxu0 0.0
        %4939 = vmatprep.subr.mxu0 0.0
        %4940 = vmatpush1.msra.mxu0 0.0
        %4941 = vmatprep.subr.mxu0 0.0
        %4942 = vmatpush1.msra.mxu0 0.0
        %4943 = vmatprep.subr.mxu0 0.0
        %4944 = vmatpush1.msra.mxu0 0.0
        %4945 = vmatprep.subr.mxu0 0.0
        %4946 = vmatpush1.msra.mxu0 0.0
        %4947 = vmatprep.subr.mxu0 0.0
        %4948 = vmatpush1.msra.mxu0 0.0
        %4949 = vmatprep.subr.mxu0 0.0
        %4950 = vmatpush1.msra.mxu0 0.0
        %4951 = vmatprep.subr.mxu0 0.0
        %4952 = vmatpush1.msra.mxu0 0.0
        %4953 = vmatprep.subr.mxu0 0.0
        %4954 = vmatpush1.msra.mxu0 0.0
        %4955 = vmatprep.subr.mxu0 0.0
        %4956 = vmatpush1.msra.mxu0 0.0
        %4957 = vmatprep.subr.mxu0 0.0
        %4958 = vmatpush1.msra.mxu0 0.0
        %4959 = vmatprep.subr.mxu0 0.0
        %4960 = vmatpush1.msra.mxu0 0.0
        %4961 = vmatprep.subr.mxu0 0.0
        %4962 = vmatpush1.msra.mxu0 0.0
        %4963 = vmatprep.subr.mxu0 0.0
        %4964 = vmatpush1.msra.mxu0 0.0
        %4965 = vmatprep.subr.mxu0 0.0
        %4966 = vmatpush1.msra.mxu0 0.0
        %4967 = vmatprep.subr.mxu0 0.0
        %4968 = vmatpush1.msra.mxu0 0.0
        %4969 = vmatprep.mubr.f32.mxu0 0.0
        %4970 = vmatmul.mubr.f32.gmra.mrb[0].mxu0 %v4810
        %v4971 = vpop.f32.mrb[0].mxu0
        %v4972 = vadd.f32 0.0, %v4971
        %v4973 = vpop.f32.mrb[0].mxu0
        %4974 = vmatprep.mubr.f32.mxu0 0.0
        %4975 = vmatmul.mubr.f32.gmra.mrb[0].mxu0 %v4813
        %v4976 = vpop.f32.mrb[0].mxu0
        %v4977 = vadd.f32 0.0, %v4976
        %v4978 = vpop.f32.mrb[0].mxu0
        %4979 = vmatprep.mubr.f32.mxu0 0.0
        %4980 = vmatmul.mubr.f32.gmra.mrb[0].mxu0 %v4816
        %v4981 = vpop.f32.mrb[0].mxu0
        %v4982 = vadd.f32 0.0, %v4981
        %v4983 = vpop.f32.mrb[0].mxu0
        %4984 = vmatprep.mubr.f32.mxu0 0.0
        %4985 = vmatmul.mubr.f32.gmra.mrb[0].mxu0 %v4819
        %v4986 = vpop.f32.mrb[0].mxu0
        %v4987 = vadd.f32 0.0, %v4986
        %v4988 = vpop.f32.mrb[0].mxu0
        %4989 = vmatprep.mubr.f32.mxu0 0.0
        %4990 = vmatmul.mubr.f32.gmra.mrb[0].mxu0 %v4822
        %v4991 = vpop.f32.mrb[0].mxu0
        %v4992 = vadd.f32 0.0, %v4991
        %v4993 = vpop.f32.mrb[0].mxu0
        %4994 = vmatprep.mubr.f32.mxu0 0.0
        %4995 = vmatmul.mubr.f32.gmra.mrb[0].mxu0 %v4825
        %v4996 = vpop.f32.mrb[0].mxu0
        %v4997 = vadd.f32 0.0, %v4996
        %v4998 = vpop.f32.mrb[0].mxu0
        %4999 = vmatprep.mubr.f32.mxu0 0.0
        %5000 = vmatmul.mubr.f32.gmra.mrb[0].mxu0 %v4828
        %v5001 = vpop.f32.mrb[0].mxu0
        %v5002 = vadd.f32 0.0, %v5001
        %v5003 = vpop.f32.mrb[0].mxu0
        %5004 = vmatprep.mubr.f32.mxu0 0.0
        %5005 = vmatmul.mubr.f32.gmra.mrb[0].mxu0 %v4831
        %v5006 = vpop.f32.mrb[0].mxu0
        %v5007 = vadd.f32 0.0, %v5006
        %v5008 = vpop.f32.mrb[0].mxu0
        %5009 = vmatprep.mubr.f32.mxu0 0.0
        %5010 = vmatmul.mubr.f32.gmra.mrb[0].mxu0 %v4834
        %v5011 = vpop.f32.mrb[0].mxu0
        %v5012 = vadd.f32 0.0, %v5011
        %v5013 = vpop.f32.mrb[0].mxu0
        %5014 = vmatprep.mubr.f32.mxu0 0.0
        %5015 = vmatmul.mubr.f32.gmra.mrb[0].mxu0 %v4837
        %v5016 = vpop.f32.mrb[0].mxu0
        %v5017 = vadd.f32 0.0, %v5016
        %v5018 = vpop.f32.mrb[0].mxu0
        %5019 = vmatprep.mubr.f32.mxu0 0.0
        %5020 = vmatmul.mubr.f32.gmra.mrb[0].mxu0 %v4840
        %v5021 = vpop.f32.mrb[0].mxu0
        %v5022 = vadd.f32 0.0, %v5021
        %v5023 = vpop.f32.mrb[0].mxu0
        %5024 = vmatprep.mubr.f32.mxu0 0.0
        %5025 = vmatmul.mubr.f32.gmra.mrb[0].mxu0 %v4843
        %v5026 = vpop.f32.mrb[0].mxu0
        %v5027 = vadd.f32 0.0, %v5026
        %v5028 = vpop.f32.mrb[0].mxu0
        %5029 = vmatprep.mubr.f32.mxu0 0.0
        %5030 = vmatmul.mubr.f32.gmra.mrb[0].mxu0 %v4846
        %v5031 = vpop.f32.mrb[0].mxu0
        %v5032 = vadd.f32 0.0, %v5031
        %v5033 = vpop.f32.mrb[0].mxu0
        %5034 = vmatprep.mubr.f32.mxu0 0.0
        %5035 = vmatmul.mubr.f32.gmra.mrb[0].mxu0 %v4849
        %v5036 = vpop.f32.mrb[0].mxu0
        %v5037 = vadd.f32 0.0, %v5036
        %v5038 = vpop.f32.mrb[0].mxu0
        %5039 = vmatprep.mubr.f32.mxu0 0.0
        %5040 = vmatmul.mubr.f32.gmra.mrb[0].mxu0 %v4852
        %v5041 = vpop.f32.mrb[0].mxu0
        %v5042 = vadd.f32 0.0, %v5041
        %v5043 = vpop.f32.mrb[0].mxu0
        %5044 = vmatprep.mubr.f32.mxu0 0.0
        %5045 = vmatmul.mubr.f32.gmra.mrb[0].mxu0 %v4855
        %v5046 = vpop.f32.mrb[0].mxu0
        %v5047 = vadd.f32 0.0, %v5046
        %v5048 = vpop.f32.mrb[0].mxu0
        %5049 = vmatprep.mubr.f32.mxu0 0.0
        %5050 = vmatmul.mubr.f32.gmra.mrb[0].mxu0 %v4858
        %v5051 = vpop.f32.mrb[0].mxu0
        %v5052 = vadd.f32 0.0, %v5051
        %v5053 = vpop.f32.mrb[0].mxu0
        %5054 = vmatprep.mubr.f32.mxu0 0.0
        %5055 = vmatmul.mubr.f32.gmra.mrb[0].mxu0 %v4861
        %v5056 = vpop.f32.mrb[0].mxu0
        %v5057 = vadd.f32 0.0, %v5056
        %v5058 = vpop.f32.mrb[0].mxu0
        %5059 = vmatprep.mubr.f32.mxu0 0.0
        %5060 = vmatmul.mubr.f32.gmra.mrb[0].mxu0 %v4864
        %v5061 = vpop.f32.mrb[0].mxu0
        %v5062 = vadd.f32 0.0, %v5061
        %v5063 = vpop.f32.mrb[0].mxu0
        %5064 = vmatprep.mubr.f32.mxu0 0.0
        %5065 = vmatmul.mubr.f32.gmra.mrb[0].mxu0 %v4867
        %v5066 = vpop.f32.mrb[0].mxu0
        %v5067 = vadd.f32 0.0, %v5066
        %v5068 = vpop.f32.mrb[0].mxu0
        %5069 = vmatprep.mubr.f32.mxu0 0.0
        %5070 = vmatmul.mubr.f32.gmra.mrb[0].mxu0 %v4870
        %v5071 = vpop.f32.mrb[0].mxu0
        %v5072 = vadd.f32 0.0, %v5071
        %v5073 = vpop.f32.mrb[0].mxu0
        %5074 = vmatprep.mubr.f32.mxu0 0.0
        %5075 = vmatmul.mubr.f32.gmra.mrb[0].mxu0 %v4873
        %v5076 = vpop.f32.mrb[0].mxu0
        %v5077 = vadd.f32 0.0, %v5076
        %v5078 = vpop.f32.mrb[0].mxu0
        %5079 = vmatprep.mubr.f32.mxu0 0.0
        %5080 = vmatmul.mubr.f32.gmra.mrb[0].mxu0 %v4876
        %v5081 = vpop.f32.mrb[0].mxu0
        %v5082 = vadd.f32 0.0, %v5081
        %v5083 = vpop.f32.mrb[0].mxu0
        %5084 = vmatprep.mubr.f32.mxu0 0.0
        %5085 = vmatmul.mubr.f32.gmra.mrb[0].mxu0 %v4879
        %v5086 = vpop.f32.mrb[0].mxu0
        %v5087 = vadd.f32 0.0, %v5086
        %v5088 = vpop.f32.mrb[0].mxu0
        %5089 = vmatprep.mubr.f32.mxu0 0.0
        %5090 = vmatmul.mubr.f32.gmra.mrb[0].mxu0 %v4882
        %v5091 = vpop.f32.mrb[0].mxu0
        %v5092 = vadd.f32 0.0, %v5091
        %v5093 = vpop.f32.mrb[0].mxu0
        %5094 = vmatprep.mubr.f32.mxu0 0.0
        %5095 = vmatmul.mubr.f32.gmra.mrb[0].mxu0 %v4885
        %v5096 = vpop.f32.mrb[0].mxu0
        %v5097 = vadd.f32 0.0, %v5096
        %v5098 = vpop.f32.mrb[0].mxu0
        %5099 = vmatprep.mubr.f32.mxu0 0.0
        %5100 = vmatmul.mubr.f32.gmra.mrb[0].mxu0 %v4888
        %v5101 = vpop.f32.mrb[0].mxu0
        %v5102 = vadd.f32 0.0, %v5101
        %v5103 = vpop.f32.mrb[0].mxu0
        %5104 = vmatprep.mubr.f32.mxu0 0.0
        %5105 = vmatmul.mubr.f32.gmra.mrb[0].mxu0 %v4891
        %v5106 = vpop.f32.mrb[0].mxu0
        %v5107 = vadd.f32 0.0, %v5106
        %v5108 = vpop.f32.mrb[0].mxu0
        %5109 = vmatprep.mubr.f32.mxu0 0.0
        %5110 = vmatmul.mubr.f32.gmra.mrb[0].mxu0 %v4894
        %v5111 = vpop.f32.mrb[0].mxu0
        %v5112 = vadd.f32 0.0, %v5111
        %v5113 = vpop.f32.mrb[0].mxu0
        %5114 = vmatprep.mubr.f32.mxu0 0.0
        %5115 = vmatmul.mubr.f32.gmra.mrb[0].mxu0 %v4897
        %v5116 = vpop.f32.mrb[0].mxu0
        %v5117 = vadd.f32 0.0, %v5116
        %v5118 = vpop.f32.mrb[0].mxu0
        %5119 = vmatprep.mubr.f32.mxu0 0.0
        %5120 = vmatmul.mubr.f32.gmra.mrb[0].mxu0 %v4900
        %v5121 = vpop.f32.mrb[0].mxu0
        %v5122 = vadd.f32 0.0, %v5121
        %v5123 = vpop.f32.mrb[0].mxu0
        %5124 = vmatprep.mubr.f32.mxu0 0.0
        %5125 = vmatmul.mubr.f32.gmra.mrb[0].mxu0 %v4903
        %v5126 = vpop.f32.mrb[0].mxu0
        %v5127 = vadd.f32 0.0, %v5126
        %v5128 = vpop.f32.mrb[0].mxu0
        %5129 = vdwg.mxu0
        %v5131 = vsel %vm240, %v4728, 0
        %v5134 = vsel %vm240, %v4729, 0
        %v5137 = vsel %vm240, %v4730, 0
        %v5140 = vsel %vm240, %v4731, 0
        %v5143 = vsel %vm240, %v4732, 0
        %v5146 = vsel %vm240, %v4733, 0
        %v5149 = vsel %vm240, %v4734, 0
        %v5152 = vsel %vm240, %v4735, 0
        %v5155 = vsel %vm240, %v4736, 0
        %v5158 = vsel %vm240, %v4737, 0
        %v5161 = vsel %vm240, %v4738, 0
        %v5164 = vsel %vm240, %v4739, 0
        %v5167 = vsel %vm240, %v4740, 0
        %v5170 = vsel %vm240, %v4741, 0
        %v5173 = vsel %vm240, %v4742, 0
        %v5176 = vsel %vm240, %v4743, 0
        %v5179 = vsel %vm240, %v4744, 0
        %v5182 = vsel %vm240, %v4745, 0
        %v5185 = vsel %vm240, %v4746, 0
        %v5188 = vsel %vm240, %v4747, 0
        %v5191 = vsel %vm240, %v4748, 0
        %v5194 = vsel %vm240, %v4749, 0
        %v5197 = vsel %vm240, %v4750, 0
        %v5200 = vsel %vm240, %v4751, 0
        %v5203 = vsel %vm240, %v4752, 0
        %v5206 = vsel %vm240, %v4753, 0
        %v5209 = vsel %vm240, %v4754, 0
        %v5212 = vsel %vm240, %v4755, 0
        %v5215 = vsel %vm240, %v4756, 0
        %v5218 = vsel %vm240, %v4757, 0
        %v5221 = vsel %vm240, %v4758, 0
        %v5224 = vsel %vm240, %v4759, 0
        %5226 = vmatprep.subr.mxu0 0.0
        %5227 = vmatpush1.msra.mxu0 %v4760
        %5228 = vmatprep.subr.mxu0 0.0
        %5229 = vmatpush1.msra.mxu0 %v4761
        %5230 = vmatprep.subr.mxu0 0.0
        %5231 = vmatpush1.msra.mxu0 %v4762
        %5232 = vmatprep.subr.mxu0 0.0
        %5233 = vmatpush1.msra.mxu0 %v4763
        %5234 = vmatprep.subr.mxu0 0.0
        %5235 = vmatpush1.msra.mxu0 %v4764
        %5236 = vmatprep.subr.mxu0 0.0
        %5237 = vmatpush1.msra.mxu0 %v4765
        %5238 = vmatprep.subr.mxu0 0.0
        %5239 = vmatpush1.msra.mxu0 %v4766
        %5240 = vmatprep.subr.mxu0 0.0
        %5241 = vmatpush1.msra.mxu0 %v4767
        %5242 = vmatprep.subr.mxu0 0.0
        %5243 = vmatpush1.msra.mxu0 0.0
        %5244 = vmatprep.subr.mxu0 0.0
        %5245 = vmatpush1.msra.mxu0 0.0
        %5246 = vmatprep.subr.mxu0 0.0
        %5247 = vmatpush1.msra.mxu0 0.0
        %5248 = vmatprep.subr.mxu0 0.0
        %5249 = vmatpush1.msra.mxu0 0.0
        %5250 = vmatprep.subr.mxu0 0.0
        %5251 = vmatpush1.msra.mxu0 0.0
        %5252 = vmatprep.subr.mxu0 0.0
        %5253 = vmatpush1.msra.mxu0 0.0
        %5254 = vmatprep.subr.mxu0 0.0
        %5255 = vmatpush1.msra.mxu0 0.0
        %5256 = vmatprep.subr.mxu0 0.0
        %5257 = vmatpush1.msra.mxu0 0.0
        %5258 = vmatprep.subr.mxu0 0.0
        %5259 = vmatpush1.msra.mxu0 0.0
        %5260 = vmatprep.subr.mxu0 0.0
        %5261 = vmatpush1.msra.mxu0 0.0
        %5262 = vmatprep.subr.mxu0 0.0
        %5263 = vmatpush1.msra.mxu0 0.0
        %5264 = vmatprep.subr.mxu0 0.0
        %5265 = vmatpush1.msra.mxu0 0.0
        %5266 = vmatprep.subr.mxu0 0.0
        %5267 = vmatpush1.msra.mxu0 0.0
        %5268 = vmatprep.subr.mxu0 0.0
        %5269 = vmatpush1.msra.mxu0 0.0
        %5270 = vmatprep.subr.mxu0 0.0
        %5271 = vmatpush1.msra.mxu0 0.0
        %5272 = vmatprep.subr.mxu0 0.0
        %5273 = vmatpush1.msra.mxu0 0.0
        %5274 = vmatprep.subr.mxu0 0.0
        %5275 = vmatpush1.msra.mxu0 0.0
        %5276 = vmatprep.subr.mxu0 0.0
        %5277 = vmatpush1.msra.mxu0 0.0
        %5278 = vmatprep.subr.mxu0 0.0
        %5279 = vmatpush1.msra.mxu0 0.0
        %5280 = vmatprep.subr.mxu0 0.0
        %5281 = vmatpush1.msra.mxu0 0.0
        %5282 = vmatprep.subr.mxu0 0.0
        %5283 = vmatpush1.msra.mxu0 0.0
        %5284 = vmatprep.subr.mxu0 0.0
        %5285 = vmatpush1.msra.mxu0 0.0
        %5286 = vmatprep.subr.mxu0 0.0
        %5287 = vmatpush1.msra.mxu0 0.0
        %5288 = vmatprep.subr.mxu0 0.0
        %5289 = vmatpush1.msra.mxu0 0.0
        %5290 = vmatprep.mubr.f32.mxu0 0.0
        %5291 = vmatmul.mubr.f32.gmra.mrb[0].mxu0 %v5131
        %v5292 = vpop.f32.mrb[0].mxu0
        %v5293 = vadd.f32 %v4972, %v5292
        %v5294 = vpop.f32.mrb[0].mxu0
        %5295 = vmatprep.mubr.f32.mxu0 0.0
        %5296 = vmatmul.mubr.f32.gmra.mrb[0].mxu0 %v5134
        %v5297 = vpop.f32.mrb[0].mxu0
        %v5298 = vadd.f32 %v4977, %v5297
        %v5299 = vpop.f32.mrb[0].mxu0
        %5300 = vmatprep.mubr.f32.mxu0 0.0
        %5301 = vmatmul.mubr.f32.gmra.mrb[0].mxu0 %v5137
        %v5302 = vpop.f32.mrb[0].mxu0
        %v5303 = vadd.f32 %v4982, %v5302
        %v5304 = vpop.f32.mrb[0].mxu0
        %5305 = vmatprep.mubr.f32.mxu0 0.0
        %5306 = vmatmul.mubr.f32.gmra.mrb[0].mxu0 %v5140
        %v5307 = vpop.f32.mrb[0].mxu0
        %v5308 = vadd.f32 %v4987, %v5307
        %v5309 = vpop.f32.mrb[0].mxu0
        %5310 = vmatprep.mubr.f32.mxu0 0.0
        %5311 = vmatmul.mubr.f32.gmra.mrb[0].mxu0 %v5143
        %v5312 = vpop.f32.mrb[0].mxu0
        %v5313 = vadd.f32 %v4992, %v5312
        %v5314 = vpop.f32.mrb[0].mxu0
        %5315 = vmatprep.mubr.f32.mxu0 0.0
        %5316 = vmatmul.mubr.f32.gmra.mrb[0].mxu0 %v5146
        %v5317 = vpop.f32.mrb[0].mxu0
        %v5318 = vadd.f32 %v4997, %v5317
        %v5319 = vpop.f32.mrb[0].mxu0
        %5320 = vmatprep.mubr.f32.mxu0 0.0
        %5321 = vmatmul.mubr.f32.gmra.mrb[0].mxu0 %v5149
        %v5322 = vpop.f32.mrb[0].mxu0
        %v5323 = vadd.f32 %v5002, %v5322
        %v5324 = vpop.f32.mrb[0].mxu0
        %5325 = vmatprep.mubr.f32.mxu0 0.0
        %5326 = vmatmul.mubr.f32.gmra.mrb[0].mxu0 %v5152
        %v5327 = vpop.f32.mrb[0].mxu0
        %v5328 = vadd.f32 %v5007, %v5327
        %v5329 = vpop.f32.mrb[0].mxu0
        %5330 = vmatprep.mubr.f32.mxu0 0.0
        %5331 = vmatmul.mubr.f32.gmra.mrb[0].mxu0 %v5155
        %v5332 = vpop.f32.mrb[0].mxu0
        %v5333 = vadd.f32 %v5012, %v5332
        %v5334 = vpop.f32.mrb[0].mxu0
        %5335 = vmatprep.mubr.f32.mxu0 0.0
        %5336 = vmatmul.mubr.f32.gmra.mrb[0].mxu0 %v5158
        %v5337 = vpop.f32.mrb[0].mxu0
        %v5338 = vadd.f32 %v5017, %v5337
        %v5339 = vpop.f32.mrb[0].mxu0
        %5340 = vmatprep.mubr.f32.mxu0 0.0
        %5341 = vmatmul.mubr.f32.gmra.mrb[0].mxu0 %v5161
        %v5342 = vpop.f32.mrb[0].mxu0
        %v5343 = vadd.f32 %v5022, %v5342
        %v5344 = vpop.f32.mrb[0].mxu0
        %5345 = vmatprep.mubr.f32.mxu0 0.0
        %5346 = vmatmul.mubr.f32.gmra.mrb[0].mxu0 %v5164
        %v5347 = vpop.f32.mrb[0].mxu0
        %v5348 = vadd.f32 %v5027, %v5347
        %v5349 = vpop.f32.mrb[0].mxu0
        %5350 = vmatprep.mubr.f32.mxu0 0.0
        %5351 = vmatmul.mubr.f32.gmra.mrb[0].mxu0 %v5167
        %v5352 = vpop.f32.mrb[0].mxu0
        %v5353 = vadd.f32 %v5032, %v5352
        %v5354 = vpop.f32.mrb[0].mxu0
        %5355 = vmatprep.mubr.f32.mxu0 0.0
        %5356 = vmatmul.mubr.f32.gmra.mrb[0].mxu0 %v5170
        %v5357 = vpop.f32.mrb[0].mxu0
        %v5358 = vadd.f32 %v5037, %v5357
        %v5359 = vpop.f32.mrb[0].mxu0
        %5360 = vmatprep.mubr.f32.mxu0 0.0
        %5361 = vmatmul.mubr.f32.gmra.mrb[0].mxu0 %v5173
        %v5362 = vpop.f32.mrb[0].mxu0
        %v5363 = vadd.f32 %v5042, %v5362
        %v5364 = vpop.f32.mrb[0].mxu0
        %5365 = vmatprep.mubr.f32.mxu0 0.0
        %5366 = vmatmul.mubr.f32.gmra.mrb[0].mxu0 %v5176
        %v5367 = vpop.f32.mrb[0].mxu0
        %v5368 = vadd.f32 %v5047, %v5367
        %v5369 = vpop.f32.mrb[0].mxu0
        %5370 = vmatprep.mubr.f32.mxu0 0.0
        %5371 = vmatmul.mubr.f32.gmra.mrb[0].mxu0 %v5179
        %v5372 = vpop.f32.mrb[0].mxu0
        %v5373 = vadd.f32 %v5052, %v5372
        %v5374 = vpop.f32.mrb[0].mxu0
        %5375 = vmatprep.mubr.f32.mxu0 0.0
        %5376 = vmatmul.mubr.f32.gmra.mrb[0].mxu0 %v5182
        %v5377 = vpop.f32.mrb[0].mxu0
        %v5378 = vadd.f32 %v5057, %v5377
        %v5379 = vpop.f32.mrb[0].mxu0
        %5380 = vmatprep.mubr.f32.mxu0 0.0
        %5381 = vmatmul.mubr.f32.gmra.mrb[0].mxu0 %v5185
        %v5382 = vpop.f32.mrb[0].mxu0
        %v5383 = vadd.f32 %v5062, %v5382
        %v5384 = vpop.f32.mrb[0].mxu0
        %5385 = vmatprep.mubr.f32.mxu0 0.0
        %5386 = vmatmul.mubr.f32.gmra.mrb[0].mxu0 %v5188
        %v5387 = vpop.f32.mrb[0].mxu0
        %v5388 = vadd.f32 %v5067, %v5387
        %v5389 = vpop.f32.mrb[0].mxu0
        %5390 = vmatprep.mubr.f32.mxu0 0.0
        %5391 = vmatmul.mubr.f32.gmra.mrb[0].mxu0 %v5191
        %v5392 = vpop.f32.mrb[0].mxu0
        %v5393 = vadd.f32 %v5072, %v5392
        %v5394 = vpop.f32.mrb[0].mxu0
        %5395 = vmatprep.mubr.f32.mxu0 0.0
        %5396 = vmatmul.mubr.f32.gmra.mrb[0].mxu0 %v5194
        %v5397 = vpop.f32.mrb[0].mxu0
        %v5398 = vadd.f32 %v5077, %v5397
        %v5399 = vpop.f32.mrb[0].mxu0
        %5400 = vmatprep.mubr.f32.mxu0 0.0
        %5401 = vmatmul.mubr.f32.gmra.mrb[0].mxu0 %v5197
        %v5402 = vpop.f32.mrb[0].mxu0
        %v5403 = vadd.f32 %v5082, %v5402
        %v5404 = vpop.f32.mrb[0].mxu0
        %5405 = vmatprep.mubr.f32.mxu0 0.0
        %5406 = vmatmul.mubr.f32.gmra.mrb[0].mxu0 %v5200
        %v5407 = vpop.f32.mrb[0].mxu0
        %v5408 = vadd.f32 %v5087, %v5407
        %v5409 = vpop.f32.mrb[0].mxu0
        %5410 = vmatprep.mubr.f32.mxu0 0.0
        %5411 = vmatmul.mubr.f32.gmra.mrb[0].mxu0 %v5203
        %v5412 = vpop.f32.mrb[0].mxu0
        %v5413 = vadd.f32 %v5092, %v5412
        %v5414 = vpop.f32.mrb[0].mxu0
        %5415 = vmatprep.mubr.f32.mxu0 0.0
        %5416 = vmatmul.mubr.f32.gmra.mrb[0].mxu0 %v5206
        %v5417 = vpop.f32.mrb[0].mxu0
        %v5418 = vadd.f32 %v5097, %v5417
        %v5419 = vpop.f32.mrb[0].mxu0
        %5420 = vmatprep.mubr.f32.mxu0 0.0
        %5421 = vmatmul.mubr.f32.gmra.mrb[0].mxu0 %v5209
        %v5422 = vpop.f32.mrb[0].mxu0
        %v5423 = vadd.f32 %v5102, %v5422
        %v5424 = vpop.f32.mrb[0].mxu0
        %5425 = vmatprep.mubr.f32.mxu0 0.0
        %5426 = vmatmul.mubr.f32.gmra.mrb[0].mxu0 %v5212
        %v5427 = vpop.f32.mrb[0].mxu0
        %v5428 = vadd.f32 %v5107, %v5427
        %v5429 = vpop.f32.mrb[0].mxu0
        %5430 = vmatprep.mubr.f32.mxu0 0.0
        %5431 = vmatmul.mubr.f32.gmra.mrb[0].mxu0 %v5215
        %v5432 = vpop.f32.mrb[0].mxu0
        %v5433 = vadd.f32 %v5112, %v5432
        %v5434 = vpop.f32.mrb[0].mxu0
        %5435 = vmatprep.mubr.f32.mxu0 0.0
        %5436 = vmatmul.mubr.f32.gmra.mrb[0].mxu0 %v5218
        %v5437 = vpop.f32.mrb[0].mxu0
        %v5438 = vadd.f32 %v5117, %v5437
        %v5439 = vpop.f32.mrb[0].mxu0
        %5440 = vmatprep.mubr.f32.mxu0 0.0
        %5441 = vmatmul.mubr.f32.gmra.mrb[0].mxu0 %v5221
        %v5442 = vpop.f32.mrb[0].mxu0
        %v5443 = vadd.f32 %v5122, %v5442
        %v5444 = vpop.f32.mrb[0].mxu0
        %5445 = vmatprep.mubr.f32.mxu0 0.0
        %5446 = vmatmul.mubr.f32.gmra.mrb[0].mxu0 %v5224
        %v5447 = vpop.f32.mrb[0].mxu0
        %v5448 = vadd.f32 %v5127, %v5447
        %v5449 = vpop.f32.mrb[0].mxu0
        %5450 = vdwg.mxu0
        %v5451 = vld [vmem:[#allocation2 + $0x9] sm:$0xff]
        %v5452 = vld [vmem:[#allocation2 + $0x11] sm:$0xff]
        %v5453 = vld [vmem:[#allocation2 + $0x19] sm:$0xff]
        %v5454 = vld [vmem:[#allocation2 + $0x21] sm:$0xff]
        %v5455 = vld [vmem:[#allocation2 + $0x29] sm:$0xff]
        %v5456 = vld [vmem:[#allocation2 + $0x31] sm:$0xff]
        %v5457 = vld [vmem:[#allocation2 + $0x39] sm:$0xff]
        %v5458 = vld [vmem:[#allocation2 + $0x41] sm:$0xff]
        %v5459 = vld [vmem:[#allocation2 + $0x49] sm:$0xff]
        %v5460 = vld [vmem:[#allocation2 + $0x51] sm:$0xff]
        %v5461 = vld [vmem:[#allocation2 + $0x59] sm:$0xff]
        %v5462 = vld [vmem:[#allocation2 + $0x61] sm:$0xff]
        %v5463 = vld [vmem:[#allocation2 + $0x69] sm:$0xff]
        %v5464 = vld [vmem:[#allocation2 + $0x71] sm:$0xff]
        %v5465 = vld [vmem:[#allocation2 + $0x79] sm:$0xff]
        %v5466 = vld [vmem:[#allocation2 + $0x81] sm:$0xff]
        %v5467 = vld [vmem:[#allocation2 + $0x89] sm:$0xff]
        %v5468 = vld [vmem:[#allocation2 + $0x91] sm:$0xff]
        %v5469 = vld [vmem:[#allocation2 + $0x99] sm:$0xff]
        %v5470 = vld [vmem:[#allocation2 + $0xa1] sm:$0xff]
        %v5471 = vld [vmem:[#allocation2 + $0xa9] sm:$0xff]
        %v5472 = vld [vmem:[#allocation2 + $0xb1] sm:$0xff]
        %v5473 = vld [vmem:[#allocation2 + $0xb9] sm:$0xff]
        %v5474 = vld [vmem:[#allocation2 + $0xc1] sm:$0xff]
        %v5475 = vld [vmem:[#allocation2 + $0xc9] sm:$0xff]
        %v5476 = vld [vmem:[#allocation2 + $0xd1] sm:$0xff]
        %v5477 = vld [vmem:[#allocation2 + $0xd9] sm:$0xff]
        %v5478 = vld [vmem:[#allocation2 + $0xe1] sm:$0xff]
        %v5479 = vld [vmem:[#allocation2 + $0xe9] sm:$0xff]
        %v5480 = vld [vmem:[#allocation2 + $0xf1] sm:$0xff]
        %v5481 = vld [vmem:[#allocation2 + $0xf9] sm:$0xff]
        %v5482 = vld [vmem:[#allocation2 + $0x101] sm:$0xff]
        %v5483 = vsel %vm1675, %v5451, 0.0
        %v5484 = vsel %vm1676, %v5452, 0.0
        %v5485 = vsel %vm1677, %v5453, 0.0
        %v5486 = vsel %vm1678, %v5454, 0.0
        %v5487 = vsel %vm1679, %v5455, 0.0
        %v5488 = vsel %vm1680, %v5456, 0.0
        %v5489 = vsel %vm1681, %v5457, 0.0
        %v5490 = vsel %vm1682, %v5458, 0.0
        %v5491 = vsel %vm1683, %v5459, 0.0
        %v5492 = vsel %vm1684, %v5460, 0.0
        %v5493 = vsel %vm1685, %v5461, 0.0
        %v5494 = vsel %vm1686, %v5462, 0.0
        %v5495 = vsel %vm1687, %v5463, 0.0
        %v5496 = vsel %vm1688, %v5464, 0.0
        %v5497 = vsel %vm1689, %v5465, 0.0
        %v5498 = vsel %vm1690, %v5466, 0.0
        %v5499 = vsel %vm1691, %v5467, 0.0
        %v5500 = vsel %vm1692, %v5468, 0.0
        %v5501 = vsel %vm1693, %v5469, 0.0
        %v5502 = vsel %vm1694, %v5470, 0.0
        %v5503 = vsel %vm1695, %v5471, 0.0
        %v5504 = vsel %vm1696, %v5472, 0.0
        %v5505 = vsel %vm1697, %v5473, 0.0
        %v5506 = vsel %vm1698, %v5474, 0.0
        %v5507 = vsel %vm1699, %v5475, 0.0
        %v5508 = vsel %vm1700, %v5476, 0.0
        %v5509 = vsel %vm1701, %v5477, 0.0
        %v5510 = vsel %vm1702, %v5478, 0.0
        %v5511 = vsel %vm1703, %v5479, 0.0
        %v5512 = vsel %vm1704, %v5480, 0.0
        %v5513 = vsel %vm1705, %v5481, 0.0
        %v5514 = vsel %vm1706, %v5482, 0.0
        %s5515 = scalar_lea.vmem [#allocation3], 128
        %v5516 = vld [vmem:[%s5515] sm:$0xff]
        %v5517 = vld [vmem:[%s5515 + $0x8] sm:$0xff]
        %v5518 = vld [vmem:[%s5515 + $0x10] sm:$0xff]
        %v5519 = vld [vmem:[%s5515 + $0x18] sm:$0xff]
        %v5520 = vld [vmem:[%s5515 + $0x20] sm:$0xff]
        %v5521 = vld [vmem:[%s5515 + $0x28] sm:$0xff]
        %v5522 = vld [vmem:[%s5515 + $0x30] sm:$0xff]
        %v5523 = vld [vmem:[%s5515 + $0x38] sm:$0xff]
        %v5525 = vsel %vm240, %v5483, 0
        %v5528 = vsel %vm240, %v5484, 0
        %v5531 = vsel %vm240, %v5485, 0
        %v5534 = vsel %vm240, %v5486, 0
        %v5537 = vsel %vm240, %v5487, 0
        %v5540 = vsel %vm240, %v5488, 0
        %v5543 = vsel %vm240, %v5489, 0
        %v5546 = vsel %vm240, %v5490, 0
        %v5549 = vsel %vm240, %v5491, 0
        %v5552 = vsel %vm240, %v5492, 0
        %v5555 = vsel %vm240, %v5493, 0
        %v5558 = vsel %vm240, %v5494, 0
        %v5561 = vsel %vm240, %v5495, 0
        %v5564 = vsel %vm240, %v5496, 0
        %v5567 = vsel %vm240, %v5497, 0
        %v5570 = vsel %vm240, %v5498, 0
        %v5573 = vsel %vm240, %v5499, 0
        %v5576 = vsel %vm240, %v5500, 0
        %v5579 = vsel %vm240, %v5501, 0
        %v5582 = vsel %vm240, %v5502, 0
        %v5585 = vsel %vm240, %v5503, 0
        %v5588 = vsel %vm240, %v5504, 0
        %v5591 = vsel %vm240, %v5505, 0
        %v5594 = vsel %vm240, %v5506, 0
        %v5597 = vsel %vm240, %v5507, 0
        %v5600 = vsel %vm240, %v5508, 0
        %v5603 = vsel %vm240, %v5509, 0
        %v5606 = vsel %vm240, %v5510, 0
        %v5609 = vsel %vm240, %v5511, 0
        %v5612 = vsel %vm240, %v5512, 0
        %v5615 = vsel %vm240, %v5513, 0
        %v5618 = vsel %vm240, %v5514, 0
        %5620 = vmatprep.subr.mxu0 0.0
        %5621 = vmatpush1.msra.mxu0 %v5516
        %5622 = vmatprep.subr.mxu0 0.0
        %5623 = vmatpush1.msra.mxu0 %v5517
        %5624 = vmatprep.subr.mxu0 0.0
        %5625 = vmatpush1.msra.mxu0 %v5518
        %5626 = vmatprep.subr.mxu0 0.0
        %5627 = vmatpush1.msra.mxu0 %v5519
        %5628 = vmatprep.subr.mxu0 0.0
        %5629 = vmatpush1.msra.mxu0 %v5520
        %5630 = vmatprep.subr.mxu0 0.0
        %5631 = vmatpush1.msra.mxu0 %v5521
        %5632 = vmatprep.subr.mxu0 0.0
        %5633 = vmatpush1.msra.mxu0 %v5522
        %5634 = vmatprep.subr.mxu0 0.0
        %5635 = vmatpush1.msra.mxu0 %v5523
        %5636 = vmatprep.subr.mxu0 0.0
        %5637 = vmatpush1.msra.mxu0 0.0
        %5638 = vmatprep.subr.mxu0 0.0
        %5639 = vmatpush1.msra.mxu0 0.0
        %5640 = vmatprep.subr.mxu0 0.0
        %5641 = vmatpush1.msra.mxu0 0.0
        %5642 = vmatprep.subr.mxu0 0.0
        %5643 = vmatpush1.msra.mxu0 0.0
        %5644 = vmatprep.subr.mxu0 0.0
        %5645 = vmatpush1.msra.mxu0 0.0
        %5646 = vmatprep.subr.mxu0 0.0
        %5647 = vmatpush1.msra.mxu0 0.0
        %5648 = vmatprep.subr.mxu0 0.0
        %5649 = vmatpush1.msra.mxu0 0.0
        %5650 = vmatprep.subr.mxu0 0.0
        %5651 = vmatpush1.msra.mxu0 0.0
        %5652 = vmatprep.subr.mxu0 0.0
        %5653 = vmatpush1.msra.mxu0 0.0
        %5654 = vmatprep.subr.mxu0 0.0
        %5655 = vmatpush1.msra.mxu0 0.0
        %5656 = vmatprep.subr.mxu0 0.0
        %5657 = vmatpush1.msra.mxu0 0.0
        %5658 = vmatprep.subr.mxu0 0.0
        %5659 = vmatpush1.msra.mxu0 0.0
        %5660 = vmatprep.subr.mxu0 0.0
        %5661 = vmatpush1.msra.mxu0 0.0
        %5662 = vmatprep.subr.mxu0 0.0
        %5663 = vmatpush1.msra.mxu0 0.0
        %5664 = vmatprep.subr.mxu0 0.0
        %5665 = vmatpush1.msra.mxu0 0.0
        %5666 = vmatprep.subr.mxu0 0.0
        %5667 = vmatpush1.msra.mxu0 0.0
        %5668 = vmatprep.subr.mxu0 0.0
        %5669 = vmatpush1.msra.mxu0 0.0
        %5670 = vmatprep.subr.mxu0 0.0
        %5671 = vmatpush1.msra.mxu0 0.0
        %5672 = vmatprep.subr.mxu0 0.0
        %5673 = vmatpush1.msra.mxu0 0.0
        %5674 = vmatprep.subr.mxu0 0.0
        %5675 = vmatpush1.msra.mxu0 0.0
        %5676 = vmatprep.subr.mxu0 0.0
        %5677 = vmatpush1.msra.mxu0 0.0
        %5678 = vmatprep.subr.mxu0 0.0
        %5679 = vmatpush1.msra.mxu0 0.0
        %5680 = vmatprep.subr.mxu0 0.0
        %5681 = vmatpush1.msra.mxu0 0.0
        %5682 = vmatprep.subr.mxu0 0.0
        %5683 = vmatpush1.msra.mxu0 0.0
        %5684 = vmatprep.mubr.f32.mxu0 0.0
        %5685 = vmatmul.mubr.f32.gmra.mrb[0].mxu0 %v5525
        %v5686 = vpop.f32.mrb[0].mxu0
        %v5687 = vadd.f32 0.0, %v5686
        %v5688 = vpop.f32.mrb[0].mxu0
        %5689 = vmatprep.mubr.f32.mxu0 0.0
        %5690 = vmatmul.mubr.f32.gmra.mrb[0].mxu0 %v5528
        %v5691 = vpop.f32.mrb[0].mxu0
        %v5692 = vadd.f32 0.0, %v5691
        %v5693 = vpop.f32.mrb[0].mxu0
        %5694 = vmatprep.mubr.f32.mxu0 0.0
        %5695 = vmatmul.mubr.f32.gmra.mrb[0].mxu0 %v5531
        %v5696 = vpop.f32.mrb[0].mxu0
        %v5697 = vadd.f32 0.0, %v5696
        %v5698 = vpop.f32.mrb[0].mxu0
        %5699 = vmatprep.mubr.f32.mxu0 0.0
        %5700 = vmatmul.mubr.f32.gmra.mrb[0].mxu0 %v5534
        %v5701 = vpop.f32.mrb[0].mxu0
        %v5702 = vadd.f32 0.0, %v5701
        %v5703 = vpop.f32.mrb[0].mxu0
        %5704 = vmatprep.mubr.f32.mxu0 0.0
        %5705 = vmatmul.mubr.f32.gmra.mrb[0].mxu0 %v5537
        %v5706 = vpop.f32.mrb[0].mxu0
        %v5707 = vadd.f32 0.0, %v5706
        %v5708 = vpop.f32.mrb[0].mxu0
        %5709 = vmatprep.mubr.f32.mxu0 0.0
        %5710 = vmatmul.mubr.f32.gmra.mrb[0].mxu0 %v5540
        %v5711 = vpop.f32.mrb[0].mxu0
        %v5712 = vadd.f32 0.0, %v5711
        %v5713 = vpop.f32.mrb[0].mxu0
        %5714 = vmatprep.mubr.f32.mxu0 0.0
        %5715 = vmatmul.mubr.f32.gmra.mrb[0].mxu0 %v5543
        %v5716 = vpop.f32.mrb[0].mxu0
        %v5717 = vadd.f32 0.0, %v5716
        %v5718 = vpop.f32.mrb[0].mxu0
        %5719 = vmatprep.mubr.f32.mxu0 0.0
        %5720 = vmatmul.mubr.f32.gmra.mrb[0].mxu0 %v5546
        %v5721 = vpop.f32.mrb[0].mxu0
        %v5722 = vadd.f32 0.0, %v5721
        %v5723 = vpop.f32.mrb[0].mxu0
        %5724 = vmatprep.mubr.f32.mxu0 0.0
        %5725 = vmatmul.mubr.f32.gmra.mrb[0].mxu0 %v5549
        %v5726 = vpop.f32.mrb[0].mxu0
        %v5727 = vadd.f32 0.0, %v5726
        %v5728 = vpop.f32.mrb[0].mxu0
        %5729 = vmatprep.mubr.f32.mxu0 0.0
        %5730 = vmatmul.mubr.f32.gmra.mrb[0].mxu0 %v5552
        %v5731 = vpop.f32.mrb[0].mxu0
        %v5732 = vadd.f32 0.0, %v5731
        %v5733 = vpop.f32.mrb[0].mxu0
        %5734 = vmatprep.mubr.f32.mxu0 0.0
        %5735 = vmatmul.mubr.f32.gmra.mrb[0].mxu0 %v5555
        %v5736 = vpop.f32.mrb[0].mxu0
        %v5737 = vadd.f32 0.0, %v5736
        %v5738 = vpop.f32.mrb[0].mxu0
        %5739 = vmatprep.mubr.f32.mxu0 0.0
        %5740 = vmatmul.mubr.f32.gmra.mrb[0].mxu0 %v5558
        %v5741 = vpop.f32.mrb[0].mxu0
        %v5742 = vadd.f32 0.0, %v5741
        %v5743 = vpop.f32.mrb[0].mxu0
        %5744 = vmatprep.mubr.f32.mxu0 0.0
        %5745 = vmatmul.mubr.f32.gmra.mrb[0].mxu0 %v5561
        %v5746 = vpop.f32.mrb[0].mxu0
        %v5747 = vadd.f32 0.0, %v5746
        %v5748 = vpop.f32.mrb[0].mxu0
        %5749 = vmatprep.mubr.f32.mxu0 0.0
        %5750 = vmatmul.mubr.f32.gmra.mrb[0].mxu0 %v5564
        %v5751 = vpop.f32.mrb[0].mxu0
        %v5752 = vadd.f32 0.0, %v5751
        %v5753 = vpop.f32.mrb[0].mxu0
        %5754 = vmatprep.mubr.f32.mxu0 0.0
        %5755 = vmatmul.mubr.f32.gmra.mrb[0].mxu0 %v5567
        %v5756 = vpop.f32.mrb[0].mxu0
        %v5757 = vadd.f32 0.0, %v5756
        %v5758 = vpop.f32.mrb[0].mxu0
        %5759 = vmatprep.mubr.f32.mxu0 0.0
        %5760 = vmatmul.mubr.f32.gmra.mrb[0].mxu0 %v5570
        %v5761 = vpop.f32.mrb[0].mxu0
        %v5762 = vadd.f32 0.0, %v5761
        %v5763 = vpop.f32.mrb[0].mxu0
        %5764 = vmatprep.mubr.f32.mxu0 0.0
        %5765 = vmatmul.mubr.f32.gmra.mrb[0].mxu0 %v5573
        %v5766 = vpop.f32.mrb[0].mxu0
        %v5767 = vadd.f32 0.0, %v5766
        %v5768 = vpop.f32.mrb[0].mxu0
        %5769 = vmatprep.mubr.f32.mxu0 0.0
        %5770 = vmatmul.mubr.f32.gmra.mrb[0].mxu0 %v5576
        %v5771 = vpop.f32.mrb[0].mxu0
        %v5772 = vadd.f32 0.0, %v5771
        %v5773 = vpop.f32.mrb[0].mxu0
        %5774 = vmatprep.mubr.f32.mxu0 0.0
        %5775 = vmatmul.mubr.f32.gmra.mrb[0].mxu0 %v5579
        %v5776 = vpop.f32.mrb[0].mxu0
        %v5777 = vadd.f32 0.0, %v5776
        %v5778 = vpop.f32.mrb[0].mxu0
        %5779 = vmatprep.mubr.f32.mxu0 0.0
        %5780 = vmatmul.mubr.f32.gmra.mrb[0].mxu0 %v5582
        %v5781 = vpop.f32.mrb[0].mxu0
        %v5782 = vadd.f32 0.0, %v5781
        %v5783 = vpop.f32.mrb[0].mxu0
        %5784 = vmatprep.mubr.f32.mxu0 0.0
        %5785 = vmatmul.mubr.f32.gmra.mrb[0].mxu0 %v5585
        %v5786 = vpop.f32.mrb[0].mxu0
        %v5787 = vadd.f32 0.0, %v5786
        %v5788 = vpop.f32.mrb[0].mxu0
        %5789 = vmatprep.mubr.f32.mxu0 0.0
        %5790 = vmatmul.mubr.f32.gmra.mrb[0].mxu0 %v5588
        %v5791 = vpop.f32.mrb[0].mxu0
        %v5792 = vadd.f32 0.0, %v5791
        %v5793 = vpop.f32.mrb[0].mxu0
        %5794 = vmatprep.mubr.f32.mxu0 0.0
        %5795 = vmatmul.mubr.f32.gmra.mrb[0].mxu0 %v5591
        %v5796 = vpop.f32.mrb[0].mxu0
        %v5797 = vadd.f32 0.0, %v5796
        %v5798 = vpop.f32.mrb[0].mxu0
        %5799 = vmatprep.mubr.f32.mxu0 0.0
        %5800 = vmatmul.mubr.f32.gmra.mrb[0].mxu0 %v5594
        %v5801 = vpop.f32.mrb[0].mxu0
        %v5802 = vadd.f32 0.0, %v5801
        %v5803 = vpop.f32.mrb[0].mxu0
        %5804 = vmatprep.mubr.f32.mxu0 0.0
        %5805 = vmatmul.mubr.f32.gmra.mrb[0].mxu0 %v5597
        %v5806 = vpop.f32.mrb[0].mxu0
        %v5807 = vadd.f32 0.0, %v5806
        %v5808 = vpop.f32.mrb[0].mxu0
        %5809 = vmatprep.mubr.f32.mxu0 0.0
        %5810 = vmatmul.mubr.f32.gmra.mrb[0].mxu0 %v5600
        %v5811 = vpop.f32.mrb[0].mxu0
        %v5812 = vadd.f32 0.0, %v5811
        %v5813 = vpop.f32.mrb[0].mxu0
        %5814 = vmatprep.mubr.f32.mxu0 0.0
        %5815 = vmatmul.mubr.f32.gmra.mrb[0].mxu0 %v5603
        %v5816 = vpop.f32.mrb[0].mxu0
        %v5817 = vadd.f32 0.0, %v5816
        %v5818 = vpop.f32.mrb[0].mxu0
        %5819 = vmatprep.mubr.f32.mxu0 0.0
        %5820 = vmatmul.mubr.f32.gmra.mrb[0].mxu0 %v5606
        %v5821 = vpop.f32.mrb[0].mxu0
        %v5822 = vadd.f32 0.0, %v5821
        %v5823 = vpop.f32.mrb[0].mxu0
        %5824 = vmatprep.mubr.f32.mxu0 0.0
        %5825 = vmatmul.mubr.f32.gmra.mrb[0].mxu0 %v5609
        %v5826 = vpop.f32.mrb[0].mxu0
        %v5827 = vadd.f32 0.0, %v5826
        %v5828 = vpop.f32.mrb[0].mxu0
        %5829 = vmatprep.mubr.f32.mxu0 0.0
        %5830 = vmatmul.mubr.f32.gmra.mrb[0].mxu0 %v5612
        %v5831 = vpop.f32.mrb[0].mxu0
        %v5832 = vadd.f32 0.0, %v5831
        %v5833 = vpop.f32.mrb[0].mxu0
        %5834 = vmatprep.mubr.f32.mxu0 0.0
        %5835 = vmatmul.mubr.f32.gmra.mrb[0].mxu0 %v5615
        %v5836 = vpop.f32.mrb[0].mxu0
        %v5837 = vadd.f32 0.0, %v5836
        %v5838 = vpop.f32.mrb[0].mxu0
        %5839 = vmatprep.mubr.f32.mxu0 0.0
        %5840 = vmatmul.mubr.f32.gmra.mrb[0].mxu0 %v5618
        %v5841 = vpop.f32.mrb[0].mxu0
        %v5842 = vadd.f32 0.0, %v5841
        %v5843 = vpop.f32.mrb[0].mxu0
        %5844 = vdwg.mxu0
        %v5845 = vadd.f32 %v5293, %v5687
        %v5846 = vadd.f32 %v5298, %v5692
        %v5847 = vadd.f32 %v5303, %v5697
        %v5848 = vadd.f32 %v5308, %v5702
        %v5849 = vadd.f32 %v5313, %v5707
        %v5850 = vadd.f32 %v5318, %v5712
        %v5851 = vadd.f32 %v5323, %v5717
        %v5852 = vadd.f32 %v5328, %v5722
        %v5853 = vadd.f32 %v5333, %v5727
        %v5854 = vadd.f32 %v5338, %v5732
        %v5855 = vadd.f32 %v5343, %v5737
        %v5856 = vadd.f32 %v5348, %v5742
        %v5857 = vadd.f32 %v5353, %v5747
        %v5858 = vadd.f32 %v5358, %v5752
        %v5859 = vadd.f32 %v5363, %v5757
        %v5860 = vadd.f32 %v5368, %v5762
        %v5861 = vadd.f32 %v5373, %v5767
        %v5862 = vadd.f32 %v5378, %v5772
        %v5863 = vadd.f32 %v5383, %v5777
        %v5864 = vadd.f32 %v5388, %v5782
        %v5865 = vadd.f32 %v5393, %v5787
        %v5866 = vadd.f32 %v5398, %v5792
        %v5867 = vadd.f32 %v5403, %v5797
        %v5868 = vadd.f32 %v5408, %v5802
        %v5869 = vadd.f32 %v5413, %v5807
        %v5870 = vadd.f32 %v5418, %v5812
        %v5871 = vadd.f32 %v5423, %v5817
        %v5872 = vadd.f32 %v5428, %v5822
        %v5873 = vadd.f32 %v5433, %v5827
        %v5874 = vadd.f32 %v5438, %v5832
        %v5875 = vadd.f32 %v5443, %v5837
        %v5876 = vadd.f32 %v5448, %v5842
        %v5877 = vld [vmem:[#allocation2 + $0x17] sm:$0xff]
        %v5878 = vld [vmem:[#allocation2 + $0x1f] sm:$0xff]
        %v5879 = vld [vmem:[#allocation2 + $0x27] sm:$0xff]
        %v5880 = vld [vmem:[#allocation2 + $0x2f] sm:$0xff]
        %v5881 = vld [vmem:[#allocation2 + $0x37] sm:$0xff]
        %v5882 = vld [vmem:[#allocation2 + $0x3f] sm:$0xff]
        %v5883 = vld [vmem:[#allocation2 + $0x47] sm:$0xff]
        %v5884 = vld [vmem:[#allocation2 + $0x4f] sm:$0xff]
        %v5885 = vld [vmem:[#allocation2 + $0x57] sm:$0xff]
        %v5886 = vld [vmem:[#allocation2 + $0x5f] sm:$0xff]
        %v5887 = vld [vmem:[#allocation2 + $0x67] sm:$0xff]
        %v5888 = vld [vmem:[#allocation2 + $0x6f] sm:$0xff]
        %v5889 = vld [vmem:[#allocation2 + $0x77] sm:$0xff]
        %v5890 = vld [vmem:[#allocation2 + $0x7f] sm:$0xff]
        %v5891 = vld [vmem:[#allocation2 + $0x87] sm:$0xff]
        %v5892 = vld [vmem:[#allocation2 + $0x8f] sm:$0xff]
        %v5893 = vld [vmem:[#allocation2 + $0x97] sm:$0xff]
        %v5894 = vld [vmem:[#allocation2 + $0x9f] sm:$0xff]
        %v5895 = vld [vmem:[#allocation2 + $0xa7] sm:$0xff]
        %v5896 = vld [vmem:[#allocation2 + $0xaf] sm:$0xff]
        %v5897 = vld [vmem:[#allocation2 + $0xb7] sm:$0xff]
        %v5898 = vld [vmem:[#allocation2 + $0xbf] sm:$0xff]
        %v5899 = vld [vmem:[#allocation2 + $0xc7] sm:$0xff]
        %v5900 = vld [vmem:[#allocation2 + $0xcf] sm:$0xff]
        %v5901 = vld [vmem:[#allocation2 + $0xd7] sm:$0xff]
        %v5902 = vld [vmem:[#allocation2 + $0xdf] sm:$0xff]
        %v5903 = vld [vmem:[#allocation2 + $0xe7] sm:$0xff]
        %v5904 = vld [vmem:[#allocation2 + $0xef] sm:$0xff]
        %v5905 = vld [vmem:[#allocation2 + $0xf7] sm:$0xff]
        %v5906 = vld [vmem:[#allocation2 + $0xff] sm:$0xff]
        %v5907 = vld [vmem:[#allocation2 + $0x107] sm:$0xff]
        %v5908 = vld [vmem:[#allocation2 + $0x10f] sm:$0xff]
        %v5909 = vsel %vm856, %v5877, 0.0
        %v5910 = vsel %vm857, %v5878, 0.0
        %v5911 = vsel %vm858, %v5879, 0.0
        %v5912 = vsel %vm859, %v5880, 0.0
        %v5913 = vsel %vm860, %v5881, 0.0
        %v5914 = vsel %vm861, %v5882, 0.0
        %v5915 = vsel %vm862, %v5883, 0.0
        %v5916 = vsel %vm863, %v5884, 0.0
        %v5917 = vsel %vm864, %v5885, 0.0
        %v5918 = vsel %vm865, %v5886, 0.0
        %v5919 = vsel %vm866, %v5887, 0.0
        %v5920 = vsel %vm867, %v5888, 0.0
        %v5921 = vsel %vm868, %v5889, 0.0
        %v5922 = vsel %vm869, %v5890, 0.0
        %v5923 = vsel %vm870, %v5891, 0.0
        %v5924 = vsel %vm871, %v5892, 0.0
        %v5925 = vsel %vm872, %v5893, 0.0
        %v5926 = vsel %vm873, %v5894, 0.0
        %v5927 = vsel %vm874, %v5895, 0.0
        %v5928 = vsel %vm875, %v5896, 0.0
        %v5929 = vsel %vm876, %v5897, 0.0
        %v5930 = vsel %vm877, %v5898, 0.0
        %v5931 = vsel %vm878, %v5899, 0.0
        %v5932 = vsel %vm879, %v5900, 0.0
        %v5933 = vsel %vm880, %v5901, 0.0
        %v5934 = vsel %vm881, %v5902, 0.0
        %v5935 = vsel %vm882, %v5903, 0.0
        %v5936 = vsel %vm883, %v5904, 0.0
        %v5937 = vsel %vm884, %v5905, 0.0
        %v5938 = vsel %vm885, %v5906, 0.0
        %v5939 = vsel %vm886, %v5907, 0.0
        %v5940 = vsel %vm887, %v5908, 0.0
        %s5941 = scalar_lea.vmem [#allocation3], 192
        %v5942 = vld [vmem:[%s5941] sm:$0xff]
        %v5943 = vld [vmem:[%s5941 + $0x8] sm:$0xff]
        %v5944 = vld [vmem:[%s5941 + $0x10] sm:$0xff]
        %v5945 = vld [vmem:[%s5941 + $0x18] sm:$0xff]
        %v5946 = vld [vmem:[%s5941 + $0x20] sm:$0xff]
        %v5947 = vld [vmem:[%s5941 + $0x28] sm:$0xff]
        %v5948 = vld [vmem:[%s5941 + $0x30] sm:$0xff]
        %v5949 = vld [vmem:[%s5941 + $0x38] sm:$0xff]
        %v5951 = vsel %vm240, %v5909, 0
        %v5954 = vsel %vm240, %v5910, 0
        %v5957 = vsel %vm240, %v5911, 0
        %v5960 = vsel %vm240, %v5912, 0
        %v5963 = vsel %vm240, %v5913, 0
        %v5966 = vsel %vm240, %v5914, 0
        %v5969 = vsel %vm240, %v5915, 0
        %v5972 = vsel %vm240, %v5916, 0
        %v5975 = vsel %vm240, %v5917, 0
        %v5978 = vsel %vm240, %v5918, 0
        %v5981 = vsel %vm240, %v5919, 0
        %v5984 = vsel %vm240, %v5920, 0
        %v5987 = vsel %vm240, %v5921, 0
        %v5990 = vsel %vm240, %v5922, 0
        %v5993 = vsel %vm240, %v5923, 0
        %v5996 = vsel %vm240, %v5924, 0
        %v5999 = vsel %vm240, %v5925, 0
        %v6002 = vsel %vm240, %v5926, 0
        %v6005 = vsel %vm240, %v5927, 0
        %v6008 = vsel %vm240, %v5928, 0
        %v6011 = vsel %vm240, %v5929, 0
        %v6014 = vsel %vm240, %v5930, 0
        %v6017 = vsel %vm240, %v5931, 0
        %v6020 = vsel %vm240, %v5932, 0
        %v6023 = vsel %vm240, %v5933, 0
        %v6026 = vsel %vm240, %v5934, 0
        %v6029 = vsel %vm240, %v5935, 0
        %v6032 = vsel %vm240, %v5936, 0
        %v6035 = vsel %vm240, %v5937, 0
        %v6038 = vsel %vm240, %v5938, 0
        %v6041 = vsel %vm240, %v5939, 0
        %v6044 = vsel %vm240, %v5940, 0
        %6046 = vmatprep.subr.mxu0 0.0
        %6047 = vmatpush1.msra.mxu0 %v5942
        %6048 = vmatprep.subr.mxu0 0.0
        %6049 = vmatpush1.msra.mxu0 %v5943
        %6050 = vmatprep.subr.mxu0 0.0
        %6051 = vmatpush1.msra.mxu0 %v5944
        %6052 = vmatprep.subr.mxu0 0.0
        %6053 = vmatpush1.msra.mxu0 %v5945
        %6054 = vmatprep.subr.mxu0 0.0
        %6055 = vmatpush1.msra.mxu0 %v5946
        %6056 = vmatprep.subr.mxu0 0.0
        %6057 = vmatpush1.msra.mxu0 %v5947
        %6058 = vmatprep.subr.mxu0 0.0
        %6059 = vmatpush1.msra.mxu0 %v5948
        %6060 = vmatprep.subr.mxu0 0.0
        %6061 = vmatpush1.msra.mxu0 %v5949
        %6062 = vmatprep.subr.mxu0 0.0
        %6063 = vmatpush1.msra.mxu0 0.0
        %6064 = vmatprep.subr.mxu0 0.0
        %6065 = vmatpush1.msra.mxu0 0.0
        %6066 = vmatprep.subr.mxu0 0.0
        %6067 = vmatpush1.msra.mxu0 0.0
        %6068 = vmatprep.subr.mxu0 0.0
        %6069 = vmatpush1.msra.mxu0 0.0
        %6070 = vmatprep.subr.mxu0 0.0
        %6071 = vmatpush1.msra.mxu0 0.0
        %6072 = vmatprep.subr.mxu0 0.0
        %6073 = vmatpush1.msra.mxu0 0.0
        %6074 = vmatprep.subr.mxu0 0.0
        %6075 = vmatpush1.msra.mxu0 0.0
        %6076 = vmatprep.subr.mxu0 0.0
        %6077 = vmatpush1.msra.mxu0 0.0
        %6078 = vmatprep.subr.mxu0 0.0
        %6079 = vmatpush1.msra.mxu0 0.0
        %6080 = vmatprep.subr.mxu0 0.0
        %6081 = vmatpush1.msra.mxu0 0.0
        %6082 = vmatprep.subr.mxu0 0.0
        %6083 = vmatpush1.msra.mxu0 0.0
        %6084 = vmatprep.subr.mxu0 0.0
        %6085 = vmatpush1.msra.mxu0 0.0
        %6086 = vmatprep.subr.mxu0 0.0
        %6087 = vmatpush1.msra.mxu0 0.0
        %6088 = vmatprep.subr.mxu0 0.0
        %6089 = vmatpush1.msra.mxu0 0.0
        %6090 = vmatprep.subr.mxu0 0.0
        %6091 = vmatpush1.msra.mxu0 0.0
        %6092 = vmatprep.subr.mxu0 0.0
        %6093 = vmatpush1.msra.mxu0 0.0
        %6094 = vmatprep.subr.mxu0 0.0
        %6095 = vmatpush1.msra.mxu0 0.0
        %6096 = vmatprep.subr.mxu0 0.0
        %6097 = vmatpush1.msra.mxu0 0.0
        %6098 = vmatprep.subr.mxu0 0.0
        %6099 = vmatpush1.msra.mxu0 0.0
        %6100 = vmatprep.subr.mxu0 0.0
        %6101 = vmatpush1.msra.mxu0 0.0
        %6102 = vmatprep.subr.mxu0 0.0
        %6103 = vmatpush1.msra.mxu0 0.0
        %6104 = vmatprep.subr.mxu0 0.0
        %6105 = vmatpush1.msra.mxu0 0.0
        %6106 = vmatprep.subr.mxu0 0.0
        %6107 = vmatpush1.msra.mxu0 0.0
        %6108 = vmatprep.subr.mxu0 0.0
        %6109 = vmatpush1.msra.mxu0 0.0
        %6110 = vmatprep.mubr.f32.mxu0 0.0
        %6111 = vmatmul.mubr.f32.gmra.mrb[0].mxu0 %v5951
        %v6112 = vpop.f32.mrb[0].mxu0
        %v6113 = vadd.f32 0.0, %v6112
        %v6114 = vpop.f32.mrb[0].mxu0
        %6115 = vmatprep.mubr.f32.mxu0 0.0
        %6116 = vmatmul.mubr.f32.gmra.mrb[0].mxu0 %v5954
        %v6117 = vpop.f32.mrb[0].mxu0
        %v6118 = vadd.f32 0.0, %v6117
        %v6119 = vpop.f32.mrb[0].mxu0
        %6120 = vmatprep.mubr.f32.mxu0 0.0
        %6121 = vmatmul.mubr.f32.gmra.mrb[0].mxu0 %v5957
        %v6122 = vpop.f32.mrb[0].mxu0
        %v6123 = vadd.f32 0.0, %v6122
        %v6124 = vpop.f32.mrb[0].mxu0
        %6125 = vmatprep.mubr.f32.mxu0 0.0
        %6126 = vmatmul.mubr.f32.gmra.mrb[0].mxu0 %v5960
        %v6127 = vpop.f32.mrb[0].mxu0
        %v6128 = vadd.f32 0.0, %v6127
        %v6129 = vpop.f32.mrb[0].mxu0
        %6130 = vmatprep.mubr.f32.mxu0 0.0
        %6131 = vmatmul.mubr.f32.gmra.mrb[0].mxu0 %v5963
        %v6132 = vpop.f32.mrb[0].mxu0
        %v6133 = vadd.f32 0.0, %v6132
        %v6134 = vpop.f32.mrb[0].mxu0
        %6135 = vmatprep.mubr.f32.mxu0 0.0
        %6136 = vmatmul.mubr.f32.gmra.mrb[0].mxu0 %v5966
        %v6137 = vpop.f32.mrb[0].mxu0
        %v6138 = vadd.f32 0.0, %v6137
        %v6139 = vpop.f32.mrb[0].mxu0
        %6140 = vmatprep.mubr.f32.mxu0 0.0
        %6141 = vmatmul.mubr.f32.gmra.mrb[0].mxu0 %v5969
        %v6142 = vpop.f32.mrb[0].mxu0
        %v6143 = vadd.f32 0.0, %v6142
        %v6144 = vpop.f32.mrb[0].mxu0
        %6145 = vmatprep.mubr.f32.mxu0 0.0
        %6146 = vmatmul.mubr.f32.gmra.mrb[0].mxu0 %v5972
        %v6147 = vpop.f32.mrb[0].mxu0
        %v6148 = vadd.f32 0.0, %v6147
        %v6149 = vpop.f32.mrb[0].mxu0
        %6150 = vmatprep.mubr.f32.mxu0 0.0
        %6151 = vmatmul.mubr.f32.gmra.mrb[0].mxu0 %v5975
        %v6152 = vpop.f32.mrb[0].mxu0
        %v6153 = vadd.f32 0.0, %v6152
        %v6154 = vpop.f32.mrb[0].mxu0
        %6155 = vmatprep.mubr.f32.mxu0 0.0
        %6156 = vmatmul.mubr.f32.gmra.mrb[0].mxu0 %v5978
        %v6157 = vpop.f32.mrb[0].mxu0
        %v6158 = vadd.f32 0.0, %v6157
        %v6159 = vpop.f32.mrb[0].mxu0
        %6160 = vmatprep.mubr.f32.mxu0 0.0
        %6161 = vmatmul.mubr.f32.gmra.mrb[0].mxu0 %v5981
        %v6162 = vpop.f32.mrb[0].mxu0
        %v6163 = vadd.f32 0.0, %v6162
        %v6164 = vpop.f32.mrb[0].mxu0
        %6165 = vmatprep.mubr.f32.mxu0 0.0
        %6166 = vmatmul.mubr.f32.gmra.mrb[0].mxu0 %v5984
        %v6167 = vpop.f32.mrb[0].mxu0
        %v6168 = vadd.f32 0.0, %v6167
        %v6169 = vpop.f32.mrb[0].mxu0
        %6170 = vmatprep.mubr.f32.mxu0 0.0
        %6171 = vmatmul.mubr.f32.gmra.mrb[0].mxu0 %v5987
        %v6172 = vpop.f32.mrb[0].mxu0
        %v6173 = vadd.f32 0.0, %v6172
        %v6174 = vpop.f32.mrb[0].mxu0
        %6175 = vmatprep.mubr.f32.mxu0 0.0
        %6176 = vmatmul.mubr.f32.gmra.mrb[0].mxu0 %v5990
        %v6177 = vpop.f32.mrb[0].mxu0
        %v6178 = vadd.f32 0.0, %v6177
        %v6179 = vpop.f32.mrb[0].mxu0
        %6180 = vmatprep.mubr.f32.mxu0 0.0
        %6181 = vmatmul.mubr.f32.gmra.mrb[0].mxu0 %v5993
        %v6182 = vpop.f32.mrb[0].mxu0
        %v6183 = vadd.f32 0.0, %v6182
        %v6184 = vpop.f32.mrb[0].mxu0
        %6185 = vmatprep.mubr.f32.mxu0 0.0
        %6186 = vmatmul.mubr.f32.gmra.mrb[0].mxu0 %v5996
        %v6187 = vpop.f32.mrb[0].mxu0
        %v6188 = vadd.f32 0.0, %v6187
        %v6189 = vpop.f32.mrb[0].mxu0
        %6190 = vmatprep.mubr.f32.mxu0 0.0
        %6191 = vmatmul.mubr.f32.gmra.mrb[0].mxu0 %v5999
        %v6192 = vpop.f32.mrb[0].mxu0
        %v6193 = vadd.f32 0.0, %v6192
        %v6194 = vpop.f32.mrb[0].mxu0
        %6195 = vmatprep.mubr.f32.mxu0 0.0
        %6196 = vmatmul.mubr.f32.gmra.mrb[0].mxu0 %v6002
        %v6197 = vpop.f32.mrb[0].mxu0
        %v6198 = vadd.f32 0.0, %v6197
        %v6199 = vpop.f32.mrb[0].mxu0
        %6200 = vmatprep.mubr.f32.mxu0 0.0
        %6201 = vmatmul.mubr.f32.gmra.mrb[0].mxu0 %v6005
        %v6202 = vpop.f32.mrb[0].mxu0
        %v6203 = vadd.f32 0.0, %v6202
        %v6204 = vpop.f32.mrb[0].mxu0
        %6205 = vmatprep.mubr.f32.mxu0 0.0
        %6206 = vmatmul.mubr.f32.gmra.mrb[0].mxu0 %v6008
        %v6207 = vpop.f32.mrb[0].mxu0
        %v6208 = vadd.f32 0.0, %v6207
        %v6209 = vpop.f32.mrb[0].mxu0
        %6210 = vmatprep.mubr.f32.mxu0 0.0
        %6211 = vmatmul.mubr.f32.gmra.mrb[0].mxu0 %v6011
        %v6212 = vpop.f32.mrb[0].mxu0
        %v6213 = vadd.f32 0.0, %v6212
        %v6214 = vpop.f32.mrb[0].mxu0
        %6215 = vmatprep.mubr.f32.mxu0 0.0
        %6216 = vmatmul.mubr.f32.gmra.mrb[0].mxu0 %v6014
        %v6217 = vpop.f32.mrb[0].mxu0
        %v6218 = vadd.f32 0.0, %v6217
        %v6219 = vpop.f32.mrb[0].mxu0
        %6220 = vmatprep.mubr.f32.mxu0 0.0
        %6221 = vmatmul.mubr.f32.gmra.mrb[0].mxu0 %v6017
        %v6222 = vpop.f32.mrb[0].mxu0
        %v6223 = vadd.f32 0.0, %v6222
        %v6224 = vpop.f32.mrb[0].mxu0
        %6225 = vmatprep.mubr.f32.mxu0 0.0
        %6226 = vmatmul.mubr.f32.gmra.mrb[0].mxu0 %v6020
        %v6227 = vpop.f32.mrb[0].mxu0
        %v6228 = vadd.f32 0.0, %v6227
        %v6229 = vpop.f32.mrb[0].mxu0
        %6230 = vmatprep.mubr.f32.mxu0 0.0
        %6231 = vmatmul.mubr.f32.gmra.mrb[0].mxu0 %v6023
        %v6232 = vpop.f32.mrb[0].mxu0
        %v6233 = vadd.f32 0.0, %v6232
        %v6234 = vpop.f32.mrb[0].mxu0
        %6235 = vmatprep.mubr.f32.mxu0 0.0
        %6236 = vmatmul.mubr.f32.gmra.mrb[0].mxu0 %v6026
        %v6237 = vpop.f32.mrb[0].mxu0
        %v6238 = vadd.f32 0.0, %v6237
        %v6239 = vpop.f32.mrb[0].mxu0
        %6240 = vmatprep.mubr.f32.mxu0 0.0
        %6241 = vmatmul.mubr.f32.gmra.mrb[0].mxu0 %v6029
        %v6242 = vpop.f32.mrb[0].mxu0
        %v6243 = vadd.f32 0.0, %v6242
        %v6244 = vpop.f32.mrb[0].mxu0
        %6245 = vmatprep.mubr.f32.mxu0 0.0
        %6246 = vmatmul.mubr.f32.gmra.mrb[0].mxu0 %v6032
        %v6247 = vpop.f32.mrb[0].mxu0
        %v6248 = vadd.f32 0.0, %v6247
        %v6249 = vpop.f32.mrb[0].mxu0
        %6250 = vmatprep.mubr.f32.mxu0 0.0
        %6251 = vmatmul.mubr.f32.gmra.mrb[0].mxu0 %v6035
        %v6252 = vpop.f32.mrb[0].mxu0
        %v6253 = vadd.f32 0.0, %v6252
        %v6254 = vpop.f32.mrb[0].mxu0
        %6255 = vmatprep.mubr.f32.mxu0 0.0
        %6256 = vmatmul.mubr.f32.gmra.mrb[0].mxu0 %v6038
        %v6257 = vpop.f32.mrb[0].mxu0
        %v6258 = vadd.f32 0.0, %v6257
        %v6259 = vpop.f32.mrb[0].mxu0
        %6260 = vmatprep.mubr.f32.mxu0 0.0
        %6261 = vmatmul.mubr.f32.gmra.mrb[0].mxu0 %v6041
        %v6262 = vpop.f32.mrb[0].mxu0
        %v6263 = vadd.f32 0.0, %v6262
        %v6264 = vpop.f32.mrb[0].mxu0
        %6265 = vmatprep.mubr.f32.mxu0 0.0
        %6266 = vmatmul.mubr.f32.gmra.mrb[0].mxu0 %v6044
        %v6267 = vpop.f32.mrb[0].mxu0
        %v6268 = vadd.f32 0.0, %v6267
        %v6269 = vpop.f32.mrb[0].mxu0
        %6270 = vdwg.mxu0
        %v6271 = vadd.f32 %v5845, %v6113
        %v6272 = vadd.f32 %v5846, %v6118
        %v6273 = vadd.f32 %v5847, %v6123
        %v6274 = vadd.f32 %v5848, %v6128
        %v6275 = vadd.f32 %v5849, %v6133
        %v6276 = vadd.f32 %v5850, %v6138
        %v6277 = vadd.f32 %v5851, %v6143
        %v6278 = vadd.f32 %v5852, %v6148
        %v6279 = vadd.f32 %v5853, %v6153
        %v6280 = vadd.f32 %v5854, %v6158
        %v6281 = vadd.f32 %v5855, %v6163
        %v6282 = vadd.f32 %v5856, %v6168
        %v6283 = vadd.f32 %v5857, %v6173
        %v6284 = vadd.f32 %v5858, %v6178
        %v6285 = vadd.f32 %v5859, %v6183
        %v6286 = vadd.f32 %v5860, %v6188
        %v6287 = vadd.f32 %v5861, %v6193
        %v6288 = vadd.f32 %v5862, %v6198
        %v6289 = vadd.f32 %v5863, %v6203
        %v6290 = vadd.f32 %v5864, %v6208
        %v6291 = vadd.f32 %v5865, %v6213
        %v6292 = vadd.f32 %v5866, %v6218
        %v6293 = vadd.f32 %v5867, %v6223
        %v6294 = vadd.f32 %v5868, %v6228
        %v6295 = vadd.f32 %v5869, %v6233
        %v6296 = vadd.f32 %v5870, %v6238
        %v6297 = vadd.f32 %v5871, %v6243
        %v6298 = vadd.f32 %v5872, %v6248
        %v6299 = vadd.f32 %v5873, %v6253
        %v6300 = vadd.f32 %v5874, %v6258
        %v6301 = vadd.f32 %v5875, %v6263
        %v6302 = vadd.f32 %v5876, %v6268
        %v6303 = vld [vmem:[#allocation2 + $0x18] sm:$0xff]
        %v6304 = vld [vmem:[#allocation2 + $0x20] sm:$0xff]
        %v6305 = vld [vmem:[#allocation2 + $0x28] sm:$0xff]
        %v6306 = vld [vmem:[#allocation2 + $0x30] sm:$0xff]
        %v6307 = vld [vmem:[#allocation2 + $0x38] sm:$0xff]
        %v6308 = vld [vmem:[#allocation2 + $0x40] sm:$0xff]
        %v6309 = vld [vmem:[#allocation2 + $0x48] sm:$0xff]
        %v6310 = vld [vmem:[#allocation2 + $0x50] sm:$0xff]
        %v6311 = vld [vmem:[#allocation2 + $0x58] sm:$0xff]
        %v6312 = vld [vmem:[#allocation2 + $0x60] sm:$0xff]
        %v6313 = vld [vmem:[#allocation2 + $0x68] sm:$0xff]
        %v6314 = vld [vmem:[#allocation2 + $0x70] sm:$0xff]
        %v6315 = vld [vmem:[#allocation2 + $0x78] sm:$0xff]
        %v6316 = vld [vmem:[#allocation2 + $0x80] sm:$0xff]
        %v6317 = vld [vmem:[#allocation2 + $0x88] sm:$0xff]
        %v6318 = vld [vmem:[#allocation2 + $0x90] sm:$0xff]
        %v6319 = vld [vmem:[#allocation2 + $0x98] sm:$0xff]
        %v6320 = vld [vmem:[#allocation2 + $0xa0] sm:$0xff]
        %v6321 = vld [vmem:[#allocation2 + $0xa8] sm:$0xff]
        %v6322 = vld [vmem:[#allocation2 + $0xb0] sm:$0xff]
        %v6323 = vld [vmem:[#allocation2 + $0xb8] sm:$0xff]
        %v6324 = vld [vmem:[#allocation2 + $0xc0] sm:$0xff]
        %v6325 = vld [vmem:[#allocation2 + $0xc8] sm:$0xff]
        %v6326 = vld [vmem:[#allocation2 + $0xd0] sm:$0xff]
        %v6327 = vld [vmem:[#allocation2 + $0xd8] sm:$0xff]
        %v6328 = vld [vmem:[#allocation2 + $0xe0] sm:$0xff]
        %v6329 = vld [vmem:[#allocation2 + $0xe8] sm:$0xff]
        %v6330 = vld [vmem:[#allocation2 + $0xf0] sm:$0xff]
        %v6331 = vld [vmem:[#allocation2 + $0xf8] sm:$0xff]
        %v6332 = vld [vmem:[#allocation2 + $0x100] sm:$0xff]
        %v6333 = vld [vmem:[#allocation2 + $0x108] sm:$0xff]
        %v6334 = vld [vmem:[#allocation2 + $0x110] sm:$0xff]
        %s6335 = scalar_lea.vmem [#allocation3], 256
        %v6336 = vld [vmem:[%s6335] sm:$0xff]
        %v6337 = vld [vmem:[%s6335 + $0x8] sm:$0xff]
        %v6338 = vld [vmem:[%s6335 + $0x10] sm:$0xff]
        %v6339 = vld [vmem:[%s6335 + $0x18] sm:$0xff]
        %v6340 = vld [vmem:[%s6335 + $0x20] sm:$0xff]
        %v6341 = vld [vmem:[%s6335 + $0x28] sm:$0xff]
        %v6342 = vld [vmem:[%s6335 + $0x30] sm:$0xff]
        %v6343 = vld [vmem:[%s6335 + $0x38] sm:$0xff]
        %v6345 = vsel %vm240, %v6303, 0
        %v6348 = vsel %vm240, %v6304, 0
        %v6351 = vsel %vm240, %v6305, 0
        %v6354 = vsel %vm240, %v6306, 0
        %v6357 = vsel %vm240, %v6307, 0
        %v6360 = vsel %vm240, %v6308, 0
        %v6363 = vsel %vm240, %v6309, 0
        %v6366 = vsel %vm240, %v6310, 0
        %v6369 = vsel %vm240, %v6311, 0
        %v6372 = vsel %vm240, %v6312, 0
        %v6375 = vsel %vm240, %v6313, 0
        %v6378 = vsel %vm240, %v6314, 0
        %v6381 = vsel %vm240, %v6315, 0
        %v6384 = vsel %vm240, %v6316, 0
        %v6387 = vsel %vm240, %v6317, 0
        %v6390 = vsel %vm240, %v6318, 0
        %v6393 = vsel %vm240, %v6319, 0
        %v6396 = vsel %vm240, %v6320, 0
        %v6399 = vsel %vm240, %v6321, 0
        %v6402 = vsel %vm240, %v6322, 0
        %v6405 = vsel %vm240, %v6323, 0
        %v6408 = vsel %vm240, %v6324, 0
        %v6411 = vsel %vm240, %v6325, 0
        %v6414 = vsel %vm240, %v6326, 0
        %v6417 = vsel %vm240, %v6327, 0
        %v6420 = vsel %vm240, %v6328, 0
        %v6423 = vsel %vm240, %v6329, 0
        %v6426 = vsel %vm240, %v6330, 0
        %v6429 = vsel %vm240, %v6331, 0
        %v6432 = vsel %vm240, %v6332, 0
        %v6435 = vsel %vm240, %v6333, 0
        %v6438 = vsel %vm240, %v6334, 0
        %6440 = vmatprep.subr.mxu0 0.0
        %6441 = vmatpush1.msra.mxu0 %v6336
        %6442 = vmatprep.subr.mxu0 0.0
        %6443 = vmatpush1.msra.mxu0 %v6337
        %6444 = vmatprep.subr.mxu0 0.0
        %6445 = vmatpush1.msra.mxu0 %v6338
        %6446 = vmatprep.subr.mxu0 0.0
        %6447 = vmatpush1.msra.mxu0 %v6339
        %6448 = vmatprep.subr.mxu0 0.0
        %6449 = vmatpush1.msra.mxu0 %v6340
        %6450 = vmatprep.subr.mxu0 0.0
        %6451 = vmatpush1.msra.mxu0 %v6341
        %6452 = vmatprep.subr.mxu0 0.0
        %6453 = vmatpush1.msra.mxu0 %v6342
        %6454 = vmatprep.subr.mxu0 0.0
        %6455 = vmatpush1.msra.mxu0 %v6343
        %6456 = vmatprep.subr.mxu0 0.0
        %6457 = vmatpush1.msra.mxu0 0.0
        %6458 = vmatprep.subr.mxu0 0.0
        %6459 = vmatpush1.msra.mxu0 0.0
        %6460 = vmatprep.subr.mxu0 0.0
        %6461 = vmatpush1.msra.mxu0 0.0
        %6462 = vmatprep.subr.mxu0 0.0
        %6463 = vmatpush1.msra.mxu0 0.0
        %6464 = vmatprep.subr.mxu0 0.0
        %6465 = vmatpush1.msra.mxu0 0.0
        %6466 = vmatprep.subr.mxu0 0.0
        %6467 = vmatpush1.msra.mxu0 0.0
        %6468 = vmatprep.subr.mxu0 0.0
        %6469 = vmatpush1.msra.mxu0 0.0
        %6470 = vmatprep.subr.mxu0 0.0
        %6471 = vmatpush1.msra.mxu0 0.0
        %6472 = vmatprep.subr.mxu0 0.0
        %6473 = vmatpush1.msra.mxu0 0.0
        %6474 = vmatprep.subr.mxu0 0.0
        %6475 = vmatpush1.msra.mxu0 0.0
        %6476 = vmatprep.subr.mxu0 0.0
        %6477 = vmatpush1.msra.mxu0 0.0
        %6478 = vmatprep.subr.mxu0 0.0
        %6479 = vmatpush1.msra.mxu0 0.0
        %6480 = vmatprep.subr.mxu0 0.0
        %6481 = vmatpush1.msra.mxu0 0.0
        %6482 = vmatprep.subr.mxu0 0.0
        %6483 = vmatpush1.msra.mxu0 0.0
        %6484 = vmatprep.subr.mxu0 0.0
        %6485 = vmatpush1.msra.mxu0 0.0
        %6486 = vmatprep.subr.mxu0 0.0
        %6487 = vmatpush1.msra.mxu0 0.0
        %6488 = vmatprep.subr.mxu0 0.0
        %6489 = vmatpush1.msra.mxu0 0.0
        %6490 = vmatprep.subr.mxu0 0.0
        %6491 = vmatpush1.msra.mxu0 0.0
        %6492 = vmatprep.subr.mxu0 0.0
        %6493 = vmatpush1.msra.mxu0 0.0
        %6494 = vmatprep.subr.mxu0 0.0
        %6495 = vmatpush1.msra.mxu0 0.0
        %6496 = vmatprep.subr.mxu0 0.0
        %6497 = vmatpush1.msra.mxu0 0.0
        %6498 = vmatprep.subr.mxu0 0.0
        %6499 = vmatpush1.msra.mxu0 0.0
        %6500 = vmatprep.subr.mxu0 0.0
        %6501 = vmatpush1.msra.mxu0 0.0
        %6502 = vmatprep.subr.mxu0 0.0
        %6503 = vmatpush1.msra.mxu0 0.0
        %6504 = vmatprep.mubr.f32.mxu0 0.0
        %6505 = vmatmul.mubr.f32.gmra.mrb[0].mxu0 %v6345
        %v6506 = vpop.f32.mrb[0].mxu0
        %v6507 = vadd.f32 0.0, %v6506
        %v6508 = vpop.f32.mrb[0].mxu0
        %6509 = vmatprep.mubr.f32.mxu0 0.0
        %6510 = vmatmul.mubr.f32.gmra.mrb[0].mxu0 %v6348
        %v6511 = vpop.f32.mrb[0].mxu0
        %v6512 = vadd.f32 0.0, %v6511
        %v6513 = vpop.f32.mrb[0].mxu0
        %6514 = vmatprep.mubr.f32.mxu0 0.0
        %6515 = vmatmul.mubr.f32.gmra.mrb[0].mxu0 %v6351
        %v6516 = vpop.f32.mrb[0].mxu0
        %v6517 = vadd.f32 0.0, %v6516
        %v6518 = vpop.f32.mrb[0].mxu0
        %6519 = vmatprep.mubr.f32.mxu0 0.0
        %6520 = vmatmul.mubr.f32.gmra.mrb[0].mxu0 %v6354
        %v6521 = vpop.f32.mrb[0].mxu0
        %v6522 = vadd.f32 0.0, %v6521
        %v6523 = vpop.f32.mrb[0].mxu0
        %6524 = vmatprep.mubr.f32.mxu0 0.0
        %6525 = vmatmul.mubr.f32.gmra.mrb[0].mxu0 %v6357
        %v6526 = vpop.f32.mrb[0].mxu0
        %v6527 = vadd.f32 0.0, %v6526
        %v6528 = vpop.f32.mrb[0].mxu0
        %6529 = vmatprep.mubr.f32.mxu0 0.0
        %6530 = vmatmul.mubr.f32.gmra.mrb[0].mxu0 %v6360
        %v6531 = vpop.f32.mrb[0].mxu0
        %v6532 = vadd.f32 0.0, %v6531
        %v6533 = vpop.f32.mrb[0].mxu0
        %6534 = vmatprep.mubr.f32.mxu0 0.0
        %6535 = vmatmul.mubr.f32.gmra.mrb[0].mxu0 %v6363
        %v6536 = vpop.f32.mrb[0].mxu0
        %v6537 = vadd.f32 0.0, %v6536
        %v6538 = vpop.f32.mrb[0].mxu0
        %6539 = vmatprep.mubr.f32.mxu0 0.0
        %6540 = vmatmul.mubr.f32.gmra.mrb[0].mxu0 %v6366
        %v6541 = vpop.f32.mrb[0].mxu0
        %v6542 = vadd.f32 0.0, %v6541
        %v6543 = vpop.f32.mrb[0].mxu0
        %6544 = vmatprep.mubr.f32.mxu0 0.0
        %6545 = vmatmul.mubr.f32.gmra.mrb[0].mxu0 %v6369
        %v6546 = vpop.f32.mrb[0].mxu0
        %v6547 = vadd.f32 0.0, %v6546
        %v6548 = vpop.f32.mrb[0].mxu0
        %6549 = vmatprep.mubr.f32.mxu0 0.0
        %6550 = vmatmul.mubr.f32.gmra.mrb[0].mxu0 %v6372
        %v6551 = vpop.f32.mrb[0].mxu0
        %v6552 = vadd.f32 0.0, %v6551
        %v6553 = vpop.f32.mrb[0].mxu0
        %6554 = vmatprep.mubr.f32.mxu0 0.0
        %6555 = vmatmul.mubr.f32.gmra.mrb[0].mxu0 %v6375
        %v6556 = vpop.f32.mrb[0].mxu0
        %v6557 = vadd.f32 0.0, %v6556
        %v6558 = vpop.f32.mrb[0].mxu0
        %6559 = vmatprep.mubr.f32.mxu0 0.0
        %6560 = vmatmul.mubr.f32.gmra.mrb[0].mxu0 %v6378
        %v6561 = vpop.f32.mrb[0].mxu0
        %v6562 = vadd.f32 0.0, %v6561
        %v6563 = vpop.f32.mrb[0].mxu0
        %6564 = vmatprep.mubr.f32.mxu0 0.0
        %6565 = vmatmul.mubr.f32.gmra.mrb[0].mxu0 %v6381
        %v6566 = vpop.f32.mrb[0].mxu0
        %v6567 = vadd.f32 0.0, %v6566
        %v6568 = vpop.f32.mrb[0].mxu0
        %6569 = vmatprep.mubr.f32.mxu0 0.0
        %6570 = vmatmul.mubr.f32.gmra.mrb[0].mxu0 %v6384
        %v6571 = vpop.f32.mrb[0].mxu0
        %v6572 = vadd.f32 0.0, %v6571
        %v6573 = vpop.f32.mrb[0].mxu0
        %6574 = vmatprep.mubr.f32.mxu0 0.0
        %6575 = vmatmul.mubr.f32.gmra.mrb[0].mxu0 %v6387
        %v6576 = vpop.f32.mrb[0].mxu0
        %v6577 = vadd.f32 0.0, %v6576
        %v6578 = vpop.f32.mrb[0].mxu0
        %6579 = vmatprep.mubr.f32.mxu0 0.0
        %6580 = vmatmul.mubr.f32.gmra.mrb[0].mxu0 %v6390
        %v6581 = vpop.f32.mrb[0].mxu0
        %v6582 = vadd.f32 0.0, %v6581
        %v6583 = vpop.f32.mrb[0].mxu0
        %6584 = vmatprep.mubr.f32.mxu0 0.0
        %6585 = vmatmul.mubr.f32.gmra.mrb[0].mxu0 %v6393
        %v6586 = vpop.f32.mrb[0].mxu0
        %v6587 = vadd.f32 0.0, %v6586
        %v6588 = vpop.f32.mrb[0].mxu0
        %6589 = vmatprep.mubr.f32.mxu0 0.0
        %6590 = vmatmul.mubr.f32.gmra.mrb[0].mxu0 %v6396
        %v6591 = vpop.f32.mrb[0].mxu0
        %v6592 = vadd.f32 0.0, %v6591
        %v6593 = vpop.f32.mrb[0].mxu0
        %6594 = vmatprep.mubr.f32.mxu0 0.0
        %6595 = vmatmul.mubr.f32.gmra.mrb[0].mxu0 %v6399
        %v6596 = vpop.f32.mrb[0].mxu0
        %v6597 = vadd.f32 0.0, %v6596
        %v6598 = vpop.f32.mrb[0].mxu0
        %6599 = vmatprep.mubr.f32.mxu0 0.0
        %6600 = vmatmul.mubr.f32.gmra.mrb[0].mxu0 %v6402
        %v6601 = vpop.f32.mrb[0].mxu0
        %v6602 = vadd.f32 0.0, %v6601
        %v6603 = vpop.f32.mrb[0].mxu0
        %6604 = vmatprep.mubr.f32.mxu0 0.0
        %6605 = vmatmul.mubr.f32.gmra.mrb[0].mxu0 %v6405
        %v6606 = vpop.f32.mrb[0].mxu0
        %v6607 = vadd.f32 0.0, %v6606
        %v6608 = vpop.f32.mrb[0].mxu0
        %6609 = vmatprep.mubr.f32.mxu0 0.0
        %6610 = vmatmul.mubr.f32.gmra.mrb[0].mxu0 %v6408
        %v6611 = vpop.f32.mrb[0].mxu0
        %v6612 = vadd.f32 0.0, %v6611
        %v6613 = vpop.f32.mrb[0].mxu0
        %6614 = vmatprep.mubr.f32.mxu0 0.0
        %6615 = vmatmul.mubr.f32.gmra.mrb[0].mxu0 %v6411
        %v6616 = vpop.f32.mrb[0].mxu0
        %v6617 = vadd.f32 0.0, %v6616
        %v6618 = vpop.f32.mrb[0].mxu0
        %6619 = vmatprep.mubr.f32.mxu0 0.0
        %6620 = vmatmul.mubr.f32.gmra.mrb[0].mxu0 %v6414
        %v6621 = vpop.f32.mrb[0].mxu0
        %v6622 = vadd.f32 0.0, %v6621
        %v6623 = vpop.f32.mrb[0].mxu0
        %6624 = vmatprep.mubr.f32.mxu0 0.0
        %6625 = vmatmul.mubr.f32.gmra.mrb[0].mxu0 %v6417
        %v6626 = vpop.f32.mrb[0].mxu0
        %v6627 = vadd.f32 0.0, %v6626
        %v6628 = vpop.f32.mrb[0].mxu0
        %6629 = vmatprep.mubr.f32.mxu0 0.0
        %6630 = vmatmul.mubr.f32.gmra.mrb[0].mxu0 %v6420
        %v6631 = vpop.f32.mrb[0].mxu0
        %v6632 = vadd.f32 0.0, %v6631
        %v6633 = vpop.f32.mrb[0].mxu0
        %6634 = vmatprep.mubr.f32.mxu0 0.0
        %6635 = vmatmul.mubr.f32.gmra.mrb[0].mxu0 %v6423
        %v6636 = vpop.f32.mrb[0].mxu0
        %v6637 = vadd.f32 0.0, %v6636
        %v6638 = vpop.f32.mrb[0].mxu0
        %6639 = vmatprep.mubr.f32.mxu0 0.0
        %6640 = vmatmul.mubr.f32.gmra.mrb[0].mxu0 %v6426
        %v6641 = vpop.f32.mrb[0].mxu0
        %v6642 = vadd.f32 0.0, %v6641
        %v6643 = vpop.f32.mrb[0].mxu0
        %6644 = vmatprep.mubr.f32.mxu0 0.0
        %6645 = vmatmul.mubr.f32.gmra.mrb[0].mxu0 %v6429
        %v6646 = vpop.f32.mrb[0].mxu0
        %v6647 = vadd.f32 0.0, %v6646
        %v6648 = vpop.f32.mrb[0].mxu0
        %6649 = vmatprep.mubr.f32.mxu0 0.0
        %6650 = vmatmul.mubr.f32.gmra.mrb[0].mxu0 %v6432
        %v6651 = vpop.f32.mrb[0].mxu0
        %v6652 = vadd.f32 0.0, %v6651
        %v6653 = vpop.f32.mrb[0].mxu0
        %6654 = vmatprep.mubr.f32.mxu0 0.0
        %6655 = vmatmul.mubr.f32.gmra.mrb[0].mxu0 %v6435
        %v6656 = vpop.f32.mrb[0].mxu0
        %v6657 = vadd.f32 0.0, %v6656
        %v6658 = vpop.f32.mrb[0].mxu0
        %6659 = vmatprep.mubr.f32.mxu0 0.0
        %6660 = vmatmul.mubr.f32.gmra.mrb[0].mxu0 %v6438
        %v6661 = vpop.f32.mrb[0].mxu0
        %v6662 = vadd.f32 0.0, %v6661
        %v6663 = vpop.f32.mrb[0].mxu0
        %6664 = vdwg.mxu0
        %v6665 = vadd.f32 %v6271, %v6507
        %v6666 = vadd.f32 %v6272, %v6512
        %v6667 = vadd.f32 %v6273, %v6517
        %v6668 = vadd.f32 %v6274, %v6522
        %v6669 = vadd.f32 %v6275, %v6527
        %v6670 = vadd.f32 %v6276, %v6532
        %v6671 = vadd.f32 %v6277, %v6537
        %v6672 = vadd.f32 %v6278, %v6542
        %v6673 = vadd.f32 %v6279, %v6547
        %v6674 = vadd.f32 %v6280, %v6552
        %v6675 = vadd.f32 %v6281, %v6557
        %v6676 = vadd.f32 %v6282, %v6562
        %v6677 = vadd.f32 %v6283, %v6567
        %v6678 = vadd.f32 %v6284, %v6572
        %v6679 = vadd.f32 %v6285, %v6577
        %v6680 = vadd.f32 %v6286, %v6582
        %v6681 = vadd.f32 %v6287, %v6587
        %v6682 = vadd.f32 %v6288, %v6592
        %v6683 = vadd.f32 %v6289, %v6597
        %v6684 = vadd.f32 %v6290, %v6602
        %v6685 = vadd.f32 %v6291, %v6607
        %v6686 = vadd.f32 %v6292, %v6612
        %v6687 = vadd.f32 %v6293, %v6617
        %v6688 = vadd.f32 %v6294, %v6622
        %v6689 = vadd.f32 %v6295, %v6627
        %v6690 = vadd.f32 %v6296, %v6632
        %v6691 = vadd.f32 %v6297, %v6637
        %v6692 = vadd.f32 %v6298, %v6642
        %v6693 = vadd.f32 %v6299, %v6647
        %v6694 = vadd.f32 %v6300, %v6652
        %v6695 = vadd.f32 %v6301, %v6657
        %v6696 = vadd.f32 %v6302, %v6662
        %v6697 = vld [vmem:[#allocation2 + $0x19] sm:$0xff]
        %v6698 = vld [vmem:[#allocation2 + $0x21] sm:$0xff]
        %v6699 = vld [vmem:[#allocation2 + $0x29] sm:$0xff]
        %v6700 = vld [vmem:[#allocation2 + $0x31] sm:$0xff]
        %v6701 = vld [vmem:[#allocation2 + $0x39] sm:$0xff]
        %v6702 = vld [vmem:[#allocation2 + $0x41] sm:$0xff]
        %v6703 = vld [vmem:[#allocation2 + $0x49] sm:$0xff]
        %v6704 = vld [vmem:[#allocation2 + $0x51] sm:$0xff]
        %v6705 = vld [vmem:[#allocation2 + $0x59] sm:$0xff]
        %v6706 = vld [vmem:[#allocation2 + $0x61] sm:$0xff]
        %v6707 = vld [vmem:[#allocation2 + $0x69] sm:$0xff]
        %v6708 = vld [vmem:[#allocation2 + $0x71] sm:$0xff]
        %v6709 = vld [vmem:[#allocation2 + $0x79] sm:$0xff]
        %v6710 = vld [vmem:[#allocation2 + $0x81] sm:$0xff]
        %v6711 = vld [vmem:[#allocation2 + $0x89] sm:$0xff]
        %v6712 = vld [vmem:[#allocation2 + $0x91] sm:$0xff]
        %v6713 = vld [vmem:[#allocation2 + $0x99] sm:$0xff]
        %v6714 = vld [vmem:[#allocation2 + $0xa1] sm:$0xff]
        %v6715 = vld [vmem:[#allocation2 + $0xa9] sm:$0xff]
        %v6716 = vld [vmem:[#allocation2 + $0xb1] sm:$0xff]
        %v6717 = vld [vmem:[#allocation2 + $0xb9] sm:$0xff]
        %v6718 = vld [vmem:[#allocation2 + $0xc1] sm:$0xff]
        %v6719 = vld [vmem:[#allocation2 + $0xc9] sm:$0xff]
        %v6720 = vld [vmem:[#allocation2 + $0xd1] sm:$0xff]
        %v6721 = vld [vmem:[#allocation2 + $0xd9] sm:$0xff]
        %v6722 = vld [vmem:[#allocation2 + $0xe1] sm:$0xff]
        %v6723 = vld [vmem:[#allocation2 + $0xe9] sm:$0xff]
        %v6724 = vld [vmem:[#allocation2 + $0xf1] sm:$0xff]
        %v6725 = vld [vmem:[#allocation2 + $0xf9] sm:$0xff]
        %v6726 = vld [vmem:[#allocation2 + $0x101] sm:$0xff]
        %v6727 = vld [vmem:[#allocation2 + $0x109] sm:$0xff]
        %v6728 = vld [vmem:[#allocation2 + $0x111] sm:$0xff]
        %v6729 = vsel %vm1675, %v6697, 0.0
        %v6730 = vsel %vm1676, %v6698, 0.0
        %v6731 = vsel %vm1677, %v6699, 0.0
        %v6732 = vsel %vm1678, %v6700, 0.0
        %v6733 = vsel %vm1679, %v6701, 0.0
        %v6734 = vsel %vm1680, %v6702, 0.0
        %v6735 = vsel %vm1681, %v6703, 0.0
        %v6736 = vsel %vm1682, %v6704, 0.0
        %v6737 = vsel %vm1683, %v6705, 0.0
        %v6738 = vsel %vm1684, %v6706, 0.0
        %v6739 = vsel %vm1685, %v6707, 0.0
        %v6740 = vsel %vm1686, %v6708, 0.0
        %v6741 = vsel %vm1687, %v6709, 0.0
        %v6742 = vsel %vm1688, %v6710, 0.0
        %v6743 = vsel %vm1689, %v6711, 0.0
        %v6744 = vsel %vm1690, %v6712, 0.0
        %v6745 = vsel %vm1691, %v6713, 0.0
        %v6746 = vsel %vm1692, %v6714, 0.0
        %v6747 = vsel %vm1693, %v6715, 0.0
        %v6748 = vsel %vm1694, %v6716, 0.0
        %v6749 = vsel %vm1695, %v6717, 0.0
        %v6750 = vsel %vm1696, %v6718, 0.0
        %v6751 = vsel %vm1697, %v6719, 0.0
        %v6752 = vsel %vm1698, %v6720, 0.0
        %v6753 = vsel %vm1699, %v6721, 0.0
        %v6754 = vsel %vm1700, %v6722, 0.0
        %v6755 = vsel %vm1701, %v6723, 0.0
        %v6756 = vsel %vm1702, %v6724, 0.0
        %v6757 = vsel %vm1703, %v6725, 0.0
        %v6758 = vsel %vm1704, %v6726, 0.0
        %v6759 = vsel %vm1705, %v6727, 0.0
        %v6760 = vsel %vm1706, %v6728, 0.0
        %s6761 = scalar_lea.vmem [#allocation3], 320
        %v6762 = vld [vmem:[%s6761] sm:$0xff]
        %v6763 = vld [vmem:[%s6761 + $0x8] sm:$0xff]
        %v6764 = vld [vmem:[%s6761 + $0x10] sm:$0xff]
        %v6765 = vld [vmem:[%s6761 + $0x18] sm:$0xff]
        %v6766 = vld [vmem:[%s6761 + $0x20] sm:$0xff]
        %v6767 = vld [vmem:[%s6761 + $0x28] sm:$0xff]
        %v6768 = vld [vmem:[%s6761 + $0x30] sm:$0xff]
        %v6769 = vld [vmem:[%s6761 + $0x38] sm:$0xff]
        %v6771 = vsel %vm240, %v6729, 0
        %v6774 = vsel %vm240, %v6730, 0
        %v6777 = vsel %vm240, %v6731, 0
        %v6780 = vsel %vm240, %v6732, 0
        %v6783 = vsel %vm240, %v6733, 0
        %v6786 = vsel %vm240, %v6734, 0
        %v6789 = vsel %vm240, %v6735, 0
        %v6792 = vsel %vm240, %v6736, 0
        %v6795 = vsel %vm240, %v6737, 0
        %v6798 = vsel %vm240, %v6738, 0
        %v6801 = vsel %vm240, %v6739, 0
        %v6804 = vsel %vm240, %v6740, 0
        %v6807 = vsel %vm240, %v6741, 0
        %v6810 = vsel %vm240, %v6742, 0
        %v6813 = vsel %vm240, %v6743, 0
        %v6816 = vsel %vm240, %v6744, 0
        %v6819 = vsel %vm240, %v6745, 0
        %v6822 = vsel %vm240, %v6746, 0
        %v6825 = vsel %vm240, %v6747, 0
        %v6828 = vsel %vm240, %v6748, 0
        %v6831 = vsel %vm240, %v6749, 0
        %v6834 = vsel %vm240, %v6750, 0
        %v6837 = vsel %vm240, %v6751, 0
        %v6840 = vsel %vm240, %v6752, 0
        %v6843 = vsel %vm240, %v6753, 0
        %v6846 = vsel %vm240, %v6754, 0
        %v6849 = vsel %vm240, %v6755, 0
        %v6852 = vsel %vm240, %v6756, 0
        %v6855 = vsel %vm240, %v6757, 0
        %v6858 = vsel %vm240, %v6758, 0
        %v6861 = vsel %vm240, %v6759, 0
        %v6864 = vsel %vm240, %v6760, 0
        %6866 = vmatprep.subr.mxu0 0.0
        %6867 = vmatpush1.msra.mxu0 %v6762
        %6868 = vmatprep.subr.mxu0 0.0
        %6869 = vmatpush1.msra.mxu0 %v6763
        %6870 = vmatprep.subr.mxu0 0.0
        %6871 = vmatpush1.msra.mxu0 %v6764
        %6872 = vmatprep.subr.mxu0 0.0
        %6873 = vmatpush1.msra.mxu0 %v6765
        %6874 = vmatprep.subr.mxu0 0.0
        %6875 = vmatpush1.msra.mxu0 %v6766
        %6876 = vmatprep.subr.mxu0 0.0
        %6877 = vmatpush1.msra.mxu0 %v6767
        %6878 = vmatprep.subr.mxu0 0.0
        %6879 = vmatpush1.msra.mxu0 %v6768
        %6880 = vmatprep.subr.mxu0 0.0
        %6881 = vmatpush1.msra.mxu0 %v6769
        %6882 = vmatprep.subr.mxu0 0.0
        %6883 = vmatpush1.msra.mxu0 0.0
        %6884 = vmatprep.subr.mxu0 0.0
        %6885 = vmatpush1.msra.mxu0 0.0
        %6886 = vmatprep.subr.mxu0 0.0
        %6887 = vmatpush1.msra.mxu0 0.0
        %6888 = vmatprep.subr.mxu0 0.0
        %6889 = vmatpush1.msra.mxu0 0.0
        %6890 = vmatprep.subr.mxu0 0.0
        %6891 = vmatpush1.msra.mxu0 0.0
        %6892 = vmatprep.subr.mxu0 0.0
        %6893 = vmatpush1.msra.mxu0 0.0
        %6894 = vmatprep.subr.mxu0 0.0
        %6895 = vmatpush1.msra.mxu0 0.0
        %6896 = vmatprep.subr.mxu0 0.0
        %6897 = vmatpush1.msra.mxu0 0.0
        %6898 = vmatprep.subr.mxu0 0.0
        %6899 = vmatpush1.msra.mxu0 0.0
        %6900 = vmatprep.subr.mxu0 0.0
        %6901 = vmatpush1.msra.mxu0 0.0
        %6902 = vmatprep.subr.mxu0 0.0
        %6903 = vmatpush1.msra.mxu0 0.0
        %6904 = vmatprep.subr.mxu0 0.0
        %6905 = vmatpush1.msra.mxu0 0.0
        %6906 = vmatprep.subr.mxu0 0.0
        %6907 = vmatpush1.msra.mxu0 0.0
        %6908 = vmatprep.subr.mxu0 0.0
        %6909 = vmatpush1.msra.mxu0 0.0
        %6910 = vmatprep.subr.mxu0 0.0
        %6911 = vmatpush1.msra.mxu0 0.0
        %6912 = vmatprep.subr.mxu0 0.0
        %6913 = vmatpush1.msra.mxu0 0.0
        %6914 = vmatprep.subr.mxu0 0.0
        %6915 = vmatpush1.msra.mxu0 0.0
        %6916 = vmatprep.subr.mxu0 0.0
        %6917 = vmatpush1.msra.mxu0 0.0
        %6918 = vmatprep.subr.mxu0 0.0
        %6919 = vmatpush1.msra.mxu0 0.0
        %6920 = vmatprep.subr.mxu0 0.0
        %6921 = vmatpush1.msra.mxu0 0.0
        %6922 = vmatprep.subr.mxu0 0.0
        %6923 = vmatpush1.msra.mxu0 0.0
        %6924 = vmatprep.subr.mxu0 0.0
        %6925 = vmatpush1.msra.mxu0 0.0
        %6926 = vmatprep.subr.mxu0 0.0
        %6927 = vmatpush1.msra.mxu0 0.0
        %6928 = vmatprep.subr.mxu0 0.0
        %6929 = vmatpush1.msra.mxu0 0.0
        %6930 = vmatprep.mubr.f32.mxu0 0.0
        %6931 = vmatmul.mubr.f32.gmra.mrb[0].mxu0 %v6771
        %v6932 = vpop.f32.mrb[0].mxu0
        %v6933 = vadd.f32 0.0, %v6932
        %v6934 = vpop.f32.mrb[0].mxu0
        %6935 = vmatprep.mubr.f32.mxu0 0.0
        %6936 = vmatmul.mubr.f32.gmra.mrb[0].mxu0 %v6774
        %v6937 = vpop.f32.mrb[0].mxu0
        %v6938 = vadd.f32 0.0, %v6937
        %v6939 = vpop.f32.mrb[0].mxu0
        %6940 = vmatprep.mubr.f32.mxu0 0.0
        %6941 = vmatmul.mubr.f32.gmra.mrb[0].mxu0 %v6777
        %v6942 = vpop.f32.mrb[0].mxu0
        %v6943 = vadd.f32 0.0, %v6942
        %v6944 = vpop.f32.mrb[0].mxu0
        %6945 = vmatprep.mubr.f32.mxu0 0.0
        %6946 = vmatmul.mubr.f32.gmra.mrb[0].mxu0 %v6780
        %v6947 = vpop.f32.mrb[0].mxu0
        %v6948 = vadd.f32 0.0, %v6947
        %v6949 = vpop.f32.mrb[0].mxu0
        %6950 = vmatprep.mubr.f32.mxu0 0.0
        %6951 = vmatmul.mubr.f32.gmra.mrb[0].mxu0 %v6783
        %v6952 = vpop.f32.mrb[0].mxu0
        %v6953 = vadd.f32 0.0, %v6952
        %v6954 = vpop.f32.mrb[0].mxu0
        %6955 = vmatprep.mubr.f32.mxu0 0.0
        %6956 = vmatmul.mubr.f32.gmra.mrb[0].mxu0 %v6786
        %v6957 = vpop.f32.mrb[0].mxu0
        %v6958 = vadd.f32 0.0, %v6957
        %v6959 = vpop.f32.mrb[0].mxu0
        %6960 = vmatprep.mubr.f32.mxu0 0.0
        %6961 = vmatmul.mubr.f32.gmra.mrb[0].mxu0 %v6789
        %v6962 = vpop.f32.mrb[0].mxu0
        %v6963 = vadd.f32 0.0, %v6962
        %v6964 = vpop.f32.mrb[0].mxu0
        %6965 = vmatprep.mubr.f32.mxu0 0.0
        %6966 = vmatmul.mubr.f32.gmra.mrb[0].mxu0 %v6792
        %v6967 = vpop.f32.mrb[0].mxu0
        %v6968 = vadd.f32 0.0, %v6967
        %v6969 = vpop.f32.mrb[0].mxu0
        %6970 = vmatprep.mubr.f32.mxu0 0.0
        %6971 = vmatmul.mubr.f32.gmra.mrb[0].mxu0 %v6795
        %v6972 = vpop.f32.mrb[0].mxu0
        %v6973 = vadd.f32 0.0, %v6972
        %v6974 = vpop.f32.mrb[0].mxu0
        %6975 = vmatprep.mubr.f32.mxu0 0.0
        %6976 = vmatmul.mubr.f32.gmra.mrb[0].mxu0 %v6798
        %v6977 = vpop.f32.mrb[0].mxu0
        %v6978 = vadd.f32 0.0, %v6977
        %v6979 = vpop.f32.mrb[0].mxu0
        %6980 = vmatprep.mubr.f32.mxu0 0.0
        %6981 = vmatmul.mubr.f32.gmra.mrb[0].mxu0 %v6801
        %v6982 = vpop.f32.mrb[0].mxu0
        %v6983 = vadd.f32 0.0, %v6982
        %v6984 = vpop.f32.mrb[0].mxu0
        %6985 = vmatprep.mubr.f32.mxu0 0.0
        %6986 = vmatmul.mubr.f32.gmra.mrb[0].mxu0 %v6804
        %v6987 = vpop.f32.mrb[0].mxu0
        %v6988 = vadd.f32 0.0, %v6987
        %v6989 = vpop.f32.mrb[0].mxu0
        %6990 = vmatprep.mubr.f32.mxu0 0.0
        %6991 = vmatmul.mubr.f32.gmra.mrb[0].mxu0 %v6807
        %v6992 = vpop.f32.mrb[0].mxu0
        %v6993 = vadd.f32 0.0, %v6992
        %v6994 = vpop.f32.mrb[0].mxu0
        %6995 = vmatprep.mubr.f32.mxu0 0.0
        %6996 = vmatmul.mubr.f32.gmra.mrb[0].mxu0 %v6810
        %v6997 = vpop.f32.mrb[0].mxu0
        %v6998 = vadd.f32 0.0, %v6997
        %v6999 = vpop.f32.mrb[0].mxu0
        %7000 = vmatprep.mubr.f32.mxu0 0.0
        %7001 = vmatmul.mubr.f32.gmra.mrb[0].mxu0 %v6813
        %v7002 = vpop.f32.mrb[0].mxu0
        %v7003 = vadd.f32 0.0, %v7002
        %v7004 = vpop.f32.mrb[0].mxu0
        %7005 = vmatprep.mubr.f32.mxu0 0.0
        %7006 = vmatmul.mubr.f32.gmra.mrb[0].mxu0 %v6816
        %v7007 = vpop.f32.mrb[0].mxu0
        %v7008 = vadd.f32 0.0, %v7007
        %v7009 = vpop.f32.mrb[0].mxu0
        %7010 = vmatprep.mubr.f32.mxu0 0.0
        %7011 = vmatmul.mubr.f32.gmra.mrb[0].mxu0 %v6819
        %v7012 = vpop.f32.mrb[0].mxu0
        %v7013 = vadd.f32 0.0, %v7012
        %v7014 = vpop.f32.mrb[0].mxu0
        %7015 = vmatprep.mubr.f32.mxu0 0.0
        %7016 = vmatmul.mubr.f32.gmra.mrb[0].mxu0 %v6822
        %v7017 = vpop.f32.mrb[0].mxu0
        %v7018 = vadd.f32 0.0, %v7017
        %v7019 = vpop.f32.mrb[0].mxu0
        %7020 = vmatprep.mubr.f32.mxu0 0.0
        %7021 = vmatmul.mubr.f32.gmra.mrb[0].mxu0 %v6825
        %v7022 = vpop.f32.mrb[0].mxu0
        %v7023 = vadd.f32 0.0, %v7022
        %v7024 = vpop.f32.mrb[0].mxu0
        %7025 = vmatprep.mubr.f32.mxu0 0.0
        %7026 = vmatmul.mubr.f32.gmra.mrb[0].mxu0 %v6828
        %v7027 = vpop.f32.mrb[0].mxu0
        %v7028 = vadd.f32 0.0, %v7027
        %v7029 = vpop.f32.mrb[0].mxu0
        %7030 = vmatprep.mubr.f32.mxu0 0.0
        %7031 = vmatmul.mubr.f32.gmra.mrb[0].mxu0 %v6831
        %v7032 = vpop.f32.mrb[0].mxu0
        %v7033 = vadd.f32 0.0, %v7032
        %v7034 = vpop.f32.mrb[0].mxu0
        %7035 = vmatprep.mubr.f32.mxu0 0.0
        %7036 = vmatmul.mubr.f32.gmra.mrb[0].mxu0 %v6834
        %v7037 = vpop.f32.mrb[0].mxu0
        %v7038 = vadd.f32 0.0, %v7037
        %v7039 = vpop.f32.mrb[0].mxu0
        %7040 = vmatprep.mubr.f32.mxu0 0.0
        %7041 = vmatmul.mubr.f32.gmra.mrb[0].mxu0 %v6837
        %v7042 = vpop.f32.mrb[0].mxu0
        %v7043 = vadd.f32 0.0, %v7042
        %v7044 = vpop.f32.mrb[0].mxu0
        %7045 = vmatprep.mubr.f32.mxu0 0.0
        %7046 = vmatmul.mubr.f32.gmra.mrb[0].mxu0 %v6840
        %v7047 = vpop.f32.mrb[0].mxu0
        %v7048 = vadd.f32 0.0, %v7047
        %v7049 = vpop.f32.mrb[0].mxu0
        %7050 = vmatprep.mubr.f32.mxu0 0.0
        %7051 = vmatmul.mubr.f32.gmra.mrb[0].mxu0 %v6843
        %v7052 = vpop.f32.mrb[0].mxu0
        %v7053 = vadd.f32 0.0, %v7052
        %v7054 = vpop.f32.mrb[0].mxu0
        %7055 = vmatprep.mubr.f32.mxu0 0.0
        %7056 = vmatmul.mubr.f32.gmra.mrb[0].mxu0 %v6846
        %v7057 = vpop.f32.mrb[0].mxu0
        %v7058 = vadd.f32 0.0, %v7057
        %v7059 = vpop.f32.mrb[0].mxu0
        %7060 = vmatprep.mubr.f32.mxu0 0.0
        %7061 = vmatmul.mubr.f32.gmra.mrb[0].mxu0 %v6849
        %v7062 = vpop.f32.mrb[0].mxu0
        %v7063 = vadd.f32 0.0, %v7062
        %v7064 = vpop.f32.mrb[0].mxu0
        %7065 = vmatprep.mubr.f32.mxu0 0.0
        %7066 = vmatmul.mubr.f32.gmra.mrb[0].mxu0 %v6852
        %v7067 = vpop.f32.mrb[0].mxu0
        %v7068 = vadd.f32 0.0, %v7067
        %v7069 = vpop.f32.mrb[0].mxu0
        %7070 = vmatprep.mubr.f32.mxu0 0.0
        %7071 = vmatmul.mubr.f32.gmra.mrb[0].mxu0 %v6855
        %v7072 = vpop.f32.mrb[0].mxu0
        %v7073 = vadd.f32 0.0, %v7072
        %v7074 = vpop.f32.mrb[0].mxu0
        %7075 = vmatprep.mubr.f32.mxu0 0.0
        %7076 = vmatmul.mubr.f32.gmra.mrb[0].mxu0 %v6858
        %v7077 = vpop.f32.mrb[0].mxu0
        %v7078 = vadd.f32 0.0, %v7077
        %v7079 = vpop.f32.mrb[0].mxu0
        %7080 = vmatprep.mubr.f32.mxu0 0.0
        %7081 = vmatmul.mubr.f32.gmra.mrb[0].mxu0 %v6861
        %v7082 = vpop.f32.mrb[0].mxu0
        %v7083 = vadd.f32 0.0, %v7082
        %v7084 = vpop.f32.mrb[0].mxu0
        %7085 = vmatprep.mubr.f32.mxu0 0.0
        %7086 = vmatmul.mubr.f32.gmra.mrb[0].mxu0 %v6864
        %v7087 = vpop.f32.mrb[0].mxu0
        %v7088 = vadd.f32 0.0, %v7087
        %v7089 = vpop.f32.mrb[0].mxu0
        %7090 = vdwg.mxu0
        %v7091 = vadd.f32 %v6665, %v6933
        %v7092 = vadd.f32 %v6666, %v6938
        %v7093 = vadd.f32 %v6667, %v6943
        %v7094 = vadd.f32 %v6668, %v6948
        %v7095 = vadd.f32 %v6669, %v6953
        %v7096 = vadd.f32 %v6670, %v6958
        %v7097 = vadd.f32 %v6671, %v6963
        %v7098 = vadd.f32 %v6672, %v6968
        %v7099 = vadd.f32 %v6673, %v6973
        %v7100 = vadd.f32 %v6674, %v6978
        %v7101 = vadd.f32 %v6675, %v6983
        %v7102 = vadd.f32 %v6676, %v6988
        %v7103 = vadd.f32 %v6677, %v6993
        %v7104 = vadd.f32 %v6678, %v6998
        %v7105 = vadd.f32 %v6679, %v7003
        %v7106 = vadd.f32 %v6680, %v7008
        %v7107 = vadd.f32 %v6681, %v7013
        %v7108 = vadd.f32 %v6682, %v7018
        %v7109 = vadd.f32 %v6683, %v7023
        %v7110 = vadd.f32 %v6684, %v7028
        %v7111 = vadd.f32 %v6685, %v7033
        %v7112 = vadd.f32 %v6686, %v7038
        %v7113 = vadd.f32 %v6687, %v7043
        %v7114 = vadd.f32 %v6688, %v7048
        %v7115 = vadd.f32 %v6689, %v7053
        %v7116 = vadd.f32 %v6690, %v7058
        %v7117 = vadd.f32 %v6691, %v7063
        %v7118 = vadd.f32 %v6692, %v7068
        %v7119 = vadd.f32 %v6693, %v7073
        %v7120 = vadd.f32 %v6694, %v7078
        %v7121 = vadd.f32 %v6695, %v7083
        %v7122 = vadd.f32 %v6696, %v7088
        %v7123 = vld [vmem:[#allocation2 + $0x27] sm:$0xff]
        %v7124 = vld [vmem:[#allocation2 + $0x2f] sm:$0xff]
        %v7125 = vld [vmem:[#allocation2 + $0x37] sm:$0xff]
        %v7126 = vld [vmem:[#allocation2 + $0x3f] sm:$0xff]
        %v7127 = vld [vmem:[#allocation2 + $0x47] sm:$0xff]
        %v7128 = vld [vmem:[#allocation2 + $0x4f] sm:$0xff]
        %v7129 = vld [vmem:[#allocation2 + $0x57] sm:$0xff]
        %v7130 = vld [vmem:[#allocation2 + $0x5f] sm:$0xff]
        %v7131 = vld [vmem:[#allocation2 + $0x67] sm:$0xff]
        %v7132 = vld [vmem:[#allocation2 + $0x6f] sm:$0xff]
        %v7133 = vld [vmem:[#allocation2 + $0x77] sm:$0xff]
        %v7134 = vld [vmem:[#allocation2 + $0x7f] sm:$0xff]
        %v7135 = vld [vmem:[#allocation2 + $0x87] sm:$0xff]
        %v7136 = vld [vmem:[#allocation2 + $0x8f] sm:$0xff]
        %v7137 = vld [vmem:[#allocation2 + $0x97] sm:$0xff]
        %v7138 = vld [vmem:[#allocation2 + $0x9f] sm:$0xff]
        %v7139 = vld [vmem:[#allocation2 + $0xa7] sm:$0xff]
        %v7140 = vld [vmem:[#allocation2 + $0xaf] sm:$0xff]
        %v7141 = vld [vmem:[#allocation2 + $0xb7] sm:$0xff]
        %v7142 = vld [vmem:[#allocation2 + $0xbf] sm:$0xff]
        %v7143 = vld [vmem:[#allocation2 + $0xc7] sm:$0xff]
        %v7144 = vld [vmem:[#allocation2 + $0xcf] sm:$0xff]
        %v7145 = vld [vmem:[#allocation2 + $0xd7] sm:$0xff]
        %v7146 = vld [vmem:[#allocation2 + $0xdf] sm:$0xff]
        %v7147 = vld [vmem:[#allocation2 + $0xe7] sm:$0xff]
        %v7148 = vld [vmem:[#allocation2 + $0xef] sm:$0xff]
        %v7149 = vld [vmem:[#allocation2 + $0xf7] sm:$0xff]
        %v7150 = vld [vmem:[#allocation2 + $0xff] sm:$0xff]
        %v7151 = vld [vmem:[#allocation2 + $0x107] sm:$0xff]
        %v7152 = vld [vmem:[#allocation2 + $0x10f] sm:$0xff]
        %v7153 = vld [vmem:[#allocation2 + $0x117] sm:$0xff]
        %v7154 = vld [vmem:[#allocation2 + $0x11f] sm:$0xff]
        %v7155 = vsel %vm856, %v7123, 0.0
        %v7156 = vsel %vm857, %v7124, 0.0
        %v7157 = vsel %vm858, %v7125, 0.0
        %v7158 = vsel %vm859, %v7126, 0.0
        %v7159 = vsel %vm860, %v7127, 0.0
        %v7160 = vsel %vm861, %v7128, 0.0
        %v7161 = vsel %vm862, %v7129, 0.0
        %v7162 = vsel %vm863, %v7130, 0.0
        %v7163 = vsel %vm864, %v7131, 0.0
        %v7164 = vsel %vm865, %v7132, 0.0
        %v7165 = vsel %vm866, %v7133, 0.0
        %v7166 = vsel %vm867, %v7134, 0.0
        %v7167 = vsel %vm868, %v7135, 0.0
        %v7168 = vsel %vm869, %v7136, 0.0
        %v7169 = vsel %vm870, %v7137, 0.0
        %v7170 = vsel %vm871, %v7138, 0.0
        %v7171 = vsel %vm872, %v7139, 0.0
        %v7172 = vsel %vm873, %v7140, 0.0
        %v7173 = vsel %vm874, %v7141, 0.0
        %v7174 = vsel %vm875, %v7142, 0.0
        %v7175 = vsel %vm876, %v7143, 0.0
        %v7176 = vsel %vm877, %v7144, 0.0
        %v7177 = vsel %vm878, %v7145, 0.0
        %v7178 = vsel %vm879, %v7146, 0.0
        %v7179 = vsel %vm880, %v7147, 0.0
        %v7180 = vsel %vm881, %v7148, 0.0
        %v7181 = vsel %vm882, %v7149, 0.0
        %v7182 = vsel %vm883, %v7150, 0.0
        %v7183 = vsel %vm884, %v7151, 0.0
        %v7184 = vsel %vm885, %v7152, 0.0
        %v7185 = vsel %vm886, %v7153, 0.0
        %v7186 = vsel %vm887, %v7154, 0.0
        %s7187 = scalar_lea.vmem [#allocation3], 384
        %v7188 = vld [vmem:[%s7187] sm:$0xff]
        %v7189 = vld [vmem:[%s7187 + $0x8] sm:$0xff]
        %v7190 = vld [vmem:[%s7187 + $0x10] sm:$0xff]
        %v7191 = vld [vmem:[%s7187 + $0x18] sm:$0xff]
        %v7192 = vld [vmem:[%s7187 + $0x20] sm:$0xff]
        %v7193 = vld [vmem:[%s7187 + $0x28] sm:$0xff]
        %v7194 = vld [vmem:[%s7187 + $0x30] sm:$0xff]
        %v7195 = vld [vmem:[%s7187 + $0x38] sm:$0xff]
        %v7197 = vsel %vm240, %v7155, 0
        %v7200 = vsel %vm240, %v7156, 0
        %v7203 = vsel %vm240, %v7157, 0
        %v7206 = vsel %vm240, %v7158, 0
        %v7209 = vsel %vm240, %v7159, 0
        %v7212 = vsel %vm240, %v7160, 0
        %v7215 = vsel %vm240, %v7161, 0
        %v7218 = vsel %vm240, %v7162, 0
        %v7221 = vsel %vm240, %v7163, 0
        %v7224 = vsel %vm240, %v7164, 0
        %v7227 = vsel %vm240, %v7165, 0
        %v7230 = vsel %vm240, %v7166, 0
        %v7233 = vsel %vm240, %v7167, 0
        %v7236 = vsel %vm240, %v7168, 0
        %v7239 = vsel %vm240, %v7169, 0
        %v7242 = vsel %vm240, %v7170, 0
        %v7245 = vsel %vm240, %v7171, 0
        %v7248 = vsel %vm240, %v7172, 0
        %v7251 = vsel %vm240, %v7173, 0
        %v7254 = vsel %vm240, %v7174, 0
        %v7257 = vsel %vm240, %v7175, 0
        %v7260 = vsel %vm240, %v7176, 0
        %v7263 = vsel %vm240, %v7177, 0
        %v7266 = vsel %vm240, %v7178, 0
        %v7269 = vsel %vm240, %v7179, 0
        %v7272 = vsel %vm240, %v7180, 0
        %v7275 = vsel %vm240, %v7181, 0
        %v7278 = vsel %vm240, %v7182, 0
        %v7281 = vsel %vm240, %v7183, 0
        %v7284 = vsel %vm240, %v7184, 0
        %v7287 = vsel %vm240, %v7185, 0
        %v7290 = vsel %vm240, %v7186, 0
        %7292 = vmatprep.subr.mxu0 0.0
        %7293 = vmatpush1.msra.mxu0 %v7188
        %7294 = vmatprep.subr.mxu0 0.0
        %7295 = vmatpush1.msra.mxu0 %v7189
        %7296 = vmatprep.subr.mxu0 0.0
        %7297 = vmatpush1.msra.mxu0 %v7190
        %7298 = vmatprep.subr.mxu0 0.0
        %7299 = vmatpush1.msra.mxu0 %v7191
        %7300 = vmatprep.subr.mxu0 0.0
        %7301 = vmatpush1.msra.mxu0 %v7192
        %7302 = vmatprep.subr.mxu0 0.0
        %7303 = vmatpush1.msra.mxu0 %v7193
        %7304 = vmatprep.subr.mxu0 0.0
        %7305 = vmatpush1.msra.mxu0 %v7194
        %7306 = vmatprep.subr.mxu0 0.0
        %7307 = vmatpush1.msra.mxu0 %v7195
        %7308 = vmatprep.subr.mxu0 0.0
        %7309 = vmatpush1.msra.mxu0 0.0
        %7310 = vmatprep.subr.mxu0 0.0
        %7311 = vmatpush1.msra.mxu0 0.0
        %7312 = vmatprep.subr.mxu0 0.0
        %7313 = vmatpush1.msra.mxu0 0.0
        %7314 = vmatprep.subr.mxu0 0.0
        %7315 = vmatpush1.msra.mxu0 0.0
        %7316 = vmatprep.subr.mxu0 0.0
        %7317 = vmatpush1.msra.mxu0 0.0
        %7318 = vmatprep.subr.mxu0 0.0
        %7319 = vmatpush1.msra.mxu0 0.0
        %7320 = vmatprep.subr.mxu0 0.0
        %7321 = vmatpush1.msra.mxu0 0.0
        %7322 = vmatprep.subr.mxu0 0.0
        %7323 = vmatpush1.msra.mxu0 0.0
        %7324 = vmatprep.subr.mxu0 0.0
        %7325 = vmatpush1.msra.mxu0 0.0
        %7326 = vmatprep.subr.mxu0 0.0
        %7327 = vmatpush1.msra.mxu0 0.0
        %7328 = vmatprep.subr.mxu0 0.0
        %7329 = vmatpush1.msra.mxu0 0.0
        %7330 = vmatprep.subr.mxu0 0.0
        %7331 = vmatpush1.msra.mxu0 0.0
        %7332 = vmatprep.subr.mxu0 0.0
        %7333 = vmatpush1.msra.mxu0 0.0
        %7334 = vmatprep.subr.mxu0 0.0
        %7335 = vmatpush1.msra.mxu0 0.0
        %7336 = vmatprep.subr.mxu0 0.0
        %7337 = vmatpush1.msra.mxu0 0.0
        %7338 = vmatprep.subr.mxu0 0.0
        %7339 = vmatpush1.msra.mxu0 0.0
        %7340 = vmatprep.subr.mxu0 0.0
        %7341 = vmatpush1.msra.mxu0 0.0
        %7342 = vmatprep.subr.mxu0 0.0
        %7343 = vmatpush1.msra.mxu0 0.0
        %7344 = vmatprep.subr.mxu0 0.0
        %7345 = vmatpush1.msra.mxu0 0.0
        %7346 = vmatprep.subr.mxu0 0.0
        %7347 = vmatpush1.msra.mxu0 0.0
        %7348 = vmatprep.subr.mxu0 0.0
        %7349 = vmatpush1.msra.mxu0 0.0
        %7350 = vmatprep.subr.mxu0 0.0
        %7351 = vmatpush1.msra.mxu0 0.0
        %7352 = vmatprep.subr.mxu0 0.0
        %7353 = vmatpush1.msra.mxu0 0.0
        %7354 = vmatprep.subr.mxu0 0.0
        %7355 = vmatpush1.msra.mxu0 0.0
        %7356 = vmatprep.mubr.f32.mxu0 0.0
        %7357 = vmatmul.mubr.f32.gmra.mrb[0].mxu0 %v7197
        %v7358 = vpop.f32.mrb[0].mxu0
        %v7359 = vadd.f32 0.0, %v7358
        %v7360 = vpop.f32.mrb[0].mxu0
        %7361 = vmatprep.mubr.f32.mxu0 0.0
        %7362 = vmatmul.mubr.f32.gmra.mrb[0].mxu0 %v7200
        %v7363 = vpop.f32.mrb[0].mxu0
        %v7364 = vadd.f32 0.0, %v7363
        %v7365 = vpop.f32.mrb[0].mxu0
        %7366 = vmatprep.mubr.f32.mxu0 0.0
        %7367 = vmatmul.mubr.f32.gmra.mrb[0].mxu0 %v7203
        %v7368 = vpop.f32.mrb[0].mxu0
        %v7369 = vadd.f32 0.0, %v7368
        %v7370 = vpop.f32.mrb[0].mxu0
        %7371 = vmatprep.mubr.f32.mxu0 0.0
        %7372 = vmatmul.mubr.f32.gmra.mrb[0].mxu0 %v7206
        %v7373 = vpop.f32.mrb[0].mxu0
        %v7374 = vadd.f32 0.0, %v7373
        %v7375 = vpop.f32.mrb[0].mxu0
        %7376 = vmatprep.mubr.f32.mxu0 0.0
        %7377 = vmatmul.mubr.f32.gmra.mrb[0].mxu0 %v7209
        %v7378 = vpop.f32.mrb[0].mxu0
        %v7379 = vadd.f32 0.0, %v7378
        %v7380 = vpop.f32.mrb[0].mxu0
        %7381 = vmatprep.mubr.f32.mxu0 0.0
        %7382 = vmatmul.mubr.f32.gmra.mrb[0].mxu0 %v7212
        %v7383 = vpop.f32.mrb[0].mxu0
        %v7384 = vadd.f32 0.0, %v7383
        %v7385 = vpop.f32.mrb[0].mxu0
        %7386 = vmatprep.mubr.f32.mxu0 0.0
        %7387 = vmatmul.mubr.f32.gmra.mrb[0].mxu0 %v7215
        %v7388 = vpop.f32.mrb[0].mxu0
        %v7389 = vadd.f32 0.0, %v7388
        %v7390 = vpop.f32.mrb[0].mxu0
        %7391 = vmatprep.mubr.f32.mxu0 0.0
        %7392 = vmatmul.mubr.f32.gmra.mrb[0].mxu0 %v7218
        %v7393 = vpop.f32.mrb[0].mxu0
        %v7394 = vadd.f32 0.0, %v7393
        %v7395 = vpop.f32.mrb[0].mxu0
        %7396 = vmatprep.mubr.f32.mxu0 0.0
        %7397 = vmatmul.mubr.f32.gmra.mrb[0].mxu0 %v7221
        %v7398 = vpop.f32.mrb[0].mxu0
        %v7399 = vadd.f32 0.0, %v7398
        %v7400 = vpop.f32.mrb[0].mxu0
        %7401 = vmatprep.mubr.f32.mxu0 0.0
        %7402 = vmatmul.mubr.f32.gmra.mrb[0].mxu0 %v7224
        %v7403 = vpop.f32.mrb[0].mxu0
        %v7404 = vadd.f32 0.0, %v7403
        %v7405 = vpop.f32.mrb[0].mxu0
        %7406 = vmatprep.mubr.f32.mxu0 0.0
        %7407 = vmatmul.mubr.f32.gmra.mrb[0].mxu0 %v7227
        %v7408 = vpop.f32.mrb[0].mxu0
        %v7409 = vadd.f32 0.0, %v7408
        %v7410 = vpop.f32.mrb[0].mxu0
        %7411 = vmatprep.mubr.f32.mxu0 0.0
        %7412 = vmatmul.mubr.f32.gmra.mrb[0].mxu0 %v7230
        %v7413 = vpop.f32.mrb[0].mxu0
        %v7414 = vadd.f32 0.0, %v7413
        %v7415 = vpop.f32.mrb[0].mxu0
        %7416 = vmatprep.mubr.f32.mxu0 0.0
        %7417 = vmatmul.mubr.f32.gmra.mrb[0].mxu0 %v7233
        %v7418 = vpop.f32.mrb[0].mxu0
        %v7419 = vadd.f32 0.0, %v7418
        %v7420 = vpop.f32.mrb[0].mxu0
        %7421 = vmatprep.mubr.f32.mxu0 0.0
        %7422 = vmatmul.mubr.f32.gmra.mrb[0].mxu0 %v7236
        %v7423 = vpop.f32.mrb[0].mxu0
        %v7424 = vadd.f32 0.0, %v7423
        %v7425 = vpop.f32.mrb[0].mxu0
        %7426 = vmatprep.mubr.f32.mxu0 0.0
        %7427 = vmatmul.mubr.f32.gmra.mrb[0].mxu0 %v7239
        %v7428 = vpop.f32.mrb[0].mxu0
        %v7429 = vadd.f32 0.0, %v7428
        %v7430 = vpop.f32.mrb[0].mxu0
        %7431 = vmatprep.mubr.f32.mxu0 0.0
        %7432 = vmatmul.mubr.f32.gmra.mrb[0].mxu0 %v7242
        %v7433 = vpop.f32.mrb[0].mxu0
        %v7434 = vadd.f32 0.0, %v7433
        %v7435 = vpop.f32.mrb[0].mxu0
        %7436 = vmatprep.mubr.f32.mxu0 0.0
        %7437 = vmatmul.mubr.f32.gmra.mrb[0].mxu0 %v7245
        %v7438 = vpop.f32.mrb[0].mxu0
        %v7439 = vadd.f32 0.0, %v7438
        %v7440 = vpop.f32.mrb[0].mxu0
        %7441 = vmatprep.mubr.f32.mxu0 0.0
        %7442 = vmatmul.mubr.f32.gmra.mrb[0].mxu0 %v7248
        %v7443 = vpop.f32.mrb[0].mxu0
        %v7444 = vadd.f32 0.0, %v7443
        %v7445 = vpop.f32.mrb[0].mxu0
        %7446 = vmatprep.mubr.f32.mxu0 0.0
        %7447 = vmatmul.mubr.f32.gmra.mrb[0].mxu0 %v7251
        %v7448 = vpop.f32.mrb[0].mxu0
        %v7449 = vadd.f32 0.0, %v7448
        %v7450 = vpop.f32.mrb[0].mxu0
        %7451 = vmatprep.mubr.f32.mxu0 0.0
        %7452 = vmatmul.mubr.f32.gmra.mrb[0].mxu0 %v7254
        %v7453 = vpop.f32.mrb[0].mxu0
        %v7454 = vadd.f32 0.0, %v7453
        %v7455 = vpop.f32.mrb[0].mxu0
        %7456 = vmatprep.mubr.f32.mxu0 0.0
        %7457 = vmatmul.mubr.f32.gmra.mrb[0].mxu0 %v7257
        %v7458 = vpop.f32.mrb[0].mxu0
        %v7459 = vadd.f32 0.0, %v7458
        %v7460 = vpop.f32.mrb[0].mxu0
        %7461 = vmatprep.mubr.f32.mxu0 0.0
        %7462 = vmatmul.mubr.f32.gmra.mrb[0].mxu0 %v7260
        %v7463 = vpop.f32.mrb[0].mxu0
        %v7464 = vadd.f32 0.0, %v7463
        %v7465 = vpop.f32.mrb[0].mxu0
        %7466 = vmatprep.mubr.f32.mxu0 0.0
        %7467 = vmatmul.mubr.f32.gmra.mrb[0].mxu0 %v7263
        %v7468 = vpop.f32.mrb[0].mxu0
        %v7469 = vadd.f32 0.0, %v7468
        %v7470 = vpop.f32.mrb[0].mxu0
        %7471 = vmatprep.mubr.f32.mxu0 0.0
        %7472 = vmatmul.mubr.f32.gmra.mrb[0].mxu0 %v7266
        %v7473 = vpop.f32.mrb[0].mxu0
        %v7474 = vadd.f32 0.0, %v7473
        %v7475 = vpop.f32.mrb[0].mxu0
        %7476 = vmatprep.mubr.f32.mxu0 0.0
        %7477 = vmatmul.mubr.f32.gmra.mrb[0].mxu0 %v7269
        %v7478 = vpop.f32.mrb[0].mxu0
        %v7479 = vadd.f32 0.0, %v7478
        %v7480 = vpop.f32.mrb[0].mxu0
        %7481 = vmatprep.mubr.f32.mxu0 0.0
        %7482 = vmatmul.mubr.f32.gmra.mrb[0].mxu0 %v7272
        %v7483 = vpop.f32.mrb[0].mxu0
        %v7484 = vadd.f32 0.0, %v7483
        %v7485 = vpop.f32.mrb[0].mxu0
        %7486 = vmatprep.mubr.f32.mxu0 0.0
        %7487 = vmatmul.mubr.f32.gmra.mrb[0].mxu0 %v7275
        %v7488 = vpop.f32.mrb[0].mxu0
        %v7489 = vadd.f32 0.0, %v7488
        %v7490 = vpop.f32.mrb[0].mxu0
        %7491 = vmatprep.mubr.f32.mxu0 0.0
        %7492 = vmatmul.mubr.f32.gmra.mrb[0].mxu0 %v7278
        %v7493 = vpop.f32.mrb[0].mxu0
        %v7494 = vadd.f32 0.0, %v7493
        %v7495 = vpop.f32.mrb[0].mxu0
        %7496 = vmatprep.mubr.f32.mxu0 0.0
        %7497 = vmatmul.mubr.f32.gmra.mrb[0].mxu0 %v7281
        %v7498 = vpop.f32.mrb[0].mxu0
        %v7499 = vadd.f32 0.0, %v7498
        %v7500 = vpop.f32.mrb[0].mxu0
        %7501 = vmatprep.mubr.f32.mxu0 0.0
        %7502 = vmatmul.mubr.f32.gmra.mrb[0].mxu0 %v7284
        %v7503 = vpop.f32.mrb[0].mxu0
        %v7504 = vadd.f32 0.0, %v7503
        %v7505 = vpop.f32.mrb[0].mxu0
        %7506 = vmatprep.mubr.f32.mxu0 0.0
        %7507 = vmatmul.mubr.f32.gmra.mrb[0].mxu0 %v7287
        %v7508 = vpop.f32.mrb[0].mxu0
        %v7509 = vadd.f32 0.0, %v7508
        %v7510 = vpop.f32.mrb[0].mxu0
        %7511 = vmatprep.mubr.f32.mxu0 0.0
        %7512 = vmatmul.mubr.f32.gmra.mrb[0].mxu0 %v7290
        %v7513 = vpop.f32.mrb[0].mxu0
        %v7514 = vadd.f32 0.0, %v7513
        %v7515 = vpop.f32.mrb[0].mxu0
        %7516 = vdwg.mxu0
        %v7517 = vadd.f32 %v7091, %v7359
        %v7518 = vadd.f32 %v7092, %v7364
        %v7519 = vadd.f32 %v7093, %v7369
        %v7520 = vadd.f32 %v7094, %v7374
        %v7521 = vadd.f32 %v7095, %v7379
        %v7522 = vadd.f32 %v7096, %v7384
        %v7523 = vadd.f32 %v7097, %v7389
        %v7524 = vadd.f32 %v7098, %v7394
        %v7525 = vadd.f32 %v7099, %v7399
        %v7526 = vadd.f32 %v7100, %v7404
        %v7527 = vadd.f32 %v7101, %v7409
        %v7528 = vadd.f32 %v7102, %v7414
        %v7529 = vadd.f32 %v7103, %v7419
        %v7530 = vadd.f32 %v7104, %v7424
        %v7531 = vadd.f32 %v7105, %v7429
        %v7532 = vadd.f32 %v7106, %v7434
        %v7533 = vadd.f32 %v7107, %v7439
        %v7534 = vadd.f32 %v7108, %v7444
        %v7535 = vadd.f32 %v7109, %v7449
        %v7536 = vadd.f32 %v7110, %v7454
        %v7537 = vadd.f32 %v7111, %v7459
        %v7538 = vadd.f32 %v7112, %v7464
        %v7539 = vadd.f32 %v7113, %v7469
        %v7540 = vadd.f32 %v7114, %v7474
        %v7541 = vadd.f32 %v7115, %v7479
        %v7542 = vadd.f32 %v7116, %v7484
        %v7543 = vadd.f32 %v7117, %v7489
        %v7544 = vadd.f32 %v7118, %v7494
        %v7545 = vadd.f32 %v7119, %v7499
        %v7546 = vadd.f32 %v7120, %v7504
        %v7547 = vadd.f32 %v7121, %v7509
        %v7548 = vadd.f32 %v7122, %v7514
        %v7549 = vld [vmem:[#allocation2 + $0x28] sm:$0xff]
        %v7550 = vld [vmem:[#allocation2 + $0x30] sm:$0xff]
        %v7551 = vld [vmem:[#allocation2 + $0x38] sm:$0xff]
        %v7552 = vld [vmem:[#allocation2 + $0x40] sm:$0xff]
        %v7553 = vld [vmem:[#allocation2 + $0x48] sm:$0xff]
        %v7554 = vld [vmem:[#allocation2 + $0x50] sm:$0xff]
        %v7555 = vld [vmem:[#allocation2 + $0x58] sm:$0xff]
        %v7556 = vld [vmem:[#allocation2 + $0x60] sm:$0xff]
        %v7557 = vld [vmem:[#allocation2 + $0x68] sm:$0xff]
        %v7558 = vld [vmem:[#allocation2 + $0x70] sm:$0xff]
        %v7559 = vld [vmem:[#allocation2 + $0x78] sm:$0xff]
        %v7560 = vld [vmem:[#allocation2 + $0x80] sm:$0xff]
        %v7561 = vld [vmem:[#allocation2 + $0x88] sm:$0xff]
        %v7562 = vld [vmem:[#allocation2 + $0x90] sm:$0xff]
        %v7563 = vld [vmem:[#allocation2 + $0x98] sm:$0xff]
        %v7564 = vld [vmem:[#allocation2 + $0xa0] sm:$0xff]
        %v7565 = vld [vmem:[#allocation2 + $0xa8] sm:$0xff]
        %v7566 = vld [vmem:[#allocation2 + $0xb0] sm:$0xff]
        %v7567 = vld [vmem:[#allocation2 + $0xb8] sm:$0xff]
        %v7568 = vld [vmem:[#allocation2 + $0xc0] sm:$0xff]
        %v7569 = vld [vmem:[#allocation2 + $0xc8] sm:$0xff]
        %v7570 = vld [vmem:[#allocation2 + $0xd0] sm:$0xff]
        %v7571 = vld [vmem:[#allocation2 + $0xd8] sm:$0xff]
        %v7572 = vld [vmem:[#allocation2 + $0xe0] sm:$0xff]
        %v7573 = vld [vmem:[#allocation2 + $0xe8] sm:$0xff]
        %v7574 = vld [vmem:[#allocation2 + $0xf0] sm:$0xff]
        %v7575 = vld [vmem:[#allocation2 + $0xf8] sm:$0xff]
        %v7576 = vld [vmem:[#allocation2 + $0x100] sm:$0xff]
        %v7577 = vld [vmem:[#allocation2 + $0x108] sm:$0xff]
        %v7578 = vld [vmem:[#allocation2 + $0x110] sm:$0xff]
        %v7579 = vld [vmem:[#allocation2 + $0x118] sm:$0xff]
        %v7580 = vld [vmem:[#allocation2 + $0x120] sm:$0xff]
        %s7581 = scalar_lea.vmem [#allocation3], 448
        %v7582 = vld [vmem:[%s7581] sm:$0xff]
        %v7583 = vld [vmem:[%s7581 + $0x8] sm:$0xff]
        %v7584 = vld [vmem:[%s7581 + $0x10] sm:$0xff]
        %v7585 = vld [vmem:[%s7581 + $0x18] sm:$0xff]
        %v7586 = vld [vmem:[%s7581 + $0x20] sm:$0xff]
        %v7587 = vld [vmem:[%s7581 + $0x28] sm:$0xff]
        %v7588 = vld [vmem:[%s7581 + $0x30] sm:$0xff]
        %v7589 = vld [vmem:[%s7581 + $0x38] sm:$0xff]
        %v7591 = vsel %vm240, %v7549, 0
        %v7594 = vsel %vm240, %v7550, 0
        %v7597 = vsel %vm240, %v7551, 0
        %v7600 = vsel %vm240, %v7552, 0
        %v7603 = vsel %vm240, %v7553, 0
        %v7606 = vsel %vm240, %v7554, 0
        %v7609 = vsel %vm240, %v7555, 0
        %v7612 = vsel %vm240, %v7556, 0
        %v7615 = vsel %vm240, %v7557, 0
        %v7618 = vsel %vm240, %v7558, 0
        %v7621 = vsel %vm240, %v7559, 0
        %v7624 = vsel %vm240, %v7560, 0
        %v7627 = vsel %vm240, %v7561, 0
        %v7630 = vsel %vm240, %v7562, 0
        %v7633 = vsel %vm240, %v7563, 0
        %v7636 = vsel %vm240, %v7564, 0
        %v7639 = vsel %vm240, %v7565, 0
        %v7642 = vsel %vm240, %v7566, 0
        %v7645 = vsel %vm240, %v7567, 0
        %v7648 = vsel %vm240, %v7568, 0
        %v7651 = vsel %vm240, %v7569, 0
        %v7654 = vsel %vm240, %v7570, 0
        %v7657 = vsel %vm240, %v7571, 0
        %v7660 = vsel %vm240, %v7572, 0
        %v7663 = vsel %vm240, %v7573, 0
        %v7666 = vsel %vm240, %v7574, 0
        %v7669 = vsel %vm240, %v7575, 0
        %v7672 = vsel %vm240, %v7576, 0
        %v7675 = vsel %vm240, %v7577, 0
        %v7678 = vsel %vm240, %v7578, 0
        %v7681 = vsel %vm240, %v7579, 0
        %v7684 = vsel %vm240, %v7580, 0
        %7686 = vmatprep.subr.mxu0 0.0
        %7687 = vmatpush1.msra.mxu0 %v7582
        %7688 = vmatprep.subr.mxu0 0.0
        %7689 = vmatpush1.msra.mxu0 %v7583
        %7690 = vmatprep.subr.mxu0 0.0
        %7691 = vmatpush1.msra.mxu0 %v7584
        %7692 = vmatprep.subr.mxu0 0.0
        %7693 = vmatpush1.msra.mxu0 %v7585
        %7694 = vmatprep.subr.mxu0 0.0
        %7695 = vmatpush1.msra.mxu0 %v7586
        %7696 = vmatprep.subr.mxu0 0.0
        %7697 = vmatpush1.msra.mxu0 %v7587
        %7698 = vmatprep.subr.mxu0 0.0
        %7699 = vmatpush1.msra.mxu0 %v7588
        %7700 = vmatprep.subr.mxu0 0.0
        %7701 = vmatpush1.msra.mxu0 %v7589
        %7702 = vmatprep.subr.mxu0 0.0
        %7703 = vmatpush1.msra.mxu0 0.0
        %7704 = vmatprep.subr.mxu0 0.0
        %7705 = vmatpush1.msra.mxu0 0.0
        %7706 = vmatprep.subr.mxu0 0.0
        %7707 = vmatpush1.msra.mxu0 0.0
        %7708 = vmatprep.subr.mxu0 0.0
        %7709 = vmatpush1.msra.mxu0 0.0
        %7710 = vmatprep.subr.mxu0 0.0
        %7711 = vmatpush1.msra.mxu0 0.0
        %7712 = vmatprep.subr.mxu0 0.0
        %7713 = vmatpush1.msra.mxu0 0.0
        %7714 = vmatprep.subr.mxu0 0.0
        %7715 = vmatpush1.msra.mxu0 0.0
        %7716 = vmatprep.subr.mxu0 0.0
        %7717 = vmatpush1.msra.mxu0 0.0
        %7718 = vmatprep.subr.mxu0 0.0
        %7719 = vmatpush1.msra.mxu0 0.0
        %7720 = vmatprep.subr.mxu0 0.0
        %7721 = vmatpush1.msra.mxu0 0.0
        %7722 = vmatprep.subr.mxu0 0.0
        %7723 = vmatpush1.msra.mxu0 0.0
        %7724 = vmatprep.subr.mxu0 0.0
        %7725 = vmatpush1.msra.mxu0 0.0
        %7726 = vmatprep.subr.mxu0 0.0
        %7727 = vmatpush1.msra.mxu0 0.0
        %7728 = vmatprep.subr.mxu0 0.0
        %7729 = vmatpush1.msra.mxu0 0.0
        %7730 = vmatprep.subr.mxu0 0.0
        %7731 = vmatpush1.msra.mxu0 0.0
        %7732 = vmatprep.subr.mxu0 0.0
        %7733 = vmatpush1.msra.mxu0 0.0
        %7734 = vmatprep.subr.mxu0 0.0
        %7735 = vmatpush1.msra.mxu0 0.0
        %7736 = vmatprep.subr.mxu0 0.0
        %7737 = vmatpush1.msra.mxu0 0.0
        %7738 = vmatprep.subr.mxu0 0.0
        %7739 = vmatpush1.msra.mxu0 0.0
        %7740 = vmatprep.subr.mxu0 0.0
        %7741 = vmatpush1.msra.mxu0 0.0
        %7742 = vmatprep.subr.mxu0 0.0
        %7743 = vmatpush1.msra.mxu0 0.0
        %7744 = vmatprep.subr.mxu0 0.0
        %7745 = vmatpush1.msra.mxu0 0.0
        %7746 = vmatprep.subr.mxu0 0.0
        %7747 = vmatpush1.msra.mxu0 0.0
        %7748 = vmatprep.subr.mxu0 0.0
        %7749 = vmatpush1.msra.mxu0 0.0
        %7750 = vmatprep.mubr.f32.mxu0 0.0
        %7751 = vmatmul.mubr.f32.gmra.mrb[0].mxu0 %v7591
        %v7752 = vpop.f32.mrb[0].mxu0
        %v7753 = vadd.f32 0.0, %v7752
        %v7754 = vpop.f32.mrb[0].mxu0
        %7755 = vmatprep.mubr.f32.mxu0 0.0
        %7756 = vmatmul.mubr.f32.gmra.mrb[0].mxu0 %v7594
        %v7757 = vpop.f32.mrb[0].mxu0
        %v7758 = vadd.f32 0.0, %v7757
        %v7759 = vpop.f32.mrb[0].mxu0
        %7760 = vmatprep.mubr.f32.mxu0 0.0
        %7761 = vmatmul.mubr.f32.gmra.mrb[0].mxu0 %v7597
        %v7762 = vpop.f32.mrb[0].mxu0
        %v7763 = vadd.f32 0.0, %v7762
        %v7764 = vpop.f32.mrb[0].mxu0
        %7765 = vmatprep.mubr.f32.mxu0 0.0
        %7766 = vmatmul.mubr.f32.gmra.mrb[0].mxu0 %v7600
        %v7767 = vpop.f32.mrb[0].mxu0
        %v7768 = vadd.f32 0.0, %v7767
        %v7769 = vpop.f32.mrb[0].mxu0
        %7770 = vmatprep.mubr.f32.mxu0 0.0
        %7771 = vmatmul.mubr.f32.gmra.mrb[0].mxu0 %v7603
        %v7772 = vpop.f32.mrb[0].mxu0
        %v7773 = vadd.f32 0.0, %v7772
        %v7774 = vpop.f32.mrb[0].mxu0
        %7775 = vmatprep.mubr.f32.mxu0 0.0
        %7776 = vmatmul.mubr.f32.gmra.mrb[0].mxu0 %v7606
        %v7777 = vpop.f32.mrb[0].mxu0
        %v7778 = vadd.f32 0.0, %v7777
        %v7779 = vpop.f32.mrb[0].mxu0
        %7780 = vmatprep.mubr.f32.mxu0 0.0
        %7781 = vmatmul.mubr.f32.gmra.mrb[0].mxu0 %v7609
        %v7782 = vpop.f32.mrb[0].mxu0
        %v7783 = vadd.f32 0.0, %v7782
        %v7784 = vpop.f32.mrb[0].mxu0
        %7785 = vmatprep.mubr.f32.mxu0 0.0
        %7786 = vmatmul.mubr.f32.gmra.mrb[0].mxu0 %v7612
        %v7787 = vpop.f32.mrb[0].mxu0
        %v7788 = vadd.f32 0.0, %v7787
        %v7789 = vpop.f32.mrb[0].mxu0
        %7790 = vmatprep.mubr.f32.mxu0 0.0
        %7791 = vmatmul.mubr.f32.gmra.mrb[0].mxu0 %v7615
        %v7792 = vpop.f32.mrb[0].mxu0
        %v7793 = vadd.f32 0.0, %v7792
        %v7794 = vpop.f32.mrb[0].mxu0
        %7795 = vmatprep.mubr.f32.mxu0 0.0
        %7796 = vmatmul.mubr.f32.gmra.mrb[0].mxu0 %v7618
        %v7797 = vpop.f32.mrb[0].mxu0
        %v7798 = vadd.f32 0.0, %v7797
        %v7799 = vpop.f32.mrb[0].mxu0
        %7800 = vmatprep.mubr.f32.mxu0 0.0
        %7801 = vmatmul.mubr.f32.gmra.mrb[0].mxu0 %v7621
        %v7802 = vpop.f32.mrb[0].mxu0
        %v7803 = vadd.f32 0.0, %v7802
        %v7804 = vpop.f32.mrb[0].mxu0
        %7805 = vmatprep.mubr.f32.mxu0 0.0
        %7806 = vmatmul.mubr.f32.gmra.mrb[0].mxu0 %v7624
        %v7807 = vpop.f32.mrb[0].mxu0
        %v7808 = vadd.f32 0.0, %v7807
        %v7809 = vpop.f32.mrb[0].mxu0
        %7810 = vmatprep.mubr.f32.mxu0 0.0
        %7811 = vmatmul.mubr.f32.gmra.mrb[0].mxu0 %v7627
        %v7812 = vpop.f32.mrb[0].mxu0
        %v7813 = vadd.f32 0.0, %v7812
        %v7814 = vpop.f32.mrb[0].mxu0
        %7815 = vmatprep.mubr.f32.mxu0 0.0
        %7816 = vmatmul.mubr.f32.gmra.mrb[0].mxu0 %v7630
        %v7817 = vpop.f32.mrb[0].mxu0
        %v7818 = vadd.f32 0.0, %v7817
        %v7819 = vpop.f32.mrb[0].mxu0
        %7820 = vmatprep.mubr.f32.mxu0 0.0
        %7821 = vmatmul.mubr.f32.gmra.mrb[0].mxu0 %v7633
        %v7822 = vpop.f32.mrb[0].mxu0
        %v7823 = vadd.f32 0.0, %v7822
        %v7824 = vpop.f32.mrb[0].mxu0
        %7825 = vmatprep.mubr.f32.mxu0 0.0
        %7826 = vmatmul.mubr.f32.gmra.mrb[0].mxu0 %v7636
        %v7827 = vpop.f32.mrb[0].mxu0
        %v7828 = vadd.f32 0.0, %v7827
        %v7829 = vpop.f32.mrb[0].mxu0
        %7830 = vmatprep.mubr.f32.mxu0 0.0
        %7831 = vmatmul.mubr.f32.gmra.mrb[0].mxu0 %v7639
        %v7832 = vpop.f32.mrb[0].mxu0
        %v7833 = vadd.f32 0.0, %v7832
        %v7834 = vpop.f32.mrb[0].mxu0
        %7835 = vmatprep.mubr.f32.mxu0 0.0
        %7836 = vmatmul.mubr.f32.gmra.mrb[0].mxu0 %v7642
        %v7837 = vpop.f32.mrb[0].mxu0
        %v7838 = vadd.f32 0.0, %v7837
        %v7839 = vpop.f32.mrb[0].mxu0
        %7840 = vmatprep.mubr.f32.mxu0 0.0
        %7841 = vmatmul.mubr.f32.gmra.mrb[0].mxu0 %v7645
        %v7842 = vpop.f32.mrb[0].mxu0
        %v7843 = vadd.f32 0.0, %v7842
        %v7844 = vpop.f32.mrb[0].mxu0
        %7845 = vmatprep.mubr.f32.mxu0 0.0
        %7846 = vmatmul.mubr.f32.gmra.mrb[0].mxu0 %v7648
        %v7847 = vpop.f32.mrb[0].mxu0
        %v7848 = vadd.f32 0.0, %v7847
        %v7849 = vpop.f32.mrb[0].mxu0
        %7850 = vmatprep.mubr.f32.mxu0 0.0
        %7851 = vmatmul.mubr.f32.gmra.mrb[0].mxu0 %v7651
        %v7852 = vpop.f32.mrb[0].mxu0
        %v7853 = vadd.f32 0.0, %v7852
        %v7854 = vpop.f32.mrb[0].mxu0
        %7855 = vmatprep.mubr.f32.mxu0 0.0
        %7856 = vmatmul.mubr.f32.gmra.mrb[0].mxu0 %v7654
        %v7857 = vpop.f32.mrb[0].mxu0
        %v7858 = vadd.f32 0.0, %v7857
        %v7859 = vpop.f32.mrb[0].mxu0
        %7860 = vmatprep.mubr.f32.mxu0 0.0
        %7861 = vmatmul.mubr.f32.gmra.mrb[0].mxu0 %v7657
        %v7862 = vpop.f32.mrb[0].mxu0
        %v7863 = vadd.f32 0.0, %v7862
        %v7864 = vpop.f32.mrb[0].mxu0
        %7865 = vmatprep.mubr.f32.mxu0 0.0
        %7866 = vmatmul.mubr.f32.gmra.mrb[0].mxu0 %v7660
        %v7867 = vpop.f32.mrb[0].mxu0
        %v7868 = vadd.f32 0.0, %v7867
        %v7869 = vpop.f32.mrb[0].mxu0
        %7870 = vmatprep.mubr.f32.mxu0 0.0
        %7871 = vmatmul.mubr.f32.gmra.mrb[0].mxu0 %v7663
        %v7872 = vpop.f32.mrb[0].mxu0
        %v7873 = vadd.f32 0.0, %v7872
        %v7874 = vpop.f32.mrb[0].mxu0
        %7875 = vmatprep.mubr.f32.mxu0 0.0
        %7876 = vmatmul.mubr.f32.gmra.mrb[0].mxu0 %v7666
        %v7877 = vpop.f32.mrb[0].mxu0
        %v7878 = vadd.f32 0.0, %v7877
        %v7879 = vpop.f32.mrb[0].mxu0
        %7880 = vmatprep.mubr.f32.mxu0 0.0
        %7881 = vmatmul.mubr.f32.gmra.mrb[0].mxu0 %v7669
        %v7882 = vpop.f32.mrb[0].mxu0
        %v7883 = vadd.f32 0.0, %v7882
        %v7884 = vpop.f32.mrb[0].mxu0
        %7885 = vmatprep.mubr.f32.mxu0 0.0
        %7886 = vmatmul.mubr.f32.gmra.mrb[0].mxu0 %v7672
        %v7887 = vpop.f32.mrb[0].mxu0
        %v7888 = vadd.f32 0.0, %v7887
        %v7889 = vpop.f32.mrb[0].mxu0
        %7890 = vmatprep.mubr.f32.mxu0 0.0
        %7891 = vmatmul.mubr.f32.gmra.mrb[0].mxu0 %v7675
        %v7892 = vpop.f32.mrb[0].mxu0
        %v7893 = vadd.f32 0.0, %v7892
        %v7894 = vpop.f32.mrb[0].mxu0
        %7895 = vmatprep.mubr.f32.mxu0 0.0
        %7896 = vmatmul.mubr.f32.gmra.mrb[0].mxu0 %v7678
        %v7897 = vpop.f32.mrb[0].mxu0
        %v7898 = vadd.f32 0.0, %v7897
        %v7899 = vpop.f32.mrb[0].mxu0
        %7900 = vmatprep.mubr.f32.mxu0 0.0
        %7901 = vmatmul.mubr.f32.gmra.mrb[0].mxu0 %v7681
        %v7902 = vpop.f32.mrb[0].mxu0
        %v7903 = vadd.f32 0.0, %v7902
        %v7904 = vpop.f32.mrb[0].mxu0
        %7905 = vmatprep.mubr.f32.mxu0 0.0
        %7906 = vmatmul.mubr.f32.gmra.mrb[0].mxu0 %v7684
        %v7907 = vpop.f32.mrb[0].mxu0
        %v7908 = vadd.f32 0.0, %v7907
        %v7909 = vpop.f32.mrb[0].mxu0
        %7910 = vdwg.mxu0
        %v7911 = vadd.f32 %v7517, %v7753
        %v7912 = vadd.f32 %v7518, %v7758
        %v7913 = vadd.f32 %v7519, %v7763
        %v7914 = vadd.f32 %v7520, %v7768
        %v7915 = vadd.f32 %v7521, %v7773
        %v7916 = vadd.f32 %v7522, %v7778
        %v7917 = vadd.f32 %v7523, %v7783
        %v7918 = vadd.f32 %v7524, %v7788
        %v7919 = vadd.f32 %v7525, %v7793
        %v7920 = vadd.f32 %v7526, %v7798
        %v7921 = vadd.f32 %v7527, %v7803
        %v7922 = vadd.f32 %v7528, %v7808
        %v7923 = vadd.f32 %v7529, %v7813
        %v7924 = vadd.f32 %v7530, %v7818
        %v7925 = vadd.f32 %v7531, %v7823
        %v7926 = vadd.f32 %v7532, %v7828
        %v7927 = vadd.f32 %v7533, %v7833
        %v7928 = vadd.f32 %v7534, %v7838
        %v7929 = vadd.f32 %v7535, %v7843
        %v7930 = vadd.f32 %v7536, %v7848
        %v7931 = vadd.f32 %v7537, %v7853
        %v7932 = vadd.f32 %v7538, %v7858
        %v7933 = vadd.f32 %v7539, %v7863
        %v7934 = vadd.f32 %v7540, %v7868
        %v7935 = vadd.f32 %v7541, %v7873
        %v7936 = vadd.f32 %v7542, %v7878
        %v7937 = vadd.f32 %v7543, %v7883
        %v7938 = vadd.f32 %v7544, %v7888
        %v7939 = vadd.f32 %v7545, %v7893
        %v7940 = vadd.f32 %v7546, %v7898
        %v7941 = vadd.f32 %v7547, %v7903
        %v7942 = vadd.f32 %v7548, %v7908
        %v7943 = vld [vmem:[#allocation2 + $0x29] sm:$0xff]
        %v7944 = vld [vmem:[#allocation2 + $0x31] sm:$0xff]
        %v7945 = vld [vmem:[#allocation2 + $0x39] sm:$0xff]
        %v7946 = vld [vmem:[#allocation2 + $0x41] sm:$0xff]
        %v7947 = vld [vmem:[#allocation2 + $0x49] sm:$0xff]
        %v7948 = vld [vmem:[#allocation2 + $0x51] sm:$0xff]
        %v7949 = vld [vmem:[#allocation2 + $0x59] sm:$0xff]
        %v7950 = vld [vmem:[#allocation2 + $0x61] sm:$0xff]
        %v7951 = vld [vmem:[#allocation2 + $0x69] sm:$0xff]
        %v7952 = vld [vmem:[#allocation2 + $0x71] sm:$0xff]
        %v7953 = vld [vmem:[#allocation2 + $0x79] sm:$0xff]
        %v7954 = vld [vmem:[#allocation2 + $0x81] sm:$0xff]
        %v7955 = vld [vmem:[#allocation2 + $0x89] sm:$0xff]
        %v7956 = vld [vmem:[#allocation2 + $0x91] sm:$0xff]
        %v7957 = vld [vmem:[#allocation2 + $0x99] sm:$0xff]
        %v7958 = vld [vmem:[#allocation2 + $0xa1] sm:$0xff]
        %v7959 = vld [vmem:[#allocation2 + $0xa9] sm:$0xff]
        %v7960 = vld [vmem:[#allocation2 + $0xb1] sm:$0xff]
        %v7961 = vld [vmem:[#allocation2 + $0xb9] sm:$0xff]
        %v7962 = vld [vmem:[#allocation2 + $0xc1] sm:$0xff]
        %v7963 = vld [vmem:[#allocation2 + $0xc9] sm:$0xff]
        %v7964 = vld [vmem:[#allocation2 + $0xd1] sm:$0xff]
        %v7965 = vld [vmem:[#allocation2 + $0xd9] sm:$0xff]
        %v7966 = vld [vmem:[#allocation2 + $0xe1] sm:$0xff]
        %v7967 = vld [vmem:[#allocation2 + $0xe9] sm:$0xff]
        %v7968 = vld [vmem:[#allocation2 + $0xf1] sm:$0xff]
        %v7969 = vld [vmem:[#allocation2 + $0xf9] sm:$0xff]
        %v7970 = vld [vmem:[#allocation2 + $0x101] sm:$0xff]
        %v7971 = vld [vmem:[#allocation2 + $0x109] sm:$0xff]
        %v7972 = vld [vmem:[#allocation2 + $0x111] sm:$0xff]
        %v7973 = vld [vmem:[#allocation2 + $0x119] sm:$0xff]
        %v7974 = vld [vmem:[#allocation2 + $0x121] sm:$0xff]
        %v7975 = vsel %vm1675, %v7943, 0.0
        %v7976 = vsel %vm1676, %v7944, 0.0
        %v7977 = vsel %vm1677, %v7945, 0.0
        %v7978 = vsel %vm1678, %v7946, 0.0
        %v7979 = vsel %vm1679, %v7947, 0.0
        %v7980 = vsel %vm1680, %v7948, 0.0
        %v7981 = vsel %vm1681, %v7949, 0.0
        %v7982 = vsel %vm1682, %v7950, 0.0
        %v7983 = vsel %vm1683, %v7951, 0.0
        %v7984 = vsel %vm1684, %v7952, 0.0
        %v7985 = vsel %vm1685, %v7953, 0.0
        %v7986 = vsel %vm1686, %v7954, 0.0
        %v7987 = vsel %vm1687, %v7955, 0.0
        %v7988 = vsel %vm1688, %v7956, 0.0
        %v7989 = vsel %vm1689, %v7957, 0.0
        %v7990 = vsel %vm1690, %v7958, 0.0
        %v7991 = vsel %vm1691, %v7959, 0.0
        %v7992 = vsel %vm1692, %v7960, 0.0
        %v7993 = vsel %vm1693, %v7961, 0.0
        %v7994 = vsel %vm1694, %v7962, 0.0
        %v7995 = vsel %vm1695, %v7963, 0.0
        %v7996 = vsel %vm1696, %v7964, 0.0
        %v7997 = vsel %vm1697, %v7965, 0.0
        %v7998 = vsel %vm1698, %v7966, 0.0
        %v7999 = vsel %vm1699, %v7967, 0.0
        %v8000 = vsel %vm1700, %v7968, 0.0
        %v8001 = vsel %vm1701, %v7969, 0.0
        %v8002 = vsel %vm1702, %v7970, 0.0
        %v8003 = vsel %vm1703, %v7971, 0.0
        %v8004 = vsel %vm1704, %v7972, 0.0
        %v8005 = vsel %vm1705, %v7973, 0.0
        %v8006 = vsel %vm1706, %v7974, 0.0
        %s8007 = scalar_lea.vmem [#allocation3], 512
        %v8008 = vld [vmem:[%s8007] sm:$0xff]
        %v8009 = vld [vmem:[%s8007 + $0x8] sm:$0xff]
        %v8010 = vld [vmem:[%s8007 + $0x10] sm:$0xff]
        %v8011 = vld [vmem:[%s8007 + $0x18] sm:$0xff]
        %v8012 = vld [vmem:[%s8007 + $0x20] sm:$0xff]
        %v8013 = vld [vmem:[%s8007 + $0x28] sm:$0xff]
        %v8014 = vld [vmem:[%s8007 + $0x30] sm:$0xff]
        %v8015 = vld [vmem:[%s8007 + $0x38] sm:$0xff]
        %v8017 = vsel %vm240, %v7975, 0
        %v8020 = vsel %vm240, %v7976, 0
        %v8023 = vsel %vm240, %v7977, 0
        %v8026 = vsel %vm240, %v7978, 0
        %v8029 = vsel %vm240, %v7979, 0
        %v8032 = vsel %vm240, %v7980, 0
        %v8035 = vsel %vm240, %v7981, 0
        %v8038 = vsel %vm240, %v7982, 0
        %v8041 = vsel %vm240, %v7983, 0
        %v8044 = vsel %vm240, %v7984, 0
        %v8047 = vsel %vm240, %v7985, 0
        %v8050 = vsel %vm240, %v7986, 0
        %v8053 = vsel %vm240, %v7987, 0
        %v8056 = vsel %vm240, %v7988, 0
        %v8059 = vsel %vm240, %v7989, 0
        %v8062 = vsel %vm240, %v7990, 0
        %v8065 = vsel %vm240, %v7991, 0
        %v8068 = vsel %vm240, %v7992, 0
        %v8071 = vsel %vm240, %v7993, 0
        %v8074 = vsel %vm240, %v7994, 0
        %v8077 = vsel %vm240, %v7995, 0
        %v8080 = vsel %vm240, %v7996, 0
        %v8083 = vsel %vm240, %v7997, 0
        %v8086 = vsel %vm240, %v7998, 0
        %v8089 = vsel %vm240, %v7999, 0
        %v8092 = vsel %vm240, %v8000, 0
        %v8095 = vsel %vm240, %v8001, 0
        %v8098 = vsel %vm240, %v8002, 0
        %v8101 = vsel %vm240, %v8003, 0
        %v8104 = vsel %vm240, %v8004, 0
        %v8107 = vsel %vm240, %v8005, 0
        %v8110 = vsel %vm240, %v8006, 0
        %8112 = vmatprep.subr.mxu0 0.0
        %8113 = vmatpush1.msra.mxu0 %v8008
        %8114 = vmatprep.subr.mxu0 0.0
        %8115 = vmatpush1.msra.mxu0 %v8009
        %8116 = vmatprep.subr.mxu0 0.0
        %8117 = vmatpush1.msra.mxu0 %v8010
        %8118 = vmatprep.subr.mxu0 0.0
        %8119 = vmatpush1.msra.mxu0 %v8011
        %8120 = vmatprep.subr.mxu0 0.0
        %8121 = vmatpush1.msra.mxu0 %v8012
        %8122 = vmatprep.subr.mxu0 0.0
        %8123 = vmatpush1.msra.mxu0 %v8013
        %8124 = vmatprep.subr.mxu0 0.0
        %8125 = vmatpush1.msra.mxu0 %v8014
        %8126 = vmatprep.subr.mxu0 0.0
        %8127 = vmatpush1.msra.mxu0 %v8015
        %8128 = vmatprep.subr.mxu0 0.0
        %8129 = vmatpush1.msra.mxu0 0.0
        %8130 = vmatprep.subr.mxu0 0.0
        %8131 = vmatpush1.msra.mxu0 0.0
        %8132 = vmatprep.subr.mxu0 0.0
        %8133 = vmatpush1.msra.mxu0 0.0
        %8134 = vmatprep.subr.mxu0 0.0
        %8135 = vmatpush1.msra.mxu0 0.0
        %8136 = vmatprep.subr.mxu0 0.0
        %8137 = vmatpush1.msra.mxu0 0.0
        %8138 = vmatprep.subr.mxu0 0.0
        %8139 = vmatpush1.msra.mxu0 0.0
        %8140 = vmatprep.subr.mxu0 0.0
        %8141 = vmatpush1.msra.mxu0 0.0
        %8142 = vmatprep.subr.mxu0 0.0
        %8143 = vmatpush1.msra.mxu0 0.0
        %8144 = vmatprep.subr.mxu0 0.0
        %8145 = vmatpush1.msra.mxu0 0.0
        %8146 = vmatprep.subr.mxu0 0.0
        %8147 = vmatpush1.msra.mxu0 0.0
        %8148 = vmatprep.subr.mxu0 0.0
        %8149 = vmatpush1.msra.mxu0 0.0
        %8150 = vmatprep.subr.mxu0 0.0
        %8151 = vmatpush1.msra.mxu0 0.0
        %8152 = vmatprep.subr.mxu0 0.0
        %8153 = vmatpush1.msra.mxu0 0.0
        %8154 = vmatprep.subr.mxu0 0.0
        %8155 = vmatpush1.msra.mxu0 0.0
        %8156 = vmatprep.subr.mxu0 0.0
        %8157 = vmatpush1.msra.mxu0 0.0
        %8158 = vmatprep.subr.mxu0 0.0
        %8159 = vmatpush1.msra.mxu0 0.0
        %8160 = vmatprep.subr.mxu0 0.0
        %8161 = vmatpush1.msra.mxu0 0.0
        %8162 = vmatprep.subr.mxu0 0.0
        %8163 = vmatpush1.msra.mxu0 0.0
        %8164 = vmatprep.subr.mxu0 0.0
        %8165 = vmatpush1.msra.mxu0 0.0
        %8166 = vmatprep.subr.mxu0 0.0
        %8167 = vmatpush1.msra.mxu0 0.0
        %8168 = vmatprep.subr.mxu0 0.0
        %8169 = vmatpush1.msra.mxu0 0.0
        %8170 = vmatprep.subr.mxu0 0.0
        %8171 = vmatpush1.msra.mxu0 0.0
        %8172 = vmatprep.subr.mxu0 0.0
        %8173 = vmatpush1.msra.mxu0 0.0
        %8174 = vmatprep.subr.mxu0 0.0
        %8175 = vmatpush1.msra.mxu0 0.0
        %8176 = vmatprep.mubr.f32.mxu0 0.0
        %8177 = vmatmul.mubr.f32.gmra.mrb[0].mxu0 %v8017
        %v8178 = vpop.f32.mrb[0].mxu0
        %v8179 = vadd.f32 0.0, %v8178
        %v8180 = vpop.f32.mrb[0].mxu0
        %8181 = vmatprep.mubr.f32.mxu0 0.0
        %8182 = vmatmul.mubr.f32.gmra.mrb[0].mxu0 %v8020
        %v8183 = vpop.f32.mrb[0].mxu0
        %v8184 = vadd.f32 0.0, %v8183
        %v8185 = vpop.f32.mrb[0].mxu0
        %8186 = vmatprep.mubr.f32.mxu0 0.0
        %8187 = vmatmul.mubr.f32.gmra.mrb[0].mxu0 %v8023
        %v8188 = vpop.f32.mrb[0].mxu0
        %v8189 = vadd.f32 0.0, %v8188
        %v8190 = vpop.f32.mrb[0].mxu0
        %8191 = vmatprep.mubr.f32.mxu0 0.0
        %8192 = vmatmul.mubr.f32.gmra.mrb[0].mxu0 %v8026
        %v8193 = vpop.f32.mrb[0].mxu0
        %v8194 = vadd.f32 0.0, %v8193
        %v8195 = vpop.f32.mrb[0].mxu0
        %8196 = vmatprep.mubr.f32.mxu0 0.0
        %8197 = vmatmul.mubr.f32.gmra.mrb[0].mxu0 %v8029
        %v8198 = vpop.f32.mrb[0].mxu0
        %v8199 = vadd.f32 0.0, %v8198
        %v8200 = vpop.f32.mrb[0].mxu0
        %8201 = vmatprep.mubr.f32.mxu0 0.0
        %8202 = vmatmul.mubr.f32.gmra.mrb[0].mxu0 %v8032
        %v8203 = vpop.f32.mrb[0].mxu0
        %v8204 = vadd.f32 0.0, %v8203
        %v8205 = vpop.f32.mrb[0].mxu0
        %8206 = vmatprep.mubr.f32.mxu0 0.0
        %8207 = vmatmul.mubr.f32.gmra.mrb[0].mxu0 %v8035
        %v8208 = vpop.f32.mrb[0].mxu0
        %v8209 = vadd.f32 0.0, %v8208
        %v8210 = vpop.f32.mrb[0].mxu0
        %8211 = vmatprep.mubr.f32.mxu0 0.0
        %8212 = vmatmul.mubr.f32.gmra.mrb[0].mxu0 %v8038
        %v8213 = vpop.f32.mrb[0].mxu0
        %v8214 = vadd.f32 0.0, %v8213
        %v8215 = vpop.f32.mrb[0].mxu0
        %8216 = vmatprep.mubr.f32.mxu0 0.0
        %8217 = vmatmul.mubr.f32.gmra.mrb[0].mxu0 %v8041
        %v8218 = vpop.f32.mrb[0].mxu0
        %v8219 = vadd.f32 0.0, %v8218
        %v8220 = vpop.f32.mrb[0].mxu0
        %8221 = vmatprep.mubr.f32.mxu0 0.0
        %8222 = vmatmul.mubr.f32.gmra.mrb[0].mxu0 %v8044
        %v8223 = vpop.f32.mrb[0].mxu0
        %v8224 = vadd.f32 0.0, %v8223
        %v8225 = vpop.f32.mrb[0].mxu0
        %8226 = vmatprep.mubr.f32.mxu0 0.0
        %8227 = vmatmul.mubr.f32.gmra.mrb[0].mxu0 %v8047
        %v8228 = vpop.f32.mrb[0].mxu0
        %v8229 = vadd.f32 0.0, %v8228
        %v8230 = vpop.f32.mrb[0].mxu0
        %8231 = vmatprep.mubr.f32.mxu0 0.0
        %8232 = vmatmul.mubr.f32.gmra.mrb[0].mxu0 %v8050
        %v8233 = vpop.f32.mrb[0].mxu0
        %v8234 = vadd.f32 0.0, %v8233
        %v8235 = vpop.f32.mrb[0].mxu0
        %8236 = vmatprep.mubr.f32.mxu0 0.0
        %8237 = vmatmul.mubr.f32.gmra.mrb[0].mxu0 %v8053
        %v8238 = vpop.f32.mrb[0].mxu0
        %v8239 = vadd.f32 0.0, %v8238
        %v8240 = vpop.f32.mrb[0].mxu0
        %8241 = vmatprep.mubr.f32.mxu0 0.0
        %8242 = vmatmul.mubr.f32.gmra.mrb[0].mxu0 %v8056
        %v8243 = vpop.f32.mrb[0].mxu0
        %v8244 = vadd.f32 0.0, %v8243
        %v8245 = vpop.f32.mrb[0].mxu0
        %8246 = vmatprep.mubr.f32.mxu0 0.0
        %8247 = vmatmul.mubr.f32.gmra.mrb[0].mxu0 %v8059
        %v8248 = vpop.f32.mrb[0].mxu0
        %v8249 = vadd.f32 0.0, %v8248
        %v8250 = vpop.f32.mrb[0].mxu0
        %8251 = vmatprep.mubr.f32.mxu0 0.0
        %8252 = vmatmul.mubr.f32.gmra.mrb[0].mxu0 %v8062
        %v8253 = vpop.f32.mrb[0].mxu0
        %v8254 = vadd.f32 0.0, %v8253
        %v8255 = vpop.f32.mrb[0].mxu0
        %8256 = vmatprep.mubr.f32.mxu0 0.0
        %8257 = vmatmul.mubr.f32.gmra.mrb[0].mxu0 %v8065
        %v8258 = vpop.f32.mrb[0].mxu0
        %v8259 = vadd.f32 0.0, %v8258
        %v8260 = vpop.f32.mrb[0].mxu0
        %8261 = vmatprep.mubr.f32.mxu0 0.0
        %8262 = vmatmul.mubr.f32.gmra.mrb[0].mxu0 %v8068
        %v8263 = vpop.f32.mrb[0].mxu0
        %v8264 = vadd.f32 0.0, %v8263
        %v8265 = vpop.f32.mrb[0].mxu0
        %8266 = vmatprep.mubr.f32.mxu0 0.0
        %8267 = vmatmul.mubr.f32.gmra.mrb[0].mxu0 %v8071
        %v8268 = vpop.f32.mrb[0].mxu0
        %v8269 = vadd.f32 0.0, %v8268
        %v8270 = vpop.f32.mrb[0].mxu0
        %8271 = vmatprep.mubr.f32.mxu0 0.0
        %8272 = vmatmul.mubr.f32.gmra.mrb[0].mxu0 %v8074
        %v8273 = vpop.f32.mrb[0].mxu0
        %v8274 = vadd.f32 0.0, %v8273
        %v8275 = vpop.f32.mrb[0].mxu0
        %8276 = vmatprep.mubr.f32.mxu0 0.0
        %8277 = vmatmul.mubr.f32.gmra.mrb[0].mxu0 %v8077
        %v8278 = vpop.f32.mrb[0].mxu0
        %v8279 = vadd.f32 0.0, %v8278
        %v8280 = vpop.f32.mrb[0].mxu0
        %8281 = vmatprep.mubr.f32.mxu0 0.0
        %8282 = vmatmul.mubr.f32.gmra.mrb[0].mxu0 %v8080
        %v8283 = vpop.f32.mrb[0].mxu0
        %v8284 = vadd.f32 0.0, %v8283
        %v8285 = vpop.f32.mrb[0].mxu0
        %8286 = vmatprep.mubr.f32.mxu0 0.0
        %8287 = vmatmul.mubr.f32.gmra.mrb[0].mxu0 %v8083
        %v8288 = vpop.f32.mrb[0].mxu0
        %v8289 = vadd.f32 0.0, %v8288
        %v8290 = vpop.f32.mrb[0].mxu0
        %8291 = vmatprep.mubr.f32.mxu0 0.0
        %8292 = vmatmul.mubr.f32.gmra.mrb[0].mxu0 %v8086
        %v8293 = vpop.f32.mrb[0].mxu0
        %v8294 = vadd.f32 0.0, %v8293
        %v8295 = vpop.f32.mrb[0].mxu0
        %8296 = vmatprep.mubr.f32.mxu0 0.0
        %8297 = vmatmul.mubr.f32.gmra.mrb[0].mxu0 %v8089
        %v8298 = vpop.f32.mrb[0].mxu0
        %v8299 = vadd.f32 0.0, %v8298
        %v8300 = vpop.f32.mrb[0].mxu0
        %8301 = vmatprep.mubr.f32.mxu0 0.0
        %8302 = vmatmul.mubr.f32.gmra.mrb[0].mxu0 %v8092
        %v8303 = vpop.f32.mrb[0].mxu0
        %v8304 = vadd.f32 0.0, %v8303
        %v8305 = vpop.f32.mrb[0].mxu0
        %8306 = vmatprep.mubr.f32.mxu0 0.0
        %8307 = vmatmul.mubr.f32.gmra.mrb[0].mxu0 %v8095
        %v8308 = vpop.f32.mrb[0].mxu0
        %v8309 = vadd.f32 0.0, %v8308
        %v8310 = vpop.f32.mrb[0].mxu0
        %8311 = vmatprep.mubr.f32.mxu0 0.0
        %8312 = vmatmul.mubr.f32.gmra.mrb[0].mxu0 %v8098
        %v8313 = vpop.f32.mrb[0].mxu0
        %v8314 = vadd.f32 0.0, %v8313
        %v8315 = vpop.f32.mrb[0].mxu0
        %8316 = vmatprep.mubr.f32.mxu0 0.0
        %8317 = vmatmul.mubr.f32.gmra.mrb[0].mxu0 %v8101
        %v8318 = vpop.f32.mrb[0].mxu0
        %v8319 = vadd.f32 0.0, %v8318
        %v8320 = vpop.f32.mrb[0].mxu0
        %8321 = vmatprep.mubr.f32.mxu0 0.0
        %8322 = vmatmul.mubr.f32.gmra.mrb[0].mxu0 %v8104
        %v8323 = vpop.f32.mrb[0].mxu0
        %v8324 = vadd.f32 0.0, %v8323
        %v8325 = vpop.f32.mrb[0].mxu0
        %8326 = vmatprep.mubr.f32.mxu0 0.0
        %8327 = vmatmul.mubr.f32.gmra.mrb[0].mxu0 %v8107
        %v8328 = vpop.f32.mrb[0].mxu0
        %v8329 = vadd.f32 0.0, %v8328
        %v8330 = vpop.f32.mrb[0].mxu0
        %8331 = vmatprep.mubr.f32.mxu0 0.0
        %8332 = vmatmul.mubr.f32.gmra.mrb[0].mxu0 %v8110
        %v8333 = vpop.f32.mrb[0].mxu0
        %v8334 = vadd.f32 0.0, %v8333
        %v8335 = vpop.f32.mrb[0].mxu0
        %8336 = vdwg.mxu0
        %v8337 = vadd.f32 %v7911, %v8179
        %v8338 = vadd.f32 %v7912, %v8184
        %v8339 = vadd.f32 %v7913, %v8189
        %v8340 = vadd.f32 %v7914, %v8194
        %v8341 = vadd.f32 %v7915, %v8199
        %v8342 = vadd.f32 %v7916, %v8204
        %v8343 = vadd.f32 %v7917, %v8209
        %v8344 = vadd.f32 %v7918, %v8214
        %v8345 = vadd.f32 %v7919, %v8219
        %v8346 = vadd.f32 %v7920, %v8224
        %v8347 = vadd.f32 %v7921, %v8229
        %v8348 = vadd.f32 %v7922, %v8234
        %v8349 = vadd.f32 %v7923, %v8239
        %v8350 = vadd.f32 %v7924, %v8244
        %v8351 = vadd.f32 %v7925, %v8249
        %v8352 = vadd.f32 %v7926, %v8254
        %v8353 = vadd.f32 %v7927, %v8259
        %v8354 = vadd.f32 %v7928, %v8264
        %v8355 = vadd.f32 %v7929, %v8269
        %v8356 = vadd.f32 %v7930, %v8274
        %v8357 = vadd.f32 %v7931, %v8279
        %v8358 = vadd.f32 %v7932, %v8284
        %v8359 = vadd.f32 %v7933, %v8289
        %v8360 = vadd.f32 %v7934, %v8294
        %v8361 = vadd.f32 %v7935, %v8299
        %v8362 = vadd.f32 %v7936, %v8304
        %v8363 = vadd.f32 %v7937, %v8309
        %v8364 = vadd.f32 %v7938, %v8314
        %v8365 = vadd.f32 %v7939, %v8319
        %v8366 = vadd.f32 %v7940, %v8324
        %v8367 = vadd.f32 %v7941, %v8329
        %v8368 = vadd.f32 %v7942, %v8334
        %v8369 = vld [vmem:[%s4] sm:$0x1]
        %v8371 = vlaneseq
        %v8372 = vshrl.u32 %v8371, 7
        %v8373 = vsub.s32 0, %v8372
        %v8374 = vrot.slane %v8369, %v8373
        %v8376 = vadd.f32 %v8337, %v8374
        %v8377 = vadd.f32 %v8338, %v8374
        %v8378 = vadd.f32 %v8339, %v8374
        %v8379 = vadd.f32 %v8340, %v8374
        %v8380 = vadd.f32 %v8341, %v8374
        %v8381 = vadd.f32 %v8342, %v8374
        %v8382 = vadd.f32 %v8343, %v8374
        %v8383 = vadd.f32 %v8344, %v8374
        %v8384 = vadd.f32 %v8345, %v8374
        %v8385 = vadd.f32 %v8346, %v8374
        %v8386 = vadd.f32 %v8347, %v8374
        %v8387 = vadd.f32 %v8348, %v8374
        %v8388 = vadd.f32 %v8349, %v8374
        %v8389 = vadd.f32 %v8350, %v8374
        %v8390 = vadd.f32 %v8351, %v8374
        %v8391 = vadd.f32 %v8352, %v8374
        %v8392 = vadd.f32 %v8353, %v8374
        %v8393 = vadd.f32 %v8354, %v8374
        %v8394 = vadd.f32 %v8355, %v8374
        %v8395 = vadd.f32 %v8356, %v8374
        %v8396 = vadd.f32 %v8357, %v8374
        %v8397 = vadd.f32 %v8358, %v8374
        %v8398 = vadd.f32 %v8359, %v8374
        %v8399 = vadd.f32 %v8360, %v8374
        %v8400 = vadd.f32 %v8361, %v8374
        %v8401 = vadd.f32 %v8362, %v8374
        %v8402 = vadd.f32 %v8363, %v8374
        %v8403 = vadd.f32 %v8364, %v8374
        %v8404 = vadd.f32 %v8365, %v8374
        %v8405 = vadd.f32 %v8366, %v8374
        %v8406 = vadd.f32 %v8367, %v8374
        %v8407 = vadd.f32 %v8368, %v8374
        %v8408 = vld [vmem:[%s234] sm:$0xff]
        %v8409 = vld [vmem:[%s234 + $0x8] sm:$0xff]
        %v8410 = vld [vmem:[%s234 + $0x10] sm:$0xff]
        %v8411 = vld [vmem:[%s234 + $0x18] sm:$0xff]
        %v8412 = vld [vmem:[%s234 + $0x20] sm:$0xff]
        %v8413 = vld [vmem:[%s234 + $0x28] sm:$0xff]
        %v8414 = vld [vmem:[%s234 + $0x30] sm:$0xff]
        %v8415 = vld [vmem:[%s234 + $0x38] sm:$0xff]
        %v8416 = vld [vmem:[%s234 + $0x40] sm:$0xff]
        %v8417 = vld [vmem:[%s234 + $0x48] sm:$0xff]
        %v8418 = vld [vmem:[%s234 + $0x50] sm:$0xff]
        %v8419 = vld [vmem:[%s234 + $0x58] sm:$0xff]
        %v8420 = vld [vmem:[%s234 + $0x60] sm:$0xff]
        %v8421 = vld [vmem:[%s234 + $0x68] sm:$0xff]
        %v8422 = vld [vmem:[%s234 + $0x70] sm:$0xff]
        %v8423 = vld [vmem:[%s234 + $0x78] sm:$0xff]
        %v8424 = vld [vmem:[%s234 + $0x80] sm:$0xff]
        %v8425 = vld [vmem:[%s234 + $0x88] sm:$0xff]
        %v8426 = vld [vmem:[%s234 + $0x90] sm:$0xff]
        %v8427 = vld [vmem:[%s234 + $0x98] sm:$0xff]
        %v8428 = vld [vmem:[%s234 + $0xa0] sm:$0xff]
        %v8429 = vld [vmem:[%s234 + $0xa8] sm:$0xff]
        %v8430 = vld [vmem:[%s234 + $0xb0] sm:$0xff]
        %v8431 = vld [vmem:[%s234 + $0xb8] sm:$0xff]
        %v8432 = vld [vmem:[%s234 + $0xc0] sm:$0xff]
        %v8433 = vld [vmem:[%s234 + $0xc8] sm:$0xff]
        %v8434 = vld [vmem:[%s234 + $0xd0] sm:$0xff]
        %v8435 = vld [vmem:[%s234 + $0xd8] sm:$0xff]
        %v8436 = vld [vmem:[%s234 + $0xe0] sm:$0xff]
        %v8437 = vld [vmem:[%s234 + $0xe8] sm:$0xff]
        %v8438 = vld [vmem:[%s234 + $0xf0] sm:$0xff]
        %v8439 = vld [vmem:[%s234 + $0xf8] sm:$0xff]
        %v8440 = vmul.f32 %v8376, 0.5
        %v8441 = vmul.f32 %v8377, 0.5
        %v8442 = vmul.f32 %v8378, 0.5
        %v8443 = vmul.f32 %v8379, 0.5
        %v8444 = vmul.f32 %v8380, 0.5
        %v8445 = vmul.f32 %v8381, 0.5
        %v8446 = vmul.f32 %v8382, 0.5
        %v8447 = vmul.f32 %v8383, 0.5
        %v8448 = vmul.f32 %v8384, 0.5
        %v8449 = vmul.f32 %v8385, 0.5
        %v8450 = vmul.f32 %v8386, 0.5
        %v8451 = vmul.f32 %v8387, 0.5
        %v8452 = vmul.f32 %v8388, 0.5
        %v8453 = vmul.f32 %v8389, 0.5
        %v8454 = vmul.f32 %v8390, 0.5
        %v8455 = vmul.f32 %v8391, 0.5
        %v8456 = vmul.f32 %v8392, 0.5
        %v8457 = vmul.f32 %v8393, 0.5
        %v8458 = vmul.f32 %v8394, 0.5
        %v8459 = vmul.f32 %v8395, 0.5
        %v8460 = vmul.f32 %v8396, 0.5
        %v8461 = vmul.f32 %v8397, 0.5
        %v8462 = vmul.f32 %v8398, 0.5
        %v8463 = vmul.f32 %v8399, 0.5
        %v8464 = vmul.f32 %v8400, 0.5
        %v8465 = vmul.f32 %v8401, 0.5
        %v8466 = vmul.f32 %v8402, 0.5
        %v8467 = vmul.f32 %v8403, 0.5
        %v8468 = vmul.f32 %v8404, 0.5
        %v8469 = vmul.f32 %v8405, 0.5
        %v8470 = vmul.f32 %v8406, 0.5
        %v8471 = vmul.f32 %v8407, 0.5
        %v8472 = vadd.f32 %v8440, %v8408
        %v8473 = vadd.f32 %v8441, %v8409
        %v8474 = vadd.f32 %v8442, %v8410
        %v8475 = vadd.f32 %v8443, %v8411
        %v8476 = vadd.f32 %v8444, %v8412
        %v8477 = vadd.f32 %v8445, %v8413
        %v8478 = vadd.f32 %v8446, %v8414
        %v8479 = vadd.f32 %v8447, %v8415
        %v8480 = vadd.f32 %v8448, %v8416
        %v8481 = vadd.f32 %v8449, %v8417
        %v8482 = vadd.f32 %v8450, %v8418
        %v8483 = vadd.f32 %v8451, %v8419
        %v8484 = vadd.f32 %v8452, %v8420
        %v8485 = vadd.f32 %v8453, %v8421
        %v8486 = vadd.f32 %v8454, %v8422
        %v8487 = vadd.f32 %v8455, %v8423
        %v8488 = vadd.f32 %v8456, %v8424
        %v8489 = vadd.f32 %v8457, %v8425
        %v8490 = vadd.f32 %v8458, %v8426
        %v8491 = vadd.f32 %v8459, %v8427
        %v8492 = vadd.f32 %v8460, %v8428
        %v8493 = vadd.f32 %v8461, %v8429
        %v8494 = vadd.f32 %v8462, %v8430
        %v8495 = vadd.f32 %v8463, %v8431
        %v8496 = vadd.f32 %v8464, %v8432
        %v8497 = vadd.f32 %v8465, %v8433
        %v8498 = vadd.f32 %v8466, %v8434
        %v8499 = vadd.f32 %v8467, %v8435
        %v8500 = vadd.f32 %v8468, %v8436
        %v8501 = vadd.f32 %v8469, %v8437
        %v8502 = vadd.f32 %v8470, %v8438
        %v8503 = vadd.f32 %v8471, %v8439
        %v8504 = vmul.f32 %v8472, 0.5
        %v8505 = vmul.f32 %v8473, 0.5
        %v8506 = vmul.f32 %v8474, 0.5
        %v8507 = vmul.f32 %v8475, 0.5
        %v8508 = vmul.f32 %v8476, 0.5
        %v8509 = vmul.f32 %v8477, 0.5
        %v8510 = vmul.f32 %v8478, 0.5
        %v8511 = vmul.f32 %v8479, 0.5
        %v8512 = vmul.f32 %v8480, 0.5
        %v8513 = vmul.f32 %v8481, 0.5
        %v8514 = vmul.f32 %v8482, 0.5
        %v8515 = vmul.f32 %v8483, 0.5
        %v8516 = vmul.f32 %v8484, 0.5
        %v8517 = vmul.f32 %v8485, 0.5
        %v8518 = vmul.f32 %v8486, 0.5
        %v8519 = vmul.f32 %v8487, 0.5
        %v8520 = vmul.f32 %v8488, 0.5
        %v8521 = vmul.f32 %v8489, 0.5
        %v8522 = vmul.f32 %v8490, 0.5
        %v8523 = vmul.f32 %v8491, 0.5
        %v8524 = vmul.f32 %v8492, 0.5
        %v8525 = vmul.f32 %v8493, 0.5
        %v8526 = vmul.f32 %v8494, 0.5
        %v8527 = vmul.f32 %v8495, 0.5
        %v8528 = vmul.f32 %v8496, 0.5
        %v8529 = vmul.f32 %v8497, 0.5
        %v8530 = vmul.f32 %v8498, 0.5
        %v8531 = vmul.f32 %v8499, 0.5
        %v8532 = vmul.f32 %v8500, 0.5
        %v8533 = vmul.f32 %v8501, 0.5
        %v8534 = vmul.f32 %v8502, 0.5
        %v8535 = vmul.f32 %v8503, 0.5
        %8536 = vst.msk [vmem:[%s239] sm:$0xff] %vm240, %v8504
        %8537 = vst.msk [vmem:[%s239 + $0x8] sm:$0xff] %vm240, %v8505
        %8538 = vst.msk [vmem:[%s239 + $0x10] sm:$0xff] %vm240, %v8506
        %8539 = vst.msk [vmem:[%s239 + $0x18] sm:$0xff] %vm240, %v8507
        %8540 = vst.msk [vmem:[%s239 + $0x20] sm:$0xff] %vm240, %v8508
        %8541 = vst.msk [vmem:[%s239 + $0x28] sm:$0xff] %vm240, %v8509
        %8542 = vst.msk [vmem:[%s239 + $0x30] sm:$0xff] %vm240, %v8510
        %8543 = vst.msk [vmem:[%s239 + $0x38] sm:$0xff] %vm240, %v8511
        %8544 = vst.msk [vmem:[%s239 + $0x40] sm:$0xff] %vm240, %v8512
        %8545 = vst.msk [vmem:[%s239 + $0x48] sm:$0xff] %vm240, %v8513
        %8546 = vst.msk [vmem:[%s239 + $0x50] sm:$0xff] %vm240, %v8514
        %8547 = vst.msk [vmem:[%s239 + $0x58] sm:$0xff] %vm240, %v8515
        %8548 = vst.msk [vmem:[%s239 + $0x60] sm:$0xff] %vm240, %v8516
        %8549 = vst.msk [vmem:[%s239 + $0x68] sm:$0xff] %vm240, %v8517
        %8550 = vst.msk [vmem:[%s239 + $0x70] sm:$0xff] %vm240, %v8518
        %8551 = vst.msk [vmem:[%s239 + $0x78] sm:$0xff] %vm240, %v8519
        %8552 = vst.msk [vmem:[%s239 + $0x80] sm:$0xff] %vm240, %v8520
        %8553 = vst.msk [vmem:[%s239 + $0x88] sm:$0xff] %vm240, %v8521
        %8554 = vst.msk [vmem:[%s239 + $0x90] sm:$0xff] %vm240, %v8522
        %8555 = vst.msk [vmem:[%s239 + $0x98] sm:$0xff] %vm240, %v8523
        %8556 = vst.msk [vmem:[%s239 + $0xa0] sm:$0xff] %vm240, %v8524
        %8557 = vst.msk [vmem:[%s239 + $0xa8] sm:$0xff] %vm240, %v8525
        %8558 = vst.msk [vmem:[%s239 + $0xb0] sm:$0xff] %vm240, %v8526
        %8559 = vst.msk [vmem:[%s239 + $0xb8] sm:$0xff] %vm240, %v8527
        %8560 = vst.msk [vmem:[%s239 + $0xc0] sm:$0xff] %vm240, %v8528
        %8561 = vst.msk [vmem:[%s239 + $0xc8] sm:$0xff] %vm240, %v8529
        %8562 = vst.msk [vmem:[%s239 + $0xd0] sm:$0xff] %vm240, %v8530
        %8563 = vst.msk [vmem:[%s239 + $0xd8] sm:$0xff] %vm240, %v8531
        %8564 = vst.msk [vmem:[%s239 + $0xe0] sm:$0xff] %vm240, %v8532
        %8565 = vst.msk [vmem:[%s239 + $0xe8] sm:$0xff] %vm240, %v8533
        %8566 = vst.msk [vmem:[%s239 + $0xf0] sm:$0xff] %vm240, %v8534
        %8567 = vst.msk [vmem:[%s239 + $0xf8] sm:$0xff] %vm240, %v8535
        %p8568 = scmp.lt.s32.totalorder %s17, 1
        %s8569 = scalar_select %p8568, %s17, 1
        %s8570 = smul.addr %s8569, 32
        %s8571 = smul.addr %s8570, 8
        %s8572 = scalar_lea.vmem %s5, %s8571
        // Predicated region
        $region45: #{tpu_custom_call.1} parent=39 // pred_check
          %p8573 = pneg %p145
        $region46: #{tpu_custom_call.1} parent=39 // pred_check_branch
          %8575 = sbr.rel (%p8573) target = $region48
        $region47: #{tpu_custom_call.1} parent=39 // pred_region
          _
        $region48: #{tpu_custom_call.1} parent=39 // pred_fallthru
          _
      $region40: #{tpu_custom_call.1} parent=5 // pred_fallthru
        _
      %p8576 = scmp.le.s32.totalorder 2, %s12
      // Predicated region
      $region49: #{tpu_custom_call.1} parent=5 // pred_check
        %p8577 = pneg %p8576
      $region50: #{tpu_custom_call.1} parent=5 // pred_check_branch
        %8579 = sbr.rel (%p8577) target = $region52
      $region51: #{tpu_custom_call.1} parent=5 // pred_region
        %s8580 = ssub.s32 %s12, 2
        // Predicated region
        $region53: #{tpu_custom_call.1} parent=51 // pred_check
          %p8581 = pneg %p151
        $region54: #{tpu_custom_call.1} parent=51 // pred_check_branch
          %8583 = sbr.rel (%p8581) target = $region56
        $region55: #{tpu_custom_call.1} parent=51 // pred_region
          %p8584 = scmp.lt.s32.totalorder %s18, 1
          %s8585 = scalar_select %p8584, %s18, 1
          %s8586 = smul.addr %s8585, 32
          %s8587 = smul.addr %s8586, 8
          %s8588 = scalar_lea.vmem %s5, %s8587
        $region56: #{tpu_custom_call.1} parent=51 // pred_fallthru
          _
      $region52: #{tpu_custom_call.1} parent=5 // pred_fallthru
        _
    $region6: #{tpu_custom_call.1} parent=1 // loop_footer
      %s16 = sadd.s32 1, %s12
    $region7: #{tpu_custom_call.1} parent=1 // loop_footer_branch
      %11 = sbr.rel target = $region3
    $region8: #{tpu_custom_call.1} parent=1 // loop_exit
      _
    %8589 = vsyncpa [#allocation4], 1
    %s8590 = scalar_lea.sflag [#allocation4], 1
    %8591 = vsyncpa %s8590, 1

</llo_original>
